<compile_context>
chip_gen: v7x
topology: tpu7x:2x2x1
jax: 0.10.0
libtpu: 0.0.40
codegen_flags: <defaults>
</compile_context>

<pallas_src>
import functools

import jax
import jax.numpy as jnp
from jax import lax
from jax.experimental import pallas as pl
from jax.experimental.pallas import tpu as pltpu

_MIB = 1024 * 1024


def _vmem_limit(block_bytes, *, scratch_bytes=0, headroom=4 * _MIB):
    """Scoped-VMEM request: double-buffered pipelined blocks + scratch + headroom (clamped)."""
    need = 2 * block_bytes + scratch_bytes + headroom
    return int(min(max(need, 32 * _MIB), 64 * _MIB))


def _pick_time_chunk(T, target=64):
    """Largest divisor of T that is <= target, so chunking needs no boundary masking."""
    # TODO(synk): support non-divisor chunk sizes by masking padded timesteps.
    for tc in range(min(T, target), 0, -1):
        if T % tc == 0:
            return tc
    return T


def _row_tile(M, tile_m):
    tm = min(tile_m, M)
    if tm != M:
        tm = max(8, (tm // 8) * 8)   # block rows must be a multiple of 8 unless full-extent
    return tm


# ----------------------------------------------------------------------------
# Recurrent bidirectional GRU kernels.
# Gate math matches torch.nn.GRU (gate order r, z, n):
#   r = sigmoid(x Wir + bir + h Whr + bhr)
#   z = sigmoid(x Wiz + biz + h Whz + bhz)
#   n = tanh   (x Win + bin + r * (h Whn + bhn))
#   h' = (1 - z) * n + z * h
# gx_t below already contains x@W_ih + b_ih + b_hh[r,z]; only b_hh[n] is added here.
# ----------------------------------------------------------------------------
def _gru_step(gx_t, h, whh, bhn):
    H = h.shape[-1]
    gh = jnp.dot(h.astype(whh.dtype), whh, preferred_element_type=jnp.float32)
    # sigmoid(x) == 0.5*(tanh(0.5*x)+1): a single EUP tanh covers both r and z lanes.
    rz = 0.5 * (jnp.tanh(0.5 * (gx_t[:, :2 * H] + gh[:, :2 * H])) + 1.0)
    r = rz[:, :H]
    z = rz[:, H:]
    n = jnp.tanh(gx_t[:, 2 * H:] + r * (gh[:, 2 * H:] + bhn))
    return n + z * (h - n)           # == (1-z)*n + z*h, one fewer VALU op


def _bigru_seq_kernel(gx_ref, whh_ref, bhn_ref, seq_ref, h_ref):
    """grid=(2, nC): axis 0 = direction (parallel), axis 1 = time chunk (arbitrary, carries h)."""
    d = pl.program_id(0)             # 0 = forward, 1 = backward
    c = pl.program_id(1)             # chunk reversal for bwd handled by the index_map
    Tc = gx_ref.shape[0]

    @pl.when(c == 0)
    def _():
        h_ref[...] = jnp.zeros_like(h_ref)

    whh = whh_ref[...]               # (H, 3H) bf16, chunk-loop invariant
    bhn = bhn_ref[...]               # (1, H)  f32
    start = d * (Tc - 1)             # fwd walks 0..Tc-1, bwd walks Tc-1..0 (torch convention)
    step = 1 - 2 * d

    def body(s, h):
        t = start + step * s
        h = _gru_step(gx_ref[t], h, whh, bhn)
        seq_ref[t] = h.astype(seq_ref.dtype)
        return h

    h_ref[...] = lax.fori_loop(0, Tc, body, h_ref[...], unroll=min(8, Tc))


def _bigru_last_kernel(gx_ref, whh_ref, bhn_ref, hlast_ref, h_ref):
    """Same recurrence; only the final hidden state per direction is written back."""
    d = pl.program_id(0)
    c = pl.program_id(1)
    Tc = gx_ref.shape[0]

    @pl.when(c == 0)
    def _():
        h_ref[...] = jnp.zeros_like(h_ref)

    whh = whh_ref[...]
    bhn = bhn_ref[...]
    start = d * (Tc - 1)
    step = 1 - 2 * d

    def body(s, h):
        t = start + step * s
        return _gru_step(gx_ref[t], h, whh, bhn)

    h_ref[...] = lax.fori_loop(0, Tc, body, h_ref[...], unroll=min(8, Tc))

    @pl.when(c == pl.num_programs(1) - 1)
    def _():
        hlast_ref[...] = h_ref[...].astype(hlast_ref.dtype)


def bigru_layer(gx, whh, bhn, *, want_sequence, time_chunk=64):
    """gx: (T, Bp, 6H) f32 hoisted projection; whh: (2, H, 3H) bf16; bhn: (2, 1, H) f32."""
    T, Bp, G = gx.shape
    H = whh.shape[1]
    assert G == 6 * H and H % 128 == 0 and Bp % 8 == 0
    Tc = _pick_time_chunk(T, time_chunk)
    nC = T // Tc

    def chunk(d, c):
        # forward walks chunks 0..nC-1, backward walks them nC-1..0
        return (1 - d) * c + d * (nC - 1 - c)

    in_specs = [
        pl.BlockSpec((Tc, Bp, 3 * H), lambda d, c: (chunk(d, c), 0, d)),   # this dir's gx chunk
        pl.BlockSpec((None, H, 3 * H), lambda d, c: (d, 0, 0)),            # W_hh for this direction
        pl.BlockSpec((None, 1, H), lambda d, c: (d, 0, 0)),                # b_hh (n gate)
    ]
    gx_block = Tc * Bp * 3 * H * 4
    w_block = H * 3 * H * 2 + H * 4

    if want_sequence:
        kernel = _bigru_seq_kernel
        # Inter-layer activations in bf16: next layer's matmul casts to bf16 anyway.
        out_shape = jax.ShapeDtypeStruct((2, T, Bp, H), jnp.bfloat16)
        out_specs = pl.BlockSpec((None, Tc, Bp, H), lambda d, c: (d, chunk(d, c), 0, 0))
        out_block = Tc * Bp * H * 2
    else:
        kernel = _bigru_last_kernel
        out_shape = jax.ShapeDtypeStruct((2, Bp, H), jnp.float32)
        out_specs = pl.BlockSpec((None, Bp, H), lambda d, c: (d, 0, 0))
        out_block = Bp * H * 4

    return pl.pallas_call(
        kernel,
        out_shape=out_shape,
        grid_spec=pltpu.PrefetchScalarGridSpec(
            num_scalar_prefetch=0,
            grid=(2, nC),
            in_specs=in_specs,
            out_specs=out_specs,
            scratch_shapes=[pltpu.VMEM((Bp, H), jnp.float32)],   # hidden-state carry across chunks
        ),
        compiler_params=pltpu.CompilerParams(
            # fwd/bwd independent -> one per TensorCore on v7x; time axis carries h -> arbitrary.
            dimension_semantics=("parallel", "arbitrary"),
            vmem_limit_bytes=_vmem_limit(gx_block + out_block + w_block,
                                         scratch_bytes=Bp * H * 4),
        ),
    )(gx, whh, bhn)


# ----------------------------------------------------------------------------
# Dense projection kernels (hoisted x @ W_ih, inter-layer projection, classifier).
# M (rows) is tiled and streamed; bf16 matmul operands, f32 accumulation / bias add.
# TODO(synk): also tile N (6H) once hidden_size >= 512.
# ----------------------------------------------------------------------------
def _proj1_kernel(x_ref, w_ref, b_ref, o_ref):
    acc = jnp.dot(x_ref[...].astype(w_ref.dtype), w_ref[...],
                  preferred_element_type=jnp.float32)
    o_ref[...] = (acc + b_ref[...]).astype(o_ref.dtype)


def _proj2_kernel(a_ref, c_ref, wa_ref, wc_ref, b_ref, o_ref):
    acc = jnp.dot(a_ref[...].astype(wa_ref.dtype), wa_ref[...],
                  preferred_element_type=jnp.float32)
    acc += jnp.dot(c_ref[...].astype(wc_ref.dtype), wc_ref[...],
                   preferred_element_type=jnp.float32)
    o_ref[...] = (acc + b_ref[...]).astype(o_ref.dtype)


def proj1(x, w, b, *, out_dtype=jnp.float32, tile_m=512):
    M, K = x.shape
    N = w.shape[1]
    tm = _row_tile(M, tile_m)
    blk = (tm * K * x.dtype.itemsize + K * N * 2 + N * 4
           + tm * N * jnp.dtype(out_dtype).itemsize)
    return pl.pallas_call(
        _proj1_kernel,
        out_shape=jax.ShapeDtypeStruct((M, N), out_dtype),
        grid_spec=pltpu.PrefetchScalarGridSpec(
            num_scalar_prefetch=0,
            grid=(pl.cdiv(M, tm),),
            in_specs=[pl.BlockSpec((tm, K), lambda i: (i, 0)),
                      pl.BlockSpec((K, N), lambda i: (0, 0)),
                      pl.BlockSpec((1, N), lambda i: (0, 0))],
            out_specs=pl.BlockSpec((tm, N), lambda i: (i, 0)),
        ),
        compiler_params=pltpu.CompilerParams(
            dimension_semantics=("parallel",),
            vmem_limit_bytes=_vmem_limit(blk),
        ),
    )(x, w, b)


def proj2(a, c, wa, wc, b, *, out_dtype=jnp.float32, tile_m=512):
    M, K = a.shape
    N = wa.shape[1]
    tm = _row_tile(M, tile_m)
    blk = (tm * K * (a.dtype.itemsize + c.dtype.itemsize) + 2 * K * N * 2 + N * 4
           + tm * N * jnp.dtype(out_dtype).itemsize)
    return pl.pallas_call(
        _proj2_kernel,
        out_shape=jax.ShapeDtypeStruct((M, N), out_dtype),
        grid_spec=pltpu.PrefetchScalarGridSpec(
            num_scalar_prefetch=0,
            grid=(pl.cdiv(M, tm),),
            in_specs=[pl.BlockSpec((tm, K), lambda i: (i, 0)),
                      pl.BlockSpec((tm, K), lambda i: (i, 0)),
                      pl.BlockSpec((K, N), lambda i: (0, 0)),
                      pl.BlockSpec((K, N), lambda i: (0, 0)),
                      pl.BlockSpec((1, N), lambda i: (0, 0))],
            out_specs=pl.BlockSpec((tm, N), lambda i: (i, 0)),
        ),
        compiler_params=pltpu.CompilerParams(
            dimension_semantics=("parallel",),
            vmem_limit_bytes=_vmem_limit(blk),
        ),
    )(a, c, wa, wc, b)


# ----------------------------------------------------------------------------
# Parameter init (torch-like shapes/distributions) + packing into the fused kernel layout.
# ----------------------------------------------------------------------------
def init_params(key, vocab_size, embed_size, hidden_size, num_layers,
                num_classes, pad_idx):
    keys = iter(jax.random.split(key, 4 + num_layers * 2 * 4))
    emb = jax.random.normal(next(keys), (vocab_size, embed_size), jnp.float32)
    emb = emb.at[pad_idx].set(0.0)

    k = 1.0 / float(hidden_size) ** 0.5
    gru = []
    for layer in range(num_layers):
        in_size = embed_size if layer == 0 else 2 * hidden_size
        dirs = []
        for _direction in range(2):  # 0 = forward, 1 = backward
            w_ih = jax.random.uniform(next(keys), (in_size, 3 * hidden_size),
                                      jnp.float32, -k, k)
            w_hh = jax.random.uniform(next(keys), (hidden_size, 3 * hidden_size),
                                      jnp.float32, -k, k)
            b_ih = jax.random.uniform(next(keys), (3 * hidden_size,),
                                      jnp.float32, -k, k)
            b_hh = jax.random.uniform(next(keys), (3 * hidden_size,),
                                      jnp.float32, -k, k)
            dirs.append((w_ih, w_hh, b_ih, b_hh))
        gru.append(dirs)

    kf = 1.0 / float(2 * hidden_size) ** 0.5
    fc_w = jax.random.uniform(next(keys), (2 * hidden_size, num_classes),
                              jnp.float32, -kf, kf)
    fc_b = jax.random.uniform(next(keys), (num_classes,), jnp.float32, -kf, kf)
    return {"embed": emb, "gru": gru, "fc_w": fc_w, "fc_b": fc_b}


def pack_plan(raw, hidden_size, num_classes):
    H = hidden_size
    assert H % 128 == 0, "hidden_size must be a multiple of 128 (lane-aligned gate slices)"

    def fuse_bias(b_ih, b_hh):
        # Fold b_hh for the r,z gates into the hoisted projection bias; keep b_hh[n] separate
        # because the n gate applies it inside r * (h @ Whn + bhn).
        return b_ih + jnp.concatenate([b_hh[:2 * H], jnp.zeros((H,), b_hh.dtype)])

    layers = []
    for li, ((wf_ih, wf_hh, bf_ih, bf_hh),
             (wb_ih, wb_hh, bb_ih, bb_hh)) in enumerate(raw["gru"]):
        w_in = jnp.concatenate([wf_ih, wb_ih], axis=1).astype(jnp.bfloat16)   # (in, 6H)
        layer = {
            "bias": jnp.concatenate([fuse_bias(bf_ih, bf_hh),
                                     fuse_bias(bb_ih, bb_hh)])[None, :],      # (1, 6H) f32
            "whh": jnp.stack([wf_hh, wb_hh]).astype(jnp.bfloat16),            # (2, H, 3H)
            "bhn": jnp.stack([bf_hh[2 * H:], bb_hh[2 * H:]])[:, None, :],     # (2, 1, H) f32
        }
        if li == 0:
            layer["w_in"] = w_in
        else:
            # split so next-layer gx = seq_fwd @ w_top + seq_bwd @ w_bot (no concat materialized)
            layer["w_top"] = w_in[:H]
            layer["w_bot"] = w_in[H:]
        layers.append(layer)

    c_pad = max(128, ((num_classes + 127) // 128) * 128)   # lane-dense classifier output
    fc_w = jnp.zeros((2 * H, c_pad), jnp.float32).at[:, :num_classes].set(raw["fc_w"])
    fc_b = jnp.zeros((c_pad,), jnp.float32).at[:num_classes].set(raw["fc_b"])
    return {
        "embed": raw["embed"],
        "layers": layers,
        "fc_w_top": fc_w[:H].astype(jnp.bfloat16),
        "fc_w_bot": fc_w[H:].astype(jnp.bfloat16),
        "fc_b": fc_b[None, :],
    }


# ----------------------------------------------------------------------------
# Forward pass matching RNN.forward (eval mode: dropouts are identity)
# TODO(synk): training-mode dropout parity is not implemented.
# ----------------------------------------------------------------------------
def rnn_forward(plan, texts, *, num_classes, pad_idx):
    B, T = texts.shape
    E = plan["embed"].shape[1]
    H = plan["layers"][0]["whh"].shape[1]
    Bp = ((B + 15) // 16) * 16       # >=16 rows: full bf16 sublane pack of the recurrent LHS

    # Pad token ids with pad_idx (its embedding row is zero) instead of padding the embedded
    # activations -> no extra (T,B,E) HBM copy.  Padded rows evolve nonzero hidden garbage but
    # are sliced off the logits below.
    if Bp != B:
        texts = jnp.pad(texts, ((0, Bp - B), (0, 0)), constant_values=pad_idx)
    # Time-major embedding gather; the (B,T)->(T,B) transpose folds into the gather indices.
    # TODO(synk): embedding lookup stays plain-JAX (HBM table gather).
    e = jnp.take(plan["embed"], texts.T, axis=0)            # (T, Bp, E)
    x2d = e.reshape(T * Bp, E)

    h_f = h_b = None
    seq_f = seq_b = None
    n_layers = len(plan["layers"])
    for li, layer in enumerate(plan["layers"]):
        last = li == n_layers - 1
        # Hoisted input projection: one streamed dense matmul per layer covering both directions.
        if li == 0:
            gx2d = proj1(x2d, layer["w_in"], layer["bias"])                       # (T*Bp, 6H)
        else:
            gx2d = proj2(seq_f, seq_b, layer["w_top"], layer["w_bot"], layer["bias"])
        gx = gx2d.reshape(T, Bp, 6 * H)

        out = bigru_layer(gx, layer["whh"], layer["bhn"], want_sequence=not last)
        if last:
            h_f, h_b = out[0], out[1]                       # final fwd / bwd hidden, (Bp, H) f32
        else:
            seq_f = out[0].reshape(T * Bp, H)               # fwd hidden sequence, bf16
            seq_b = out[1].reshape(T * Bp, H)               # bwd hidden sequence, bf16
        # inter-layer GRU dropout is identity in eval mode

    # self.dropout(cat) is identity in eval mode; concat + fc1 fused, classes padded to 128 lanes.
    logits = proj2(h_f, h_b, plan["fc_w_top"], plan["fc_w_bot"], plan["fc_b"])    # (Bp, 128)
    return logits[:B, :num_classes]


if __name__ == "__main__":
    vocab_size, embed_size, hidden_size = 32, 64, 128
    num_layers, num_classes, pad_idx = 2, 8, 0
    B, T = 4, 8

    key = jax.random.PRNGKey(0)
    pkey, tkey = jax.random.split(key)
    raw = init_params(pkey, vocab_size, embed_size, hidden_size,
                      num_layers, num_classes, pad_idx)
    plan = pack_plan(raw, hidden_size, num_classes)
    texts = jax.random.randint(tkey, (B, T), 0, vocab_size, dtype=jnp.int32)

    fwd = jax.jit(functools.partial(rnn_forward, num_classes=num_classes, pad_idx=pad_idx))
    logits = fwd(plan, texts)
    jax.block_until_ready(logits)
    assert logits.shape == (B, num_classes)
    assert bool(jnp.all(jnp.isfinite(logits)))
    print("KERNEL_OK")
</pallas_src>

<mosaic_0001>
module attributes {stable_mosaic.version = 11 : i64} {
  func.func @_proj1_kernel(%arg0: i32, %arg1: memref<128x64xf32, #tpu.memory_space<vmem>>, %arg2: memref<64x768xbf16, #tpu.memory_space<vmem>>, %arg3: memref<1x768xf32, #tpu.memory_space<vmem>>, %arg4: memref<128x768xf32, #tpu.memory_space<vmem>>) attributes {dimension_semantics = [#tpu.dimension_semantics<parallel>], iteration_bounds = array<i64: 1>, scalar_prefetch = 0 : i64, scratch_operands = 0 : i64, tpu.core_type = #tpu.core_type<tc>, window_params = [{transform_indices = @transform_0, window_bounds = array<i64: 128, 64>}, {pipeline_mode = #tpu.pipeline_mode<synchronous>, transform_indices = @transform_1, window_bounds = array<i64: 64, 768>}, {pipeline_mode = #tpu.pipeline_mode<synchronous>, transform_indices = @transform_2, window_bounds = array<i64: 1, 768>}, {transform_indices = @transform_3, window_bounds = array<i64: 128, 768>}]} {
    %c0 = arith.constant 0 : index
    %c0_0 = arith.constant 0 : index
    %0 = vector.load %arg1[%c0, %c0_0] : memref<128x64xf32, #tpu.memory_space<vmem>>, vector<128x64xf32>
    %1 = arith.truncf %0 : vector<128x64xf32> to vector<128x64xbf16>
    %c0_1 = arith.constant 0 : index
    %c0_2 = arith.constant 0 : index
    %2 = vector.load %arg2[%c0_1, %c0_2] : memref<64x768xbf16, #tpu.memory_space<vmem>>, vector<64x768xbf16>
    %cst = arith.constant dense<0.000000e+00> : vector<128x768xf32>
    %3 = tpu.matmul %1, %2, %cst {dimension_numbers = #tpu.dot_dimension_numbers<[1], [0], [0], [1], [0, 0, 1, 1], [], []>} : vector<128x64xbf16>, vector<64x768xbf16>, vector<128x768xf32> -> vector<128x768xf32>
    %c0_3 = arith.constant 0 : index
    %c0_4 = arith.constant 0 : index
    %4 = vector.load %arg3[%c0_3, %c0_4] : memref<1x768xf32, #tpu.memory_space<vmem>>, vector<1x768xf32>
    %5 = vector.broadcast %4 : vector<1x768xf32> to vector<128x768xf32>
    %6 = arith.addf %3, %5 : vector<128x768xf32>
    %c0_5 = arith.constant 0 : index
    %c0_6 = arith.constant 0 : index
    %7 = vector.load %arg4[%c0_5, %c0_6] : memref<128x768xf32, #tpu.memory_space<vmem>>, vector<128x768xf32>
    tpu.vector_store %arg4[%c0_5, %c0_6], %6 {strides = array<i32>} : memref<128x768xf32, #tpu.memory_space<vmem>>, vector<128x768xf32>,
    return
  }
  func.func @transform_0(%arg0: i32) -> (i32, i32) {
    %c0_i32 = arith.constant 0 : i32
    %c0_i32_0 = arith.constant 0 : i32
    return %arg0, %c0_i32 : i32, i32
  }
  func.func @transform_1(%arg0: i32) -> (i32, i32) {
    %c0_i32 = arith.constant 0 : i32
    %c0_i32_0 = arith.constant 0 : i32
    %c0_i32_1 = arith.constant 0 : i32
    return %c0_i32, %c0_i32_0 : i32, i32
  }
  func.func @transform_2(%arg0: i32) -> (i32, i32) {
    %c0_i32 = arith.constant 0 : i32
    %c0_i32_0 = arith.constant 0 : i32
    %c0_i32_1 = arith.constant 0 : i32
    return %c0_i32, %c0_i32_0 : i32, i32
  }
  func.func @transform_3(%arg0: i32) -> (i32, i32) {
    %c0_i32 = arith.constant 0 : i32
    %c0_i32_0 = arith.constant 0 : i32
    return %arg0, %c0_i32 : i32, i32
  }
}

module attributes {stable_mosaic.version = 11 : i64} {
  func.func @_bigru_seq_kernel(%arg0: i32, %arg1: i32, %arg2: memref<8x16x384xf32, #tpu.memory_space<vmem>>, %arg3: memref<1x128x384xbf16, #tpu.memory_space<vmem>>, %arg4: memref<1x1x128xf32, #tpu.memory_space<vmem>>, %arg5: memref<1x8x16x128xbf16, #tpu.memory_space<vmem>>, %arg6: memref<16x128xf32, #tpu.memory_space<vmem>>) attributes {dimension_semantics = [#tpu.dimension_semantics<parallel>, #tpu.dimension_semantics<arbitrary>], iteration_bounds = array<i64: 2, 1>, scalar_prefetch = 0 : i64, scratch_operands = 1 : i64, tpu.core_type = #tpu.core_type<tc>, window_params = [{transform_indices = @transform_0, window_bounds = array<i64: 8, 16, 384>}, {transform_indices = @transform_1, window_bounds = array<i64: 1, 128, 384>}, {transform_indices = @transform_2, window_bounds = array<i64: 1, 1, 128>}, {transform_indices = @transform_3, window_bounds = array<i64: 1, 8, 16, 128>}]} {
    %c0_i32 = arith.constant 0 : i32
    %0 = arith.cmpi eq, %arg1, %c0_i32 : i32
    %1 = arith.extui %0 : i1 to i32
    %c0_i32_0 = arith.constant 0 : i32
    %2 = arith.cmpi ne, %1, %c0_i32_0 : i32
    scf.if %2 {
      %cst_85 = arith.constant 0.000000e+00 : f32
      %284 = vector.broadcast %cst_85 : f32 to vector<16x128xf32>
      %c0_86 = arith.constant 0 : index
      %c0_87 = arith.constant 0 : index
      %285 = vector.load %arg6[%c0_86, %c0_87] : memref<16x128xf32, #tpu.memory_space<vmem>>, vector<16x128xf32>
      tpu.vector_store %arg6[%c0_86, %c0_87], %284 {strides = array<i32>} : memref<16x128xf32, #tpu.memory_space<vmem>>, vector<16x128xf32>,
    } else {
    }
    %c0 = arith.constant 0 : index
    %c0_1 = arith.constant 0 : index
    %c0_2 = arith.constant 0 : index
    %3 = vector.load %arg3[%c0, %c0_1, %c0_2] : memref<1x128x384xbf16, #tpu.memory_space<vmem>>, vector<1x128x384xbf16>
    %4 = vector.shape_cast %3 : vector<1x128x384xbf16> to vector<128x384xbf16>
    %c0_3 = arith.constant 0 : index
    %c0_4 = arith.constant 0 : index
    %c0_5 = arith.constant 0 : index
    %5 = vector.load %arg4[%c0_3, %c0_4, %c0_5] : memref<1x1x128xf32, #tpu.memory_space<vmem>>, vector<1x1x128xf32>
    %6 = vector.shape_cast %5 : vector<1x1x128xf32> to vector<1x128xf32>
    %c7_i32 = arith.constant 7 : i32
    %7 = arith.muli %arg0, %c7_i32 : i32
    %c2_i32 = arith.constant 2 : i32
    %8 = arith.muli %c2_i32, %arg0 : i32
    %c1_i32 = arith.constant 1 : i32
    %9 = arith.subi %c1_i32, %8 : i32
    %c0_6 = arith.constant 0 : index
    %c0_7 = arith.constant 0 : index
    %10 = vector.load %arg6[%c0_6, %c0_7] : memref<16x128xf32, #tpu.memory_space<vmem>>, vector<16x128xf32>
    %c0_i32_8 = arith.constant 0 : i32
    %11 = arith.muli %9, %c0_i32_8 : i32
    %12 = arith.addi %7, %11 : i32
    %13 = arith.index_cast %12 : i32 to index
    %c0_9 = arith.constant 0 : index
    %c0_10 = arith.constant 0 : index
    %14 = vector.load %arg2[%13, %c0_9, %c0_10] : memref<8x16x384xf32, #tpu.memory_space<vmem>>, vector<1x16x384xf32>
    %15 = vector.shape_cast %14 : vector<1x16x384xf32> to vector<16x384xf32>
    %16 = arith.truncf %10 : vector<16x128xf32> to vector<16x128xbf16>
    %cst = arith.constant dense<0.000000e+00> : vector<16x384xf32>
    %17 = tpu.matmul %16, %4, %cst {dimension_numbers = #tpu.dot_dimension_numbers<[1], [0], [0], [1], [0, 0, 1, 1], [], []>} : vector<16x128xbf16>, vector<128x384xbf16>, vector<16x384xf32> -> vector<16x384xf32>
    %18 = vector.extract_strided_slice %15 {offsets = [0, 0], sizes = [16, 256], strides = [1, 1]} : vector<16x384xf32> to vector<16x256xf32>
    %19 = vector.extract_strided_slice %17 {offsets = [0, 0], sizes = [16, 256], strides = [1, 1]} : vector<16x384xf32> to vector<16x256xf32>
    %20 = arith.addf %18, %19 : vector<16x256xf32>
    %cst_11 = arith.constant 5.000000e-01 : f32
    %21 = vector.broadcast %cst_11 : f32 to vector<16x256xf32>
    %22 = arith.mulf %21, %20 : vector<16x256xf32>
    %23 = math.tanh %22 : vector<16x256xf32>
    %cst_12 = arith.constant 1.000000e+00 : f32
    %24 = vector.broadcast %cst_12 : f32 to vector<16x256xf32>
    %25 = arith.addf %23, %24 : vector<16x256xf32>
    %cst_13 = arith.constant 5.000000e-01 : f32
    %26 = vector.broadcast %cst_13 : f32 to vector<16x256xf32>
    %27 = arith.mulf %26, %25 : vector<16x256xf32>
    %28 = vector.extract_strided_slice %27 {offsets = [0, 0], sizes = [16, 128], strides = [1, 1]} : vector<16x256xf32> to vector<16x128xf32>
    %29 = vector.extract_strided_slice %27 {offsets = [0, 128], sizes = [16, 128], strides = [1, 1]} : vector<16x256xf32> to vector<16x128xf32>
    %30 = vector.extract_strided_slice %15 {offsets = [0, 256], sizes = [16, 128], strides = [1, 1]} : vector<16x384xf32> to vector<16x128xf32>
    %31 = vector.extract_strided_slice %17 {offsets = [0, 256], sizes = [16, 128], strides = [1, 1]} : vector<16x384xf32> to vector<16x128xf32>
    %32 = vector.broadcast %6 : vector<1x128xf32> to vector<16x128xf32>
    %33 = arith.addf %31, %32 : vector<16x128xf32>
    %34 = arith.mulf %28, %33 : vector<16x128xf32>
    %35 = arith.addf %30, %34 : vector<16x128xf32>
    %36 = math.tanh %35 : vector<16x128xf32>
    %37 = arith.subf %10, %36 : vector<16x128xf32>
    %38 = arith.mulf %29, %37 : vector<16x128xf32>
    %39 = arith.addf %36, %38 : vector<16x128xf32>
    %40 = arith.truncf %39 : vector<16x128xf32> to vector<16x128xbf16>
    %c0_14 = arith.constant 0 : index
    %41 = arith.index_cast %12 : i32 to index
    %c0_15 = arith.constant 0 : index
    %c0_16 = arith.constant 0 : index
    %42 = vector.load %arg5[%c0_14, %41, %c0_15, %c0_16] : memref<1x8x16x128xbf16, #tpu.memory_space<vmem>>, vector<1x1x16x128xbf16>
    %43 = vector.shape_cast %42 : vector<1x1x16x128xbf16> to vector<16x128xbf16>
    %44 = vector.shape_cast %40 : vector<16x128xbf16> to vector<1x1x16x128xbf16>
    tpu.vector_store %arg5[%c0_14, %41, %c0_15, %c0_16], %44 {strides = array<i32>} : memref<1x8x16x128xbf16, #tpu.memory_space<vmem>>, vector<1x1x16x128xbf16>,
    %c1_i32_17 = arith.constant 1 : i32
    %45 = arith.muli %9, %c1_i32_17 : i32
    %46 = arith.addi %7, %45 : i32
    %47 = arith.index_cast %46 : i32 to index
    %c0_18 = arith.constant 0 : index
    %c0_19 = arith.constant 0 : index
    %48 = vector.load %arg2[%47, %c0_18, %c0_19] : memref<8x16x384xf32, #tpu.memory_space<vmem>>, vector<1x16x384xf32>
    %49 = vector.shape_cast %48 : vector<1x16x384xf32> to vector<16x384xf32>
    %50 = arith.truncf %39 : vector<16x128xf32> to vector<16x128xbf16>
    %cst_20 = arith.constant dense<0.000000e+00> : vector<16x384xf32>
    %51 = tpu.matmul %50, %4, %cst_20 {dimension_numbers = #tpu.dot_dimension_numbers<[1], [0], [0], [1], [0, 0, 1, 1], [], []>} : vector<16x128xbf16>, vector<128x384xbf16>, vector<16x384xf32> -> vector<16x384xf32>
    %52 = vector.extract_strided_slice %49 {offsets = [0, 0], sizes = [16, 256], strides = [1, 1]} : vector<16x384xf32> to vector<16x256xf32>
    %53 = vector.extract_strided_slice %51 {offsets = [0, 0], sizes = [16, 256], strides = [1, 1]} : vector<16x384xf32> to vector<16x256xf32>
    %54 = arith.addf %52, %53 : vector<16x256xf32>
    %cst_21 = arith.constant 5.000000e-01 : f32
    %55 = vector.broadcast %cst_21 : f32 to vector<16x256xf32>
    %56 = arith.mulf %55, %54 : vector<16x256xf32>
    %57 = math.tanh %56 : vector<16x256xf32>
    %cst_22 = arith.constant 1.000000e+00 : f32
    %58 = vector.broadcast %cst_22 : f32 to vector<16x256xf32>
    %59 = arith.addf %57, %58 : vector<16x256xf32>
    %cst_23 = arith.constant 5.000000e-01 : f32
    %60 = vector.broadcast %cst_23 : f32 to vector<16x256xf32>
    %61 = arith.mulf %60, %59 : vector<16x256xf32>
    %62 = vector.extract_strided_slice %61 {offsets = [0, 0], sizes = [16, 128], strides = [1, 1]} : vector<16x256xf32> to vector<16x128xf32>
    %63 = vector.extract_strided_slice %61 {offsets = [0, 128], sizes = [16, 128], strides = [1, 1]} : vector<16x256xf32> to vector<16x128xf32>
    %64 = vector.extract_strided_slice %49 {offsets = [0, 256], sizes = [16, 128], strides = [1, 1]} : vector<16x384xf32> to vector<16x128xf32>
    %65 = vector.extract_strided_slice %51 {offsets = [0, 256], sizes = [16, 128], strides = [1, 1]} : vector<16x384xf32> to vector<16x128xf32>
    %66 = vector.broadcast %6 : vector<1x128xf32> to vector<16x128xf32>
    %67 = arith.addf %65, %66 : vector<16x128xf32>
    %68 = arith.mulf %62, %67 : vector<16x128xf32>
    %69 = arith.addf %64, %68 : vector<16x128xf32>
    %70 = math.tanh %69 : vector<16x128xf32>
    %71 = arith.subf %39, %70 : vector<16x128xf32>
    %72 = arith.mulf %63, %71 : vector<16x128xf32>
    %73 = arith.addf %70, %72 : vector<16x128xf32>
    %74 = arith.truncf %73 : vector<16x128xf32> to vector<16x128xbf16>
    %c0_24 = arith.constant 0 : index
    %75 = arith.index_cast %46 : i32 to index
    %c0_25 = arith.constant 0 : index
    %c0_26 = arith.constant 0 : index
    %76 = vector.load %arg5[%c0_24, %75, %c0_25, %c0_26] : memref<1x8x16x128xbf16, #tpu.memory_space<vmem>>, vector<1x1x16x128xbf16>
    %77 = vector.shape_cast %76 : vector<1x1x16x128xbf16> to vector<16x128xbf16>
    %78 = vector.shape_cast %74 : vector<16x128xbf16> to vector<1x1x16x128xbf16>
    tpu.vector_store %arg5[%c0_24, %75, %c0_25, %c0_26], %78 {strides = array<i32>} : memref<1x8x16x128xbf16, #tpu.memory_space<vmem>>, vector<1x1x16x128xbf16>,
    %c2_i32_27 = arith.constant 2 : i32
    %79 = arith.muli %9, %c2_i32_27 : i32
    %80 = arith.addi %7, %79 : i32
    %81 = arith.index_cast %80 : i32 to index
    %c0_28 = arith.constant 0 : index
    %c0_29 = arith.constant 0 : index
    %82 = vector.load %arg2[%81, %c0_28, %c0_29] : memref<8x16x384xf32, #tpu.memory_space<vmem>>, vector<1x16x384xf32>
    %83 = vector.shape_cast %82 : vector<1x16x384xf32> to vector<16x384xf32>
    %84 = arith.truncf %73 : vector<16x128xf32> to vector<16x128xbf16>
    %cst_30 = arith.constant dense<0.000000e+00> : vector<16x384xf32>
    %85 = tpu.matmul %84, %4, %cst_30 {dimension_numbers = #tpu.dot_dimension_numbers<[1], [0], [0], [1], [0, 0, 1, 1], [], []>} : vector<16x128xbf16>, vector<128x384xbf16>, vector<16x384xf32> -> vector<16x384xf32>
    %86 = vector.extract_strided_slice %83 {offsets = [0, 0], sizes = [16, 256], strides = [1, 1]} : vector<16x384xf32> to vector<16x256xf32>
    %87 = vector.extract_strided_slice %85 {offsets = [0, 0], sizes = [16, 256], strides = [1, 1]} : vector<16x384xf32> to vector<16x256xf32>
    %88 = arith.addf %86, %87 : vector<16x256xf32>
    %cst_31 = arith.constant 5.000000e-01 : f32
    %89 = vector.broadcast %cst_31 : f32 to vector<16x256xf32>
    %90 = arith.mulf %89, %88 : vector<16x256xf32>
    %91 = math.tanh %90 : vector<16x256xf32>
    %cst_32 = arith.constant 1.000000e+00 : f32
    %92 = vector.broadcast %cst_32 : f32 to vector<16x256xf32>
    %93 = arith.addf %91, %92 : vector<16x256xf32>
    %cst_33 = arith.constant 5.000000e-01 : f32
    %94 = vector.broadcast %cst_33 : f32 to vector<16x256xf32>
    %95 = arith.mulf %94, %93 : vector<16x256xf32>
    %96 = vector.extract_strided_slice %95 {offsets = [0, 0], sizes = [16, 128], strides = [1, 1]} : vector<16x256xf32> to vector<16x128xf32>
    %97 = vector.extract_strided_slice %95 {offsets = [0, 128], sizes = [16, 128], strides = [1, 1]} : vector<16x256xf32> to vector<16x128xf32>
    %98 = vector.extract_strided_slice %83 {offsets = [0, 256], sizes = [16, 128], strides = [1, 1]} : vector<16x384xf32> to vector<16x128xf32>
    %99 = vector.extract_strided_slice %85 {offsets = [0, 256], sizes = [16, 128], strides = [1, 1]} : vector<16x384xf32> to vector<16x128xf32>
    %100 = vector.broadcast %6 : vector<1x128xf32> to vector<16x128xf32>
    %101 = arith.addf %99, %100 : vector<16x128xf32>
    %102 = arith.mulf %96, %101 : vector<16x128xf32>
    %103 = arith.addf %98, %102 : vector<16x128xf32>
    %104 = math.tanh %103 : vector<16x128xf32>
    %105 = arith.subf %73, %104 : vector<16x128xf32>
    %106 = arith.mulf %97, %105 : vector<16x128xf32>
    %107 = arith.addf %104, %106 : vector<16x128xf32>
    %108 = arith.truncf %107 : vector<16x128xf32> to vector<16x128xbf16>
    %c0_34 = arith.constant 0 : index
    %109 = arith.index_cast %80 : i32 to index
    %c0_35 = arith.constant 0 : index
    %c0_36 = arith.constant 0 : index
    %110 = vector.load %arg5[%c0_34, %109, %c0_35, %c0_36] : memref<1x8x16x128xbf16, #tpu.memory_space<vmem>>, vector<1x1x16x128xbf16>
    %111 = vector.shape_cast %110 : vector<1x1x16x128xbf16> to vector<16x128xbf16>
    %112 = vector.shape_cast %108 : vector<16x128xbf16> to vector<1x1x16x128xbf16>
    tpu.vector_store %arg5[%c0_34, %109, %c0_35, %c0_36], %112 {strides = array<i32>} : memref<1x8x16x128xbf16, #tpu.memory_space<vmem>>, vector<1x1x16x128xbf16>,
    %c3_i32 = arith.constant 3 : i32
    %113 = arith.muli %9, %c3_i32 : i32
    %114 = arith.addi %7, %113 : i32
    %115 = arith.index_cast %114 : i32 to index
    %c0_37 = arith.constant 0 : index
    %c0_38 = arith.constant 0 : index
    %116 = vector.load %arg2[%115, %c0_37, %c0_38] : memref<8x16x384xf32, #tpu.memory_space<vmem>>, vector<1x16x384xf32>
    %117 = vector.shape_cast %116 : vector<1x16x384xf32> to vector<16x384xf32>
    %118 = arith.truncf %107 : vector<16x128xf32> to vector<16x128xbf16>
    %cst_39 = arith.constant dense<0.000000e+00> : vector<16x384xf32>
    %119 = tpu.matmul %118, %4, %cst_39 {dimension_numbers = #tpu.dot_dimension_numbers<[1], [0], [0], [1], [0, 0, 1, 1], [], []>} : vector<16x128xbf16>, vector<128x384xbf16>, vector<16x384xf32> -> vector<16x384xf32>
    %120 = vector.extract_strided_slice %117 {offsets = [0, 0], sizes = [16, 256], strides = [1, 1]} : vector<16x384xf32> to vector<16x256xf32>
    %121 = vector.extract_strided_slice %119 {offsets = [0, 0], sizes = [16, 256], strides = [1, 1]} : vector<16x384xf32> to vector<16x256xf32>
    %122 = arith.addf %120, %121 : vector<16x256xf32>
    %cst_40 = arith.constant 5.000000e-01 : f32
    %123 = vector.broadcast %cst_40 : f32 to vector<16x256xf32>
    %124 = arith.mulf %123, %122 : vector<16x256xf32>
    %125 = math.tanh %124 : vector<16x256xf32>
    %cst_41 = arith.constant 1.000000e+00 : f32
    %126 = vector.broadcast %cst_41 : f32 to vector<16x256xf32>
    %127 = arith.addf %125, %126 : vector<16x256xf32>
    %cst_42 = arith.constant 5.000000e-01 : f32
    %128 = vector.broadcast %cst_42 : f32 to vector<16x256xf32>
    %129 = arith.mulf %128, %127 : vector<16x256xf32>
    %130 = vector.extract_strided_slice %129 {offsets = [0, 0], sizes = [16, 128], strides = [1, 1]} : vector<16x256xf32> to vector<16x128xf32>
    %131 = vector.extract_strided_slice %129 {offsets = [0, 128], sizes = [16, 128], strides = [1, 1]} : vector<16x256xf32> to vector<16x128xf32>
    %132 = vector.extract_strided_slice %117 {offsets = [0, 256], sizes = [16, 128], strides = [1, 1]} : vector<16x384xf32> to vector<16x128xf32>
    %133 = vector.extract_strided_slice %119 {offsets = [0, 256], sizes = [16, 128], strides = [1, 1]} : vector<16x384xf32> to vector<16x128xf32>
    %134 = vector.broadcast %6 : vector<1x128xf32> to vector<16x128xf32>
    %135 = arith.addf %133, %134 : vector<16x128xf32>
    %136 = arith.mulf %130, %135 : vector<16x128xf32>
    %137 = arith.addf %132, %136 : vector<16x128xf32>
    %138 = math.tanh %137 : vector<16x128xf32>
    %139 = arith.subf %107, %138 : vector<16x128xf32>
    %140 = arith.mulf %131, %139 : vector<16x128xf32>
    %141 = arith.addf %138, %140 : vector<16x128xf32>
    %142 = arith.truncf %141 : vector<16x128xf32> to vector<16x128xbf16>
    %c0_43 = arith.constant 0 : index
    %143 = arith.index_cast %114 : i32 to index
    %c0_44 = arith.constant 0 : index
    %c0_45 = arith.constant 0 : index
    %144 = vector.load %arg5[%c0_43, %143, %c0_44, %c0_45] : memref<1x8x16x128xbf16, #tpu.memory_space<vmem>>, vector<1x1x16x128xbf16>
    %145 = vector.shape_cast %144 : vector<1x1x16x128xbf16> to vector<16x128xbf16>
    %146 = vector.shape_cast %142 : vector<16x128xbf16> to vector<1x1x16x128xbf16>
    tpu.vector_store %arg5[%c0_43, %143, %c0_44, %c0_45], %146 {strides = array<i32>} : memref<1x8x16x128xbf16, #tpu.memory_space<vmem>>, vector<1x1x16x128xbf16>,
    %c4_i32 = arith.constant 4 : i32
    %147 = arith.muli %9, %c4_i32 : i32
    %148 = arith.addi %7, %147 : i32
    %149 = arith.index_cast %148 : i32 to index
    %c0_46 = arith.constant 0 : index
    %c0_47 = arith.constant 0 : index
    %150 = vector.load %arg2[%149, %c0_46, %c0_47] : memref<8x16x384xf32, #tpu.memory_space<vmem>>, vector<1x16x384xf32>
    %151 = vector.shape_cast %150 : vector<1x16x384xf32> to vector<16x384xf32>
    %152 = arith.truncf %141 : vector<16x128xf32> to vector<16x128xbf16>
    %cst_48 = arith.constant dense<0.000000e+00> : vector<16x384xf32>
    %153 = tpu.matmul %152, %4, %cst_48 {dimension_numbers = #tpu.dot_dimension_numbers<[1], [0], [0], [1], [0, 0, 1, 1], [], []>} : vector<16x128xbf16>, vector<128x384xbf16>, vector<16x384xf32> -> vector<16x384xf32>
    %154 = vector.extract_strided_slice %151 {offsets = [0, 0], sizes = [16, 256], strides = [1, 1]} : vector<16x384xf32> to vector<16x256xf32>
    %155 = vector.extract_strided_slice %153 {offsets = [0, 0], sizes = [16, 256], strides = [1, 1]} : vector<16x384xf32> to vector<16x256xf32>
    %156 = arith.addf %154, %155 : vector<16x256xf32>
    %cst_49 = arith.constant 5.000000e-01 : f32
    %157 = vector.broadcast %cst_49 : f32 to vector<16x256xf32>
    %158 = arith.mulf %157, %156 : vector<16x256xf32>
    %159 = math.tanh %158 : vector<16x256xf32>
    %cst_50 = arith.constant 1.000000e+00 : f32
    %160 = vector.broadcast %cst_50 : f32 to vector<16x256xf32>
    %161 = arith.addf %159, %160 : vector<16x256xf32>
    %cst_51 = arith.constant 5.000000e-01 : f32
    %162 = vector.broadcast %cst_51 : f32 to vector<16x256xf32>
    %163 = arith.mulf %162, %161 : vector<16x256xf32>
    %164 = vector.extract_strided_slice %163 {offsets = [0, 0], sizes = [16, 128], strides = [1, 1]} : vector<16x256xf32> to vector<16x128xf32>
    %165 = vector.extract_strided_slice %163 {offsets = [0, 128], sizes = [16, 128], strides = [1, 1]} : vector<16x256xf32> to vector<16x128xf32>
    %166 = vector.extract_strided_slice %151 {offsets = [0, 256], sizes = [16, 128], strides = [1, 1]} : vector<16x384xf32> to vector<16x128xf32>
    %167 = vector.extract_strided_slice %153 {offsets = [0, 256], sizes = [16, 128], strides = [1, 1]} : vector<16x384xf32> to vector<16x128xf32>
    %168 = vector.broadcast %6 : vector<1x128xf32> to vector<16x128xf32>
    %169 = arith.addf %167, %168 : vector<16x128xf32>
    %170 = arith.mulf %164, %169 : vector<16x128xf32>
    %171 = arith.addf %166, %170 : vector<16x128xf32>
    %172 = math.tanh %171 : vector<16x128xf32>
    %173 = arith.subf %141, %172 : vector<16x128xf32>
    %174 = arith.mulf %165, %173 : vector<16x128xf32>
    %175 = arith.addf %172, %174 : vector<16x128xf32>
    %176 = arith.truncf %175 : vector<16x128xf32> to vector<16x128xbf16>
    %c0_52 = arith.constant 0 : index
    %177 = arith.index_cast %148 : i32 to index
    %c0_53 = arith.constant 0 : index
    %c0_54 = arith.constant 0 : index
    %178 = vector.load %arg5[%c0_52, %177, %c0_53, %c0_54] : memref<1x8x16x128xbf16, #tpu.memory_space<vmem>>, vector<1x1x16x128xbf16>
    %179 = vector.shape_cast %178 : vector<1x1x16x128xbf16> to vector<16x128xbf16>
    %180 = vector.shape_cast %176 : vector<16x128xbf16> to vector<1x1x16x128xbf16>
    tpu.vector_store %arg5[%c0_52, %177, %c0_53, %c0_54], %180 {strides = array<i32>} : memref<1x8x16x128xbf16, #tpu.memory_space<vmem>>, vector<1x1x16x128xbf16>,
    %c5_i32 = arith.constant 5 : i32
    %181 = arith.muli %9, %c5_i32 : i32
    %182 = arith.addi %7, %181 : i32
    %183 = arith.index_cast %182 : i32 to index
    %c0_55 = arith.constant 0 : index
    %c0_56 = arith.constant 0 : index
    %184 = vector.load %arg2[%183, %c0_55, %c0_56] : memref<8x16x384xf32, #tpu.memory_space<vmem>>, vector<1x16x384xf32>
    %185 = vector.shape_cast %184 : vector<1x16x384xf32> to vector<16x384xf32>
    %186 = arith.truncf %175 : vector<16x128xf32> to vector<16x128xbf16>
    %cst_57 = arith.constant dense<0.000000e+00> : vector<16x384xf32>
    %187 = tpu.matmul %186, %4, %cst_57 {dimension_numbers = #tpu.dot_dimension_numbers<[1], [0], [0], [1], [0, 0, 1, 1], [], []>} : vector<16x128xbf16>, vector<128x384xbf16>, vector<16x384xf32> -> vector<16x384xf32>
    %188 = vector.extract_strided_slice %185 {offsets = [0, 0], sizes = [16, 256], strides = [1, 1]} : vector<16x384xf32> to vector<16x256xf32>
    %189 = vector.extract_strided_slice %187 {offsets = [0, 0], sizes = [16, 256], strides = [1, 1]} : vector<16x384xf32> to vector<16x256xf32>
    %190 = arith.addf %188, %189 : vector<16x256xf32>
    %cst_58 = arith.constant 5.000000e-01 : f32
    %191 = vector.broadcast %cst_58 : f32 to vector<16x256xf32>
    %192 = arith.mulf %191, %190 : vector<16x256xf32>
    %193 = math.tanh %192 : vector<16x256xf32>
    %cst_59 = arith.constant 1.000000e+00 : f32
    %194 = vector.broadcast %cst_59 : f32 to vector<16x256xf32>
    %195 = arith.addf %193, %194 : vector<16x256xf32>
    %cst_60 = arith.constant 5.000000e-01 : f32
    %196 = vector.broadcast %cst_60 : f32 to vector<16x256xf32>
    %197 = arith.mulf %196, %195 : vector<16x256xf32>
    %198 = vector.extract_strided_slice %197 {offsets = [0, 0], sizes = [16, 128], strides = [1, 1]} : vector<16x256xf32> to vector<16x128xf32>
    %199 = vector.extract_strided_slice %197 {offsets = [0, 128], sizes = [16, 128], strides = [1, 1]} : vector<16x256xf32> to vector<16x128xf32>
    %200 = vector.extract_strided_slice %185 {offsets = [0, 256], sizes = [16, 128], strides = [1, 1]} : vector<16x384xf32> to vector<16x128xf32>
    %201 = vector.extract_strided_slice %187 {offsets = [0, 256], sizes = [16, 128], strides = [1, 1]} : vector<16x384xf32> to vector<16x128xf32>
    %202 = vector.broadcast %6 : vector<1x128xf32> to vector<16x128xf32>
    %203 = arith.addf %201, %202 : vector<16x128xf32>
    %204 = arith.mulf %198, %203 : vector<16x128xf32>
    %205 = arith.addf %200, %204 : vector<16x128xf32>
    %206 = math.tanh %205 : vector<16x128xf32>
    %207 = arith.subf %175, %206 : vector<16x128xf32>
    %208 = arith.mulf %199, %207 : vector<16x128xf32>
    %209 = arith.addf %206, %208 : vector<16x128xf32>
    %210 = arith.truncf %209 : vector<16x128xf32> to vector<16x128xbf16>
    %c0_61 = arith.constant 0 : index
    %211 = arith.index_cast %182 : i32 to index
    %c0_62 = arith.constant 0 : index
    %c0_63 = arith.constant 0 : index
    %212 = vector.load %arg5[%c0_61, %211, %c0_62, %c0_63] : memref<1x8x16x128xbf16, #tpu.memory_space<vmem>>, vector<1x1x16x128xbf16>
    %213 = vector.shape_cast %212 : vector<1x1x16x128xbf16> to vector<16x128xbf16>
    %214 = vector.shape_cast %210 : vector<16x128xbf16> to vector<1x1x16x128xbf16>
    tpu.vector_store %arg5[%c0_61, %211, %c0_62, %c0_63], %214 {strides = array<i32>} : memref<1x8x16x128xbf16, #tpu.memory_space<vmem>>, vector<1x1x16x128xbf16>,
    %c6_i32 = arith.constant 6 : i32
    %215 = arith.muli %9, %c6_i32 : i32
    %216 = arith.addi %7, %215 : i32
    %217 = arith.index_cast %216 : i32 to index
    %c0_64 = arith.constant 0 : index
    %c0_65 = arith.constant 0 : index
    %218 = vector.load %arg2[%217, %c0_64, %c0_65] : memref<8x16x384xf32, #tpu.memory_space<vmem>>, vector<1x16x384xf32>
    %219 = vector.shape_cast %218 : vector<1x16x384xf32> to vector<16x384xf32>
    %220 = arith.truncf %209 : vector<16x128xf32> to vector<16x128xbf16>
    %cst_66 = arith.constant dense<0.000000e+00> : vector<16x384xf32>
    %221 = tpu.matmul %220, %4, %cst_66 {dimension_numbers = #tpu.dot_dimension_numbers<[1], [0], [0], [1], [0, 0, 1, 1], [], []>} : vector<16x128xbf16>, vector<128x384xbf16>, vector<16x384xf32> -> vector<16x384xf32>
    %222 = vector.extract_strided_slice %219 {offsets = [0, 0], sizes = [16, 256], strides = [1, 1]} : vector<16x384xf32> to vector<16x256xf32>
    %223 = vector.extract_strided_slice %221 {offsets = [0, 0], sizes = [16, 256], strides = [1, 1]} : vector<16x384xf32> to vector<16x256xf32>
    %224 = arith.addf %222, %223 : vector<16x256xf32>
    %cst_67 = arith.constant 5.000000e-01 : f32
    %225 = vector.broadcast %cst_67 : f32 to vector<16x256xf32>
    %226 = arith.mulf %225, %224 : vector<16x256xf32>
    %227 = math.tanh %226 : vector<16x256xf32>
    %cst_68 = arith.constant 1.000000e+00 : f32
    %228 = vector.broadcast %cst_68 : f32 to vector<16x256xf32>
    %229 = arith.addf %227, %228 : vector<16x256xf32>
    %cst_69 = arith.constant 5.000000e-01 : f32
    %230 = vector.broadcast %cst_69 : f32 to vector<16x256xf32>
    %231 = arith.mulf %230, %229 : vector<16x256xf32>
    %232 = vector.extract_strided_slice %231 {offsets = [0, 0], sizes = [16, 128], strides = [1, 1]} : vector<16x256xf32> to vector<16x128xf32>
    %233 = vector.extract_strided_slice %231 {offsets = [0, 128], sizes = [16, 128], strides = [1, 1]} : vector<16x256xf32> to vector<16x128xf32>
    %234 = vector.extract_strided_slice %219 {offsets = [0, 256], sizes = [16, 128], strides = [1, 1]} : vector<16x384xf32> to vector<16x128xf32>
    %235 = vector.extract_strided_slice %221 {offsets = [0, 256], sizes = [16, 128], strides = [1, 1]} : vector<16x384xf32> to vector<16x128xf32>
    %236 = vector.broadcast %6 : vector<1x128xf32> to vector<16x128xf32>
    %237 = arith.addf %235, %236 : vector<16x128xf32>
    %238 = arith.mulf %232, %237 : vector<16x128xf32>
    %239 = arith.addf %234, %238 : vector<16x128xf32>
    %240 = math.tanh %239 : vector<16x128xf32>
    %241 = arith.subf %209, %240 : vector<16x128xf32>
    %242 = arith.mulf %233, %241 : vector<16x128xf32>
    %243 = arith.addf %240, %242 : vector<16x128xf32>
    %244 = arith.truncf %243 : vector<16x128xf32> to vector<16x128xbf16>
    %c0_70 = arith.constant 0 : index
    %245 = arith.index_cast %216 : i32 to index
    %c0_71 = arith.constant 0 : index
    %c0_72 = arith.constant 0 : index
    %246 = vector.load %arg5[%c0_70, %245, %c0_71, %c0_72] : memref<1x8x16x128xbf16, #tpu.memory_space<vmem>>, vector<1x1x16x128xbf16>
    %247 = vector.shape_cast %246 : vector<1x1x16x128xbf16> to vector<16x128xbf16>
    %248 = vector.shape_cast %244 : vector<16x128xbf16> to vector<1x1x16x128xbf16>
    tpu.vector_store %arg5[%c0_70, %245, %c0_71, %c0_72], %248 {strides = array<i32>} : memref<1x8x16x128xbf16, #tpu.memory_space<vmem>>, vector<1x1x16x128xbf16>,
    %c7_i32_73 = arith.constant 7 : i32
    %249 = arith.muli %9, %c7_i32_73 : i32
    %250 = arith.addi %7, %249 : i32
    %251 = arith.index_cast %250 : i32 to index
    %c0_74 = arith.constant 0 : index
    %c0_75 = arith.constant 0 : index
    %252 = vector.load %arg2[%251, %c0_74, %c0_75] : memref<8x16x384xf32, #tpu.memory_space<vmem>>, vector<1x16x384xf32>
    %253 = vector.shape_cast %252 : vector<1x16x384xf32> to vector<16x384xf32>
    %254 = arith.truncf %243 : vector<16x128xf32> to vector<16x128xbf16>
    %cst_76 = arith.constant dense<0.000000e+00> : vector<16x384xf32>
    %255 = tpu.matmul %254, %4, %cst_76 {dimension_numbers = #tpu.dot_dimension_numbers<[1], [0], [0], [1], [0, 0, 1, 1], [], []>} : vector<16x128xbf16>, vector<128x384xbf16>, vector<16x384xf32> -> vector<16x384xf32>
    %256 = vector.extract_strided_slice %253 {offsets = [0, 0], sizes = [16, 256], strides = [1, 1]} : vector<16x384xf32> to vector<16x256xf32>
    %257 = vector.extract_strided_slice %255 {offsets = [0, 0], sizes = [16, 256], strides = [1, 1]} : vector<16x384xf32> to vector<16x256xf32>
    %258 = arith.addf %256, %257 : vector<16x256xf32>
    %cst_77 = arith.constant 5.000000e-01 : f32
    %259 = vector.broadcast %cst_77 : f32 to vector<16x256xf32>
    %260 = arith.mulf %259, %258 : vector<16x256xf32>
    %261 = math.tanh %260 : vector<16x256xf32>
    %cst_78 = arith.constant 1.000000e+00 : f32
    %262 = vector.broadcast %cst_78 : f32 to vector<16x256xf32>
    %263 = arith.addf %261, %262 : vector<16x256xf32>
    %cst_79 = arith.constant 5.000000e-01 : f32
    %264 = vector.broadcast %cst_79 : f32 to vector<16x256xf32>
    %265 = arith.mulf %264, %263 : vector<16x256xf32>
    %266 = vector.extract_strided_slice %265 {offsets = [0, 0], sizes = [16, 128], strides = [1, 1]} : vector<16x256xf32> to vector<16x128xf32>
    %267 = vector.extract_strided_slice %265 {offsets = [0, 128], sizes = [16, 128], strides = [1, 1]} : vector<16x256xf32> to vector<16x128xf32>
    %268 = vector.extract_strided_slice %253 {offsets = [0, 256], sizes = [16, 128], strides = [1, 1]} : vector<16x384xf32> to vector<16x128xf32>
    %269 = vector.extract_strided_slice %255 {offsets = [0, 256], sizes = [16, 128], strides = [1, 1]} : vector<16x384xf32> to vector<16x128xf32>
    %270 = vector.broadcast %6 : vector<1x128xf32> to vector<16x128xf32>
    %271 = arith.addf %269, %270 : vector<16x128xf32>
    %272 = arith.mulf %266, %271 : vector<16x128xf32>
    %273 = arith.addf %268, %272 : vector<16x128xf32>
    %274 = math.tanh %273 : vector<16x128xf32>
    %275 = arith.subf %243, %274 : vector<16x128xf32>
    %276 = arith.mulf %267, %275 : vector<16x128xf32>
    %277 = arith.addf %274, %276 : vector<16x128xf32>
    %278 = arith.truncf %277 : vector<16x128xf32> to vector<16x128xbf16>
    %c0_80 = arith.constant 0 : index
    %279 = arith.index_cast %250 : i32 to index
    %c0_81 = arith.constant 0 : index
    %c0_82 = arith.constant 0 : index
    %280 = vector.load %arg5[%c0_80, %279, %c0_81, %c0_82] : memref<1x8x16x128xbf16, #tpu.memory_space<vmem>>, vector<1x1x16x128xbf16>
    %281 = vector.shape_cast %280 : vector<1x1x16x128xbf16> to vector<16x128xbf16>
    %282 = vector.shape_cast %278 : vector<16x128xbf16> to vector<1x1x16x128xbf16>
    tpu.vector_store %arg5[%c0_80, %279, %c0_81, %c0_82], %282 {strides = array<i32>} : memref<1x8x16x128xbf16, #tpu.memory_space<vmem>>, vector<1x1x16x128xbf16>,
    %c8_i32 = arith.constant 8 : i32
    %c0_83 = arith.constant 0 : index
    %c0_84 = arith.constant 0 : index
    %283 = vector.load %arg6[%c0_83, %c0_84] : memref<16x128xf32, #tpu.memory_space<vmem>>, vector<16x128xf32>
    tpu.vector_store %arg6[%c0_83, %c0_84], %277 {strides = array<i32>} : memref<16x128xf32, #tpu.memory_space<vmem>>, vector<16x128xf32>,
    return
  }
  func.func @transform_0(%arg0: i32, %arg1: i32) -> (i32, i32, i32) {
    %c1_i32 = arith.constant 1 : i32
    %0 = arith.subi %c1_i32, %arg0 : i32
    %1 = arith.muli %0, %arg1 : i32
    %c0_i32 = arith.constant 0 : i32
    %2 = arith.subi %c0_i32, %arg1 : i32
    %3 = arith.muli %arg0, %2 : i32
    %4 = arith.addi %1, %3 : i32
    %c0_i32_0 = arith.constant 0 : i32
    %c0_i32_1 = arith.constant 0 : i32
    return %4, %c0_i32_0, %arg0 : i32, i32, i32
  }
  func.func @transform_1(%arg0: i32, %arg1: i32) -> (i32, i32, i32) {
    %c0_i32 = arith.constant 0 : i32
    %c0_i32_0 = arith.constant 0 : i32
    %c0_i32_1 = arith.constant 0 : i32
    return %arg0, %c0_i32, %c0_i32_0 : i32, i32, i32
  }
  func.func @transform_2(%arg0: i32, %arg1: i32) -> (i32, i32, i32) {
    %c0_i32 = arith.constant 0 : i32
    %c0_i32_0 = arith.constant 0 : i32
    %c0_i32_1 = arith.constant 0 : i32
    return %arg0, %c0_i32, %c0_i32_0 : i32, i32, i32
  }
  func.func @transform_3(%arg0: i32, %arg1: i32) -> (i32, i32, i32, i32) {
    %c1_i32 = arith.constant 1 : i32
    %0 = arith.subi %c1_i32, %arg0 : i32
    %1 = arith.muli %0, %arg1 : i32
    %c0_i32 = arith.constant 0 : i32
    %2 = arith.subi %c0_i32, %arg1 : i32
    %3 = arith.muli %arg0, %2 : i32
    %4 = arith.addi %1, %3 : i32
    %c0_i32_0 = arith.constant 0 : i32
    %c0_i32_1 = arith.constant 0 : i32
    %c0_i32_2 = arith.constant 0 : i32
    return %arg0, %4, %c0_i32_0, %c0_i32_1 : i32, i32, i32, i32
  }
}

module attributes {stable_mosaic.version = 11 : i64} {
  func.func @_proj2_kernel(%arg0: i32, %arg1: memref<128x128xbf16, #tpu.memory_space<vmem>>, %arg2: memref<128x128xbf16, #tpu.memory_space<vmem>>, %arg3: memref<128x768xbf16, #tpu.memory_space<vmem>>, %arg4: memref<128x768xbf16, #tpu.memory_space<vmem>>, %arg5: memref<1x768xf32, #tpu.memory_space<vmem>>, %arg6: memref<128x768xf32, #tpu.memory_space<vmem>>) attributes {dimension_semantics = [#tpu.dimension_semantics<parallel>], iteration_bounds = array<i64: 1>, scalar_prefetch = 0 : i64, scratch_operands = 0 : i64, tpu.core_type = #tpu.core_type<tc>, window_params = [{transform_indices = @transform_0, window_bounds = array<i64: 128, 128>}, {transform_indices = @transform_1, window_bounds = array<i64: 128, 128>}, {pipeline_mode = #tpu.pipeline_mode<synchronous>, transform_indices = @transform_2, window_bounds = array<i64: 128, 768>}, {pipeline_mode = #tpu.pipeline_mode<synchronous>, transform_indices = @transform_3, window_bounds = array<i64: 128, 768>}, {pipeline_mode = #tpu.pipeline_mode<synchronous>, transform_indices = @transform_4, window_bounds = array<i64: 1, 768>}, {transform_indices = @transform_5, window_bounds = array<i64: 128, 768>}]} {
    %c0 = arith.constant 0 : index
    %c0_0 = arith.constant 0 : index
    %0 = vector.load %arg1[%c0, %c0_0] : memref<128x128xbf16, #tpu.memory_space<vmem>>, vector<128x128xbf16>
    %c0_1 = arith.constant 0 : index
    %c0_2 = arith.constant 0 : index
    %1 = vector.load %arg3[%c0_1, %c0_2] : memref<128x768xbf16, #tpu.memory_space<vmem>>, vector<128x768xbf16>
    %cst = arith.constant dense<0.000000e+00> : vector<128x768xf32>
    %2 = tpu.matmul %0, %1, %cst {dimension_numbers = #tpu.dot_dimension_numbers<[1], [0], [0], [1], [0, 0, 1, 1], [], []>} : vector<128x128xbf16>, vector<128x768xbf16>, vector<128x768xf32> -> vector<128x768xf32>
    %c0_3 = arith.constant 0 : index
    %c0_4 = arith.constant 0 : index
    %3 = vector.load %arg2[%c0_3, %c0_4] : memref<128x128xbf16, #tpu.memory_space<vmem>>, vector<128x128xbf16>
    %c0_5 = arith.constant 0 : index
    %c0_6 = arith.constant 0 : index
    %4 = vector.load %arg4[%c0_5, %c0_6] : memref<128x768xbf16, #tpu.memory_space<vmem>>, vector<128x768xbf16>
    %cst_7 = arith.constant dense<0.000000e+00> : vector<128x768xf32>
    %5 = tpu.matmul %3, %4, %cst_7 {dimension_numbers = #tpu.dot_dimension_numbers<[1], [0], [0], [1], [0, 0, 1, 1], [], []>} : vector<128x128xbf16>, vector<128x768xbf16>, vector<128x768xf32> -> vector<128x768xf32>
    %6 = arith.addf %2, %5 : vector<128x768xf32>
    %c0_8 = arith.constant 0 : index
    %c0_9 = arith.constant 0 : index
    %7 = vector.load %arg5[%c0_8, %c0_9] : memref<1x768xf32, #tpu.memory_space<vmem>>, vector<1x768xf32>
    %8 = vector.broadcast %7 : vector<1x768xf32> to vector<128x768xf32>
    %9 = arith.addf %6, %8 : vector<128x768xf32>
    %c0_10 = arith.constant 0 : index
    %c0_11 = arith.constant 0 : index
    %10 = vector.load %arg6[%c0_10, %c0_11] : memref<128x768xf32, #tpu.memory_space<vmem>>, vector<128x768xf32>
    tpu.vector_store %arg6[%c0_10, %c0_11], %9 {strides = array<i32>} : memref<128x768xf32, #tpu.memory_space<vmem>>, vector<128x768xf32>,
    return
  }
  func.func @transform_0(%arg0: i32) -> (i32, i32) {
    %c0_i32 = arith.constant 0 : i32
    %c0_i32_0 = arith.constant 0 : i32
    return %arg0, %c0_i32 : i32, i32
  }
  func.func @transform_1(%arg0: i32) -> (i32, i32) {
    %c0_i32 = arith.constant 0 : i32
    %c0_i32_0 = arith.constant 0 : i32
    return %arg0, %c0_i32 : i32, i32
  }
  func.func @transform_2(%arg0: i32) -> (i32, i32) {
    %c0_i32 = arith.constant 0 : i32
    %c0_i32_0 = arith.constant 0 : i32
    %c0_i32_1 = arith.constant 0 : i32
    return %c0_i32, %c0_i32_0 : i32, i32
  }
  func.func @transform_3(%arg0: i32) -> (i32, i32) {
    %c0_i32 = arith.constant 0 : i32
    %c0_i32_0 = arith.constant 0 : i32
    %c0_i32_1 = arith.constant 0 : i32
    return %c0_i32, %c0_i32_0 : i32, i32
  }
  func.func @transform_4(%arg0: i32) -> (i32, i32) {
    %c0_i32 = arith.constant 0 : i32
    %c0_i32_0 = arith.constant 0 : i32
    %c0_i32_1 = arith.constant 0 : i32
    return %c0_i32, %c0_i32_0 : i32, i32
  }
  func.func @transform_5(%arg0: i32) -> (i32, i32) {
    %c0_i32 = arith.constant 0 : i32
    %c0_i32_0 = arith.constant 0 : i32
    return %arg0, %c0_i32 : i32, i32
  }
}

module attributes {stable_mosaic.version = 11 : i64} {
  func.func @_bigru_last_kernel(%arg0: i32, %arg1: i32, %arg2: memref<8x16x384xf32, #tpu.memory_space<vmem>>, %arg3: memref<1x128x384xbf16, #tpu.memory_space<vmem>>, %arg4: memref<1x1x128xf32, #tpu.memory_space<vmem>>, %arg5: memref<1x16x128xf32, #tpu.memory_space<vmem>>, %arg6: memref<16x128xf32, #tpu.memory_space<vmem>>) attributes {dimension_semantics = [#tpu.dimension_semantics<parallel>, #tpu.dimension_semantics<arbitrary>], iteration_bounds = array<i64: 2, 1>, scalar_prefetch = 0 : i64, scratch_operands = 1 : i64, tpu.core_type = #tpu.core_type<tc>, window_params = [{transform_indices = @transform_0, window_bounds = array<i64: 8, 16, 384>}, {transform_indices = @transform_1, window_bounds = array<i64: 1, 128, 384>}, {transform_indices = @transform_2, window_bounds = array<i64: 1, 1, 128>}, {transform_indices = @transform_3, window_bounds = array<i64: 1, 16, 128>}]} {
    %c0_i32 = arith.constant 0 : i32
    %0 = arith.cmpi eq, %arg1, %c0_i32 : i32
    %1 = arith.extui %0 : i1 to i32
    %c0_i32_0 = arith.constant 0 : i32
    %2 = arith.cmpi ne, %1, %c0_i32_0 : i32
    scf.if %2 {
      %cst_63 = arith.constant 0.000000e+00 : f32
      %247 = vector.broadcast %cst_63 : f32 to vector<16x128xf32>
      %c0_64 = arith.constant 0 : index
      %c0_65 = arith.constant 0 : index
      %248 = vector.load %arg6[%c0_64, %c0_65] : memref<16x128xf32, #tpu.memory_space<vmem>>, vector<16x128xf32>
      tpu.vector_store %arg6[%c0_64, %c0_65], %247 {strides = array<i32>} : memref<16x128xf32, #tpu.memory_space<vmem>>, vector<16x128xf32>,
    } else {
    }
    %c0 = arith.constant 0 : index
    %c0_1 = arith.constant 0 : index
    %c0_2 = arith.constant 0 : index
    %3 = vector.load %arg3[%c0, %c0_1, %c0_2] : memref<1x128x384xbf16, #tpu.memory_space<vmem>>, vector<1x128x384xbf16>
    %4 = vector.shape_cast %3 : vector<1x128x384xbf16> to vector<128x384xbf16>
    %c0_3 = arith.constant 0 : index
    %c0_4 = arith.constant 0 : index
    %c0_5 = arith.constant 0 : index
    %5 = vector.load %arg4[%c0_3, %c0_4, %c0_5] : memref<1x1x128xf32, #tpu.memory_space<vmem>>, vector<1x1x128xf32>
    %6 = vector.shape_cast %5 : vector<1x1x128xf32> to vector<1x128xf32>
    %c7_i32 = arith.constant 7 : i32
    %7 = arith.muli %arg0, %c7_i32 : i32
    %c2_i32 = arith.constant 2 : i32
    %8 = arith.muli %c2_i32, %arg0 : i32
    %c1_i32 = arith.constant 1 : i32
    %9 = arith.subi %c1_i32, %8 : i32
    %c0_6 = arith.constant 0 : index
    %c0_7 = arith.constant 0 : index
    %10 = vector.load %arg6[%c0_6, %c0_7] : memref<16x128xf32, #tpu.memory_space<vmem>>, vector<16x128xf32>
    %c0_i32_8 = arith.constant 0 : i32
    %11 = arith.muli %9, %c0_i32_8 : i32
    %12 = arith.addi %7, %11 : i32
    %13 = arith.index_cast %12 : i32 to index
    %c0_9 = arith.constant 0 : index
    %c0_10 = arith.constant 0 : index
    %14 = vector.load %arg2[%13, %c0_9, %c0_10] : memref<8x16x384xf32, #tpu.memory_space<vmem>>, vector<1x16x384xf32>
    %15 = vector.shape_cast %14 : vector<1x16x384xf32> to vector<16x384xf32>
    %16 = arith.truncf %10 : vector<16x128xf32> to vector<16x128xbf16>
    %cst = arith.constant dense<0.000000e+00> : vector<16x384xf32>
    %17 = tpu.matmul %16, %4, %cst {dimension_numbers = #tpu.dot_dimension_numbers<[1], [0], [0], [1], [0, 0, 1, 1], [], []>} : vector<16x128xbf16>, vector<128x384xbf16>, vector<16x384xf32> -> vector<16x384xf32>
    %18 = vector.extract_strided_slice %15 {offsets = [0, 0], sizes = [16, 256], strides = [1, 1]} : vector<16x384xf32> to vector<16x256xf32>
    %19 = vector.extract_strided_slice %17 {offsets = [0, 0], sizes = [16, 256], strides = [1, 1]} : vector<16x384xf32> to vector<16x256xf32>
    %20 = arith.addf %18, %19 : vector<16x256xf32>
    %cst_11 = arith.constant 5.000000e-01 : f32
    %21 = vector.broadcast %cst_11 : f32 to vector<16x256xf32>
    %22 = arith.mulf %21, %20 : vector<16x256xf32>
    %23 = math.tanh %22 : vector<16x256xf32>
    %cst_12 = arith.constant 1.000000e+00 : f32
    %24 = vector.broadcast %cst_12 : f32 to vector<16x256xf32>
    %25 = arith.addf %23, %24 : vector<16x256xf32>
    %cst_13 = arith.constant 5.000000e-01 : f32
    %26 = vector.broadcast %cst_13 : f32 to vector<16x256xf32>
    %27 = arith.mulf %26, %25 : vector<16x256xf32>
    %28 = vector.extract_strided_slice %27 {offsets = [0, 0], sizes = [16, 128], strides = [1, 1]} : vector<16x256xf32> to vector<16x128xf32>
    %29 = vector.extract_strided_slice %27 {offsets = [0, 128], sizes = [16, 128], strides = [1, 1]} : vector<16x256xf32> to vector<16x128xf32>
    %30 = vector.extract_strided_slice %15 {offsets = [0, 256], sizes = [16, 128], strides = [1, 1]} : vector<16x384xf32> to vector<16x128xf32>
    %31 = vector.extract_strided_slice %17 {offsets = [0, 256], sizes = [16, 128], strides = [1, 1]} : vector<16x384xf32> to vector<16x128xf32>
    %32 = vector.broadcast %6 : vector<1x128xf32> to vector<16x128xf32>
    %33 = arith.addf %31, %32 : vector<16x128xf32>
    %34 = arith.mulf %28, %33 : vector<16x128xf32>
    %35 = arith.addf %30, %34 : vector<16x128xf32>
    %36 = math.tanh %35 : vector<16x128xf32>
    %37 = arith.subf %10, %36 : vector<16x128xf32>
    %38 = arith.mulf %29, %37 : vector<16x128xf32>
    %39 = arith.addf %36, %38 : vector<16x128xf32>
    %c1_i32_14 = arith.constant 1 : i32
    %40 = arith.muli %9, %c1_i32_14 : i32
    %41 = arith.addi %7, %40 : i32
    %42 = arith.index_cast %41 : i32 to index
    %c0_15 = arith.constant 0 : index
    %c0_16 = arith.constant 0 : index
    %43 = vector.load %arg2[%42, %c0_15, %c0_16] : memref<8x16x384xf32, #tpu.memory_space<vmem>>, vector<1x16x384xf32>
    %44 = vector.shape_cast %43 : vector<1x16x384xf32> to vector<16x384xf32>
    %45 = arith.truncf %39 : vector<16x128xf32> to vector<16x128xbf16>
    %cst_17 = arith.constant dense<0.000000e+00> : vector<16x384xf32>
    %46 = tpu.matmul %45, %4, %cst_17 {dimension_numbers = #tpu.dot_dimension_numbers<[1], [0], [0], [1], [0, 0, 1, 1], [], []>} : vector<16x128xbf16>, vector<128x384xbf16>, vector<16x384xf32> -> vector<16x384xf32>
    %47 = vector.extract_strided_slice %44 {offsets = [0, 0], sizes = [16, 256], strides = [1, 1]} : vector<16x384xf32> to vector<16x256xf32>
    %48 = vector.extract_strided_slice %46 {offsets = [0, 0], sizes = [16, 256], strides = [1, 1]} : vector<16x384xf32> to vector<16x256xf32>
    %49 = arith.addf %47, %48 : vector<16x256xf32>
    %cst_18 = arith.constant 5.000000e-01 : f32
    %50 = vector.broadcast %cst_18 : f32 to vector<16x256xf32>
    %51 = arith.mulf %50, %49 : vector<16x256xf32>
    %52 = math.tanh %51 : vector<16x256xf32>
    %cst_19 = arith.constant 1.000000e+00 : f32
    %53 = vector.broadcast %cst_19 : f32 to vector<16x256xf32>
    %54 = arith.addf %52, %53 : vector<16x256xf32>
    %cst_20 = arith.constant 5.000000e-01 : f32
    %55 = vector.broadcast %cst_20 : f32 to vector<16x256xf32>
    %56 = arith.mulf %55, %54 : vector<16x256xf32>
    %57 = vector.extract_strided_slice %56 {offsets = [0, 0], sizes = [16, 128], strides = [1, 1]} : vector<16x256xf32> to vector<16x128xf32>
    %58 = vector.extract_strided_slice %56 {offsets = [0, 128], sizes = [16, 128], strides = [1, 1]} : vector<16x256xf32> to vector<16x128xf32>
    %59 = vector.extract_strided_slice %44 {offsets = [0, 256], sizes = [16, 128], strides = [1, 1]} : vector<16x384xf32> to vector<16x128xf32>
    %60 = vector.extract_strided_slice %46 {offsets = [0, 256], sizes = [16, 128], strides = [1, 1]} : vector<16x384xf32> to vector<16x128xf32>
    %61 = vector.broadcast %6 : vector<1x128xf32> to vector<16x128xf32>
    %62 = arith.addf %60, %61 : vector<16x128xf32>
    %63 = arith.mulf %57, %62 : vector<16x128xf32>
    %64 = arith.addf %59, %63 : vector<16x128xf32>
    %65 = math.tanh %64 : vector<16x128xf32>
    %66 = arith.subf %39, %65 : vector<16x128xf32>
    %67 = arith.mulf %58, %66 : vector<16x128xf32>
    %68 = arith.addf %65, %67 : vector<16x128xf32>
    %c2_i32_21 = arith.constant 2 : i32
    %69 = arith.muli %9, %c2_i32_21 : i32
    %70 = arith.addi %7, %69 : i32
    %71 = arith.index_cast %70 : i32 to index
    %c0_22 = arith.constant 0 : index
    %c0_23 = arith.constant 0 : index
    %72 = vector.load %arg2[%71, %c0_22, %c0_23] : memref<8x16x384xf32, #tpu.memory_space<vmem>>, vector<1x16x384xf32>
    %73 = vector.shape_cast %72 : vector<1x16x384xf32> to vector<16x384xf32>
    %74 = arith.truncf %68 : vector<16x128xf32> to vector<16x128xbf16>
    %cst_24 = arith.constant dense<0.000000e+00> : vector<16x384xf32>
    %75 = tpu.matmul %74, %4, %cst_24 {dimension_numbers = #tpu.dot_dimension_numbers<[1], [0], [0], [1], [0, 0, 1, 1], [], []>} : vector<16x128xbf16>, vector<128x384xbf16>, vector<16x384xf32> -> vector<16x384xf32>
    %76 = vector.extract_strided_slice %73 {offsets = [0, 0], sizes = [16, 256], strides = [1, 1]} : vector<16x384xf32> to vector<16x256xf32>
    %77 = vector.extract_strided_slice %75 {offsets = [0, 0], sizes = [16, 256], strides = [1, 1]} : vector<16x384xf32> to vector<16x256xf32>
    %78 = arith.addf %76, %77 : vector<16x256xf32>
    %cst_25 = arith.constant 5.000000e-01 : f32
    %79 = vector.broadcast %cst_25 : f32 to vector<16x256xf32>
    %80 = arith.mulf %79, %78 : vector<16x256xf32>
    %81 = math.tanh %80 : vector<16x256xf32>
    %cst_26 = arith.constant 1.000000e+00 : f32
    %82 = vector.broadcast %cst_26 : f32 to vector<16x256xf32>
    %83 = arith.addf %81, %82 : vector<16x256xf32>
    %cst_27 = arith.constant 5.000000e-01 : f32
    %84 = vector.broadcast %cst_27 : f32 to vector<16x256xf32>
    %85 = arith.mulf %84, %83 : vector<16x256xf32>
    %86 = vector.extract_strided_slice %85 {offsets = [0, 0], sizes = [16, 128], strides = [1, 1]} : vector<16x256xf32> to vector<16x128xf32>
    %87 = vector.extract_strided_slice %85 {offsets = [0, 128], sizes = [16, 128], strides = [1, 1]} : vector<16x256xf32> to vector<16x128xf32>
    %88 = vector.extract_strided_slice %73 {offsets = [0, 256], sizes = [16, 128], strides = [1, 1]} : vector<16x384xf32> to vector<16x128xf32>
    %89 = vector.extract_strided_slice %75 {offsets = [0, 256], sizes = [16, 128], strides = [1, 1]} : vector<16x384xf32> to vector<16x128xf32>
    %90 = vector.broadcast %6 : vector<1x128xf32> to vector<16x128xf32>
    %91 = arith.addf %89, %90 : vector<16x128xf32>
    %92 = arith.mulf %86, %91 : vector<16x128xf32>
    %93 = arith.addf %88, %92 : vector<16x128xf32>
    %94 = math.tanh %93 : vector<16x128xf32>
    %95 = arith.subf %68, %94 : vector<16x128xf32>
    %96 = arith.mulf %87, %95 : vector<16x128xf32>
    %97 = arith.addf %94, %96 : vector<16x128xf32>
    %c3_i32 = arith.constant 3 : i32
    %98 = arith.muli %9, %c3_i32 : i32
    %99 = arith.addi %7, %98 : i32
    %100 = arith.index_cast %99 : i32 to index
    %c0_28 = arith.constant 0 : index
    %c0_29 = arith.constant 0 : index
    %101 = vector.load %arg2[%100, %c0_28, %c0_29] : memref<8x16x384xf32, #tpu.memory_space<vmem>>, vector<1x16x384xf32>
    %102 = vector.shape_cast %101 : vector<1x16x384xf32> to vector<16x384xf32>
    %103 = arith.truncf %97 : vector<16x128xf32> to vector<16x128xbf16>
    %cst_30 = arith.constant dense<0.000000e+00> : vector<16x384xf32>
    %104 = tpu.matmul %103, %4, %cst_30 {dimension_numbers = #tpu.dot_dimension_numbers<[1], [0], [0], [1], [0, 0, 1, 1], [], []>} : vector<16x128xbf16>, vector<128x384xbf16>, vector<16x384xf32> -> vector<16x384xf32>
    %105 = vector.extract_strided_slice %102 {offsets = [0, 0], sizes = [16, 256], strides = [1, 1]} : vector<16x384xf32> to vector<16x256xf32>
    %106 = vector.extract_strided_slice %104 {offsets = [0, 0], sizes = [16, 256], strides = [1, 1]} : vector<16x384xf32> to vector<16x256xf32>
    %107 = arith.addf %105, %106 : vector<16x256xf32>
    %cst_31 = arith.constant 5.000000e-01 : f32
    %108 = vector.broadcast %cst_31 : f32 to vector<16x256xf32>
    %109 = arith.mulf %108, %107 : vector<16x256xf32>
    %110 = math.tanh %109 : vector<16x256xf32>
    %cst_32 = arith.constant 1.000000e+00 : f32
    %111 = vector.broadcast %cst_32 : f32 to vector<16x256xf32>
    %112 = arith.addf %110, %111 : vector<16x256xf32>
    %cst_33 = arith.constant 5.000000e-01 : f32
    %113 = vector.broadcast %cst_33 : f32 to vector<16x256xf32>
    %114 = arith.mulf %113, %112 : vector<16x256xf32>
    %115 = vector.extract_strided_slice %114 {offsets = [0, 0], sizes = [16, 128], strides = [1, 1]} : vector<16x256xf32> to vector<16x128xf32>
    %116 = vector.extract_strided_slice %114 {offsets = [0, 128], sizes = [16, 128], strides = [1, 1]} : vector<16x256xf32> to vector<16x128xf32>
    %117 = vector.extract_strided_slice %102 {offsets = [0, 256], sizes = [16, 128], strides = [1, 1]} : vector<16x384xf32> to vector<16x128xf32>
    %118 = vector.extract_strided_slice %104 {offsets = [0, 256], sizes = [16, 128], strides = [1, 1]} : vector<16x384xf32> to vector<16x128xf32>
    %119 = vector.broadcast %6 : vector<1x128xf32> to vector<16x128xf32>
    %120 = arith.addf %118, %119 : vector<16x128xf32>
    %121 = arith.mulf %115, %120 : vector<16x128xf32>
    %122 = arith.addf %117, %121 : vector<16x128xf32>
    %123 = math.tanh %122 : vector<16x128xf32>
    %124 = arith.subf %97, %123 : vector<16x128xf32>
    %125 = arith.mulf %116, %124 : vector<16x128xf32>
    %126 = arith.addf %123, %125 : vector<16x128xf32>
    %c4_i32 = arith.constant 4 : i32
    %127 = arith.muli %9, %c4_i32 : i32
    %128 = arith.addi %7, %127 : i32
    %129 = arith.index_cast %128 : i32 to index
    %c0_34 = arith.constant 0 : index
    %c0_35 = arith.constant 0 : index
    %130 = vector.load %arg2[%129, %c0_34, %c0_35] : memref<8x16x384xf32, #tpu.memory_space<vmem>>, vector<1x16x384xf32>
    %131 = vector.shape_cast %130 : vector<1x16x384xf32> to vector<16x384xf32>
    %132 = arith.truncf %126 : vector<16x128xf32> to vector<16x128xbf16>
    %cst_36 = arith.constant dense<0.000000e+00> : vector<16x384xf32>
    %133 = tpu.matmul %132, %4, %cst_36 {dimension_numbers = #tpu.dot_dimension_numbers<[1], [0], [0], [1], [0, 0, 1, 1], [], []>} : vector<16x128xbf16>, vector<128x384xbf16>, vector<16x384xf32> -> vector<16x384xf32>
    %134 = vector.extract_strided_slice %131 {offsets = [0, 0], sizes = [16, 256], strides = [1, 1]} : vector<16x384xf32> to vector<16x256xf32>
    %135 = vector.extract_strided_slice %133 {offsets = [0, 0], sizes = [16, 256], strides = [1, 1]} : vector<16x384xf32> to vector<16x256xf32>
    %136 = arith.addf %134, %135 : vector<16x256xf32>
    %cst_37 = arith.constant 5.000000e-01 : f32
    %137 = vector.broadcast %cst_37 : f32 to vector<16x256xf32>
    %138 = arith.mulf %137, %136 : vector<16x256xf32>
    %139 = math.tanh %138 : vector<16x256xf32>
    %cst_38 = arith.constant 1.000000e+00 : f32
    %140 = vector.broadcast %cst_38 : f32 to vector<16x256xf32>
    %141 = arith.addf %139, %140 : vector<16x256xf32>
    %cst_39 = arith.constant 5.000000e-01 : f32
    %142 = vector.broadcast %cst_39 : f32 to vector<16x256xf32>
    %143 = arith.mulf %142, %141 : vector<16x256xf32>
    %144 = vector.extract_strided_slice %143 {offsets = [0, 0], sizes = [16, 128], strides = [1, 1]} : vector<16x256xf32> to vector<16x128xf32>
    %145 = vector.extract_strided_slice %143 {offsets = [0, 128], sizes = [16, 128], strides = [1, 1]} : vector<16x256xf32> to vector<16x128xf32>
    %146 = vector.extract_strided_slice %131 {offsets = [0, 256], sizes = [16, 128], strides = [1, 1]} : vector<16x384xf32> to vector<16x128xf32>
    %147 = vector.extract_strided_slice %133 {offsets = [0, 256], sizes = [16, 128], strides = [1, 1]} : vector<16x384xf32> to vector<16x128xf32>
    %148 = vector.broadcast %6 : vector<1x128xf32> to vector<16x128xf32>
    %149 = arith.addf %147, %148 : vector<16x128xf32>
    %150 = arith.mulf %144, %149 : vector<16x128xf32>
    %151 = arith.addf %146, %150 : vector<16x128xf32>
    %152 = math.tanh %151 : vector<16x128xf32>
    %153 = arith.subf %126, %152 : vector<16x128xf32>
    %154 = arith.mulf %145, %153 : vector<16x128xf32>
    %155 = arith.addf %152, %154 : vector<16x128xf32>
    %c5_i32 = arith.constant 5 : i32
    %156 = arith.muli %9, %c5_i32 : i32
    %157 = arith.addi %7, %156 : i32
    %158 = arith.index_cast %157 : i32 to index
    %c0_40 = arith.constant 0 : index
    %c0_41 = arith.constant 0 : index
    %159 = vector.load %arg2[%158, %c0_40, %c0_41] : memref<8x16x384xf32, #tpu.memory_space<vmem>>, vector<1x16x384xf32>
    %160 = vector.shape_cast %159 : vector<1x16x384xf32> to vector<16x384xf32>
    %161 = arith.truncf %155 : vector<16x128xf32> to vector<16x128xbf16>
    %cst_42 = arith.constant dense<0.000000e+00> : vector<16x384xf32>
    %162 = tpu.matmul %161, %4, %cst_42 {dimension_numbers = #tpu.dot_dimension_numbers<[1], [0], [0], [1], [0, 0, 1, 1], [], []>} : vector<16x128xbf16>, vector<128x384xbf16>, vector<16x384xf32> -> vector<16x384xf32>
    %163 = vector.extract_strided_slice %160 {offsets = [0, 0], sizes = [16, 256], strides = [1, 1]} : vector<16x384xf32> to vector<16x256xf32>
    %164 = vector.extract_strided_slice %162 {offsets = [0, 0], sizes = [16, 256], strides = [1, 1]} : vector<16x384xf32> to vector<16x256xf32>
    %165 = arith.addf %163, %164 : vector<16x256xf32>
    %cst_43 = arith.constant 5.000000e-01 : f32
    %166 = vector.broadcast %cst_43 : f32 to vector<16x256xf32>
    %167 = arith.mulf %166, %165 : vector<16x256xf32>
    %168 = math.tanh %167 : vector<16x256xf32>
    %cst_44 = arith.constant 1.000000e+00 : f32
    %169 = vector.broadcast %cst_44 : f32 to vector<16x256xf32>
    %170 = arith.addf %168, %169 : vector<16x256xf32>
    %cst_45 = arith.constant 5.000000e-01 : f32
    %171 = vector.broadcast %cst_45 : f32 to vector<16x256xf32>
    %172 = arith.mulf %171, %170 : vector<16x256xf32>
    %173 = vector.extract_strided_slice %172 {offsets = [0, 0], sizes = [16, 128], strides = [1, 1]} : vector<16x256xf32> to vector<16x128xf32>
    %174 = vector.extract_strided_slice %172 {offsets = [0, 128], sizes = [16, 128], strides = [1, 1]} : vector<16x256xf32> to vector<16x128xf32>
    %175 = vector.extract_strided_slice %160 {offsets = [0, 256], sizes = [16, 128], strides = [1, 1]} : vector<16x384xf32> to vector<16x128xf32>
    %176 = vector.extract_strided_slice %162 {offsets = [0, 256], sizes = [16, 128], strides = [1, 1]} : vector<16x384xf32> to vector<16x128xf32>
    %177 = vector.broadcast %6 : vector<1x128xf32> to vector<16x128xf32>
    %178 = arith.addf %176, %177 : vector<16x128xf32>
    %179 = arith.mulf %173, %178 : vector<16x128xf32>
    %180 = arith.addf %175, %179 : vector<16x128xf32>
    %181 = math.tanh %180 : vector<16x128xf32>
    %182 = arith.subf %155, %181 : vector<16x128xf32>
    %183 = arith.mulf %174, %182 : vector<16x128xf32>
    %184 = arith.addf %181, %183 : vector<16x128xf32>
    %c6_i32 = arith.constant 6 : i32
    %185 = arith.muli %9, %c6_i32 : i32
    %186 = arith.addi %7, %185 : i32
    %187 = arith.index_cast %186 : i32 to index
    %c0_46 = arith.constant 0 : index
    %c0_47 = arith.constant 0 : index
    %188 = vector.load %arg2[%187, %c0_46, %c0_47] : memref<8x16x384xf32, #tpu.memory_space<vmem>>, vector<1x16x384xf32>
    %189 = vector.shape_cast %188 : vector<1x16x384xf32> to vector<16x384xf32>
    %190 = arith.truncf %184 : vector<16x128xf32> to vector<16x128xbf16>
    %cst_48 = arith.constant dense<0.000000e+00> : vector<16x384xf32>
    %191 = tpu.matmul %190, %4, %cst_48 {dimension_numbers = #tpu.dot_dimension_numbers<[1], [0], [0], [1], [0, 0, 1, 1], [], []>} : vector<16x128xbf16>, vector<128x384xbf16>, vector<16x384xf32> -> vector<16x384xf32>
    %192 = vector.extract_strided_slice %189 {offsets = [0, 0], sizes = [16, 256], strides = [1, 1]} : vector<16x384xf32> to vector<16x256xf32>
    %193 = vector.extract_strided_slice %191 {offsets = [0, 0], sizes = [16, 256], strides = [1, 1]} : vector<16x384xf32> to vector<16x256xf32>
    %194 = arith.addf %192, %193 : vector<16x256xf32>
    %cst_49 = arith.constant 5.000000e-01 : f32
    %195 = vector.broadcast %cst_49 : f32 to vector<16x256xf32>
    %196 = arith.mulf %195, %194 : vector<16x256xf32>
    %197 = math.tanh %196 : vector<16x256xf32>
    %cst_50 = arith.constant 1.000000e+00 : f32
    %198 = vector.broadcast %cst_50 : f32 to vector<16x256xf32>
    %199 = arith.addf %197, %198 : vector<16x256xf32>
    %cst_51 = arith.constant 5.000000e-01 : f32
    %200 = vector.broadcast %cst_51 : f32 to vector<16x256xf32>
    %201 = arith.mulf %200, %199 : vector<16x256xf32>
    %202 = vector.extract_strided_slice %201 {offsets = [0, 0], sizes = [16, 128], strides = [1, 1]} : vector<16x256xf32> to vector<16x128xf32>
    %203 = vector.extract_strided_slice %201 {offsets = [0, 128], sizes = [16, 128], strides = [1, 1]} : vector<16x256xf32> to vector<16x128xf32>
    %204 = vector.extract_strided_slice %189 {offsets = [0, 256], sizes = [16, 128], strides = [1, 1]} : vector<16x384xf32> to vector<16x128xf32>
    %205 = vector.extract_strided_slice %191 {offsets = [0, 256], sizes = [16, 128], strides = [1, 1]} : vector<16x384xf32> to vector<16x128xf32>
    %206 = vector.broadcast %6 : vector<1x128xf32> to vector<16x128xf32>
    %207 = arith.addf %205, %206 : vector<16x128xf32>
    %208 = arith.mulf %202, %207 : vector<16x128xf32>
    %209 = arith.addf %204, %208 : vector<16x128xf32>
    %210 = math.tanh %209 : vector<16x128xf32>
    %211 = arith.subf %184, %210 : vector<16x128xf32>
    %212 = arith.mulf %203, %211 : vector<16x128xf32>
    %213 = arith.addf %210, %212 : vector<16x128xf32>
    %c7_i32_52 = arith.constant 7 : i32
    %214 = arith.muli %9, %c7_i32_52 : i32
    %215 = arith.addi %7, %214 : i32
    %216 = arith.index_cast %215 : i32 to index
    %c0_53 = arith.constant 0 : index
    %c0_54 = arith.constant 0 : index
    %217 = vector.load %arg2[%216, %c0_53, %c0_54] : memref<8x16x384xf32, #tpu.memory_space<vmem>>, vector<1x16x384xf32>
    %218 = vector.shape_cast %217 : vector<1x16x384xf32> to vector<16x384xf32>
    %219 = arith.truncf %213 : vector<16x128xf32> to vector<16x128xbf16>
    %cst_55 = arith.constant dense<0.000000e+00> : vector<16x384xf32>
    %220 = tpu.matmul %219, %4, %cst_55 {dimension_numbers = #tpu.dot_dimension_numbers<[1], [0], [0], [1], [0, 0, 1, 1], [], []>} : vector<16x128xbf16>, vector<128x384xbf16>, vector<16x384xf32> -> vector<16x384xf32>
    %221 = vector.extract_strided_slice %218 {offsets = [0, 0], sizes = [16, 256], strides = [1, 1]} : vector<16x384xf32> to vector<16x256xf32>
    %222 = vector.extract_strided_slice %220 {offsets = [0, 0], sizes = [16, 256], strides = [1, 1]} : vector<16x384xf32> to vector<16x256xf32>
    %223 = arith.addf %221, %222 : vector<16x256xf32>
    %cst_56 = arith.constant 5.000000e-01 : f32
    %224 = vector.broadcast %cst_56 : f32 to vector<16x256xf32>
    %225 = arith.mulf %224, %223 : vector<16x256xf32>
    %226 = math.tanh %225 : vector<16x256xf32>
    %cst_57 = arith.constant 1.000000e+00 : f32
    %227 = vector.broadcast %cst_57 : f32 to vector<16x256xf32>
    %228 = arith.addf %226, %227 : vector<16x256xf32>
    %cst_58 = arith.constant 5.000000e-01 : f32
    %229 = vector.broadcast %cst_58 : f32 to vector<16x256xf32>
    %230 = arith.mulf %229, %228 : vector<16x256xf32>
    %231 = vector.extract_strided_slice %230 {offsets = [0, 0], sizes = [16, 128], strides = [1, 1]} : vector<16x256xf32> to vector<16x128xf32>
    %232 = vector.extract_strided_slice %230 {offsets = [0, 128], sizes = [16, 128], strides = [1, 1]} : vector<16x256xf32> to vector<16x128xf32>
    %233 = vector.extract_strided_slice %218 {offsets = [0, 256], sizes = [16, 128], strides = [1, 1]} : vector<16x384xf32> to vector<16x128xf32>
    %234 = vector.extract_strided_slice %220 {offsets = [0, 256], sizes = [16, 128], strides = [1, 1]} : vector<16x384xf32> to vector<16x128xf32>
    %235 = vector.broadcast %6 : vector<1x128xf32> to vector<16x128xf32>
    %236 = arith.addf %234, %235 : vector<16x128xf32>
    %237 = arith.mulf %231, %236 : vector<16x128xf32>
    %238 = arith.addf %233, %237 : vector<16x128xf32>
    %239 = math.tanh %238 : vector<16x128xf32>
    %240 = arith.subf %213, %239 : vector<16x128xf32>
    %241 = arith.mulf %232, %240 : vector<16x128xf32>
    %242 = arith.addf %239, %241 : vector<16x128xf32>
    %c8_i32 = arith.constant 8 : i32
    %c0_59 = arith.constant 0 : index
    %c0_60 = arith.constant 0 : index
    %243 = vector.load %arg6[%c0_59, %c0_60] : memref<16x128xf32, #tpu.memory_space<vmem>>, vector<16x128xf32>
    tpu.vector_store %arg6[%c0_59, %c0_60], %242 {strides = array<i32>} : memref<16x128xf32, #tpu.memory_space<vmem>>, vector<16x128xf32>,
    %c0_i32_61 = arith.constant 0 : i32
    %244 = arith.cmpi eq, %arg1, %c0_i32_61 : i32
    %245 = arith.extui %244 : i1 to i32
    %c0_i32_62 = arith.constant 0 : i32
    %246 = arith.cmpi ne, %245, %c0_i32_62 : i32
    scf.if %246 {
      %c0_63 = arith.constant 0 : index
      %c0_64 = arith.constant 0 : index
      %247 = vector.load %arg6[%c0_63, %c0_64] : memref<16x128xf32, #tpu.memory_space<vmem>>, vector<16x128xf32>
      %c0_65 = arith.constant 0 : index
      %c0_66 = arith.constant 0 : index
      %c0_67 = arith.constant 0 : index
      %248 = vector.load %arg5[%c0_65, %c0_66, %c0_67] : memref<1x16x128xf32, #tpu.memory_space<vmem>>, vector<1x16x128xf32>
      %249 = vector.shape_cast %248 : vector<1x16x128xf32> to vector<16x128xf32>
      %250 = vector.shape_cast %247 : vector<16x128xf32> to vector<1x16x128xf32>
      tpu.vector_store %arg5[%c0_65, %c0_66, %c0_67], %250 {strides = array<i32>} : memref<1x16x128xf32, #tpu.memory_space<vmem>>, vector<1x16x128xf32>,
    } else {
    }
    return
  }
  func.func @transform_0(%arg0: i32, %arg1: i32) -> (i32, i32, i32) {
    %c1_i32 = arith.constant 1 : i32
    %0 = arith.subi %c1_i32, %arg0 : i32
    %1 = arith.muli %0, %arg1 : i32
    %c0_i32 = arith.constant 0 : i32
    %2 = arith.subi %c0_i32, %arg1 : i32
    %3 = arith.muli %arg0, %2 : i32
    %4 = arith.addi %1, %3 : i32
    %c0_i32_0 = arith.constant 0 : i32
    %c0_i32_1 = arith.constant 0 : i32
    return %4, %c0_i32_0, %arg0 : i32, i32, i32
  }
  func.func @transform_1(%arg0: i32, %arg1: i32) -> (i32, i32, i32) {
    %c0_i32 = arith.constant 0 : i32
    %c0_i32_0 = arith.constant 0 : i32
    %c0_i32_1 = arith.constant 0 : i32
    return %arg0, %c0_i32, %c0_i32_0 : i32, i32, i32
  }
  func.func @transform_2(%arg0: i32, %arg1: i32) -> (i32, i32, i32) {
    %c0_i32 = arith.constant 0 : i32
    %c0_i32_0 = arith.constant 0 : i32
    %c0_i32_1 = arith.constant 0 : i32
    return %arg0, %c0_i32, %c0_i32_0 : i32, i32, i32
  }
  func.func @transform_3(%arg0: i32, %arg1: i32) -> (i32, i32, i32) {
    %c0_i32 = arith.constant 0 : i32
    %c0_i32_0 = arith.constant 0 : i32
    %c0_i32_1 = arith.constant 0 : i32
    return %arg0, %c0_i32, %c0_i32_0 : i32, i32, i32
  }
}

module attributes {stable_mosaic.version = 11 : i64} {
  func.func @_proj2_kernel(%arg0: i32, %arg1: memref<16x128xf32, #tpu.memory_space<vmem>>, %arg2: memref<16x128xf32, #tpu.memory_space<vmem>>, %arg3: memref<128x128xbf16, #tpu.memory_space<vmem>>, %arg4: memref<128x128xbf16, #tpu.memory_space<vmem>>, %arg5: memref<1x128xf32, #tpu.memory_space<vmem>>, %arg6: memref<16x128xf32, #tpu.memory_space<vmem>>) attributes {dimension_semantics = [#tpu.dimension_semantics<parallel>], iteration_bounds = array<i64: 1>, scalar_prefetch = 0 : i64, scratch_operands = 0 : i64, tpu.core_type = #tpu.core_type<tc>, window_params = [{transform_indices = @transform_0, window_bounds = array<i64: 16, 128>}, {transform_indices = @transform_1, window_bounds = array<i64: 16, 128>}, {pipeline_mode = #tpu.pipeline_mode<synchronous>, transform_indices = @transform_2, window_bounds = array<i64: 128, 128>}, {pipeline_mode = #tpu.pipeline_mode<synchronous>, transform_indices = @transform_3, window_bounds = array<i64: 128, 128>}, {pipeline_mode = #tpu.pipeline_mode<synchronous>, transform_indices = @transform_4, window_bounds = array<i64: 1, 128>}, {transform_indices = @transform_5, window_bounds = array<i64: 16, 128>}]} {
    %c0 = arith.constant 0 : index
    %c0_0 = arith.constant 0 : index
    %0 = vector.load %arg1[%c0, %c0_0] : memref<16x128xf32, #tpu.memory_space<vmem>>, vector<16x128xf32>
    %1 = arith.truncf %0 : vector<16x128xf32> to vector<16x128xbf16>
    %c0_1 = arith.constant 0 : index
    %c0_2 = arith.constant 0 : index
    %2 = vector.load %arg3[%c0_1, %c0_2] : memref<128x128xbf16, #tpu.memory_space<vmem>>, vector<128x128xbf16>
    %cst = arith.constant dense<0.000000e+00> : vector<16x128xf32>
    %3 = tpu.matmul %1, %2, %cst {dimension_numbers = #tpu.dot_dimension_numbers<[1], [0], [0], [1], [0, 0, 1, 1], [], []>} : vector<16x128xbf16>, vector<128x128xbf16>, vector<16x128xf32> -> vector<16x128xf32>
    %c0_3 = arith.constant 0 : index
    %c0_4 = arith.constant 0 : index
    %4 = vector.load %arg2[%c0_3, %c0_4] : memref<16x128xf32, #tpu.memory_space<vmem>>, vector<16x128xf32>
    %5 = arith.truncf %4 : vector<16x128xf32> to vector<16x128xbf16>
    %c0_5 = arith.constant 0 : index
    %c0_6 = arith.constant 0 : index
    %6 = vector.load %arg4[%c0_5, %c0_6] : memref<128x128xbf16, #tpu.memory_space<vmem>>, vector<128x128xbf16>
    %cst_7 = arith.constant dense<0.000000e+00> : vector<16x128xf32>
    %7 = tpu.matmul %5, %6, %cst_7 {dimension_numbers = #tpu.dot_dimension_numbers<[1], [0], [0], [1], [0, 0, 1, 1], [], []>} : vector<16x128xbf16>, vector<128x128xbf16>, vector<16x128xf32> -> vector<16x128xf32>
    %8 = arith.addf %3, %7 : vector<16x128xf32>
    %c0_8 = arith.constant 0 : index
    %c0_9 = arith.constant 0 : index
    %9 = vector.load %arg5[%c0_8, %c0_9] : memref<1x128xf32, #tpu.memory_space<vmem>>, vector<1x128xf32>
    %10 = vector.broadcast %9 : vector<1x128xf32> to vector<16x128xf32>
    %11 = arith.addf %8, %10 : vector<16x128xf32>
    %c0_10 = arith.constant 0 : index
    %c0_11 = arith.constant 0 : index
    %12 = vector.load %arg6[%c0_10, %c0_11] : memref<16x128xf32, #tpu.memory_space<vmem>>, vector<16x128xf32>
    tpu.vector_store %arg6[%c0_10, %c0_11], %11 {strides = array<i32>} : memref<16x128xf32, #tpu.memory_space<vmem>>, vector<16x128xf32>,
    return
  }
  func.func @transform_0(%arg0: i32) -> (i32, i32) {
    %c0_i32 = arith.constant 0 : i32
    %c0_i32_0 = arith.constant 0 : i32
    return %arg0, %c0_i32 : i32, i32
  }
  func.func @transform_1(%arg0: i32) -> (i32, i32) {
    %c0_i32 = arith.constant 0 : i32
    %c0_i32_0 = arith.constant 0 : i32
    return %arg0, %c0_i32 : i32, i32
  }
  func.func @transform_2(%arg0: i32) -> (i32, i32) {
    %c0_i32 = arith.constant 0 : i32
    %c0_i32_0 = arith.constant 0 : i32
    %c0_i32_1 = arith.constant 0 : i32
    return %c0_i32, %c0_i32_0 : i32, i32
  }
  func.func @transform_3(%arg0: i32) -> (i32, i32) {
    %c0_i32 = arith.constant 0 : i32
    %c0_i32_0 = arith.constant 0 : i32
    %c0_i32_1 = arith.constant 0 : i32
    return %c0_i32, %c0_i32_0 : i32, i32
  }
  func.func @transform_4(%arg0: i32) -> (i32, i32) {
    %c0_i32 = arith.constant 0 : i32
    %c0_i32_0 = arith.constant 0 : i32
    %c0_i32_1 = arith.constant 0 : i32
    return %c0_i32, %c0_i32_0 : i32, i32
  }
  func.func @transform_5(%arg0: i32) -> (i32, i32) {
    %c0_i32 = arith.constant 0 : i32
    %c0_i32_0 = arith.constant 0 : i32
    return %arg0, %c0_i32 : i32, i32
  }
}

</mosaic_0001>

<llo_original>
// kernel: rnn_forward.5
$region0: #{rnn_forward.5}
  #allocation0 [shape = 'u32[]', space=smem, size = 0x4, offset = 0x4, fixed_abs, tag = 'smem constant byte address 0x4 - core index']
  #allocation1 [shape = 'u32[144,128]{1,0:T(1,128)}', space=vmem, size = 0x12000, scoped, tag = 'internal scratch']
  %s0 = inlined_call_operand.vmem [shape: f32[128,64], index: 0, kind: input, shape index: {}]
  %s1 = inlined_call_operand.vmem [shape: bf16[64,768], index: 1, kind: input, shape index: {}]
  %s2 = inlined_call_operand.vmem [shape: f32[1,768], index: 2, kind: input, shape index: {}]
  %s3 = inlined_call_operand.vmem [shape: f32[128,768], index: 3, kind: output, shape index: {}]
  %s4 = sld [smem:[#allocation0]]
  $region22: #{rnn_forward.5} parent=0
    _
  %s6 = ssub.s32 1, %s4
  %s7 = scalar_select 0, %s6, %s4
  // Predicated region
  $region2: #{rnn_forward.5} parent=0 // pred_check
    _
  $region3: #{rnn_forward.5} parent=0 // pred_check_branch
    %9 = sbr.rel (0) target = $region5
  $region4: #{rnn_forward.5} parent=0 // pred_region
    _
  $region5: #{rnn_forward.5} parent=0 // pred_fallthru
    _
  // Predicated region
  $region6: #{rnn_forward.5} parent=0 // pred_check
    _
  $region7: #{rnn_forward.5} parent=0 // pred_check_branch
    %11 = sbr.rel (0) target = $region9
  $region8: #{rnn_forward.5} parent=0 // pred_region
    _
  $region9: #{rnn_forward.5} parent=0 // pred_fallthru
    _
  // Predicated region
  $region10: #{rnn_forward.5} parent=0 // pred_check
    _
  $region11: #{rnn_forward.5} parent=0 // pred_check_branch
    %13 = sbr.rel (0) target = $region13
  $region12: #{rnn_forward.5} parent=0 // pred_region
    _
  $region13: #{rnn_forward.5} parent=0 // pred_fallthru
    _
  %v15 = vld [vmem:[%s0] sm:$0xff]
  %v16 = vld [vmem:[%s0 + $0x8] sm:$0xff]
  %v17 = vld [vmem:[%s0 + $0x10] sm:$0xff]
  %v18 = vld [vmem:[%s0 + $0x18] sm:$0xff]
  %v19 = vld [vmem:[%s0 + $0x20] sm:$0xff]
  %v20 = vld [vmem:[%s0 + $0x28] sm:$0xff]
  %v21 = vld [vmem:[%s0 + $0x30] sm:$0xff]
  %v22 = vld [vmem:[%s0 + $0x38] sm:$0xff]
  %v23 = vld [vmem:[%s0 + $0x40] sm:$0xff]
  %v24 = vld [vmem:[%s0 + $0x48] sm:$0xff]
  %v25 = vld [vmem:[%s0 + $0x50] sm:$0xff]
  %v26 = vld [vmem:[%s0 + $0x58] sm:$0xff]
  %v27 = vld [vmem:[%s0 + $0x60] sm:$0xff]
  %v28 = vld [vmem:[%s0 + $0x68] sm:$0xff]
  %v29 = vld [vmem:[%s0 + $0x70] sm:$0xff]
  %v30 = vld [vmem:[%s0 + $0x78] sm:$0xff]
  %v31 = vpack.c.bf16 %v16, %v15
  %v32 = vpack.c.bf16 %v18, %v17
  %v33 = vpack.c.bf16 %v20, %v19
  %v34 = vpack.c.bf16 %v22, %v21
  %v35 = vpack.c.bf16 %v24, %v23
  %v36 = vpack.c.bf16 %v26, %v25
  %v37 = vpack.c.bf16 %v28, %v27
  %v38 = vpack.c.bf16 %v30, %v29
  %v39 = vld [vmem:[%s1] sm:$0xff]
  %v40 = vld [vmem:[%s1 + $0x8] sm:$0xff]
  %v41 = vld [vmem:[%s1 + $0x10] sm:$0xff]
  %v42 = vld [vmem:[%s1 + $0x18] sm:$0xff]
  %v43 = vld [vmem:[%s1 + $0x20] sm:$0xff]
  %v44 = vld [vmem:[%s1 + $0x28] sm:$0xff]
  %v45 = vld [vmem:[%s1 + $0x30] sm:$0xff]
  %v46 = vld [vmem:[%s1 + $0x38] sm:$0xff]
  %v47 = vld [vmem:[%s1 + $0x40] sm:$0xff]
  %v48 = vld [vmem:[%s1 + $0x48] sm:$0xff]
  %v49 = vld [vmem:[%s1 + $0x50] sm:$0xff]
  %v50 = vld [vmem:[%s1 + $0x58] sm:$0xff]
  %v51 = vld [vmem:[%s1 + $0x60] sm:$0xff]
  %v52 = vld [vmem:[%s1 + $0x68] sm:$0xff]
  %v53 = vld [vmem:[%s1 + $0x70] sm:$0xff]
  %v54 = vld [vmem:[%s1 + $0x78] sm:$0xff]
  %v55 = vld [vmem:[%s1 + $0x80] sm:$0xff]
  %v56 = vld [vmem:[%s1 + $0x88] sm:$0xff]
  %v57 = vld [vmem:[%s1 + $0x90] sm:$0xff]
  %v58 = vld [vmem:[%s1 + $0x98] sm:$0xff]
  %v59 = vld [vmem:[%s1 + $0xa0] sm:$0xff]
  %v60 = vld [vmem:[%s1 + $0xa8] sm:$0xff]
  %v61 = vld [vmem:[%s1 + $0xb0] sm:$0xff]
  %v62 = vld [vmem:[%s1 + $0xb8] sm:$0xff]
  %v63 = vld [vmem:[%s2] sm:$0x3f]
  %v65 = vlaneseq
  %v66 = vshrl.u32 %v65, 7
  %v67 = vsub.s32 0, %v66
  %v68 = vrot.slane %v63, %v67
  %v69 = vlaneseq
  %v70 = vshrl.u32 %v69, 7
  %v71 = vsub.s32 1, %v70
  %v72 = vrot.slane %v63, %v71
  %v73 = vlaneseq
  %v74 = vshrl.u32 %v73, 7
  %v75 = vsub.s32 2, %v74
  %v76 = vrot.slane %v63, %v75
  %v77 = vlaneseq
  %v78 = vshrl.u32 %v77, 7
  %v79 = vsub.s32 3, %v78
  %v80 = vrot.slane %v63, %v79
  %v81 = vlaneseq
  %v82 = vshrl.u32 %v81, 7
  %v83 = vsub.s32 4, %v82
  %v84 = vrot.slane %v63, %v83
  %v85 = vlaneseq
  %v86 = vshrl.u32 %v85, 7
  %v87 = vsub.s32 5, %v86
  %v88 = vrot.slane %v63, %v87
  %v119 = vunpack.c.l.b16 %v39
  %v120 = vunpack.c.h.b16 %v39
  %v121 = vunpack.c.l.b16 %v40
  %v122 = vunpack.c.h.b16 %v40
  %v123 = vunpack.c.l.b16 %v41
  %v124 = vunpack.c.h.b16 %v41
  %v125 = vunpack.c.l.b16 %v42
  %v126 = vunpack.c.h.b16 %v42
  %v127 = vunpack.c.l.b16 %v43
  %v128 = vunpack.c.h.b16 %v43
  %v129 = vunpack.c.l.b16 %v44
  %v130 = vunpack.c.h.b16 %v44
  %v131 = vunpack.c.l.b16 %v45
  %v132 = vunpack.c.h.b16 %v45
  %v133 = vunpack.c.l.b16 %v46
  %v134 = vunpack.c.h.b16 %v46
  %v135 = vunpack.c.l.b16 %v47
  %v136 = vunpack.c.h.b16 %v47
  %v137 = vunpack.c.l.b16 %v48
  %v138 = vunpack.c.h.b16 %v48
  %v139 = vunpack.c.l.b16 %v49
  %v140 = vunpack.c.h.b16 %v49
  %v141 = vunpack.c.l.b16 %v50
  %v142 = vunpack.c.h.b16 %v50
  %v143 = vunpack.c.l.b16 %v51
  %v144 = vunpack.c.h.b16 %v51
  %v145 = vunpack.c.l.b16 %v52
  %v146 = vunpack.c.h.b16 %v52
  %v147 = vunpack.c.l.b16 %v53
  %v148 = vunpack.c.h.b16 %v53
  %v149 = vunpack.c.l.b16 %v54
  %v150 = vunpack.c.h.b16 %v54
  %v151 = vunpack.c.l.b16 %v55
  %v152 = vunpack.c.h.b16 %v55
  %v153 = vunpack.c.l.b16 %v56
  %v154 = vunpack.c.h.b16 %v56
  %v155 = vunpack.c.l.b16 %v57
  %v156 = vunpack.c.h.b16 %v57
  %v157 = vunpack.c.l.b16 %v58
  %v158 = vunpack.c.h.b16 %v58
  %v159 = vunpack.c.l.b16 %v59
  %v160 = vunpack.c.h.b16 %v59
  %v161 = vunpack.c.l.b16 %v60
  %v162 = vunpack.c.h.b16 %v60
  %v163 = vunpack.c.l.b16 %v61
  %v164 = vunpack.c.h.b16 %v61
  %v165 = vunpack.c.l.b16 %v62
  %v166 = vunpack.c.h.b16 %v62
  %v167 = vpack.c.b16 %v125, %v119
  %v168 = vpack.c.b16 %v126, %v120
  %v169 = vpack.c.b16 %v127, %v121
  %v170 = vpack.c.b16 %v128, %v122
  %v171 = vpack.c.b16 %v129, %v123
  %v172 = vpack.c.b16 %v130, %v124
  %v173 = vpack.c.b16 %v137, %v131
  %v174 = vpack.c.b16 %v138, %v132
  %v175 = vpack.c.b16 %v139, %v133
  %v176 = vpack.c.b16 %v140, %v134
  %v177 = vpack.c.b16 %v141, %v135
  %v178 = vpack.c.b16 %v142, %v136
  %v179 = vpack.c.b16 %v149, %v143
  %v180 = vpack.c.b16 %v150, %v144
  %v181 = vpack.c.b16 %v151, %v145
  %v182 = vpack.c.b16 %v152, %v146
  %v183 = vpack.c.b16 %v153, %v147
  %v184 = vpack.c.b16 %v154, %v148
  %v185 = vpack.c.b16 %v161, %v155
  %v186 = vpack.c.b16 %v162, %v156
  %v187 = vpack.c.b16 %v163, %v157
  %v188 = vpack.c.b16 %v164, %v158
  %v189 = vpack.c.b16 %v165, %v159
  %v190 = vpack.c.b16 %v166, %v160
  %vm215 = vcmask 523264
  %v217 = vsel %vm215, %v31, 0
  %v220 = vsel %vm215, %v32, 0
  %v223 = vsel %vm215, %v33, 0
  %v226 = vsel %vm215, %v34, 0
  %v229 = vsel %vm215, %v35, 0
  %v232 = vsel %vm215, %v36, 0
  %v235 = vsel %vm215, %v37, 0
  %v238 = vsel %vm215, %v38, 0
  %240 = vmatprep.subr.bf16.mxu0 %v168
  %241 = vmatpush1.bf16.msra.mxu0 %v167
  %242 = vmatprep.subr.bf16.mxu0 %v174
  %243 = vmatpush1.bf16.msra.mxu0 %v173
  %244 = vmatprep.subr.bf16.mxu0 %v180
  %245 = vmatpush1.bf16.msra.mxu0 %v179
  %246 = vmatprep.subr.bf16.mxu0 %v186
  %247 = vmatpush1.bf16.msra.mxu0 %v185
  %248 = vmatprep.subr.bf16.mxu0 0
  %249 = vmatpush1.bf16.msra.mxu0 0
  %250 = vmatprep.subr.bf16.mxu0 0
  %251 = vmatpush1.bf16.msra.mxu0 0
  %252 = vmatprep.subr.bf16.mxu0 0
  %253 = vmatpush1.bf16.msra.mxu0 0
  %254 = vmatprep.subr.bf16.mxu0 0
  %255 = vmatpush1.bf16.msra.mxu0 0
  %256 = vmatprep.subr.bf16.mxu0 0
  %257 = vmatpush1.bf16.msra.mxu0 0
  %258 = vmatprep.subr.bf16.mxu0 0
  %259 = vmatpush1.bf16.msra.mxu0 0
  %260 = vmatprep.subr.bf16.mxu0 0
  %261 = vmatpush1.bf16.msra.mxu0 0
  %262 = vmatprep.subr.bf16.mxu0 0
  %263 = vmatpush1.bf16.msra.mxu0 0
  %264 = vmatprep.subr.bf16.mxu0 0
  %265 = vmatpush1.bf16.msra.mxu0 0
  %266 = vmatprep.subr.bf16.mxu0 0
  %267 = vmatpush1.bf16.msra.mxu0 0
  %268 = vmatprep.subr.bf16.mxu0 0
  %269 = vmatpush1.bf16.msra.mxu0 0
  %270 = vmatprep.subr.bf16.mxu0 0
  %271 = vmatpush1.bf16.msra.mxu0 0
  %272 = vmatprep.mubr.bf16.mxu0 0
  %273 = vmatmul.mubr.bf16.gmra.mrb[0].mxu0 %v217
  %v274 = vpop.f32.mrb[0].mxu0
  %v275 = vadd.f32 %v68, %v274
  %v276 = vpop.f32.mrb[0].mxu0
  %v277 = vadd.f32 %v72, %v276
  %v278 = vpop.f32.mrb[0].mxu0
  %v279 = vadd.f32 %v68, %v278
  %v280 = vpop.f32.mrb[0].mxu0
  %v281 = vadd.f32 %v72, %v280
  %282 = vmatprep.mubr.bf16.mxu0 0
  %283 = vmatmul.mubr.bf16.gmra.mrb[0].mxu0 %v220
  %v284 = vpop.f32.mrb[0].mxu0
  %v285 = vadd.f32 %v68, %v284
  %v286 = vpop.f32.mrb[0].mxu0
  %v287 = vadd.f32 %v72, %v286
  %v288 = vpop.f32.mrb[0].mxu0
  %v289 = vadd.f32 %v68, %v288
  %v290 = vpop.f32.mrb[0].mxu0
  %v291 = vadd.f32 %v72, %v290
  %292 = vmatprep.mubr.bf16.mxu0 0
  %293 = vmatmul.mubr.bf16.gmra.mrb[0].mxu0 %v223
  %v294 = vpop.f32.mrb[0].mxu0
  %v295 = vadd.f32 %v68, %v294
  %v296 = vpop.f32.mrb[0].mxu0
  %v297 = vadd.f32 %v72, %v296
  %v298 = vpop.f32.mrb[0].mxu0
  %v299 = vadd.f32 %v68, %v298
  %v300 = vpop.f32.mrb[0].mxu0
  %v301 = vadd.f32 %v72, %v300
  %302 = vmatprep.mubr.bf16.mxu0 0
  %303 = vmatmul.mubr.bf16.gmra.mrb[0].mxu0 %v226
  %v304 = vpop.f32.mrb[0].mxu0
  %v305 = vadd.f32 %v68, %v304
  %v306 = vpop.f32.mrb[0].mxu0
  %v307 = vadd.f32 %v72, %v306
  %v308 = vpop.f32.mrb[0].mxu0
  %v309 = vadd.f32 %v68, %v308
  %v310 = vpop.f32.mrb[0].mxu0
  %v311 = vadd.f32 %v72, %v310
  %312 = vmatprep.mubr.bf16.mxu0 0
  %313 = vmatmul.mubr.bf16.gmra.mrb[0].mxu0 %v229
  %v314 = vpop.f32.mrb[0].mxu0
  %v315 = vadd.f32 %v68, %v314
  %v316 = vpop.f32.mrb[0].mxu0
  %v317 = vadd.f32 %v72, %v316
  %v318 = vpop.f32.mrb[0].mxu0
  %v319 = vadd.f32 %v68, %v318
  %v320 = vpop.f32.mrb[0].mxu0
  %v321 = vadd.f32 %v72, %v320
  %322 = vmatprep.mubr.bf16.mxu0 0
  %323 = vmatmul.mubr.bf16.gmra.mrb[0].mxu0 %v232
  %v324 = vpop.f32.mrb[0].mxu0
  %v325 = vadd.f32 %v68, %v324
  %v326 = vpop.f32.mrb[0].mxu0
  %v327 = vadd.f32 %v72, %v326
  %v328 = vpop.f32.mrb[0].mxu0
  %v329 = vadd.f32 %v68, %v328
  %v330 = vpop.f32.mrb[0].mxu0
  %v331 = vadd.f32 %v72, %v330
  %332 = vmatprep.mubr.bf16.mxu0 0
  %333 = vmatmul.mubr.bf16.gmra.mrb[0].mxu0 %v235
  %v334 = vpop.f32.mrb[0].mxu0
  %v335 = vadd.f32 %v68, %v334
  %v336 = vpop.f32.mrb[0].mxu0
  %v337 = vadd.f32 %v72, %v336
  %v338 = vpop.f32.mrb[0].mxu0
  %v339 = vadd.f32 %v68, %v338
  %v340 = vpop.f32.mrb[0].mxu0
  %v341 = vadd.f32 %v72, %v340
  %342 = vmatprep.mubr.bf16.mxu0 0
  %343 = vmatmul.mubr.bf16.gmra.mrb[0].mxu0 %v238
  %v344 = vpop.f32.mrb[0].mxu0
  %v345 = vadd.f32 %v68, %v344
  %v346 = vpop.f32.mrb[0].mxu0
  %v347 = vadd.f32 %v72, %v346
  %v348 = vpop.f32.mrb[0].mxu0
  %v349 = vadd.f32 %v68, %v348
  %v350 = vpop.f32.mrb[0].mxu0
  %v351 = vadd.f32 %v72, %v350
  %352 = vdwg.mxu0
  %353 = vmatprep.subr.bf16.mxu0 %v170
  %354 = vmatpush1.bf16.msra.mxu0 %v169
  %355 = vmatprep.subr.bf16.mxu0 %v176
  %356 = vmatpush1.bf16.msra.mxu0 %v175
  %357 = vmatprep.subr.bf16.mxu0 %v182
  %358 = vmatpush1.bf16.msra.mxu0 %v181
  %359 = vmatprep.subr.bf16.mxu0 %v188
  %360 = vmatpush1.bf16.msra.mxu0 %v187
  %361 = vmatprep.subr.bf16.mxu0 0
  %362 = vmatpush1.bf16.msra.mxu0 0
  %363 = vmatprep.subr.bf16.mxu0 0
  %364 = vmatpush1.bf16.msra.mxu0 0
  %365 = vmatprep.subr.bf16.mxu0 0
  %366 = vmatpush1.bf16.msra.mxu0 0
  %367 = vmatprep.subr.bf16.mxu0 0
  %368 = vmatpush1.bf16.msra.mxu0 0
  %369 = vmatprep.subr.bf16.mxu0 0
  %370 = vmatpush1.bf16.msra.mxu0 0
  %371 = vmatprep.subr.bf16.mxu0 0
  %372 = vmatpush1.bf16.msra.mxu0 0
  %373 = vmatprep.subr.bf16.mxu0 0
  %374 = vmatpush1.bf16.msra.mxu0 0
  %375 = vmatprep.subr.bf16.mxu0 0
  %376 = vmatpush1.bf16.msra.mxu0 0
  %377 = vmatprep.subr.bf16.mxu0 0
  %378 = vmatpush1.bf16.msra.mxu0 0
  %379 = vmatprep.subr.bf16.mxu0 0
  %380 = vmatpush1.bf16.msra.mxu0 0
  %381 = vmatprep.subr.bf16.mxu0 0
  %382 = vmatpush1.bf16.msra.mxu0 0
  %383 = vmatprep.subr.bf16.mxu0 0
  %384 = vmatpush1.bf16.msra.mxu0 0
  %385 = vmatprep.mubr.bf16.mxu0 0
  %386 = vmatmul.mubr.bf16.gmra.mrb[0].mxu0 %v217
  %v387 = vpop.f32.mrb[0].mxu0
  %v388 = vadd.f32 %v76, %v387
  %v389 = vpop.f32.mrb[0].mxu0
  %v390 = vadd.f32 %v80, %v389
  %v391 = vpop.f32.mrb[0].mxu0
  %v392 = vadd.f32 %v76, %v391
  %v393 = vpop.f32.mrb[0].mxu0
  %v394 = vadd.f32 %v80, %v393
  %395 = vmatprep.mubr.bf16.mxu0 0
  %396 = vmatmul.mubr.bf16.gmra.mrb[0].mxu0 %v220
  %v397 = vpop.f32.mrb[0].mxu0
  %v398 = vadd.f32 %v76, %v397
  %v399 = vpop.f32.mrb[0].mxu0
  %v400 = vadd.f32 %v80, %v399
  %v401 = vpop.f32.mrb[0].mxu0
  %v402 = vadd.f32 %v76, %v401
  %v403 = vpop.f32.mrb[0].mxu0
  %v404 = vadd.f32 %v80, %v403
  %405 = vmatprep.mubr.bf16.mxu0 0
  %406 = vmatmul.mubr.bf16.gmra.mrb[0].mxu0 %v223
  %v407 = vpop.f32.mrb[0].mxu0
  %v408 = vadd.f32 %v76, %v407
  %v409 = vpop.f32.mrb[0].mxu0
  %v410 = vadd.f32 %v80, %v409
  %v411 = vpop.f32.mrb[0].mxu0
  %v412 = vadd.f32 %v76, %v411
  %v413 = vpop.f32.mrb[0].mxu0
  %v414 = vadd.f32 %v80, %v413
  %415 = vmatprep.mubr.bf16.mxu0 0
  %416 = vmatmul.mubr.bf16.gmra.mrb[0].mxu0 %v226
  %v417 = vpop.f32.mrb[0].mxu0
  %v418 = vadd.f32 %v76, %v417
  %v419 = vpop.f32.mrb[0].mxu0
  %v420 = vadd.f32 %v80, %v419
  %v421 = vpop.f32.mrb[0].mxu0
  %v422 = vadd.f32 %v76, %v421
  %v423 = vpop.f32.mrb[0].mxu0
  %v424 = vadd.f32 %v80, %v423
  %425 = vmatprep.mubr.bf16.mxu0 0
  %426 = vmatmul.mubr.bf16.gmra.mrb[0].mxu0 %v229
  %v427 = vpop.f32.mrb[0].mxu0
  %v428 = vadd.f32 %v76, %v427
  %v429 = vpop.f32.mrb[0].mxu0
  %v430 = vadd.f32 %v80, %v429
  %v431 = vpop.f32.mrb[0].mxu0
  %v432 = vadd.f32 %v76, %v431
  %v433 = vpop.f32.mrb[0].mxu0
  %v434 = vadd.f32 %v80, %v433
  %435 = vmatprep.mubr.bf16.mxu0 0
  %436 = vmatmul.mubr.bf16.gmra.mrb[0].mxu0 %v232
  %v437 = vpop.f32.mrb[0].mxu0
  %v438 = vadd.f32 %v76, %v437
  %v439 = vpop.f32.mrb[0].mxu0
  %v440 = vadd.f32 %v80, %v439
  %v441 = vpop.f32.mrb[0].mxu0
  %v442 = vadd.f32 %v76, %v441
  %v443 = vpop.f32.mrb[0].mxu0
  %v444 = vadd.f32 %v80, %v443
  %445 = vmatprep.mubr.bf16.mxu0 0
  %446 = vmatmul.mubr.bf16.gmra.mrb[0].mxu0 %v235
  %v447 = vpop.f32.mrb[0].mxu0
  %v448 = vadd.f32 %v76, %v447
  %v449 = vpop.f32.mrb[0].mxu0
  %v450 = vadd.f32 %v80, %v449
  %v451 = vpop.f32.mrb[0].mxu0
  %v452 = vadd.f32 %v76, %v451
  %v453 = vpop.f32.mrb[0].mxu0
  %v454 = vadd.f32 %v80, %v453
  %455 = vmatprep.mubr.bf16.mxu0 0
  %456 = vmatmul.mubr.bf16.gmra.mrb[0].mxu0 %v238
  %v457 = vpop.f32.mrb[0].mxu0
  %v458 = vadd.f32 %v76, %v457
  %v459 = vpop.f32.mrb[0].mxu0
  %v460 = vadd.f32 %v80, %v459
  %v461 = vpop.f32.mrb[0].mxu0
  %v462 = vadd.f32 %v76, %v461
  %v463 = vpop.f32.mrb[0].mxu0
  %v464 = vadd.f32 %v80, %v463
  %465 = vdwg.mxu0
  %466 = vmatprep.subr.bf16.mxu0 %v172
  %467 = vmatpush1.bf16.msra.mxu0 %v171
  %468 = vmatprep.subr.bf16.mxu0 %v178
  %469 = vmatpush1.bf16.msra.mxu0 %v177
  %470 = vmatprep.subr.bf16.mxu0 %v184
  %471 = vmatpush1.bf16.msra.mxu0 %v183
  %472 = vmatprep.subr.bf16.mxu0 %v190
  %473 = vmatpush1.bf16.msra.mxu0 %v189
  %474 = vmatprep.subr.bf16.mxu0 0
  %475 = vmatpush1.bf16.msra.mxu0 0
  %476 = vmatprep.subr.bf16.mxu0 0
  %477 = vmatpush1.bf16.msra.mxu0 0
  %478 = vmatprep.subr.bf16.mxu0 0
  %479 = vmatpush1.bf16.msra.mxu0 0
  %480 = vmatprep.subr.bf16.mxu0 0
  %481 = vmatpush1.bf16.msra.mxu0 0
  %482 = vmatprep.subr.bf16.mxu0 0
  %483 = vmatpush1.bf16.msra.mxu0 0
  %484 = vmatprep.subr.bf16.mxu0 0
  %485 = vmatpush1.bf16.msra.mxu0 0
  %486 = vmatprep.subr.bf16.mxu0 0
  %487 = vmatpush1.bf16.msra.mxu0 0
  %488 = vmatprep.subr.bf16.mxu0 0
  %489 = vmatpush1.bf16.msra.mxu0 0
  %490 = vmatprep.subr.bf16.mxu0 0
  %491 = vmatpush1.bf16.msra.mxu0 0
  %492 = vmatprep.subr.bf16.mxu0 0
  %493 = vmatpush1.bf16.msra.mxu0 0
  %494 = vmatprep.subr.bf16.mxu0 0
  %495 = vmatpush1.bf16.msra.mxu0 0
  %496 = vmatprep.subr.bf16.mxu0 0
  %497 = vmatpush1.bf16.msra.mxu0 0
  %498 = vmatprep.mubr.bf16.mxu0 0
  %499 = vmatmul.mubr.bf16.gmra.mrb[0].mxu0 %v217
  %v500 = vpop.f32.mrb[0].mxu0
  %v501 = vadd.f32 %v84, %v500
  %v502 = vpop.f32.mrb[0].mxu0
  %v503 = vadd.f32 %v88, %v502
  %v504 = vpop.f32.mrb[0].mxu0
  %v505 = vadd.f32 %v84, %v504
  %v506 = vpop.f32.mrb[0].mxu0
  %v507 = vadd.f32 %v88, %v506
  %508 = vmatprep.mubr.bf16.mxu0 0
  %509 = vmatmul.mubr.bf16.gmra.mrb[0].mxu0 %v220
  %v510 = vpop.f32.mrb[0].mxu0
  %v511 = vadd.f32 %v84, %v510
  %v512 = vpop.f32.mrb[0].mxu0
  %v513 = vadd.f32 %v88, %v512
  %v514 = vpop.f32.mrb[0].mxu0
  %v515 = vadd.f32 %v84, %v514
  %v516 = vpop.f32.mrb[0].mxu0
  %v517 = vadd.f32 %v88, %v516
  %518 = vmatprep.mubr.bf16.mxu0 0
  %519 = vmatmul.mubr.bf16.gmra.mrb[0].mxu0 %v223
  %v520 = vpop.f32.mrb[0].mxu0
  %v521 = vadd.f32 %v84, %v520
  %v522 = vpop.f32.mrb[0].mxu0
  %v523 = vadd.f32 %v88, %v522
  %v524 = vpop.f32.mrb[0].mxu0
  %v525 = vadd.f32 %v84, %v524
  %v526 = vpop.f32.mrb[0].mxu0
  %v527 = vadd.f32 %v88, %v526
  %528 = vmatprep.mubr.bf16.mxu0 0
  %529 = vmatmul.mubr.bf16.gmra.mrb[0].mxu0 %v226
  %v530 = vpop.f32.mrb[0].mxu0
  %v531 = vadd.f32 %v84, %v530
  %v532 = vpop.f32.mrb[0].mxu0
  %v533 = vadd.f32 %v88, %v532
  %v534 = vpop.f32.mrb[0].mxu0
  %v535 = vadd.f32 %v84, %v534
  %v536 = vpop.f32.mrb[0].mxu0
  %v537 = vadd.f32 %v88, %v536
  %538 = vmatprep.mubr.bf16.mxu0 0
  %539 = vmatmul.mubr.bf16.gmra.mrb[0].mxu0 %v229
  %v540 = vpop.f32.mrb[0].mxu0
  %v541 = vadd.f32 %v84, %v540
  %v542 = vpop.f32.mrb[0].mxu0
  %v543 = vadd.f32 %v88, %v542
  %v544 = vpop.f32.mrb[0].mxu0
  %v545 = vadd.f32 %v84, %v544
  %v546 = vpop.f32.mrb[0].mxu0
  %v547 = vadd.f32 %v88, %v546
  %548 = vmatprep.mubr.bf16.mxu0 0
  %549 = vmatmul.mubr.bf16.gmra.mrb[0].mxu0 %v232
  %v550 = vpop.f32.mrb[0].mxu0
  %v551 = vadd.f32 %v84, %v550
  %v552 = vpop.f32.mrb[0].mxu0
  %v553 = vadd.f32 %v88, %v552
  %v554 = vpop.f32.mrb[0].mxu0
  %v555 = vadd.f32 %v84, %v554
  %v556 = vpop.f32.mrb[0].mxu0
  %v557 = vadd.f32 %v88, %v556
  %558 = vmatprep.mubr.bf16.mxu0 0
  %559 = vmatmul.mubr.bf16.gmra.mrb[0].mxu0 %v235
  %v560 = vpop.f32.mrb[0].mxu0
  %v561 = vadd.f32 %v84, %v560
  %v562 = vpop.f32.mrb[0].mxu0
  %v563 = vadd.f32 %v88, %v562
  %v564 = vpop.f32.mrb[0].mxu0
  %v565 = vadd.f32 %v84, %v564
  %v566 = vpop.f32.mrb[0].mxu0
  %v567 = vadd.f32 %v88, %v566
  %568 = vmatprep.mubr.bf16.mxu0 0
  %569 = vmatmul.mubr.bf16.gmra.mrb[0].mxu0 %v238
  %v570 = vpop.f32.mrb[0].mxu0
  %v571 = vadd.f32 %v84, %v570
  %v572 = vpop.f32.mrb[0].mxu0
  %v573 = vadd.f32 %v88, %v572
  %v574 = vpop.f32.mrb[0].mxu0
  %v575 = vadd.f32 %v84, %v574
  %v576 = vpop.f32.mrb[0].mxu0
  %v577 = vadd.f32 %v88, %v576
  %578 = vdwg.mxu0
  %579 = vst [vmem:[%s3] sm:$0xff] %v275
  %580 = vst [vmem:[%s3 + $0x8] sm:$0xff] %v277
  %581 = vst [vmem:[%s3 + $0x10] sm:$0xff] %v388
  %582 = vst [vmem:[%s3 + $0x18] sm:$0xff] %v390
  %583 = vst [vmem:[%s3 + $0x20] sm:$0xff] %v501
  %584 = vst [vmem:[%s3 + $0x28] sm:$0xff] %v503
  %585 = vst [vmem:[%s3 + $0x30] sm:$0xff] %v279
  %586 = vst [vmem:[%s3 + $0x38] sm:$0xff] %v281
  %587 = vst [vmem:[%s3 + $0x40] sm:$0xff] %v392
  %588 = vst [vmem:[%s3 + $0x48] sm:$0xff] %v394
  %589 = vst [vmem:[%s3 + $0x50] sm:$0xff] %v505
  %590 = vst [vmem:[%s3 + $0x58] sm:$0xff] %v507
  %591 = vst [vmem:[%s3 + $0x60] sm:$0xff] %v285
  %592 = vst [vmem:[%s3 + $0x68] sm:$0xff] %v287
  %593 = vst [vmem:[%s3 + $0x70] sm:$0xff] %v398
  %594 = vst [vmem:[%s3 + $0x78] sm:$0xff] %v400
  %595 = vst [vmem:[%s3 + $0x80] sm:$0xff] %v511
  %596 = vst [vmem:[%s3 + $0x88] sm:$0xff] %v513
  %597 = vst [vmem:[%s3 + $0x90] sm:$0xff] %v289
  %598 = vst [vmem:[%s3 + $0x98] sm:$0xff] %v291
  %599 = vst [vmem:[%s3 + $0xa0] sm:$0xff] %v402
  %600 = vst [vmem:[%s3 + $0xa8] sm:$0xff] %v404
  %601 = vst [vmem:[%s3 + $0xb0] sm:$0xff] %v515
  %602 = vst [vmem:[%s3 + $0xb8] sm:$0xff] %v517
  %603 = vst [vmem:[%s3 + $0xc0] sm:$0xff] %v295
  %604 = vst [vmem:[%s3 + $0xc8] sm:$0xff] %v297
  %605 = vst [vmem:[%s3 + $0xd0] sm:$0xff] %v408
  %606 = vst [vmem:[%s3 + $0xd8] sm:$0xff] %v410
  %607 = vst [vmem:[%s3 + $0xe0] sm:$0xff] %v521
  %608 = vst [vmem:[%s3 + $0xe8] sm:$0xff] %v523
  %609 = vst [vmem:[%s3 + $0xf0] sm:$0xff] %v299
  %610 = vst [vmem:[%s3 + $0xf8] sm:$0xff] %v301
  %611 = vst [vmem:[%s3 + $0x100] sm:$0xff] %v412
  %612 = vst [vmem:[%s3 + $0x108] sm:$0xff] %v414
  %613 = vst [vmem:[%s3 + $0x110] sm:$0xff] %v525
  %614 = vst [vmem:[%s3 + $0x118] sm:$0xff] %v527
  %615 = vst [vmem:[%s3 + $0x120] sm:$0xff] %v305
  %616 = vst [vmem:[%s3 + $0x128] sm:$0xff] %v307
  %617 = vst [vmem:[%s3 + $0x130] sm:$0xff] %v418
  %618 = vst [vmem:[%s3 + $0x138] sm:$0xff] %v420
  %619 = vst [vmem:[%s3 + $0x140] sm:$0xff] %v531
  %620 = vst [vmem:[%s3 + $0x148] sm:$0xff] %v533
  %621 = vst [vmem:[%s3 + $0x150] sm:$0xff] %v309
  %622 = vst [vmem:[%s3 + $0x158] sm:$0xff] %v311
  %623 = vst [vmem:[%s3 + $0x160] sm:$0xff] %v422
  %624 = vst [vmem:[%s3 + $0x168] sm:$0xff] %v424
  %625 = vst [vmem:[%s3 + $0x170] sm:$0xff] %v535
  %626 = vst [vmem:[%s3 + $0x178] sm:$0xff] %v537
  %627 = vst [vmem:[%s3 + $0x180] sm:$0xff] %v315
  %628 = vst [vmem:[%s3 + $0x188] sm:$0xff] %v317
  %629 = vst [vmem:[%s3 + $0x190] sm:$0xff] %v428
  %630 = vst [vmem:[%s3 + $0x198] sm:$0xff] %v430
  %631 = vst [vmem:[%s3 + $0x1a0] sm:$0xff] %v541
  %632 = vst [vmem:[%s3 + $0x1a8] sm:$0xff] %v543
  %633 = vst [vmem:[%s3 + $0x1b0] sm:$0xff] %v319
  %634 = vst [vmem:[%s3 + $0x1b8] sm:$0xff] %v321
  %635 = vst [vmem:[%s3 + $0x1c0] sm:$0xff] %v432
  %636 = vst [vmem:[%s3 + $0x1c8] sm:$0xff] %v434
  %637 = vst [vmem:[%s3 + $0x1d0] sm:$0xff] %v545
  %638 = vst [vmem:[%s3 + $0x1d8] sm:$0xff] %v547
  %639 = vst [vmem:[%s3 + $0x1e0] sm:$0xff] %v325
  %640 = vst [vmem:[%s3 + $0x1e8] sm:$0xff] %v327
  %641 = vst [vmem:[%s3 + $0x1f0] sm:$0xff] %v438
  %642 = vst [vmem:[%s3 + $0x1f8] sm:$0xff] %v440
  %643 = vst [vmem:[%s3 + $0x200] sm:$0xff] %v551
  %644 = vst [vmem:[%s3 + $0x208] sm:$0xff] %v553
  %645 = vst [vmem:[%s3 + $0x210] sm:$0xff] %v329
  %646 = vst [vmem:[%s3 + $0x218] sm:$0xff] %v331
  %647 = vst [vmem:[%s3 + $0x220] sm:$0xff] %v442
  %648 = vst [vmem:[%s3 + $0x228] sm:$0xff] %v444
  %649 = vst [vmem:[%s3 + $0x230] sm:$0xff] %v555
  %650 = vst [vmem:[%s3 + $0x238] sm:$0xff] %v557
  %651 = vst [vmem:[%s3 + $0x240] sm:$0xff] %v335
  %652 = vst [vmem:[%s3 + $0x248] sm:$0xff] %v337
  %653 = vst [vmem:[%s3 + $0x250] sm:$0xff] %v448
  %654 = vst [vmem:[%s3 + $0x258] sm:$0xff] %v450
  %655 = vst [vmem:[%s3 + $0x260] sm:$0xff] %v561
  %656 = vst [vmem:[%s3 + $0x268] sm:$0xff] %v563
  %657 = vst [vmem:[%s3 + $0x270] sm:$0xff] %v339
  %658 = vst [vmem:[%s3 + $0x278] sm:$0xff] %v341
  %659 = vst [vmem:[%s3 + $0x280] sm:$0xff] %v452
  %660 = vst [vmem:[%s3 + $0x288] sm:$0xff] %v454
  %661 = vst [vmem:[%s3 + $0x290] sm:$0xff] %v565
  %662 = vst [vmem:[%s3 + $0x298] sm:$0xff] %v567
  %663 = vst [vmem:[%s3 + $0x2a0] sm:$0xff] %v345
  %664 = vst [vmem:[%s3 + $0x2a8] sm:$0xff] %v347
  %665 = vst [vmem:[%s3 + $0x2b0] sm:$0xff] %v458
  %666 = vst [vmem:[%s3 + $0x2b8] sm:$0xff] %v460
  %667 = vst [vmem:[%s3 + $0x2c0] sm:$0xff] %v571
  %668 = vst [vmem:[%s3 + $0x2c8] sm:$0xff] %v573
  %669 = vst [vmem:[%s3 + $0x2d0] sm:$0xff] %v349
  %670 = vst [vmem:[%s3 + $0x2d8] sm:$0xff] %v351
  %671 = vst [vmem:[%s3 + $0x2e0] sm:$0xff] %v462
  %672 = vst [vmem:[%s3 + $0x2e8] sm:$0xff] %v464
  %673 = vst [vmem:[%s3 + $0x2f0] sm:$0xff] %v575
  %674 = vst [vmem:[%s3 + $0x2f8] sm:$0xff] %v577
  // Predicated region
  $region14: #{rnn_forward.5} parent=0 // pred_check
    _
  $region15: #{rnn_forward.5} parent=0 // pred_check_branch
    %676 = sbr.rel (0) target = $region17
  $region16: #{rnn_forward.5} parent=0 // pred_region
    _
  $region17: #{rnn_forward.5} parent=0 // pred_fallthru
    _
  // Predicated region
  $region18: #{rnn_forward.5} parent=0 // pred_check
    _
  $region19: #{rnn_forward.5} parent=0 // pred_check_branch
    %678 = sbr.rel (0) target = $region21
  $region20: #{rnn_forward.5} parent=0 // pred_region
    _
  $region21: #{rnn_forward.5} parent=0 // pred_fallthru
    _

// kernel: rnn_forward.6
$region0: #{rnn_forward.6}
  #allocation0 [shape = 'u32[]', space=smem, size = 0x4, offset = 0x4, fixed_abs, tag = 'smem constant byte address 0x4 - core index']
  #allocation1 [shape = 'u32[144,128]{1,0:T(1,128)}', space=vmem, size = 0x12000, scoped, tag = 'internal scratch']
  #allocation2 [shape = 'f32[16,128]{1,0:T(8,128)}', space=vmem, size = 0x2000, scoped, tag = 'scratch operand']
  %s0 = inlined_call_operand.vmem [shape: f32[8,16,768], index: 0, kind: input, shape index: {}]
  %s1 = inlined_call_operand.vmem [shape: bf16[2,128,384], index: 1, kind: input, shape index: {}]
  %s2 = inlined_call_operand.vmem [shape: f32[2,1,128], index: 2, kind: input, shape index: {}]
  %s3 = inlined_call_operand.vmem [shape: bf16[2,8,16,128], index: 3, kind: output, shape index: {}]
  %s4 = sld [smem:[#allocation0]]
  $region72: #{rnn_forward.6} parent=0
    _
  %s6 = ssub.s32 1, %s4
  %s7 = scalar_select 0, %s6, %s4
  $region1: #{rnn_forward.6} parent=0
    #allocation3 [shape = 'u8[393216]{0}', space=vmem, size = 0x60000, scoped, tag = 'input window, operand 0']
    loop: start=0, step=1, limit=4
    $region2: #{rnn_forward.6} parent=1 // loop_pre_header
      _
    $region3: #{rnn_forward.6} parent=1 // loop_header
      %s9 = sphi 0, %s13
      %p10 = scmp.ge.s32.totalorder %s9, 4
      %s16 = sphi 0, %s28
      %s17 = sphi 0, %s24
      %s18 = sphi 0, %s16
      %s19 = sphi 0, %s17
      %s20 = sphi 0, %s18
      %s21 = sphi 0, %s19
      %s43 = sphi 0, %s45
      %s46 = sphi 0, %s43
      %s47 = sphi 0, %s46
      %s63 = sphi 0, %s47
      %s69 = sphi 0, %s71
      %s72 = sphi 0, %s69
      %s73 = sphi 0, %s72
      %s89 = sphi 0, %s73
      %s95 = sphi 0, %s97
      %s98 = sphi 0, %s95
      %s99 = sphi 0, %s98
      %s115 = sphi 0, %s99
      %s133 = sphi 0, %s135
      %s136 = sphi 0, %s133
      %s137 = sphi 0, %s136
      %s153 = sphi 0, %s137
    $region4: #{rnn_forward.6} parent=1 // loop_header_branch
      %12 = sbr.rel (%p10) target = $region8
    $region5: #{rnn_forward.6} parent=1 // loop_body
      %s14 = ssub.s32 %s9, 1
      %s15 = ssub.s32 %s9, 2
      %s22 = sadd.s32 1, %s17
      %p23 = scmp.ge.s32.totalorder %s22, 1
      %s24 = scalar_select %p23, 0, %s22
      %s25 = sadd.s32 1, %s16
      %s26 = scalar_select %p23, %s25, %s16
      %p27 = scmp.ge.s32.totalorder %s26, 2
      %s28 = scalar_select %p27, 0, %s26
      %s29 = ssub.s32 1, %s16
      %s30 = smul.u32 %s29, %s17
      %s31 = ssub.s32 0, %s17
      %s32 = smul.u32 %s16, %s31
      %s33 = sadd.s32 %s30, %s32
      %s34 = ssub.s32 1, %s28
      %s35 = smul.u32 %s34, %s24
      %s36 = ssub.s32 0, %s24
      %s37 = smul.u32 %s28, %s36
      %s38 = sadd.s32 %s35, %s37
      %s39 = ssub.s32 %s33, %s38
      %s40 = ssub.s32 %s16, %s28
      %s41 = sor.u32 %s39, %s40
      %p42 = scmp.eq.s32.totalorder %s41, 0
      %s44 = sadd.s32 %s43, 1
      %s45 = scalar_select %p42, %s43, %s44
      %p48 = pneg %p42
      %p49 = scmp.eq.s32.totalorder %s9, 1
      %p50 = por %p48, %p49
      %p51 = scmp.ne.s32.totalorder %s43, %s46
      %p52 = scmp.eq.s32.totalorder %s9, 0
      %p53 = por %p51, %p52
      %p54 = scmp.ne.s32.totalorder %s43, %s46
      %p55 = scmp.eq.s32.totalorder %s14, 1
      %p56 = por %p54, %p55
      %p57 = scmp.ne.s32.totalorder %s46, %s47
      %p58 = scmp.eq.s32.totalorder %s14, 0
      %p59 = por %p57, %p58
      %p60 = scmp.ne.s32.totalorder %s46, %s47
      %p61 = scmp.eq.s32.totalorder %s15, 1
      %p62 = por %p60, %p61
      %p64 = scmp.ne.s32.totalorder %s47, %s63
      %p65 = scmp.eq.s32.totalorder %s15, 0
      %p66 = por %p64, %p65
      %s67 = ssub.s32 %s16, %s28
      %p68 = scmp.eq.s32.totalorder %s67, 0
      %s70 = sadd.s32 %s69, 1
      %s71 = scalar_select %p68, %s69, %s70
      %p74 = pneg %p68
      %p75 = scmp.eq.s32.totalorder %s9, 1
      %p76 = por %p74, %p75
      %p77 = scmp.ne.s32.totalorder %s69, %s72
      %p78 = scmp.eq.s32.totalorder %s9, 0
      %p79 = por %p77, %p78
      %p80 = scmp.ne.s32.totalorder %s69, %s72
      %p81 = scmp.eq.s32.totalorder %s14, 1
      %p82 = por %p80, %p81
      %p83 = scmp.ne.s32.totalorder %s72, %s73
      %p84 = scmp.eq.s32.totalorder %s14, 0
      %p85 = por %p83, %p84
      %p86 = scmp.ne.s32.totalorder %s72, %s73
      %p87 = scmp.eq.s32.totalorder %s15, 1
      %p88 = por %p86, %p87
      %p90 = scmp.ne.s32.totalorder %s73, %s89
      %p91 = scmp.eq.s32.totalorder %s15, 0
      %p92 = por %p90, %p91
      %s93 = ssub.s32 %s16, %s28
      %p94 = scmp.eq.s32.totalorder %s93, 0
      %s96 = sadd.s32 %s95, 1
      %s97 = scalar_select %p94, %s95, %s96
      %p100 = pneg %p94
      %p101 = scmp.eq.s32.totalorder %s9, 1
      %p102 = por %p100, %p101
      %p103 = scmp.ne.s32.totalorder %s95, %s98
      %p104 = scmp.eq.s32.totalorder %s9, 0
      %p105 = por %p103, %p104
      %p106 = scmp.ne.s32.totalorder %s95, %s98
      %p107 = scmp.eq.s32.totalorder %s14, 1
      %p108 = por %p106, %p107
      %p109 = scmp.ne.s32.totalorder %s98, %s99
      %p110 = scmp.eq.s32.totalorder %s14, 0
      %p111 = por %p109, %p110
      %p112 = scmp.ne.s32.totalorder %s98, %s99
      %p113 = scmp.eq.s32.totalorder %s15, 1
      %p114 = por %p112, %p113
      %p116 = scmp.ne.s32.totalorder %s99, %s115
      %p117 = scmp.eq.s32.totalorder %s15, 0
      %p118 = por %p116, %p117
      %s119 = ssub.s32 1, %s16
      %s120 = smul.u32 %s119, %s17
      %s121 = ssub.s32 0, %s17
      %s122 = smul.u32 %s16, %s121
      %s123 = sadd.s32 %s120, %s122
      %s124 = ssub.s32 1, %s28
      %s125 = smul.u32 %s124, %s24
      %s126 = ssub.s32 0, %s24
      %s127 = smul.u32 %s28, %s126
      %s128 = sadd.s32 %s125, %s127
      %s129 = ssub.s32 %s16, %s28
      %s130 = ssub.s32 %s123, %s128
      %s131 = sor.u32 %s129, %s130
      %p132 = scmp.eq.s32.totalorder %s131, 0
      %s134 = sadd.s32 %s133, 1
      %s135 = scalar_select %p132, %s133, %s134
      %p138 = pneg %p132
      %p139 = scmp.eq.s32.totalorder %s9, 1
      %p140 = por %p138, %p139
      %p141 = scmp.ne.s32.totalorder %s133, %s136
      %p142 = scmp.eq.s32.totalorder %s9, 0
      %p143 = por %p141, %p142
      %p144 = scmp.ne.s32.totalorder %s133, %s136
      %p145 = scmp.eq.s32.totalorder %s14, 1
      %p146 = por %p144, %p145
      %p147 = scmp.ne.s32.totalorder %s136, %s137
      %p148 = scmp.eq.s32.totalorder %s14, 0
      %p149 = por %p147, %p148
      %p150 = scmp.ne.s32.totalorder %s136, %s137
      %p151 = scmp.eq.s32.totalorder %s15, 1
      %p152 = por %p150, %p151
      %p154 = scmp.ne.s32.totalorder %s137, %s153
      %p155 = scmp.eq.s32.totalorder %s15, 0
      %p156 = por %p154, %p155
      %p157 = scmp.le.s32.totalorder 1, %s9
      %p158 = scmp.lt.s32.totalorder %s9, 3
      %p159 = pnand %p157, %p158
      %p160 = pneg %p159
      // Predicated region
      $region9: #{rnn_forward.6} parent=5 // pred_check
        _
      $region10: #{rnn_forward.6} parent=5 // pred_check_branch
        %162 = sbr.rel (%p159) target = $region12
      $region11: #{rnn_forward.6} parent=5 // pred_region
        %s163 = ssub.s32 %s9, 1
      $region12: #{rnn_forward.6} parent=5 // pred_fallthru
        _
      %p164 = scmp.lt.s32.totalorder %s9, 2
      // Predicated region
      $region13: #{rnn_forward.6} parent=5 // pred_check
        %p165 = pneg %p164
      $region14: #{rnn_forward.6} parent=5 // pred_check_branch
        %167 = sbr.rel (%p165) target = $region16
      $region15: #{rnn_forward.6} parent=5 // pred_region
        // Predicated region
        $region17: #{rnn_forward.6} parent=15 // pred_check
          %p168 = pneg %p53
        $region18: #{rnn_forward.6} parent=15 // pred_check_branch
          %170 = sbr.rel (%p168) target = $region20
        $region19: #{rnn_forward.6} parent=15 // pred_region
          %s171 = sand.u32 %s43, 1
          %s172 = sand.u32 %s43, 1
          %s173 = smul.addr %s172, 384
          %s174 = scalar_lea.vmem [#allocation3], %s173
          %s175 = ssub.s32 1, %s16
          %s176 = smul.u32 %s175, %s17
          %s177 = ssub.s32 0, %s17
          %s178 = smul.u32 %s16, %s177
          %s179 = sadd.s32 %s176, %s178
          %s180 = smul.u32 8, %s179
          %s181 = smul.u32 3, %s16
          %s182 = smul.addr %s180, 12
          %s183 = sadd.s32 %s181, %s182
          %s184 = smul.addr %s183, 8
          %s185 = scalar_lea.vmem %s0, %s184
          // Predicated region
          $region21: #{rnn_forward.6} parent=19 // pred_check
            _
          $region22: #{rnn_forward.6} parent=19 // pred_check_branch
            %187 = sbr.rel (0) target = $region24
          $region23: #{rnn_forward.6} parent=19 // pred_region
            // Predicated region
            $region25: #{rnn_forward.6} parent=23 // pred_check
              _
            $region26: #{rnn_forward.6} parent=23 // pred_check_branch
              %189 = sbr.rel (0) target = $region28
            $region27: #{rnn_forward.6} parent=23 // pred_region
              loop: start=0, step=1, limit=1
              $region29: #{rnn_forward.6} parent=27 // loop_pre_header
                _
              $region30: #{rnn_forward.6} parent=27 // loop_header
                %s191 = sphi 0, %s195
                %p192 = scmp.ge.s32.totalorder %s191, 1
                %s196 = sphi %s185, %s185
                %s197 = sphi %s174, %s174
              $region31: #{rnn_forward.6} parent=27 // loop_header_branch
                %194 = sbr.rel (%p192) target = $region35
              $region32: #{rnn_forward.6} parent=27 // loop_body
                %v198 = vld [vmem:[%s196] sm:$0xff]
                %199 = vst [vmem:[%s197] sm:$0xff] %v198
                %v200 = vld [vmem:[%s196 + $0x8] sm:$0xff]
                %201 = vst [vmem:[%s197 + $0x8] sm:$0xff] %v200
                %v202 = vld [vmem:[%s196 + $0x10] sm:$0xff]
                %203 = vst [vmem:[%s197 + $0x10] sm:$0xff] %v202
                %v204 = vld [vmem:[%s196 + $0x30] sm:$0xff]
                %205 = vst [vmem:[%s197 + $0x18] sm:$0xff] %v204
                %v206 = vld [vmem:[%s196 + $0x38] sm:$0xff]
                %207 = vst [vmem:[%s197 + $0x20] sm:$0xff] %v206
                %v208 = vld [vmem:[%s196 + $0x40] sm:$0xff]
                %209 = vst [vmem:[%s197 + $0x28] sm:$0xff] %v208
                %v210 = vld [vmem:[%s196 + $0x60] sm:$0xff]
                %211 = vst [vmem:[%s197 + $0x30] sm:$0xff] %v210
                %v212 = vld [vmem:[%s196 + $0x68] sm:$0xff]
                %213 = vst [vmem:[%s197 + $0x38] sm:$0xff] %v212
                %v214 = vld [vmem:[%s196 + $0x70] sm:$0xff]
                %215 = vst [vmem:[%s197 + $0x40] sm:$0xff] %v214
                %v216 = vld [vmem:[%s196 + $0x90] sm:$0xff]
                %217 = vst [vmem:[%s197 + $0x48] sm:$0xff] %v216
                %v218 = vld [vmem:[%s196 + $0x98] sm:$0xff]
                %219 = vst [vmem:[%s197 + $0x50] sm:$0xff] %v218
                %v220 = vld [vmem:[%s196 + $0xa0] sm:$0xff]
                %221 = vst [vmem:[%s197 + $0x58] sm:$0xff] %v220
                %v222 = vld [vmem:[%s196 + $0xc0] sm:$0xff]
                %223 = vst [vmem:[%s197 + $0x60] sm:$0xff] %v222
                %v224 = vld [vmem:[%s196 + $0xc8] sm:$0xff]
                %225 = vst [vmem:[%s197 + $0x68] sm:$0xff] %v224
                %v226 = vld [vmem:[%s196 + $0xd0] sm:$0xff]
                %227 = vst [vmem:[%s197 + $0x70] sm:$0xff] %v226
                %v228 = vld [vmem:[%s196 + $0xf0] sm:$0xff]
                %229 = vst [vmem:[%s197 + $0x78] sm:$0xff] %v228
                %v230 = vld [vmem:[%s196 + $0xf8] sm:$0xff]
                %231 = vst [vmem:[%s197 + $0x80] sm:$0xff] %v230
                %v232 = vld [vmem:[%s196 + $0x100] sm:$0xff]
                %233 = vst [vmem:[%s197 + $0x88] sm:$0xff] %v232
                %v234 = vld [vmem:[%s196 + $0x120] sm:$0xff]
                %235 = vst [vmem:[%s197 + $0x90] sm:$0xff] %v234
                %v236 = vld [vmem:[%s196 + $0x128] sm:$0xff]
                %237 = vst [vmem:[%s197 + $0x98] sm:$0xff] %v236
                %v238 = vld [vmem:[%s196 + $0x130] sm:$0xff]
                %239 = vst [vmem:[%s197 + $0xa0] sm:$0xff] %v238
                %v240 = vld [vmem:[%s196 + $0x150] sm:$0xff]
                %241 = vst [vmem:[%s197 + $0xa8] sm:$0xff] %v240
                %v242 = vld [vmem:[%s196 + $0x158] sm:$0xff]
                %243 = vst [vmem:[%s197 + $0xb0] sm:$0xff] %v242
                %v244 = vld [vmem:[%s196 + $0x160] sm:$0xff]
                %245 = vst [vmem:[%s197 + $0xb8] sm:$0xff] %v244
                %v246 = vld [vmem:[%s196 + $0x180] sm:$0xff]
                %247 = vst [vmem:[%s197 + $0xc0] sm:$0xff] %v246
                %v248 = vld [vmem:[%s196 + $0x188] sm:$0xff]
                %249 = vst [vmem:[%s197 + $0xc8] sm:$0xff] %v248
                %v250 = vld [vmem:[%s196 + $0x190] sm:$0xff]
                %251 = vst [vmem:[%s197 + $0xd0] sm:$0xff] %v250
                %v252 = vld [vmem:[%s196 + $0x1b0] sm:$0xff]
                %253 = vst [vmem:[%s197 + $0xd8] sm:$0xff] %v252
                %v254 = vld [vmem:[%s196 + $0x1b8] sm:$0xff]
                %255 = vst [vmem:[%s197 + $0xe0] sm:$0xff] %v254
                %v256 = vld [vmem:[%s196 + $0x1c0] sm:$0xff]
                %257 = vst [vmem:[%s197 + $0xe8] sm:$0xff] %v256
                %v258 = vld [vmem:[%s196 + $0x1e0] sm:$0xff]
                %259 = vst [vmem:[%s197 + $0xf0] sm:$0xff] %v258
                %v260 = vld [vmem:[%s196 + $0x1e8] sm:$0xff]
                %261 = vst [vmem:[%s197 + $0xf8] sm:$0xff] %v260
                %v262 = vld [vmem:[%s196 + $0x1f0] sm:$0xff]
                %263 = vst [vmem:[%s197 + $0x100] sm:$0xff] %v262
                %v264 = vld [vmem:[%s196 + $0x210] sm:$0xff]
                %265 = vst [vmem:[%s197 + $0x108] sm:$0xff] %v264
                %v266 = vld [vmem:[%s196 + $0x218] sm:$0xff]
                %267 = vst [vmem:[%s197 + $0x110] sm:$0xff] %v266
                %v268 = vld [vmem:[%s196 + $0x220] sm:$0xff]
                %269 = vst [vmem:[%s197 + $0x118] sm:$0xff] %v268
                %v270 = vld [vmem:[%s196 + $0x240] sm:$0xff]
                %271 = vst [vmem:[%s197 + $0x120] sm:$0xff] %v270
                %v272 = vld [vmem:[%s196 + $0x248] sm:$0xff]
                %273 = vst [vmem:[%s197 + $0x128] sm:$0xff] %v272
                %v274 = vld [vmem:[%s196 + $0x250] sm:$0xff]
                %275 = vst [vmem:[%s197 + $0x130] sm:$0xff] %v274
                %v276 = vld [vmem:[%s196 + $0x270] sm:$0xff]
                %277 = vst [vmem:[%s197 + $0x138] sm:$0xff] %v276
                %v278 = vld [vmem:[%s196 + $0x278] sm:$0xff]
                %279 = vst [vmem:[%s197 + $0x140] sm:$0xff] %v278
                %v280 = vld [vmem:[%s196 + $0x280] sm:$0xff]
                %281 = vst [vmem:[%s197 + $0x148] sm:$0xff] %v280
                %v282 = vld [vmem:[%s196 + $0x2a0] sm:$0xff]
                %283 = vst [vmem:[%s197 + $0x150] sm:$0xff] %v282
                %v284 = vld [vmem:[%s196 + $0x2a8] sm:$0xff]
                %285 = vst [vmem:[%s197 + $0x158] sm:$0xff] %v284
                %v286 = vld [vmem:[%s196 + $0x2b0] sm:$0xff]
                %287 = vst [vmem:[%s197 + $0x160] sm:$0xff] %v286
                %v288 = vld [vmem:[%s196 + $0x2d0] sm:$0xff]
                %289 = vst [vmem:[%s197 + $0x168] sm:$0xff] %v288
                %v290 = vld [vmem:[%s196 + $0x2d8] sm:$0xff]
                %291 = vst [vmem:[%s197 + $0x170] sm:$0xff] %v290
                %v292 = vld [vmem:[%s196 + $0x2e0] sm:$0xff]
                %293 = vst [vmem:[%s197 + $0x178] sm:$0xff] %v292
              $region33: #{rnn_forward.6} parent=27 // loop_footer
                %s195 = sadd.s32 1, %s191
              $region34: #{rnn_forward.6} parent=27 // loop_footer_branch
                %190 = sbr.rel target = $region30
              $region35: #{rnn_forward.6} parent=27 // loop_exit
                _
            $region28: #{rnn_forward.6} parent=23 // pred_fallthru
              _
            // Predicated region
            $region36: #{rnn_forward.6} parent=23 // pred_check
              _
            $region37: #{rnn_forward.6} parent=23 // pred_check_branch
              %295 = sbr.rel target = $region39
            $region38: #{rnn_forward.6} parent=23 // pred_region
              _
            $region39: #{rnn_forward.6} parent=23 // pred_fallthru
              _
          $region24: #{rnn_forward.6} parent=19 // pred_fallthru
            _
          %296 = vnop
        $region20: #{rnn_forward.6} parent=15 // pred_fallthru
          _
        // Predicated region
        $region40: #{rnn_forward.6} parent=15 // pred_check
          %p297 = pneg %p79
        $region41: #{rnn_forward.6} parent=15 // pred_check_branch
          %299 = sbr.rel (%p297) target = $region43
        $region42: #{rnn_forward.6} parent=15 // pred_region
          %p300 = scmp.lt.s32.totalorder %s16, 1
          %s301 = scalar_select %p300, %s16, 1
          %s302 = smul.addr %s301, 48
          %s303 = smul.addr %s302, 4
          %s304 = scalar_lea.vmem %s1, %s303
        $region43: #{rnn_forward.6} parent=15 // pred_fallthru
          _
        // Predicated region
        $region44: #{rnn_forward.6} parent=15 // pred_check
          %p305 = pneg %p105
        $region45: #{rnn_forward.6} parent=15 // pred_check_branch
          %307 = sbr.rel (%p305) target = $region47
        $region46: #{rnn_forward.6} parent=15 // pred_region
          %p308 = scmp.lt.s32.totalorder %s16, 1
          %s309 = scalar_select %p308, %s16, 1
          %s310 = scalar_lea.vmem %s2, %s309
        $region47: #{rnn_forward.6} parent=15 // pred_fallthru
          _
      $region16: #{rnn_forward.6} parent=5 // pred_fallthru
        _
      %p311 = scmp.le.s32.totalorder 1, %s9
      %p312 = scmp.lt.s32.totalorder %s9, 3
      %p313 = pnand %p311, %p312
      %p314 = pneg %p313
      // Predicated region
      $region48: #{rnn_forward.6} parent=5 // pred_check
        _
      $region49: #{rnn_forward.6} parent=5 // pred_check_branch
        %316 = sbr.rel (%p313) target = $region51
      $region50: #{rnn_forward.6} parent=5 // pred_region
        %s317 = ssub.s32 %s9, 1
        %s318 = sand.u32 %s46, 1
        %s319 = sand.u32 %s46, 1
        %s320 = smul.addr %s319, 384
        %s321 = scalar_lea.vmem [#allocation3], %s320
        // Predicated region
        $region52: #{rnn_forward.6} parent=50 // pred_check
          %p322 = pneg %p59
        $region53: #{rnn_forward.6} parent=50 // pred_check_branch
          %324 = sbr.rel (%p322) target = $region55
        $region54: #{rnn_forward.6} parent=50 // pred_region
          _
        $region55: #{rnn_forward.6} parent=50 // pred_fallthru
          _
        %s325 = sand.u32 %s46, 1
        %s326 = sand.u32 %s46, 1
        %s327 = smul.addr %s326, 384
        %s328 = scalar_lea.vmem [#allocation3], %s327
        %p329 = pneg %p59
        %p330 = pneg %p56
        %p331 = scmp.lt.s32.totalorder %s18, 1
        %s332 = scalar_select %p331, %s18, 1
        %s333 = smul.addr %s332, 48
        %s334 = smul.addr %s333, 4
        %s335 = scalar_lea.vmem %s1, %s334
        %p336 = pneg %p85
        %p337 = pneg %p82
        %p338 = scmp.lt.s32.totalorder %s18, 1
        %s339 = scalar_select %p338, %s18, 1
        %s340 = scalar_lea.vmem %s2, %s339
        %p341 = pneg %p111
        %p342 = pneg %p108
        %p343 = pneg %p149
        %p344 = pneg %p146
        %s345 = ssub.s32 1, %s18
        %s346 = smul.u32 %s345, %s19
        %s347 = ssub.s32 0, %s19
        %s348 = smul.u32 %s18, %s347
        %s349 = sadd.s32 %s346, %s348
        %s350 = smul.u32 8, %s349
        %p351 = scmp.lt.s32.totalorder %s18, 1
        %s352 = scalar_select %p351, %s18, 1
        %p353 = scmp.lt.s32.totalorder %s350, 7
        %s354 = scalar_select %p353, %s350, 7
        %s355 = smul.addr %s354, 2
        %s356 = smul.addr %s352, 16
        %s357 = sadd.s32 %s355, %s356
        %s358 = smul.addr %s357, 4
        %s359 = scalar_lea.vmem %s3, %s358
        %s360 = ssub.s32 1, %s18
        %s361 = smul.u32 %s360, %s19
        %s362 = ssub.s32 0, %s19
        %s363 = smul.u32 %s18, %s362
        %s364 = sadd.s32 %s361, %s363
        %s365 = smul.u32 8, %s364
        %s366 = smul.u32 3, %s18
        %p367 = scmp.lt.s32.totalorder %s18, 1
        %s368 = scalar_select %p367, %s18, 1
        %s369 = smul.addr %s368, 48
        %s370 = smul.addr %s369, 4
        %s371 = scalar_lea.vmem %s1, %s370
        %p372 = scmp.lt.s32.totalorder %s18, 1
        %s373 = scalar_select %p372, %s18, 1
        %s374 = scalar_lea.vmem %s2, %s373
        %s375 = ssub.s32 1, %s18
        %s376 = smul.u32 %s375, %s19
        %s377 = ssub.s32 0, %s19
        %s378 = smul.u32 %s18, %s377
        %s379 = sadd.s32 %s376, %s378
        %s380 = smul.u32 8, %s379
        %p381 = scmp.lt.s32.totalorder %s18, 1
        %s382 = scalar_select %p381, %s18, 1
        %p383 = scmp.lt.s32.totalorder %s380, 7
        %s384 = scalar_select %p383, %s380, 7
        %s385 = smul.addr %s384, 2
        %s386 = smul.addr %s382, 16
        %s387 = sadd.s32 %s385, %s386
        %s388 = smul.addr %s387, 4
        %s389 = scalar_lea.vmem %s3, %s388
        %s390 = ssub.s32 1, %s18
        %s391 = smul.u32 %s390, %s19
        %s392 = ssub.s32 0, %s19
        %s393 = smul.u32 %s18, %s392
        %s394 = sadd.s32 %s391, %s393
        %s395 = smul.u32 8, %s394
        %p397 = scmp.eq.s32.totalorder %s19, 0
        // Predicated region
        $region56: #{rnn_forward.6} parent=50 // pred_check
          %p398 = pneg %p397
        $region57: #{rnn_forward.6} parent=50 // pred_check_branch
          %400 = sbr.rel (%p398) target = $region59
        $region58: #{rnn_forward.6} parent=50 // pred_region
          %401 = vst [vmem:[#allocation2] sm:$0xff] 0.0
          %402 = vst [vmem:[#allocation2 + $0x8] sm:$0xff] 0.0
        $region59: #{rnn_forward.6} parent=50 // pred_fallthru
          _
        %v403 = vld [vmem:[%s371] sm:$0xff]
        %v404 = vld [vmem:[%s371 + $0x8] sm:$0xf]
        %v405 = vld [vmem:[%s371 + $0xc] sm:$0xff]
        %v406 = vld [vmem:[%s371 + $0x14] sm:$0xf]
        %v407 = vld [vmem:[%s371 + $0x18] sm:$0xff]
        %v408 = vld [vmem:[%s371 + $0x20] sm:$0xf]
        %v409 = vld [vmem:[%s371 + $0x24] sm:$0xff]
        %v410 = vld [vmem:[%s371 + $0x2c] sm:$0xf]
        %v411 = vld [vmem:[%s371 + $0x30] sm:$0xff]
        %v412 = vld [vmem:[%s371 + $0x38] sm:$0xf]
        %v413 = vld [vmem:[%s371 + $0x3c] sm:$0xff]
        %v414 = vld [vmem:[%s371 + $0x44] sm:$0xf]
        %v415 = vld [vmem:[%s371 + $0x48] sm:$0xff]
        %v416 = vld [vmem:[%s371 + $0x50] sm:$0xf]
        %v417 = vld [vmem:[%s371 + $0x54] sm:$0xff]
        %v418 = vld [vmem:[%s371 + $0x5c] sm:$0xf]
        %v419 = vld [vmem:[%s371 + $0x60] sm:$0xff]
        %v420 = vld [vmem:[%s371 + $0x68] sm:$0xf]
        %v421 = vld [vmem:[%s371 + $0x6c] sm:$0xff]
        %v422 = vld [vmem:[%s371 + $0x74] sm:$0xf]
        %v423 = vld [vmem:[%s371 + $0x78] sm:$0xff]
        %v424 = vld [vmem:[%s371 + $0x80] sm:$0xf]
        %v425 = vld [vmem:[%s371 + $0x84] sm:$0xff]
        %v426 = vld [vmem:[%s371 + $0x8c] sm:$0xf]
        %v427 = vld [vmem:[%s371 + $0x90] sm:$0xff]
        %v428 = vld [vmem:[%s371 + $0x98] sm:$0xf]
        %v429 = vld [vmem:[%s371 + $0x9c] sm:$0xff]
        %v430 = vld [vmem:[%s371 + $0xa4] sm:$0xf]
        %v431 = vld [vmem:[%s371 + $0xa8] sm:$0xff]
        %v432 = vld [vmem:[%s371 + $0xb0] sm:$0xf]
        %v433 = vld [vmem:[%s371 + $0xb4] sm:$0xff]
        %v434 = vld [vmem:[%s371 + $0xbc] sm:$0xf]
        %v435 = vld [vmem:[%s374] sm:$0x1]
        %s436 = smul.u32 %s18, 7
        %s437 = smul.u32 %s18, 2
        %s438 = ssub.s32 1, %s437
        %v439 = vld [vmem:[#allocation2] sm:$0xff]
        %v440 = vld [vmem:[#allocation2 + $0x8] sm:$0xff]
        %s441 = smul.u32 %s436, 6
        %s442 = smul.addr %s441, 8
        %s443 = scalar_lea.vmem %s321, %s442 [#allocation3]
        %v444 = vld [vmem:[%s443] sm:$0xff]
        %v445 = vld [vmem:[%s443 + $0x8] sm:$0xff]
        %v446 = vld [vmem:[%s443 + $0x10] sm:$0xff]
        %v447 = vld [vmem:[%s443 + $0x18] sm:$0xff]
        %v448 = vld [vmem:[%s443 + $0x20] sm:$0xff]
        %v449 = vld [vmem:[%s443 + $0x28] sm:$0xff]
        %v450 = vpack.c.bf16 %v440, %v439
        %v483 = vunpack.c.l.b16 %v403
        %v484 = vunpack.c.h.b16 %v403
        %v485 = vunpack.c.l.b16 %v404
        %v486 = vunpack.c.l.b16 %v405
        %v487 = vunpack.c.h.b16 %v405
        %v488 = vunpack.c.l.b16 %v406
        %v489 = vunpack.c.l.b16 %v407
        %v490 = vunpack.c.h.b16 %v407
        %v491 = vunpack.c.l.b16 %v408
        %v492 = vunpack.c.l.b16 %v409
        %v493 = vunpack.c.h.b16 %v409
        %v494 = vunpack.c.l.b16 %v410
        %v495 = vunpack.c.l.b16 %v411
        %v496 = vunpack.c.h.b16 %v411
        %v497 = vunpack.c.l.b16 %v412
        %v498 = vunpack.c.l.b16 %v413
        %v499 = vunpack.c.h.b16 %v413
        %v500 = vunpack.c.l.b16 %v414
        %v501 = vunpack.c.l.b16 %v415
        %v502 = vunpack.c.h.b16 %v415
        %v503 = vunpack.c.l.b16 %v416
        %v504 = vunpack.c.l.b16 %v417
        %v505 = vunpack.c.h.b16 %v417
        %v506 = vunpack.c.l.b16 %v418
        %v507 = vunpack.c.l.b16 %v419
        %v508 = vunpack.c.h.b16 %v419
        %v509 = vunpack.c.l.b16 %v420
        %v510 = vunpack.c.l.b16 %v421
        %v511 = vunpack.c.h.b16 %v421
        %v512 = vunpack.c.l.b16 %v422
        %v513 = vunpack.c.l.b16 %v423
        %v514 = vunpack.c.h.b16 %v423
        %v515 = vunpack.c.l.b16 %v424
        %v516 = vunpack.c.l.b16 %v425
        %v517 = vunpack.c.h.b16 %v425
        %v518 = vunpack.c.l.b16 %v426
        %v519 = vunpack.c.l.b16 %v427
        %v520 = vunpack.c.h.b16 %v427
        %v521 = vunpack.c.l.b16 %v428
        %v522 = vunpack.c.l.b16 %v429
        %v523 = vunpack.c.h.b16 %v429
        %v524 = vunpack.c.l.b16 %v430
        %v525 = vunpack.c.l.b16 %v431
        %v526 = vunpack.c.h.b16 %v431
        %v527 = vunpack.c.l.b16 %v432
        %v528 = vunpack.c.l.b16 %v433
        %v529 = vunpack.c.h.b16 %v433
        %v530 = vunpack.c.l.b16 %v434
        %v531 = vpack.c.b16 %v486, %v483
        %v532 = vpack.c.b16 %v487, %v484
        %v533 = vpack.c.b16 %v488, %v485
        %v534 = vpack.c.b16 %v492, %v489
        %v535 = vpack.c.b16 %v493, %v490
        %v536 = vpack.c.b16 %v494, %v491
        %v537 = vpack.c.b16 %v498, %v495
        %v538 = vpack.c.b16 %v499, %v496
        %v539 = vpack.c.b16 %v500, %v497
        %v540 = vpack.c.b16 %v504, %v501
        %v541 = vpack.c.b16 %v505, %v502
        %v542 = vpack.c.b16 %v506, %v503
        %v543 = vpack.c.b16 %v510, %v507
        %v544 = vpack.c.b16 %v511, %v508
        %v545 = vpack.c.b16 %v512, %v509
        %v546 = vpack.c.b16 %v516, %v513
        %v547 = vpack.c.b16 %v517, %v514
        %v548 = vpack.c.b16 %v518, %v515
        %v549 = vpack.c.b16 %v522, %v519
        %v550 = vpack.c.b16 %v523, %v520
        %v551 = vpack.c.b16 %v524, %v521
        %v552 = vpack.c.b16 %v528, %v525
        %v553 = vpack.c.b16 %v529, %v526
        %v554 = vpack.c.b16 %v530, %v527
        %579 = vmatprep.subr.bf16.mxu0 %v532
        %580 = vmatpush1.bf16.msra.mxu0 %v531
        %581 = vmatprep.subr.bf16.mxu0 %v535
        %582 = vmatpush1.bf16.msra.mxu0 %v534
        %583 = vmatprep.subr.bf16.mxu0 %v538
        %584 = vmatpush1.bf16.msra.mxu0 %v537
        %585 = vmatprep.subr.bf16.mxu0 %v541
        %586 = vmatpush1.bf16.msra.mxu0 %v540
        %587 = vmatprep.subr.bf16.mxu0 %v544
        %588 = vmatpush1.bf16.msra.mxu0 %v543
        %589 = vmatprep.subr.bf16.mxu0 %v547
        %590 = vmatpush1.bf16.msra.mxu0 %v546
        %591 = vmatprep.subr.bf16.mxu0 %v550
        %592 = vmatpush1.bf16.msra.mxu0 %v549
        %593 = vmatprep.subr.bf16.mxu0 %v553
        %594 = vmatpush1.bf16.msra.mxu0 %v552
        %595 = vmatprep.subr.bf16.mxu0 0
        %596 = vmatpush1.bf16.msra.mxu0 0
        %597 = vmatprep.subr.bf16.mxu0 0
        %598 = vmatpush1.bf16.msra.mxu0 0
        %599 = vmatprep.subr.bf16.mxu0 0
        %600 = vmatpush1.bf16.msra.mxu0 0
        %601 = vmatprep.subr.bf16.mxu0 0
        %602 = vmatpush1.bf16.msra.mxu0 0
        %603 = vmatprep.subr.bf16.mxu0 0
        %604 = vmatpush1.bf16.msra.mxu0 0
        %605 = vmatprep.subr.bf16.mxu0 0
        %606 = vmatpush1.bf16.msra.mxu0 0
        %607 = vmatprep.subr.bf16.mxu0 0
        %608 = vmatpush1.bf16.msra.mxu0 0
        %609 = vmatprep.subr.bf16.mxu0 0
        %610 = vmatpush1.bf16.msra.mxu0 0
        %611 = vmatprep.mubr.bf16.mxu0 0
        %612 = vmatmul.mubr.bf16.gmra.mrb[0].mxu0 %v450
        %v613 = vpop.f32.mrb[0].mxu0
        %v614 = vadd.f32 0.0, %v613
        %v615 = vpop.f32.mrb[0].mxu0
        %v616 = vadd.f32 0.0, %v615
        %v617 = vpop.f32.mrb[0].mxu0
        %v618 = vadd.f32 0.0, %v617
        %v619 = vpop.f32.mrb[0].mxu0
        %v620 = vadd.f32 0.0, %v619
        %621 = vdwg.mxu0
        %622 = vmatprep.subr.bf16.mxu0 0
        %623 = vmatpush1.bf16.msra.mxu0 %v533
        %624 = vmatprep.subr.bf16.mxu0 0
        %625 = vmatpush1.bf16.msra.mxu0 %v536
        %626 = vmatprep.subr.bf16.mxu0 0
        %627 = vmatpush1.bf16.msra.mxu0 %v539
        %628 = vmatprep.subr.bf16.mxu0 0
        %629 = vmatpush1.bf16.msra.mxu0 %v542
        %630 = vmatprep.subr.bf16.mxu0 0
        %631 = vmatpush1.bf16.msra.mxu0 %v545
        %632 = vmatprep.subr.bf16.mxu0 0
        %633 = vmatpush1.bf16.msra.mxu0 %v548
        %634 = vmatprep.subr.bf16.mxu0 0
        %635 = vmatpush1.bf16.msra.mxu0 %v551
        %636 = vmatprep.subr.bf16.mxu0 0
        %637 = vmatpush1.bf16.msra.mxu0 %v554
        %638 = vmatprep.subr.bf16.mxu0 0
        %639 = vmatpush1.bf16.msra.mxu0 0
        %640 = vmatprep.subr.bf16.mxu0 0
        %641 = vmatpush1.bf16.msra.mxu0 0
        %642 = vmatprep.subr.bf16.mxu0 0
        %643 = vmatpush1.bf16.msra.mxu0 0
        %644 = vmatprep.subr.bf16.mxu0 0
        %645 = vmatpush1.bf16.msra.mxu0 0
        %646 = vmatprep.subr.bf16.mxu0 0
        %647 = vmatpush1.bf16.msra.mxu0 0
        %648 = vmatprep.subr.bf16.mxu0 0
        %649 = vmatpush1.bf16.msra.mxu0 0
        %650 = vmatprep.subr.bf16.mxu0 0
        %651 = vmatpush1.bf16.msra.mxu0 0
        %652 = vmatprep.subr.bf16.mxu0 0
        %653 = vmatpush1.bf16.msra.mxu0 0
        %654 = vmatprep.mubr.bf16.mxu0 0
        %655 = vmatmul.mubr.bf16.gmra.mrb[0].mxu0 %v450
        %v656 = vpop.f32.mrb[0].mxu0
        %v657 = vadd.f32 0.0, %v656
        %v658 = vpop.f32.mrb[0].mxu0
        %v659 = vpop.f32.mrb[0].mxu0
        %v660 = vadd.f32 0.0, %v659
        %v661 = vpop.f32.mrb[0].mxu0
        %662 = vdwg.mxu0
        %v663 = vadd.f32 %v444, %v614
        %v664 = vadd.f32 %v445, %v616
        %v665 = vadd.f32 %v447, %v618
        %v666 = vadd.f32 %v448, %v620
        %v667 = vmul.f32 %v663, 0.5
        %v668 = vmul.f32 %v664, 0.5
        %v669 = vmul.f32 %v665, 0.5
        %v670 = vmul.f32 %v666, 0.5
        %v671 = vtanh.pop %v667
        %v672 = vtanh.pop %v668
        %v673 = vtanh.pop %v669
        %v674 = vtanh.pop %v670
        %v675 = vadd.f32 %v671, 1.0
        %v676 = vadd.f32 %v672, 1.0
        %v677 = vadd.f32 %v673, 1.0
        %v678 = vadd.f32 %v674, 1.0
        %v679 = vmul.f32 %v675, 0.5
        %v680 = vmul.f32 %v676, 0.5
        %v681 = vmul.f32 %v677, 0.5
        %v682 = vmul.f32 %v678, 0.5
        %v684 = vlaneseq
        %v685 = vshrl.u32 %v684, 7
        %v686 = vsub.s32 0, %v685
        %v687 = vrot.slane %v435, %v686
        %v689 = vadd.f32 %v657, %v687
        %v690 = vadd.f32 %v660, %v687
        %v691 = vmul.f32 %v679, %v689
        %v692 = vmul.f32 %v681, %v690
        %v693 = vadd.f32 %v446, %v691
        %v694 = vadd.f32 %v449, %v692
        %v695 = vtanh.pop %v693
        %v696 = vtanh.pop %v694
        %v697 = vsub.f32 %v439, %v695
        %v698 = vsub.f32 %v440, %v696
        %v699 = vmul.f32 %v680, %v697
        %v700 = vmul.f32 %v682, %v698
        %v701 = vadd.f32 %v695, %v699
        %v702 = vadd.f32 %v696, %v700
        %v703 = vpack.c.bf16 %v702, %v701
        %v705 = vunpack.c.l.b16 %v703
        %v706 = vunpack.c.h.b16 %v703
        %v707 = vpack.c.b16 %v705, %v705
        %v708 = vpack.c.b16 %v706, %v706
        %s711 = smul.u32 %s436, 2
        %s712 = smul.addr %s711, 4
        %s713 = scalar_lea.vmem %s389, %s712
        %714 = vst [vmem:[%s713] sm:$0xf] %v707
        %715 = vst [vmem:[%s713 + $0x4] sm:$0xf] %v708
        %s716 = sadd.s32 %s436, %s438
        %s717 = smul.u32 %s716, 6
        %s718 = smul.addr %s717, 8
        %s719 = scalar_lea.vmem %s321, %s718 [#allocation3]
        %v720 = vld [vmem:[%s719] sm:$0xff]
        %v721 = vld [vmem:[%s719 + $0x8] sm:$0xff]
        %v722 = vld [vmem:[%s719 + $0x10] sm:$0xff]
        %v723 = vld [vmem:[%s719 + $0x18] sm:$0xff]
        %v724 = vld [vmem:[%s719 + $0x20] sm:$0xff]
        %v725 = vld [vmem:[%s719 + $0x28] sm:$0xff]
        %726 = vmatprep.subr.bf16.mxu0 %v532
        %727 = vmatpush1.bf16.msra.mxu0 %v531
        %728 = vmatprep.subr.bf16.mxu0 %v535
        %729 = vmatpush1.bf16.msra.mxu0 %v534
        %730 = vmatprep.subr.bf16.mxu0 %v538
        %731 = vmatpush1.bf16.msra.mxu0 %v537
        %732 = vmatprep.subr.bf16.mxu0 %v541
        %733 = vmatpush1.bf16.msra.mxu0 %v540
        %734 = vmatprep.subr.bf16.mxu0 %v544
        %735 = vmatpush1.bf16.msra.mxu0 %v543
        %736 = vmatprep.subr.bf16.mxu0 %v547
        %737 = vmatpush1.bf16.msra.mxu0 %v546
        %738 = vmatprep.subr.bf16.mxu0 %v550
        %739 = vmatpush1.bf16.msra.mxu0 %v549
        %740 = vmatprep.subr.bf16.mxu0 %v553
        %741 = vmatpush1.bf16.msra.mxu0 %v552
        %742 = vmatprep.subr.bf16.mxu0 0
        %743 = vmatpush1.bf16.msra.mxu0 0
        %744 = vmatprep.subr.bf16.mxu0 0
        %745 = vmatpush1.bf16.msra.mxu0 0
        %746 = vmatprep.subr.bf16.mxu0 0
        %747 = vmatpush1.bf16.msra.mxu0 0
        %748 = vmatprep.subr.bf16.mxu0 0
        %749 = vmatpush1.bf16.msra.mxu0 0
        %750 = vmatprep.subr.bf16.mxu0 0
        %751 = vmatpush1.bf16.msra.mxu0 0
        %752 = vmatprep.subr.bf16.mxu0 0
        %753 = vmatpush1.bf16.msra.mxu0 0
        %754 = vmatprep.subr.bf16.mxu0 0
        %755 = vmatpush1.bf16.msra.mxu0 0
        %756 = vmatprep.subr.bf16.mxu0 0
        %757 = vmatpush1.bf16.msra.mxu0 0
        %758 = vmatprep.mubr.bf16.mxu0 0
        %759 = vmatmul.mubr.bf16.gmra.mrb[0].mxu0 %v703
        %v760 = vpop.f32.mrb[0].mxu0
        %v761 = vadd.f32 0.0, %v760
        %v762 = vpop.f32.mrb[0].mxu0
        %v763 = vadd.f32 0.0, %v762
        %v764 = vpop.f32.mrb[0].mxu0
        %v765 = vadd.f32 0.0, %v764
        %v766 = vpop.f32.mrb[0].mxu0
        %v767 = vadd.f32 0.0, %v766
        %768 = vdwg.mxu0
        %769 = vmatprep.subr.bf16.mxu0 0
        %770 = vmatpush1.bf16.msra.mxu0 %v533
        %771 = vmatprep.subr.bf16.mxu0 0
        %772 = vmatpush1.bf16.msra.mxu0 %v536
        %773 = vmatprep.subr.bf16.mxu0 0
        %774 = vmatpush1.bf16.msra.mxu0 %v539
        %775 = vmatprep.subr.bf16.mxu0 0
        %776 = vmatpush1.bf16.msra.mxu0 %v542
        %777 = vmatprep.subr.bf16.mxu0 0
        %778 = vmatpush1.bf16.msra.mxu0 %v545
        %779 = vmatprep.subr.bf16.mxu0 0
        %780 = vmatpush1.bf16.msra.mxu0 %v548
        %781 = vmatprep.subr.bf16.mxu0 0
        %782 = vmatpush1.bf16.msra.mxu0 %v551
        %783 = vmatprep.subr.bf16.mxu0 0
        %784 = vmatpush1.bf16.msra.mxu0 %v554
        %785 = vmatprep.subr.bf16.mxu0 0
        %786 = vmatpush1.bf16.msra.mxu0 0
        %787 = vmatprep.subr.bf16.mxu0 0
        %788 = vmatpush1.bf16.msra.mxu0 0
        %789 = vmatprep.subr.bf16.mxu0 0
        %790 = vmatpush1.bf16.msra.mxu0 0
        %791 = vmatprep.subr.bf16.mxu0 0
        %792 = vmatpush1.bf16.msra.mxu0 0
        %793 = vmatprep.subr.bf16.mxu0 0
        %794 = vmatpush1.bf16.msra.mxu0 0
        %795 = vmatprep.subr.bf16.mxu0 0
        %796 = vmatpush1.bf16.msra.mxu0 0
        %797 = vmatprep.subr.bf16.mxu0 0
        %798 = vmatpush1.bf16.msra.mxu0 0
        %799 = vmatprep.subr.bf16.mxu0 0
        %800 = vmatpush1.bf16.msra.mxu0 0
        %801 = vmatprep.mubr.bf16.mxu0 0
        %802 = vmatmul.mubr.bf16.gmra.mrb[0].mxu0 %v703
        %v803 = vpop.f32.mrb[0].mxu0
        %v804 = vadd.f32 0.0, %v803
        %v805 = vpop.f32.mrb[0].mxu0
        %v806 = vpop.f32.mrb[0].mxu0
        %v807 = vadd.f32 0.0, %v806
        %v808 = vpop.f32.mrb[0].mxu0
        %809 = vdwg.mxu0
        %v810 = vadd.f32 %v720, %v761
        %v811 = vadd.f32 %v721, %v763
        %v812 = vadd.f32 %v723, %v765
        %v813 = vadd.f32 %v724, %v767
        %v814 = vmul.f32 %v810, 0.5
        %v815 = vmul.f32 %v811, 0.5
        %v816 = vmul.f32 %v812, 0.5
        %v817 = vmul.f32 %v813, 0.5
        %v818 = vtanh.pop %v814
        %v819 = vtanh.pop %v815
        %v820 = vtanh.pop %v816
        %v821 = vtanh.pop %v817
        %v822 = vadd.f32 %v818, 1.0
        %v823 = vadd.f32 %v819, 1.0
        %v824 = vadd.f32 %v820, 1.0
        %v825 = vadd.f32 %v821, 1.0
        %v826 = vmul.f32 %v822, 0.5
        %v827 = vmul.f32 %v823, 0.5
        %v828 = vmul.f32 %v824, 0.5
        %v829 = vmul.f32 %v825, 0.5
        %v830 = vadd.f32 %v804, %v687
        %v831 = vadd.f32 %v807, %v687
        %v832 = vmul.f32 %v826, %v830
        %v833 = vmul.f32 %v828, %v831
        %v834 = vadd.f32 %v722, %v832
        %v835 = vadd.f32 %v725, %v833
        %v836 = vtanh.pop %v834
        %v837 = vtanh.pop %v835
        %v838 = vsub.f32 %v701, %v836
        %v839 = vsub.f32 %v702, %v837
        %v840 = vmul.f32 %v827, %v838
        %v841 = vmul.f32 %v829, %v839
        %v842 = vadd.f32 %v836, %v840
        %v843 = vadd.f32 %v837, %v841
        %v844 = vpack.c.bf16 %v843, %v842
        %v846 = vunpack.c.l.b16 %v844
        %v847 = vunpack.c.h.b16 %v844
        %v848 = vpack.c.b16 %v846, %v846
        %v849 = vpack.c.b16 %v847, %v847
        %s852 = smul.u32 %s716, 2
        %s853 = smul.addr %s852, 4
        %s854 = scalar_lea.vmem %s389, %s853
        %855 = vst [vmem:[%s854] sm:$0xf] %v848
        %856 = vst [vmem:[%s854 + $0x4] sm:$0xf] %v849
        %s857 = smul.u32 %s438, 2
        %s858 = sadd.s32 %s436, %s857
        %s859 = smul.u32 %s858, 6
        %s860 = smul.addr %s859, 8
        %s861 = scalar_lea.vmem %s321, %s860 [#allocation3]
        %v862 = vld [vmem:[%s861] sm:$0xff]
        %v863 = vld [vmem:[%s861 + $0x8] sm:$0xff]
        %v864 = vld [vmem:[%s861 + $0x10] sm:$0xff]
        %v865 = vld [vmem:[%s861 + $0x18] sm:$0xff]
        %v866 = vld [vmem:[%s861 + $0x20] sm:$0xff]
        %v867 = vld [vmem:[%s861 + $0x28] sm:$0xff]
        %868 = vmatprep.subr.bf16.mxu0 %v532
        %869 = vmatpush1.bf16.msra.mxu0 %v531
        %870 = vmatprep.subr.bf16.mxu0 %v535
        %871 = vmatpush1.bf16.msra.mxu0 %v534
        %872 = vmatprep.subr.bf16.mxu0 %v538
        %873 = vmatpush1.bf16.msra.mxu0 %v537
        %874 = vmatprep.subr.bf16.mxu0 %v541
        %875 = vmatpush1.bf16.msra.mxu0 %v540
        %876 = vmatprep.subr.bf16.mxu0 %v544
        %877 = vmatpush1.bf16.msra.mxu0 %v543
        %878 = vmatprep.subr.bf16.mxu0 %v547
        %879 = vmatpush1.bf16.msra.mxu0 %v546
        %880 = vmatprep.subr.bf16.mxu0 %v550
        %881 = vmatpush1.bf16.msra.mxu0 %v549
        %882 = vmatprep.subr.bf16.mxu0 %v553
        %883 = vmatpush1.bf16.msra.mxu0 %v552
        %884 = vmatprep.subr.bf16.mxu0 0
        %885 = vmatpush1.bf16.msra.mxu0 0
        %886 = vmatprep.subr.bf16.mxu0 0
        %887 = vmatpush1.bf16.msra.mxu0 0
        %888 = vmatprep.subr.bf16.mxu0 0
        %889 = vmatpush1.bf16.msra.mxu0 0
        %890 = vmatprep.subr.bf16.mxu0 0
        %891 = vmatpush1.bf16.msra.mxu0 0
        %892 = vmatprep.subr.bf16.mxu0 0
        %893 = vmatpush1.bf16.msra.mxu0 0
        %894 = vmatprep.subr.bf16.mxu0 0
        %895 = vmatpush1.bf16.msra.mxu0 0
        %896 = vmatprep.subr.bf16.mxu0 0
        %897 = vmatpush1.bf16.msra.mxu0 0
        %898 = vmatprep.subr.bf16.mxu0 0
        %899 = vmatpush1.bf16.msra.mxu0 0
        %900 = vmatprep.mubr.bf16.mxu0 0
        %901 = vmatmul.mubr.bf16.gmra.mrb[0].mxu0 %v844
        %v902 = vpop.f32.mrb[0].mxu0
        %v903 = vadd.f32 0.0, %v902
        %v904 = vpop.f32.mrb[0].mxu0
        %v905 = vadd.f32 0.0, %v904
        %v906 = vpop.f32.mrb[0].mxu0
        %v907 = vadd.f32 0.0, %v906
        %v908 = vpop.f32.mrb[0].mxu0
        %v909 = vadd.f32 0.0, %v908
        %910 = vdwg.mxu0
        %911 = vmatprep.subr.bf16.mxu0 0
        %912 = vmatpush1.bf16.msra.mxu0 %v533
        %913 = vmatprep.subr.bf16.mxu0 0
        %914 = vmatpush1.bf16.msra.mxu0 %v536
        %915 = vmatprep.subr.bf16.mxu0 0
        %916 = vmatpush1.bf16.msra.mxu0 %v539
        %917 = vmatprep.subr.bf16.mxu0 0
        %918 = vmatpush1.bf16.msra.mxu0 %v542
        %919 = vmatprep.subr.bf16.mxu0 0
        %920 = vmatpush1.bf16.msra.mxu0 %v545
        %921 = vmatprep.subr.bf16.mxu0 0
        %922 = vmatpush1.bf16.msra.mxu0 %v548
        %923 = vmatprep.subr.bf16.mxu0 0
        %924 = vmatpush1.bf16.msra.mxu0 %v551
        %925 = vmatprep.subr.bf16.mxu0 0
        %926 = vmatpush1.bf16.msra.mxu0 %v554
        %927 = vmatprep.subr.bf16.mxu0 0
        %928 = vmatpush1.bf16.msra.mxu0 0
        %929 = vmatprep.subr.bf16.mxu0 0
        %930 = vmatpush1.bf16.msra.mxu0 0
        %931 = vmatprep.subr.bf16.mxu0 0
        %932 = vmatpush1.bf16.msra.mxu0 0
        %933 = vmatprep.subr.bf16.mxu0 0
        %934 = vmatpush1.bf16.msra.mxu0 0
        %935 = vmatprep.subr.bf16.mxu0 0
        %936 = vmatpush1.bf16.msra.mxu0 0
        %937 = vmatprep.subr.bf16.mxu0 0
        %938 = vmatpush1.bf16.msra.mxu0 0
        %939 = vmatprep.subr.bf16.mxu0 0
        %940 = vmatpush1.bf16.msra.mxu0 0
        %941 = vmatprep.subr.bf16.mxu0 0
        %942 = vmatpush1.bf16.msra.mxu0 0
        %943 = vmatprep.mubr.bf16.mxu0 0
        %944 = vmatmul.mubr.bf16.gmra.mrb[0].mxu0 %v844
        %v945 = vpop.f32.mrb[0].mxu0
        %v946 = vadd.f32 0.0, %v945
        %v947 = vpop.f32.mrb[0].mxu0
        %v948 = vpop.f32.mrb[0].mxu0
        %v949 = vadd.f32 0.0, %v948
        %v950 = vpop.f32.mrb[0].mxu0
        %951 = vdwg.mxu0
        %v952 = vadd.f32 %v862, %v903
        %v953 = vadd.f32 %v863, %v905
        %v954 = vadd.f32 %v865, %v907
        %v955 = vadd.f32 %v866, %v909
        %v956 = vmul.f32 %v952, 0.5
        %v957 = vmul.f32 %v953, 0.5
        %v958 = vmul.f32 %v954, 0.5
        %v959 = vmul.f32 %v955, 0.5
        %v960 = vtanh.pop %v956
        %v961 = vtanh.pop %v957
        %v962 = vtanh.pop %v958
        %v963 = vtanh.pop %v959
        %v964 = vadd.f32 %v960, 1.0
        %v965 = vadd.f32 %v961, 1.0
        %v966 = vadd.f32 %v962, 1.0
        %v967 = vadd.f32 %v963, 1.0
        %v968 = vmul.f32 %v964, 0.5
        %v969 = vmul.f32 %v965, 0.5
        %v970 = vmul.f32 %v966, 0.5
        %v971 = vmul.f32 %v967, 0.5
        %v972 = vadd.f32 %v946, %v687
        %v973 = vadd.f32 %v949, %v687
        %v974 = vmul.f32 %v968, %v972
        %v975 = vmul.f32 %v970, %v973
        %v976 = vadd.f32 %v864, %v974
        %v977 = vadd.f32 %v867, %v975
        %v978 = vtanh.pop %v976
        %v979 = vtanh.pop %v977
        %v980 = vsub.f32 %v842, %v978
        %v981 = vsub.f32 %v843, %v979
        %v982 = vmul.f32 %v969, %v980
        %v983 = vmul.f32 %v971, %v981
        %v984 = vadd.f32 %v978, %v982
        %v985 = vadd.f32 %v979, %v983
        %v986 = vpack.c.bf16 %v985, %v984
        %v988 = vunpack.c.l.b16 %v986
        %v989 = vunpack.c.h.b16 %v986
        %v990 = vpack.c.b16 %v988, %v988
        %v991 = vpack.c.b16 %v989, %v989
        %s994 = smul.u32 %s858, 2
        %s995 = smul.addr %s994, 4
        %s996 = scalar_lea.vmem %s389, %s995
        %997 = vst [vmem:[%s996] sm:$0xf] %v990
        %998 = vst [vmem:[%s996 + $0x4] sm:$0xf] %v991
        %s999 = smul.u32 %s438, 3
        %s1000 = sadd.s32 %s436, %s999
        %s1001 = smul.u32 %s1000, 6
        %s1002 = smul.addr %s1001, 8
        %s1003 = scalar_lea.vmem %s321, %s1002 [#allocation3]
        %v1004 = vld [vmem:[%s1003] sm:$0xff]
        %v1005 = vld [vmem:[%s1003 + $0x8] sm:$0xff]
        %v1006 = vld [vmem:[%s1003 + $0x10] sm:$0xff]
        %v1007 = vld [vmem:[%s1003 + $0x18] sm:$0xff]
        %v1008 = vld [vmem:[%s1003 + $0x20] sm:$0xff]
        %v1009 = vld [vmem:[%s1003 + $0x28] sm:$0xff]
        %1010 = vmatprep.subr.bf16.mxu0 %v532
        %1011 = vmatpush1.bf16.msra.mxu0 %v531
        %1012 = vmatprep.subr.bf16.mxu0 %v535
        %1013 = vmatpush1.bf16.msra.mxu0 %v534
        %1014 = vmatprep.subr.bf16.mxu0 %v538
        %1015 = vmatpush1.bf16.msra.mxu0 %v537
        %1016 = vmatprep.subr.bf16.mxu0 %v541
        %1017 = vmatpush1.bf16.msra.mxu0 %v540
        %1018 = vmatprep.subr.bf16.mxu0 %v544
        %1019 = vmatpush1.bf16.msra.mxu0 %v543
        %1020 = vmatprep.subr.bf16.mxu0 %v547
        %1021 = vmatpush1.bf16.msra.mxu0 %v546
        %1022 = vmatprep.subr.bf16.mxu0 %v550
        %1023 = vmatpush1.bf16.msra.mxu0 %v549
        %1024 = vmatprep.subr.bf16.mxu0 %v553
        %1025 = vmatpush1.bf16.msra.mxu0 %v552
        %1026 = vmatprep.subr.bf16.mxu0 0
        %1027 = vmatpush1.bf16.msra.mxu0 0
        %1028 = vmatprep.subr.bf16.mxu0 0
        %1029 = vmatpush1.bf16.msra.mxu0 0
        %1030 = vmatprep.subr.bf16.mxu0 0
        %1031 = vmatpush1.bf16.msra.mxu0 0
        %1032 = vmatprep.subr.bf16.mxu0 0
        %1033 = vmatpush1.bf16.msra.mxu0 0
        %1034 = vmatprep.subr.bf16.mxu0 0
        %1035 = vmatpush1.bf16.msra.mxu0 0
        %1036 = vmatprep.subr.bf16.mxu0 0
        %1037 = vmatpush1.bf16.msra.mxu0 0
        %1038 = vmatprep.subr.bf16.mxu0 0
        %1039 = vmatpush1.bf16.msra.mxu0 0
        %1040 = vmatprep.subr.bf16.mxu0 0
        %1041 = vmatpush1.bf16.msra.mxu0 0
        %1042 = vmatprep.mubr.bf16.mxu0 0
        %1043 = vmatmul.mubr.bf16.gmra.mrb[0].mxu0 %v986
        %v1044 = vpop.f32.mrb[0].mxu0
        %v1045 = vadd.f32 0.0, %v1044
        %v1046 = vpop.f32.mrb[0].mxu0
        %v1047 = vadd.f32 0.0, %v1046
        %v1048 = vpop.f32.mrb[0].mxu0
        %v1049 = vadd.f32 0.0, %v1048
        %v1050 = vpop.f32.mrb[0].mxu0
        %v1051 = vadd.f32 0.0, %v1050
        %1052 = vdwg.mxu0
        %1053 = vmatprep.subr.bf16.mxu0 0
        %1054 = vmatpush1.bf16.msra.mxu0 %v533
        %1055 = vmatprep.subr.bf16.mxu0 0
        %1056 = vmatpush1.bf16.msra.mxu0 %v536
        %1057 = vmatprep.subr.bf16.mxu0 0
        %1058 = vmatpush1.bf16.msra.mxu0 %v539
        %1059 = vmatprep.subr.bf16.mxu0 0
        %1060 = vmatpush1.bf16.msra.mxu0 %v542
        %1061 = vmatprep.subr.bf16.mxu0 0
        %1062 = vmatpush1.bf16.msra.mxu0 %v545
        %1063 = vmatprep.subr.bf16.mxu0 0
        %1064 = vmatpush1.bf16.msra.mxu0 %v548
        %1065 = vmatprep.subr.bf16.mxu0 0
        %1066 = vmatpush1.bf16.msra.mxu0 %v551
        %1067 = vmatprep.subr.bf16.mxu0 0
        %1068 = vmatpush1.bf16.msra.mxu0 %v554
        %1069 = vmatprep.subr.bf16.mxu0 0
        %1070 = vmatpush1.bf16.msra.mxu0 0
        %1071 = vmatprep.subr.bf16.mxu0 0
        %1072 = vmatpush1.bf16.msra.mxu0 0
        %1073 = vmatprep.subr.bf16.mxu0 0
        %1074 = vmatpush1.bf16.msra.mxu0 0
        %1075 = vmatprep.subr.bf16.mxu0 0
        %1076 = vmatpush1.bf16.msra.mxu0 0
        %1077 = vmatprep.subr.bf16.mxu0 0
        %1078 = vmatpush1.bf16.msra.mxu0 0
        %1079 = vmatprep.subr.bf16.mxu0 0
        %1080 = vmatpush1.bf16.msra.mxu0 0
        %1081 = vmatprep.subr.bf16.mxu0 0
        %1082 = vmatpush1.bf16.msra.mxu0 0
        %1083 = vmatprep.subr.bf16.mxu0 0
        %1084 = vmatpush1.bf16.msra.mxu0 0
        %1085 = vmatprep.mubr.bf16.mxu0 0
        %1086 = vmatmul.mubr.bf16.gmra.mrb[0].mxu0 %v986
        %v1087 = vpop.f32.mrb[0].mxu0
        %v1088 = vadd.f32 0.0, %v1087
        %v1089 = vpop.f32.mrb[0].mxu0
        %v1090 = vpop.f32.mrb[0].mxu0
        %v1091 = vadd.f32 0.0, %v1090
        %v1092 = vpop.f32.mrb[0].mxu0
        %1093 = vdwg.mxu0
        %v1094 = vadd.f32 %v1004, %v1045
        %v1095 = vadd.f32 %v1005, %v1047
        %v1096 = vadd.f32 %v1007, %v1049
        %v1097 = vadd.f32 %v1008, %v1051
        %v1098 = vmul.f32 %v1094, 0.5
        %v1099 = vmul.f32 %v1095, 0.5
        %v1100 = vmul.f32 %v1096, 0.5
        %v1101 = vmul.f32 %v1097, 0.5
        %v1102 = vtanh.pop %v1098
        %v1103 = vtanh.pop %v1099
        %v1104 = vtanh.pop %v1100
        %v1105 = vtanh.pop %v1101
        %v1106 = vadd.f32 %v1102, 1.0
        %v1107 = vadd.f32 %v1103, 1.0
        %v1108 = vadd.f32 %v1104, 1.0
        %v1109 = vadd.f32 %v1105, 1.0
        %v1110 = vmul.f32 %v1106, 0.5
        %v1111 = vmul.f32 %v1107, 0.5
        %v1112 = vmul.f32 %v1108, 0.5
        %v1113 = vmul.f32 %v1109, 0.5
        %v1114 = vadd.f32 %v1088, %v687
        %v1115 = vadd.f32 %v1091, %v687
        %v1116 = vmul.f32 %v1110, %v1114
        %v1117 = vmul.f32 %v1112, %v1115
        %v1118 = vadd.f32 %v1006, %v1116
        %v1119 = vadd.f32 %v1009, %v1117
        %v1120 = vtanh.pop %v1118
        %v1121 = vtanh.pop %v1119
        %v1122 = vsub.f32 %v984, %v1120
        %v1123 = vsub.f32 %v985, %v1121
        %v1124 = vmul.f32 %v1111, %v1122
        %v1125 = vmul.f32 %v1113, %v1123
        %v1126 = vadd.f32 %v1120, %v1124
        %v1127 = vadd.f32 %v1121, %v1125
        %v1128 = vpack.c.bf16 %v1127, %v1126
        %v1130 = vunpack.c.l.b16 %v1128
        %v1131 = vunpack.c.h.b16 %v1128
        %v1132 = vpack.c.b16 %v1130, %v1130
        %v1133 = vpack.c.b16 %v1131, %v1131
        %s1136 = smul.u32 %s1000, 2
        %s1137 = smul.addr %s1136, 4
        %s1138 = scalar_lea.vmem %s389, %s1137
        %1139 = vst [vmem:[%s1138] sm:$0xf] %v1132
        %1140 = vst [vmem:[%s1138 + $0x4] sm:$0xf] %v1133
        %s1141 = smul.u32 %s438, 4
        %s1142 = sadd.s32 %s436, %s1141
        %s1143 = smul.u32 %s1142, 6
        %s1144 = smul.addr %s1143, 8
        %s1145 = scalar_lea.vmem %s321, %s1144 [#allocation3]
        %v1146 = vld [vmem:[%s1145] sm:$0xff]
        %v1147 = vld [vmem:[%s1145 + $0x8] sm:$0xff]
        %v1148 = vld [vmem:[%s1145 + $0x10] sm:$0xff]
        %v1149 = vld [vmem:[%s1145 + $0x18] sm:$0xff]
        %v1150 = vld [vmem:[%s1145 + $0x20] sm:$0xff]
        %v1151 = vld [vmem:[%s1145 + $0x28] sm:$0xff]
        %1152 = vmatprep.subr.bf16.mxu0 %v532
        %1153 = vmatpush1.bf16.msra.mxu0 %v531
        %1154 = vmatprep.subr.bf16.mxu0 %v535
        %1155 = vmatpush1.bf16.msra.mxu0 %v534
        %1156 = vmatprep.subr.bf16.mxu0 %v538
        %1157 = vmatpush1.bf16.msra.mxu0 %v537
        %1158 = vmatprep.subr.bf16.mxu0 %v541
        %1159 = vmatpush1.bf16.msra.mxu0 %v540
        %1160 = vmatprep.subr.bf16.mxu0 %v544
        %1161 = vmatpush1.bf16.msra.mxu0 %v543
        %1162 = vmatprep.subr.bf16.mxu0 %v547
        %1163 = vmatpush1.bf16.msra.mxu0 %v546
        %1164 = vmatprep.subr.bf16.mxu0 %v550
        %1165 = vmatpush1.bf16.msra.mxu0 %v549
        %1166 = vmatprep.subr.bf16.mxu0 %v553
        %1167 = vmatpush1.bf16.msra.mxu0 %v552
        %1168 = vmatprep.subr.bf16.mxu0 0
        %1169 = vmatpush1.bf16.msra.mxu0 0
        %1170 = vmatprep.subr.bf16.mxu0 0
        %1171 = vmatpush1.bf16.msra.mxu0 0
        %1172 = vmatprep.subr.bf16.mxu0 0
        %1173 = vmatpush1.bf16.msra.mxu0 0
        %1174 = vmatprep.subr.bf16.mxu0 0
        %1175 = vmatpush1.bf16.msra.mxu0 0
        %1176 = vmatprep.subr.bf16.mxu0 0
        %1177 = vmatpush1.bf16.msra.mxu0 0
        %1178 = vmatprep.subr.bf16.mxu0 0
        %1179 = vmatpush1.bf16.msra.mxu0 0
        %1180 = vmatprep.subr.bf16.mxu0 0
        %1181 = vmatpush1.bf16.msra.mxu0 0
        %1182 = vmatprep.subr.bf16.mxu0 0
        %1183 = vmatpush1.bf16.msra.mxu0 0
        %1184 = vmatprep.mubr.bf16.mxu0 0
        %1185 = vmatmul.mubr.bf16.gmra.mrb[0].mxu0 %v1128
        %v1186 = vpop.f32.mrb[0].mxu0
        %v1187 = vadd.f32 0.0, %v1186
        %v1188 = vpop.f32.mrb[0].mxu0
        %v1189 = vadd.f32 0.0, %v1188
        %v1190 = vpop.f32.mrb[0].mxu0
        %v1191 = vadd.f32 0.0, %v1190
        %v1192 = vpop.f32.mrb[0].mxu0
        %v1193 = vadd.f32 0.0, %v1192
        %1194 = vdwg.mxu0
        %1195 = vmatprep.subr.bf16.mxu0 0
        %1196 = vmatpush1.bf16.msra.mxu0 %v533
        %1197 = vmatprep.subr.bf16.mxu0 0
        %1198 = vmatpush1.bf16.msra.mxu0 %v536
        %1199 = vmatprep.subr.bf16.mxu0 0
        %1200 = vmatpush1.bf16.msra.mxu0 %v539
        %1201 = vmatprep.subr.bf16.mxu0 0
        %1202 = vmatpush1.bf16.msra.mxu0 %v542
        %1203 = vmatprep.subr.bf16.mxu0 0
        %1204 = vmatpush1.bf16.msra.mxu0 %v545
        %1205 = vmatprep.subr.bf16.mxu0 0
        %1206 = vmatpush1.bf16.msra.mxu0 %v548
        %1207 = vmatprep.subr.bf16.mxu0 0
        %1208 = vmatpush1.bf16.msra.mxu0 %v551
        %1209 = vmatprep.subr.bf16.mxu0 0
        %1210 = vmatpush1.bf16.msra.mxu0 %v554
        %1211 = vmatprep.subr.bf16.mxu0 0
        %1212 = vmatpush1.bf16.msra.mxu0 0
        %1213 = vmatprep.subr.bf16.mxu0 0
        %1214 = vmatpush1.bf16.msra.mxu0 0
        %1215 = vmatprep.subr.bf16.mxu0 0
        %1216 = vmatpush1.bf16.msra.mxu0 0
        %1217 = vmatprep.subr.bf16.mxu0 0
        %1218 = vmatpush1.bf16.msra.mxu0 0
        %1219 = vmatprep.subr.bf16.mxu0 0
        %1220 = vmatpush1.bf16.msra.mxu0 0
        %1221 = vmatprep.subr.bf16.mxu0 0
        %1222 = vmatpush1.bf16.msra.mxu0 0
        %1223 = vmatprep.subr.bf16.mxu0 0
        %1224 = vmatpush1.bf16.msra.mxu0 0
        %1225 = vmatprep.subr.bf16.mxu0 0
        %1226 = vmatpush1.bf16.msra.mxu0 0
        %1227 = vmatprep.mubr.bf16.mxu0 0
        %1228 = vmatmul.mubr.bf16.gmra.mrb[0].mxu0 %v1128
        %v1229 = vpop.f32.mrb[0].mxu0
        %v1230 = vadd.f32 0.0, %v1229
        %v1231 = vpop.f32.mrb[0].mxu0
        %v1232 = vpop.f32.mrb[0].mxu0
        %v1233 = vadd.f32 0.0, %v1232
        %v1234 = vpop.f32.mrb[0].mxu0
        %1235 = vdwg.mxu0
        %v1236 = vadd.f32 %v1146, %v1187
        %v1237 = vadd.f32 %v1147, %v1189
        %v1238 = vadd.f32 %v1149, %v1191
        %v1239 = vadd.f32 %v1150, %v1193
        %v1240 = vmul.f32 %v1236, 0.5
        %v1241 = vmul.f32 %v1237, 0.5
        %v1242 = vmul.f32 %v1238, 0.5
        %v1243 = vmul.f32 %v1239, 0.5
        %v1244 = vtanh.pop %v1240
        %v1245 = vtanh.pop %v1241
        %v1246 = vtanh.pop %v1242
        %v1247 = vtanh.pop %v1243
        %v1248 = vadd.f32 %v1244, 1.0
        %v1249 = vadd.f32 %v1245, 1.0
        %v1250 = vadd.f32 %v1246, 1.0
        %v1251 = vadd.f32 %v1247, 1.0
        %v1252 = vmul.f32 %v1248, 0.5
        %v1253 = vmul.f32 %v1249, 0.5
        %v1254 = vmul.f32 %v1250, 0.5
        %v1255 = vmul.f32 %v1251, 0.5
        %v1256 = vadd.f32 %v1230, %v687
        %v1257 = vadd.f32 %v1233, %v687
        %v1258 = vmul.f32 %v1252, %v1256
        %v1259 = vmul.f32 %v1254, %v1257
        %v1260 = vadd.f32 %v1148, %v1258
        %v1261 = vadd.f32 %v1151, %v1259
        %v1262 = vtanh.pop %v1260
        %v1263 = vtanh.pop %v1261
        %v1264 = vsub.f32 %v1126, %v1262
        %v1265 = vsub.f32 %v1127, %v1263
        %v1266 = vmul.f32 %v1253, %v1264
        %v1267 = vmul.f32 %v1255, %v1265
        %v1268 = vadd.f32 %v1262, %v1266
        %v1269 = vadd.f32 %v1263, %v1267
        %v1270 = vpack.c.bf16 %v1269, %v1268
        %v1272 = vunpack.c.l.b16 %v1270
        %v1273 = vunpack.c.h.b16 %v1270
        %v1274 = vpack.c.b16 %v1272, %v1272
        %v1275 = vpack.c.b16 %v1273, %v1273
        %s1278 = smul.u32 %s1142, 2
        %s1279 = smul.addr %s1278, 4
        %s1280 = scalar_lea.vmem %s389, %s1279
        %1281 = vst [vmem:[%s1280] sm:$0xf] %v1274
        %1282 = vst [vmem:[%s1280 + $0x4] sm:$0xf] %v1275
        %s1283 = smul.u32 %s438, 5
        %s1284 = sadd.s32 %s436, %s1283
        %s1285 = smul.u32 %s1284, 6
        %s1286 = smul.addr %s1285, 8
        %s1287 = scalar_lea.vmem %s321, %s1286 [#allocation3]
        %v1288 = vld [vmem:[%s1287] sm:$0xff]
        %v1289 = vld [vmem:[%s1287 + $0x8] sm:$0xff]
        %v1290 = vld [vmem:[%s1287 + $0x10] sm:$0xff]
        %v1291 = vld [vmem:[%s1287 + $0x18] sm:$0xff]
        %v1292 = vld [vmem:[%s1287 + $0x20] sm:$0xff]
        %v1293 = vld [vmem:[%s1287 + $0x28] sm:$0xff]
        %1294 = vmatprep.subr.bf16.mxu0 %v532
        %1295 = vmatpush1.bf16.msra.mxu0 %v531
        %1296 = vmatprep.subr.bf16.mxu0 %v535
        %1297 = vmatpush1.bf16.msra.mxu0 %v534
        %1298 = vmatprep.subr.bf16.mxu0 %v538
        %1299 = vmatpush1.bf16.msra.mxu0 %v537
        %1300 = vmatprep.subr.bf16.mxu0 %v541
        %1301 = vmatpush1.bf16.msra.mxu0 %v540
        %1302 = vmatprep.subr.bf16.mxu0 %v544
        %1303 = vmatpush1.bf16.msra.mxu0 %v543
        %1304 = vmatprep.subr.bf16.mxu0 %v547
        %1305 = vmatpush1.bf16.msra.mxu0 %v546
        %1306 = vmatprep.subr.bf16.mxu0 %v550
        %1307 = vmatpush1.bf16.msra.mxu0 %v549
        %1308 = vmatprep.subr.bf16.mxu0 %v553
        %1309 = vmatpush1.bf16.msra.mxu0 %v552
        %1310 = vmatprep.subr.bf16.mxu0 0
        %1311 = vmatpush1.bf16.msra.mxu0 0
        %1312 = vmatprep.subr.bf16.mxu0 0
        %1313 = vmatpush1.bf16.msra.mxu0 0
        %1314 = vmatprep.subr.bf16.mxu0 0
        %1315 = vmatpush1.bf16.msra.mxu0 0
        %1316 = vmatprep.subr.bf16.mxu0 0
        %1317 = vmatpush1.bf16.msra.mxu0 0
        %1318 = vmatprep.subr.bf16.mxu0 0
        %1319 = vmatpush1.bf16.msra.mxu0 0
        %1320 = vmatprep.subr.bf16.mxu0 0
        %1321 = vmatpush1.bf16.msra.mxu0 0
        %1322 = vmatprep.subr.bf16.mxu0 0
        %1323 = vmatpush1.bf16.msra.mxu0 0
        %1324 = vmatprep.subr.bf16.mxu0 0
        %1325 = vmatpush1.bf16.msra.mxu0 0
        %1326 = vmatprep.mubr.bf16.mxu0 0
        %1327 = vmatmul.mubr.bf16.gmra.mrb[0].mxu0 %v1270
        %v1328 = vpop.f32.mrb[0].mxu0
        %v1329 = vadd.f32 0.0, %v1328
        %v1330 = vpop.f32.mrb[0].mxu0
        %v1331 = vadd.f32 0.0, %v1330
        %v1332 = vpop.f32.mrb[0].mxu0
        %v1333 = vadd.f32 0.0, %v1332
        %v1334 = vpop.f32.mrb[0].mxu0
        %v1335 = vadd.f32 0.0, %v1334
        %1336 = vdwg.mxu0
        %1337 = vmatprep.subr.bf16.mxu0 0
        %1338 = vmatpush1.bf16.msra.mxu0 %v533
        %1339 = vmatprep.subr.bf16.mxu0 0
        %1340 = vmatpush1.bf16.msra.mxu0 %v536
        %1341 = vmatprep.subr.bf16.mxu0 0
        %1342 = vmatpush1.bf16.msra.mxu0 %v539
        %1343 = vmatprep.subr.bf16.mxu0 0
        %1344 = vmatpush1.bf16.msra.mxu0 %v542
        %1345 = vmatprep.subr.bf16.mxu0 0
        %1346 = vmatpush1.bf16.msra.mxu0 %v545
        %1347 = vmatprep.subr.bf16.mxu0 0
        %1348 = vmatpush1.bf16.msra.mxu0 %v548
        %1349 = vmatprep.subr.bf16.mxu0 0
        %1350 = vmatpush1.bf16.msra.mxu0 %v551
        %1351 = vmatprep.subr.bf16.mxu0 0
        %1352 = vmatpush1.bf16.msra.mxu0 %v554
        %1353 = vmatprep.subr.bf16.mxu0 0
        %1354 = vmatpush1.bf16.msra.mxu0 0
        %1355 = vmatprep.subr.bf16.mxu0 0
        %1356 = vmatpush1.bf16.msra.mxu0 0
        %1357 = vmatprep.subr.bf16.mxu0 0
        %1358 = vmatpush1.bf16.msra.mxu0 0
        %1359 = vmatprep.subr.bf16.mxu0 0
        %1360 = vmatpush1.bf16.msra.mxu0 0
        %1361 = vmatprep.subr.bf16.mxu0 0
        %1362 = vmatpush1.bf16.msra.mxu0 0
        %1363 = vmatprep.subr.bf16.mxu0 0
        %1364 = vmatpush1.bf16.msra.mxu0 0
        %1365 = vmatprep.subr.bf16.mxu0 0
        %1366 = vmatpush1.bf16.msra.mxu0 0
        %1367 = vmatprep.subr.bf16.mxu0 0
        %1368 = vmatpush1.bf16.msra.mxu0 0
        %1369 = vmatprep.mubr.bf16.mxu0 0
        %1370 = vmatmul.mubr.bf16.gmra.mrb[0].mxu0 %v1270
        %v1371 = vpop.f32.mrb[0].mxu0
        %v1372 = vadd.f32 0.0, %v1371
        %v1373 = vpop.f32.mrb[0].mxu0
        %v1374 = vpop.f32.mrb[0].mxu0
        %v1375 = vadd.f32 0.0, %v1374
        %v1376 = vpop.f32.mrb[0].mxu0
        %1377 = vdwg.mxu0
        %v1378 = vadd.f32 %v1288, %v1329
        %v1379 = vadd.f32 %v1289, %v1331
        %v1380 = vadd.f32 %v1291, %v1333
        %v1381 = vadd.f32 %v1292, %v1335
        %v1382 = vmul.f32 %v1378, 0.5
        %v1383 = vmul.f32 %v1379, 0.5
        %v1384 = vmul.f32 %v1380, 0.5
        %v1385 = vmul.f32 %v1381, 0.5
        %v1386 = vtanh.pop %v1382
        %v1387 = vtanh.pop %v1383
        %v1388 = vtanh.pop %v1384
        %v1389 = vtanh.pop %v1385
        %v1390 = vadd.f32 %v1386, 1.0
        %v1391 = vadd.f32 %v1387, 1.0
        %v1392 = vadd.f32 %v1388, 1.0
        %v1393 = vadd.f32 %v1389, 1.0
        %v1394 = vmul.f32 %v1390, 0.5
        %v1395 = vmul.f32 %v1391, 0.5
        %v1396 = vmul.f32 %v1392, 0.5
        %v1397 = vmul.f32 %v1393, 0.5
        %v1398 = vadd.f32 %v1372, %v687
        %v1399 = vadd.f32 %v1375, %v687
        %v1400 = vmul.f32 %v1394, %v1398
        %v1401 = vmul.f32 %v1396, %v1399
        %v1402 = vadd.f32 %v1290, %v1400
        %v1403 = vadd.f32 %v1293, %v1401
        %v1404 = vtanh.pop %v1402
        %v1405 = vtanh.pop %v1403
        %v1406 = vsub.f32 %v1268, %v1404
        %v1407 = vsub.f32 %v1269, %v1405
        %v1408 = vmul.f32 %v1395, %v1406
        %v1409 = vmul.f32 %v1397, %v1407
        %v1410 = vadd.f32 %v1404, %v1408
        %v1411 = vadd.f32 %v1405, %v1409
        %v1412 = vpack.c.bf16 %v1411, %v1410
        %v1414 = vunpack.c.l.b16 %v1412
        %v1415 = vunpack.c.h.b16 %v1412
        %v1416 = vpack.c.b16 %v1414, %v1414
        %v1417 = vpack.c.b16 %v1415, %v1415
        %s1420 = smul.u32 %s1284, 2
        %s1421 = smul.addr %s1420, 4
        %s1422 = scalar_lea.vmem %s389, %s1421
        %1423 = vst [vmem:[%s1422] sm:$0xf] %v1416
        %1424 = vst [vmem:[%s1422 + $0x4] sm:$0xf] %v1417
        %s1425 = smul.u32 %s438, 6
        %s1426 = sadd.s32 %s436, %s1425
        %s1427 = smul.u32 %s1426, 6
        %s1428 = smul.addr %s1427, 8
        %s1429 = scalar_lea.vmem %s321, %s1428 [#allocation3]
        %v1430 = vld [vmem:[%s1429] sm:$0xff]
        %v1431 = vld [vmem:[%s1429 + $0x8] sm:$0xff]
        %v1432 = vld [vmem:[%s1429 + $0x10] sm:$0xff]
        %v1433 = vld [vmem:[%s1429 + $0x18] sm:$0xff]
        %v1434 = vld [vmem:[%s1429 + $0x20] sm:$0xff]
        %v1435 = vld [vmem:[%s1429 + $0x28] sm:$0xff]
        %1436 = vmatprep.subr.bf16.mxu0 %v532
        %1437 = vmatpush1.bf16.msra.mxu0 %v531
        %1438 = vmatprep.subr.bf16.mxu0 %v535
        %1439 = vmatpush1.bf16.msra.mxu0 %v534
        %1440 = vmatprep.subr.bf16.mxu0 %v538
        %1441 = vmatpush1.bf16.msra.mxu0 %v537
        %1442 = vmatprep.subr.bf16.mxu0 %v541
        %1443 = vmatpush1.bf16.msra.mxu0 %v540
        %1444 = vmatprep.subr.bf16.mxu0 %v544
        %1445 = vmatpush1.bf16.msra.mxu0 %v543
        %1446 = vmatprep.subr.bf16.mxu0 %v547
        %1447 = vmatpush1.bf16.msra.mxu0 %v546
        %1448 = vmatprep.subr.bf16.mxu0 %v550
        %1449 = vmatpush1.bf16.msra.mxu0 %v549
        %1450 = vmatprep.subr.bf16.mxu0 %v553
        %1451 = vmatpush1.bf16.msra.mxu0 %v552
        %1452 = vmatprep.subr.bf16.mxu0 0
        %1453 = vmatpush1.bf16.msra.mxu0 0
        %1454 = vmatprep.subr.bf16.mxu0 0
        %1455 = vmatpush1.bf16.msra.mxu0 0
        %1456 = vmatprep.subr.bf16.mxu0 0
        %1457 = vmatpush1.bf16.msra.mxu0 0
        %1458 = vmatprep.subr.bf16.mxu0 0
        %1459 = vmatpush1.bf16.msra.mxu0 0
        %1460 = vmatprep.subr.bf16.mxu0 0
        %1461 = vmatpush1.bf16.msra.mxu0 0
        %1462 = vmatprep.subr.bf16.mxu0 0
        %1463 = vmatpush1.bf16.msra.mxu0 0
        %1464 = vmatprep.subr.bf16.mxu0 0
        %1465 = vmatpush1.bf16.msra.mxu0 0
        %1466 = vmatprep.subr.bf16.mxu0 0
        %1467 = vmatpush1.bf16.msra.mxu0 0
        %1468 = vmatprep.mubr.bf16.mxu0 0
        %1469 = vmatmul.mubr.bf16.gmra.mrb[0].mxu0 %v1412
        %v1470 = vpop.f32.mrb[0].mxu0
        %v1471 = vadd.f32 0.0, %v1470
        %v1472 = vpop.f32.mrb[0].mxu0
        %v1473 = vadd.f32 0.0, %v1472
        %v1474 = vpop.f32.mrb[0].mxu0
        %v1475 = vadd.f32 0.0, %v1474
        %v1476 = vpop.f32.mrb[0].mxu0
        %v1477 = vadd.f32 0.0, %v1476
        %1478 = vdwg.mxu0
        %1479 = vmatprep.subr.bf16.mxu0 0
        %1480 = vmatpush1.bf16.msra.mxu0 %v533
        %1481 = vmatprep.subr.bf16.mxu0 0
        %1482 = vmatpush1.bf16.msra.mxu0 %v536
        %1483 = vmatprep.subr.bf16.mxu0 0
        %1484 = vmatpush1.bf16.msra.mxu0 %v539
        %1485 = vmatprep.subr.bf16.mxu0 0
        %1486 = vmatpush1.bf16.msra.mxu0 %v542
        %1487 = vmatprep.subr.bf16.mxu0 0
        %1488 = vmatpush1.bf16.msra.mxu0 %v545
        %1489 = vmatprep.subr.bf16.mxu0 0
        %1490 = vmatpush1.bf16.msra.mxu0 %v548
        %1491 = vmatprep.subr.bf16.mxu0 0
        %1492 = vmatpush1.bf16.msra.mxu0 %v551
        %1493 = vmatprep.subr.bf16.mxu0 0
        %1494 = vmatpush1.bf16.msra.mxu0 %v554
        %1495 = vmatprep.subr.bf16.mxu0 0
        %1496 = vmatpush1.bf16.msra.mxu0 0
        %1497 = vmatprep.subr.bf16.mxu0 0
        %1498 = vmatpush1.bf16.msra.mxu0 0
        %1499 = vmatprep.subr.bf16.mxu0 0
        %1500 = vmatpush1.bf16.msra.mxu0 0
        %1501 = vmatprep.subr.bf16.mxu0 0
        %1502 = vmatpush1.bf16.msra.mxu0 0
        %1503 = vmatprep.subr.bf16.mxu0 0
        %1504 = vmatpush1.bf16.msra.mxu0 0
        %1505 = vmatprep.subr.bf16.mxu0 0
        %1506 = vmatpush1.bf16.msra.mxu0 0
        %1507 = vmatprep.subr.bf16.mxu0 0
        %1508 = vmatpush1.bf16.msra.mxu0 0
        %1509 = vmatprep.subr.bf16.mxu0 0
        %1510 = vmatpush1.bf16.msra.mxu0 0
        %1511 = vmatprep.mubr.bf16.mxu0 0
        %1512 = vmatmul.mubr.bf16.gmra.mrb[0].mxu0 %v1412
        %v1513 = vpop.f32.mrb[0].mxu0
        %v1514 = vadd.f32 0.0, %v1513
        %v1515 = vpop.f32.mrb[0].mxu0
        %v1516 = vpop.f32.mrb[0].mxu0
        %v1517 = vadd.f32 0.0, %v1516
        %v1518 = vpop.f32.mrb[0].mxu0
        %1519 = vdwg.mxu0
        %v1520 = vadd.f32 %v1430, %v1471
        %v1521 = vadd.f32 %v1431, %v1473
        %v1522 = vadd.f32 %v1433, %v1475
        %v1523 = vadd.f32 %v1434, %v1477
        %v1524 = vmul.f32 %v1520, 0.5
        %v1525 = vmul.f32 %v1521, 0.5
        %v1526 = vmul.f32 %v1522, 0.5
        %v1527 = vmul.f32 %v1523, 0.5
        %v1528 = vtanh.pop %v1524
        %v1529 = vtanh.pop %v1525
        %v1530 = vtanh.pop %v1526
        %v1531 = vtanh.pop %v1527
        %v1532 = vadd.f32 %v1528, 1.0
        %v1533 = vadd.f32 %v1529, 1.0
        %v1534 = vadd.f32 %v1530, 1.0
        %v1535 = vadd.f32 %v1531, 1.0
        %v1536 = vmul.f32 %v1532, 0.5
        %v1537 = vmul.f32 %v1533, 0.5
        %v1538 = vmul.f32 %v1534, 0.5
        %v1539 = vmul.f32 %v1535, 0.5
        %v1540 = vadd.f32 %v1514, %v687
        %v1541 = vadd.f32 %v1517, %v687
        %v1542 = vmul.f32 %v1536, %v1540
        %v1543 = vmul.f32 %v1538, %v1541
        %v1544 = vadd.f32 %v1432, %v1542
        %v1545 = vadd.f32 %v1435, %v1543
        %v1546 = vtanh.pop %v1544
        %v1547 = vtanh.pop %v1545
        %v1548 = vsub.f32 %v1410, %v1546
        %v1549 = vsub.f32 %v1411, %v1547
        %v1550 = vmul.f32 %v1537, %v1548
        %v1551 = vmul.f32 %v1539, %v1549
        %v1552 = vadd.f32 %v1546, %v1550
        %v1553 = vadd.f32 %v1547, %v1551
        %v1554 = vpack.c.bf16 %v1553, %v1552
        %v1556 = vunpack.c.l.b16 %v1554
        %v1557 = vunpack.c.h.b16 %v1554
        %v1558 = vpack.c.b16 %v1556, %v1556
        %v1559 = vpack.c.b16 %v1557, %v1557
        %s1562 = smul.u32 %s1426, 2
        %s1563 = smul.addr %s1562, 4
        %s1564 = scalar_lea.vmem %s389, %s1563
        %1565 = vst [vmem:[%s1564] sm:$0xf] %v1558
        %1566 = vst [vmem:[%s1564 + $0x4] sm:$0xf] %v1559
        %s1567 = smul.u32 %s438, 7
        %s1568 = sadd.s32 %s436, %s1567
        %s1569 = smul.u32 %s1568, 6
        %s1570 = smul.addr %s1569, 8
        %s1571 = scalar_lea.vmem %s321, %s1570 [#allocation3]
        %v1572 = vld [vmem:[%s1571] sm:$0xff]
        %v1573 = vld [vmem:[%s1571 + $0x8] sm:$0xff]
        %v1574 = vld [vmem:[%s1571 + $0x10] sm:$0xff]
        %v1575 = vld [vmem:[%s1571 + $0x18] sm:$0xff]
        %v1576 = vld [vmem:[%s1571 + $0x20] sm:$0xff]
        %v1577 = vld [vmem:[%s1571 + $0x28] sm:$0xff]
        %1578 = vmatprep.subr.bf16.mxu0 %v532
        %1579 = vmatpush1.bf16.msra.mxu0 %v531
        %1580 = vmatprep.subr.bf16.mxu0 %v535
        %1581 = vmatpush1.bf16.msra.mxu0 %v534
        %1582 = vmatprep.subr.bf16.mxu0 %v538
        %1583 = vmatpush1.bf16.msra.mxu0 %v537
        %1584 = vmatprep.subr.bf16.mxu0 %v541
        %1585 = vmatpush1.bf16.msra.mxu0 %v540
        %1586 = vmatprep.subr.bf16.mxu0 %v544
        %1587 = vmatpush1.bf16.msra.mxu0 %v543
        %1588 = vmatprep.subr.bf16.mxu0 %v547
        %1589 = vmatpush1.bf16.msra.mxu0 %v546
        %1590 = vmatprep.subr.bf16.mxu0 %v550
        %1591 = vmatpush1.bf16.msra.mxu0 %v549
        %1592 = vmatprep.subr.bf16.mxu0 %v553
        %1593 = vmatpush1.bf16.msra.mxu0 %v552
        %1594 = vmatprep.subr.bf16.mxu0 0
        %1595 = vmatpush1.bf16.msra.mxu0 0
        %1596 = vmatprep.subr.bf16.mxu0 0
        %1597 = vmatpush1.bf16.msra.mxu0 0
        %1598 = vmatprep.subr.bf16.mxu0 0
        %1599 = vmatpush1.bf16.msra.mxu0 0
        %1600 = vmatprep.subr.bf16.mxu0 0
        %1601 = vmatpush1.bf16.msra.mxu0 0
        %1602 = vmatprep.subr.bf16.mxu0 0
        %1603 = vmatpush1.bf16.msra.mxu0 0
        %1604 = vmatprep.subr.bf16.mxu0 0
        %1605 = vmatpush1.bf16.msra.mxu0 0
        %1606 = vmatprep.subr.bf16.mxu0 0
        %1607 = vmatpush1.bf16.msra.mxu0 0
        %1608 = vmatprep.subr.bf16.mxu0 0
        %1609 = vmatpush1.bf16.msra.mxu0 0
        %1610 = vmatprep.mubr.bf16.mxu0 0
        %1611 = vmatmul.mubr.bf16.gmra.mrb[0].mxu0 %v1554
        %v1612 = vpop.f32.mrb[0].mxu0
        %v1613 = vadd.f32 0.0, %v1612
        %v1614 = vpop.f32.mrb[0].mxu0
        %v1615 = vadd.f32 0.0, %v1614
        %v1616 = vpop.f32.mrb[0].mxu0
        %v1617 = vadd.f32 0.0, %v1616
        %v1618 = vpop.f32.mrb[0].mxu0
        %v1619 = vadd.f32 0.0, %v1618
        %1620 = vdwg.mxu0
        %1621 = vmatprep.subr.bf16.mxu0 0
        %1622 = vmatpush1.bf16.msra.mxu0 %v533
        %1623 = vmatprep.subr.bf16.mxu0 0
        %1624 = vmatpush1.bf16.msra.mxu0 %v536
        %1625 = vmatprep.subr.bf16.mxu0 0
        %1626 = vmatpush1.bf16.msra.mxu0 %v539
        %1627 = vmatprep.subr.bf16.mxu0 0
        %1628 = vmatpush1.bf16.msra.mxu0 %v542
        %1629 = vmatprep.subr.bf16.mxu0 0
        %1630 = vmatpush1.bf16.msra.mxu0 %v545
        %1631 = vmatprep.subr.bf16.mxu0 0
        %1632 = vmatpush1.bf16.msra.mxu0 %v548
        %1633 = vmatprep.subr.bf16.mxu0 0
        %1634 = vmatpush1.bf16.msra.mxu0 %v551
        %1635 = vmatprep.subr.bf16.mxu0 0
        %1636 = vmatpush1.bf16.msra.mxu0 %v554
        %1637 = vmatprep.subr.bf16.mxu0 0
        %1638 = vmatpush1.bf16.msra.mxu0 0
        %1639 = vmatprep.subr.bf16.mxu0 0
        %1640 = vmatpush1.bf16.msra.mxu0 0
        %1641 = vmatprep.subr.bf16.mxu0 0
        %1642 = vmatpush1.bf16.msra.mxu0 0
        %1643 = vmatprep.subr.bf16.mxu0 0
        %1644 = vmatpush1.bf16.msra.mxu0 0
        %1645 = vmatprep.subr.bf16.mxu0 0
        %1646 = vmatpush1.bf16.msra.mxu0 0
        %1647 = vmatprep.subr.bf16.mxu0 0
        %1648 = vmatpush1.bf16.msra.mxu0 0
        %1649 = vmatprep.subr.bf16.mxu0 0
        %1650 = vmatpush1.bf16.msra.mxu0 0
        %1651 = vmatprep.subr.bf16.mxu0 0
        %1652 = vmatpush1.bf16.msra.mxu0 0
        %1653 = vmatprep.mubr.bf16.mxu0 0
        %1654 = vmatmul.mubr.bf16.gmra.mrb[0].mxu0 %v1554
        %v1655 = vpop.f32.mrb[0].mxu0
        %v1656 = vadd.f32 0.0, %v1655
        %v1657 = vpop.f32.mrb[0].mxu0
        %v1658 = vpop.f32.mrb[0].mxu0
        %v1659 = vadd.f32 0.0, %v1658
        %v1660 = vpop.f32.mrb[0].mxu0
        %1661 = vdwg.mxu0
        %v1662 = vadd.f32 %v1572, %v1613
        %v1663 = vadd.f32 %v1573, %v1615
        %v1664 = vadd.f32 %v1575, %v1617
        %v1665 = vadd.f32 %v1576, %v1619
        %v1666 = vmul.f32 %v1662, 0.5
        %v1667 = vmul.f32 %v1663, 0.5
        %v1668 = vmul.f32 %v1664, 0.5
        %v1669 = vmul.f32 %v1665, 0.5
        %v1670 = vtanh.pop %v1666
        %v1671 = vtanh.pop %v1667
        %v1672 = vtanh.pop %v1668
        %v1673 = vtanh.pop %v1669
        %v1674 = vadd.f32 %v1670, 1.0
        %v1675 = vadd.f32 %v1671, 1.0
        %v1676 = vadd.f32 %v1672, 1.0
        %v1677 = vadd.f32 %v1673, 1.0
        %v1678 = vmul.f32 %v1674, 0.5
        %v1679 = vmul.f32 %v1675, 0.5
        %v1680 = vmul.f32 %v1676, 0.5
        %v1681 = vmul.f32 %v1677, 0.5
        %v1682 = vadd.f32 %v1656, %v687
        %v1683 = vadd.f32 %v1659, %v687
        %v1684 = vmul.f32 %v1678, %v1682
        %v1685 = vmul.f32 %v1680, %v1683
        %v1686 = vadd.f32 %v1574, %v1684
        %v1687 = vadd.f32 %v1577, %v1685
        %v1688 = vtanh.pop %v1686
        %v1689 = vtanh.pop %v1687
        %v1690 = vsub.f32 %v1552, %v1688
        %v1691 = vsub.f32 %v1553, %v1689
        %v1692 = vmul.f32 %v1679, %v1690
        %v1693 = vmul.f32 %v1681, %v1691
        %v1694 = vadd.f32 %v1688, %v1692
        %v1695 = vadd.f32 %v1689, %v1693
        %v1696 = vpack.c.bf16 %v1695, %v1694
        %v1698 = vunpack.c.l.b16 %v1696
        %v1699 = vunpack.c.h.b16 %v1696
        %v1700 = vpack.c.b16 %v1698, %v1698
        %v1701 = vpack.c.b16 %v1699, %v1699
        %s1704 = smul.u32 %s1568, 2
        %s1705 = smul.addr %s1704, 4
        %s1706 = scalar_lea.vmem %s389, %s1705
        %1707 = vst [vmem:[%s1706] sm:$0xf] %v1700
        %1708 = vst [vmem:[%s1706 + $0x4] sm:$0xf] %v1701
        %1709 = vst [vmem:[#allocation2] sm:$0xff] %v1694
        %1710 = vst [vmem:[#allocation2 + $0x8] sm:$0xff] %v1695
        %s1711 = ssub.s32 1, %s18
        %s1712 = smul.u32 %s1711, %s19
        %s1713 = ssub.s32 0, %s19
        %s1714 = smul.u32 %s18, %s1713
        %s1715 = sadd.s32 %s1712, %s1714
        %s1716 = smul.u32 8, %s1715
        %p1717 = scmp.lt.s32.totalorder %s18, 1
        %s1718 = scalar_select %p1717, %s18, 1
        %p1719 = scmp.lt.s32.totalorder %s1716, 7
        %s1720 = scalar_select %p1719, %s1716, 7
        %s1721 = smul.addr %s1720, 2
        %s1722 = smul.addr %s1718, 16
        %s1723 = sadd.s32 %s1721, %s1722
        %s1724 = smul.addr %s1723, 4
        %s1725 = scalar_lea.vmem %s3, %s1724
        // Predicated region
        $region60: #{rnn_forward.6} parent=50 // pred_check
          %p1726 = pneg %p146
        $region61: #{rnn_forward.6} parent=50 // pred_check_branch
          %1728 = sbr.rel (%p1726) target = $region63
        $region62: #{rnn_forward.6} parent=50 // pred_region
          %s1729 = ssub.s32 1, %s18
          %s1730 = smul.u32 %s1729, %s19
          %s1731 = ssub.s32 0, %s19
          %s1732 = smul.u32 %s18, %s1731
          %s1733 = sadd.s32 %s1730, %s1732
          %s1734 = smul.u32 8, %s1733
        $region63: #{rnn_forward.6} parent=50 // pred_fallthru
          _
      $region51: #{rnn_forward.6} parent=5 // pred_fallthru
        _
      %p1735 = scmp.le.s32.totalorder 2, %s9
      // Predicated region
      $region64: #{rnn_forward.6} parent=5 // pred_check
        %p1736 = pneg %p1735
      $region65: #{rnn_forward.6} parent=5 // pred_check_branch
        %1738 = sbr.rel (%p1736) target = $region67
      $region66: #{rnn_forward.6} parent=5 // pred_region
        %s1739 = ssub.s32 %s9, 2
        // Predicated region
        $region68: #{rnn_forward.6} parent=66 // pred_check
          %p1740 = pneg %p152
        $region69: #{rnn_forward.6} parent=66 // pred_check_branch
          %1742 = sbr.rel (%p1740) target = $region71
        $region70: #{rnn_forward.6} parent=66 // pred_region
          %s1743 = ssub.s32 1, %s20
          %s1744 = smul.u32 %s1743, %s21
          %s1745 = ssub.s32 0, %s21
          %s1746 = smul.u32 %s20, %s1745
          %s1747 = sadd.s32 %s1744, %s1746
          %s1748 = smul.u32 8, %s1747
          %p1749 = scmp.lt.s32.totalorder %s20, 1
          %s1750 = scalar_select %p1749, %s20, 1
          %p1751 = scmp.lt.s32.totalorder %s1748, 7
          %s1752 = scalar_select %p1751, %s1748, 7
          %s1753 = smul.addr %s1752, 2
          %s1754 = smul.addr %s1750, 16
          %s1755 = sadd.s32 %s1753, %s1754
          %s1756 = smul.addr %s1755, 4
          %s1757 = scalar_lea.vmem %s3, %s1756
        $region71: #{rnn_forward.6} parent=66 // pred_fallthru
          _
      $region67: #{rnn_forward.6} parent=5 // pred_fallthru
        _
    $region6: #{rnn_forward.6} parent=1 // loop_footer
      %s13 = sadd.s32 1, %s9
    $region7: #{rnn_forward.6} parent=1 // loop_footer_branch
      %8 = sbr.rel target = $region3
    $region8: #{rnn_forward.6} parent=1 // loop_exit
      _

// kernel: rnn_forward.7
$region0: #{rnn_forward.7}
  #allocation0 [shape = 'u32[]', space=smem, size = 0x4, offset = 0x4, fixed_abs, tag = 'smem constant byte address 0x4 - core index']
  #allocation1 [shape = 'u32[144,128]{1,0:T(1,128)}', space=vmem, size = 0x12000, scoped, tag = 'internal scratch']
  %s0 = inlined_call_operand.vmem [shape: bf16[128,128], index: 0, kind: input, shape index: {}]
  %s1 = inlined_call_operand.vmem [shape: bf16[128,128], index: 1, kind: input, shape index: {}]
  %s2 = inlined_call_operand.vmem [shape: bf16[128,768], index: 2, kind: input, shape index: {}]
  %s3 = inlined_call_operand.vmem [shape: bf16[128,768], index: 3, kind: input, shape index: {}]
  %s4 = inlined_call_operand.vmem [shape: f32[1,768], index: 4, kind: input, shape index: {}]
  %s5 = inlined_call_operand.vmem [shape: f32[128,768], index: 5, kind: output, shape index: {}]
  %s6 = sld [smem:[#allocation0]]
  $region30: #{rnn_forward.7} parent=0
    _
  %s8 = ssub.s32 1, %s6
  %s9 = scalar_select 0, %s8, %s6
  // Predicated region
  $region2: #{rnn_forward.7} parent=0 // pred_check
    _
  $region3: #{rnn_forward.7} parent=0 // pred_check_branch
    %11 = sbr.rel (0) target = $region5
  $region4: #{rnn_forward.7} parent=0 // pred_region
    _
  $region5: #{rnn_forward.7} parent=0 // pred_fallthru
    _
  // Predicated region
  $region6: #{rnn_forward.7} parent=0 // pred_check
    _
  $region7: #{rnn_forward.7} parent=0 // pred_check_branch
    %13 = sbr.rel (0) target = $region9
  $region8: #{rnn_forward.7} parent=0 // pred_region
    _
  $region9: #{rnn_forward.7} parent=0 // pred_fallthru
    _
  // Predicated region
  $region10: #{rnn_forward.7} parent=0 // pred_check
    _
  $region11: #{rnn_forward.7} parent=0 // pred_check_branch
    %15 = sbr.rel (0) target = $region13
  $region12: #{rnn_forward.7} parent=0 // pred_region
    _
  $region13: #{rnn_forward.7} parent=0 // pred_fallthru
    _
  // Predicated region
  $region14: #{rnn_forward.7} parent=0 // pred_check
    _
  $region15: #{rnn_forward.7} parent=0 // pred_check_branch
    %17 = sbr.rel (0) target = $region17
  $region16: #{rnn_forward.7} parent=0 // pred_region
    _
  $region17: #{rnn_forward.7} parent=0 // pred_fallthru
    _
  // Predicated region
  $region18: #{rnn_forward.7} parent=0 // pred_check
    _
  $region19: #{rnn_forward.7} parent=0 // pred_check_branch
    %19 = sbr.rel (0) target = $region21
  $region20: #{rnn_forward.7} parent=0 // pred_region
    _
  $region21: #{rnn_forward.7} parent=0 // pred_fallthru
    _
  %v21 = vld [vmem:[%s0] sm:$0xf]
  %v22 = vld [vmem:[%s0 + $0x4] sm:$0xf]
  %v23 = vld [vmem:[%s0 + $0x8] sm:$0xf]
  %v24 = vld [vmem:[%s0 + $0xc] sm:$0xf]
  %v25 = vld [vmem:[%s0 + $0x10] sm:$0xf]
  %v26 = vld [vmem:[%s0 + $0x14] sm:$0xf]
  %v27 = vld [vmem:[%s0 + $0x18] sm:$0xf]
  %v28 = vld [vmem:[%s0 + $0x1c] sm:$0xf]
  %v29 = vld [vmem:[%s0 + $0x20] sm:$0xf]
  %v30 = vld [vmem:[%s0 + $0x24] sm:$0xf]
  %v31 = vld [vmem:[%s0 + $0x28] sm:$0xf]
  %v32 = vld [vmem:[%s0 + $0x2c] sm:$0xf]
  %v33 = vld [vmem:[%s0 + $0x30] sm:$0xf]
  %v34 = vld [vmem:[%s0 + $0x34] sm:$0xf]
  %v35 = vld [vmem:[%s0 + $0x38] sm:$0xf]
  %v36 = vld [vmem:[%s0 + $0x3c] sm:$0xf]
  %v37 = vld [vmem:[%s2] sm:$0xff]
  %v38 = vld [vmem:[%s2 + $0x8] sm:$0xff]
  %v39 = vld [vmem:[%s2 + $0x10] sm:$0xff]
  %v40 = vld [vmem:[%s2 + $0x18] sm:$0xff]
  %v41 = vld [vmem:[%s2 + $0x20] sm:$0xff]
  %v42 = vld [vmem:[%s2 + $0x28] sm:$0xff]
  %v43 = vld [vmem:[%s2 + $0x30] sm:$0xff]
  %v44 = vld [vmem:[%s2 + $0x38] sm:$0xff]
  %v45 = vld [vmem:[%s2 + $0x40] sm:$0xff]
  %v46 = vld [vmem:[%s2 + $0x48] sm:$0xff]
  %v47 = vld [vmem:[%s2 + $0x50] sm:$0xff]
  %v48 = vld [vmem:[%s2 + $0x58] sm:$0xff]
  %v49 = vld [vmem:[%s2 + $0x60] sm:$0xff]
  %v50 = vld [vmem:[%s2 + $0x68] sm:$0xff]
  %v51 = vld [vmem:[%s2 + $0x70] sm:$0xff]
  %v52 = vld [vmem:[%s2 + $0x78] sm:$0xff]
  %v53 = vld [vmem:[%s2 + $0x80] sm:$0xff]
  %v54 = vld [vmem:[%s2 + $0x88] sm:$0xff]
  %v55 = vld [vmem:[%s2 + $0x90] sm:$0xff]
  %v56 = vld [vmem:[%s2 + $0x98] sm:$0xff]
  %v57 = vld [vmem:[%s2 + $0xa0] sm:$0xff]
  %v58 = vld [vmem:[%s2 + $0xa8] sm:$0xff]
  %v59 = vld [vmem:[%s2 + $0xb0] sm:$0xff]
  %v60 = vld [vmem:[%s2 + $0xb8] sm:$0xff]
  %v61 = vld [vmem:[%s2 + $0xc0] sm:$0xff]
  %v62 = vld [vmem:[%s2 + $0xc8] sm:$0xff]
  %v63 = vld [vmem:[%s2 + $0xd0] sm:$0xff]
  %v64 = vld [vmem:[%s2 + $0xd8] sm:$0xff]
  %v65 = vld [vmem:[%s2 + $0xe0] sm:$0xff]
  %v66 = vld [vmem:[%s2 + $0xe8] sm:$0xff]
  %v67 = vld [vmem:[%s2 + $0xf0] sm:$0xff]
  %v68 = vld [vmem:[%s2 + $0xf8] sm:$0xff]
  %v69 = vld [vmem:[%s2 + $0x100] sm:$0xff]
  %v70 = vld [vmem:[%s2 + $0x108] sm:$0xff]
  %v71 = vld [vmem:[%s2 + $0x110] sm:$0xff]
  %v72 = vld [vmem:[%s2 + $0x118] sm:$0xff]
  %v73 = vld [vmem:[%s2 + $0x120] sm:$0xff]
  %v74 = vld [vmem:[%s2 + $0x128] sm:$0xff]
  %v75 = vld [vmem:[%s2 + $0x130] sm:$0xff]
  %v76 = vld [vmem:[%s2 + $0x138] sm:$0xff]
  %v77 = vld [vmem:[%s2 + $0x140] sm:$0xff]
  %v78 = vld [vmem:[%s2 + $0x148] sm:$0xff]
  %v79 = vld [vmem:[%s2 + $0x150] sm:$0xff]
  %v80 = vld [vmem:[%s2 + $0x158] sm:$0xff]
  %v81 = vld [vmem:[%s2 + $0x160] sm:$0xff]
  %v82 = vld [vmem:[%s2 + $0x168] sm:$0xff]
  %v83 = vld [vmem:[%s2 + $0x170] sm:$0xff]
  %v84 = vld [vmem:[%s2 + $0x178] sm:$0xff]
  %v85 = vld [vmem:[%s1] sm:$0xf]
  %v86 = vld [vmem:[%s1 + $0x4] sm:$0xf]
  %v87 = vld [vmem:[%s1 + $0x8] sm:$0xf]
  %v88 = vld [vmem:[%s1 + $0xc] sm:$0xf]
  %v89 = vld [vmem:[%s1 + $0x10] sm:$0xf]
  %v90 = vld [vmem:[%s1 + $0x14] sm:$0xf]
  %v91 = vld [vmem:[%s1 + $0x18] sm:$0xf]
  %v92 = vld [vmem:[%s1 + $0x1c] sm:$0xf]
  %v93 = vld [vmem:[%s1 + $0x20] sm:$0xf]
  %v94 = vld [vmem:[%s1 + $0x24] sm:$0xf]
  %v95 = vld [vmem:[%s1 + $0x28] sm:$0xf]
  %v96 = vld [vmem:[%s1 + $0x2c] sm:$0xf]
  %v97 = vld [vmem:[%s1 + $0x30] sm:$0xf]
  %v98 = vld [vmem:[%s1 + $0x34] sm:$0xf]
  %v99 = vld [vmem:[%s1 + $0x38] sm:$0xf]
  %v100 = vld [vmem:[%s1 + $0x3c] sm:$0xf]
  %v101 = vld [vmem:[%s3] sm:$0xff]
  %v102 = vld [vmem:[%s3 + $0x8] sm:$0xff]
  %v103 = vld [vmem:[%s3 + $0x10] sm:$0xff]
  %v104 = vld [vmem:[%s3 + $0x18] sm:$0xff]
  %v105 = vld [vmem:[%s3 + $0x20] sm:$0xff]
  %v106 = vld [vmem:[%s3 + $0x28] sm:$0xff]
  %v107 = vld [vmem:[%s3 + $0x30] sm:$0xff]
  %v108 = vld [vmem:[%s3 + $0x38] sm:$0xff]
  %v109 = vld [vmem:[%s3 + $0x40] sm:$0xff]
  %v110 = vld [vmem:[%s3 + $0x48] sm:$0xff]
  %v111 = vld [vmem:[%s3 + $0x50] sm:$0xff]
  %v112 = vld [vmem:[%s3 + $0x58] sm:$0xff]
  %v113 = vld [vmem:[%s3 + $0x60] sm:$0xff]
  %v114 = vld [vmem:[%s3 + $0x68] sm:$0xff]
  %v115 = vld [vmem:[%s3 + $0x70] sm:$0xff]
  %v116 = vld [vmem:[%s3 + $0x78] sm:$0xff]
  %v117 = vld [vmem:[%s3 + $0x80] sm:$0xff]
  %v118 = vld [vmem:[%s3 + $0x88] sm:$0xff]
  %v119 = vld [vmem:[%s3 + $0x90] sm:$0xff]
  %v120 = vld [vmem:[%s3 + $0x98] sm:$0xff]
  %v121 = vld [vmem:[%s3 + $0xa0] sm:$0xff]
  %v122 = vld [vmem:[%s3 + $0xa8] sm:$0xff]
  %v123 = vld [vmem:[%s3 + $0xb0] sm:$0xff]
  %v124 = vld [vmem:[%s3 + $0xb8] sm:$0xff]
  %v125 = vld [vmem:[%s3 + $0xc0] sm:$0xff]
  %v126 = vld [vmem:[%s3 + $0xc8] sm:$0xff]
  %v127 = vld [vmem:[%s3 + $0xd0] sm:$0xff]
  %v128 = vld [vmem:[%s3 + $0xd8] sm:$0xff]
  %v129 = vld [vmem:[%s3 + $0xe0] sm:$0xff]
  %v130 = vld [vmem:[%s3 + $0xe8] sm:$0xff]
  %v131 = vld [vmem:[%s3 + $0xf0] sm:$0xff]
  %v132 = vld [vmem:[%s3 + $0xf8] sm:$0xff]
  %v133 = vld [vmem:[%s3 + $0x100] sm:$0xff]
  %v134 = vld [vmem:[%s3 + $0x108] sm:$0xff]
  %v135 = vld [vmem:[%s3 + $0x110] sm:$0xff]
  %v136 = vld [vmem:[%s3 + $0x118] sm:$0xff]
  %v137 = vld [vmem:[%s3 + $0x120] sm:$0xff]
  %v138 = vld [vmem:[%s3 + $0x128] sm:$0xff]
  %v139 = vld [vmem:[%s3 + $0x130] sm:$0xff]
  %v140 = vld [vmem:[%s3 + $0x138] sm:$0xff]
  %v141 = vld [vmem:[%s3 + $0x140] sm:$0xff]
  %v142 = vld [vmem:[%s3 + $0x148] sm:$0xff]
  %v143 = vld [vmem:[%s3 + $0x150] sm:$0xff]
  %v144 = vld [vmem:[%s3 + $0x158] sm:$0xff]
  %v145 = vld [vmem:[%s3 + $0x160] sm:$0xff]
  %v146 = vld [vmem:[%s3 + $0x168] sm:$0xff]
  %v147 = vld [vmem:[%s3 + $0x170] sm:$0xff]
  %v148 = vld [vmem:[%s3 + $0x178] sm:$0xff]
  %v165 = vunpack.c.l.b16 %v85
  %v166 = vunpack.c.l.b16 %v86
  %v167 = vunpack.c.l.b16 %v87
  %v168 = vunpack.c.l.b16 %v88
  %v169 = vunpack.c.l.b16 %v89
  %v170 = vunpack.c.l.b16 %v90
  %v171 = vunpack.c.l.b16 %v91
  %v172 = vunpack.c.l.b16 %v92
  %v173 = vunpack.c.l.b16 %v93
  %v174 = vunpack.c.l.b16 %v94
  %v175 = vunpack.c.l.b16 %v95
  %v176 = vunpack.c.l.b16 %v96
  %v177 = vunpack.c.l.b16 %v97
  %v178 = vunpack.c.l.b16 %v98
  %v179 = vunpack.c.l.b16 %v99
  %v180 = vunpack.c.l.b16 %v100
  %v181 = vpack.c.b16 %v166, %v165
  %v182 = vpack.c.b16 %v168, %v167
  %v183 = vpack.c.b16 %v170, %v169
  %v184 = vpack.c.b16 %v172, %v171
  %v185 = vpack.c.b16 %v174, %v173
  %v186 = vpack.c.b16 %v176, %v175
  %v187 = vpack.c.b16 %v178, %v177
  %v188 = vpack.c.b16 %v180, %v179
  %v245 = vunpack.c.l.b16 %v101
  %v246 = vunpack.c.h.b16 %v101
  %v247 = vunpack.c.l.b16 %v102
  %v248 = vunpack.c.h.b16 %v102
  %v249 = vunpack.c.l.b16 %v103
  %v250 = vunpack.c.h.b16 %v103
  %v251 = vunpack.c.l.b16 %v104
  %v252 = vunpack.c.h.b16 %v104
  %v253 = vunpack.c.l.b16 %v105
  %v254 = vunpack.c.h.b16 %v105
  %v255 = vunpack.c.l.b16 %v106
  %v256 = vunpack.c.h.b16 %v106
  %v257 = vunpack.c.l.b16 %v107
  %v258 = vunpack.c.h.b16 %v107
  %v259 = vunpack.c.l.b16 %v108
  %v260 = vunpack.c.h.b16 %v108
  %v261 = vunpack.c.l.b16 %v109
  %v262 = vunpack.c.h.b16 %v109
  %v263 = vunpack.c.l.b16 %v110
  %v264 = vunpack.c.h.b16 %v110
  %v265 = vunpack.c.l.b16 %v111
  %v266 = vunpack.c.h.b16 %v111
  %v267 = vunpack.c.l.b16 %v112
  %v268 = vunpack.c.h.b16 %v112
  %v269 = vunpack.c.l.b16 %v113
  %v270 = vunpack.c.h.b16 %v113
  %v271 = vunpack.c.l.b16 %v114
  %v272 = vunpack.c.h.b16 %v114
  %v273 = vunpack.c.l.b16 %v115
  %v274 = vunpack.c.h.b16 %v115
  %v275 = vunpack.c.l.b16 %v116
  %v276 = vunpack.c.h.b16 %v116
  %v277 = vunpack.c.l.b16 %v117
  %v278 = vunpack.c.h.b16 %v117
  %v279 = vunpack.c.l.b16 %v118
  %v280 = vunpack.c.h.b16 %v118
  %v281 = vunpack.c.l.b16 %v119
  %v282 = vunpack.c.h.b16 %v119
  %v283 = vunpack.c.l.b16 %v120
  %v284 = vunpack.c.h.b16 %v120
  %v285 = vunpack.c.l.b16 %v121
  %v286 = vunpack.c.h.b16 %v121
  %v287 = vunpack.c.l.b16 %v122
  %v288 = vunpack.c.h.b16 %v122
  %v289 = vunpack.c.l.b16 %v123
  %v290 = vunpack.c.h.b16 %v123
  %v291 = vunpack.c.l.b16 %v124
  %v292 = vunpack.c.h.b16 %v124
  %v293 = vunpack.c.l.b16 %v125
  %v294 = vunpack.c.h.b16 %v125
  %v295 = vunpack.c.l.b16 %v126
  %v296 = vunpack.c.h.b16 %v126
  %v297 = vunpack.c.l.b16 %v127
  %v298 = vunpack.c.h.b16 %v127
  %v299 = vunpack.c.l.b16 %v128
  %v300 = vunpack.c.h.b16 %v128
  %v301 = vunpack.c.l.b16 %v129
  %v302 = vunpack.c.h.b16 %v129
  %v303 = vunpack.c.l.b16 %v130
  %v304 = vunpack.c.h.b16 %v130
  %v305 = vunpack.c.l.b16 %v131
  %v306 = vunpack.c.h.b16 %v131
  %v307 = vunpack.c.l.b16 %v132
  %v308 = vunpack.c.h.b16 %v132
  %v309 = vunpack.c.l.b16 %v133
  %v310 = vunpack.c.h.b16 %v133
  %v311 = vunpack.c.l.b16 %v134
  %v312 = vunpack.c.h.b16 %v134
  %v313 = vunpack.c.l.b16 %v135
  %v314 = vunpack.c.h.b16 %v135
  %v315 = vunpack.c.l.b16 %v136
  %v316 = vunpack.c.h.b16 %v136
  %v317 = vunpack.c.l.b16 %v137
  %v318 = vunpack.c.h.b16 %v137
  %v319 = vunpack.c.l.b16 %v138
  %v320 = vunpack.c.h.b16 %v138
  %v321 = vunpack.c.l.b16 %v139
  %v322 = vunpack.c.h.b16 %v139
  %v323 = vunpack.c.l.b16 %v140
  %v324 = vunpack.c.h.b16 %v140
  %v325 = vunpack.c.l.b16 %v141
  %v326 = vunpack.c.h.b16 %v141
  %v327 = vunpack.c.l.b16 %v142
  %v328 = vunpack.c.h.b16 %v142
  %v329 = vunpack.c.l.b16 %v143
  %v330 = vunpack.c.h.b16 %v143
  %v331 = vunpack.c.l.b16 %v144
  %v332 = vunpack.c.h.b16 %v144
  %v333 = vunpack.c.l.b16 %v145
  %v334 = vunpack.c.h.b16 %v145
  %v335 = vunpack.c.l.b16 %v146
  %v336 = vunpack.c.h.b16 %v146
  %v337 = vunpack.c.l.b16 %v147
  %v338 = vunpack.c.h.b16 %v147
  %v339 = vunpack.c.l.b16 %v148
  %v340 = vunpack.c.h.b16 %v148
  %v341 = vpack.c.b16 %v251, %v245
  %v342 = vpack.c.b16 %v252, %v246
  %v343 = vpack.c.b16 %v253, %v247
  %v344 = vpack.c.b16 %v254, %v248
  %v345 = vpack.c.b16 %v255, %v249
  %v346 = vpack.c.b16 %v256, %v250
  %v347 = vpack.c.b16 %v263, %v257
  %v348 = vpack.c.b16 %v264, %v258
  %v349 = vpack.c.b16 %v265, %v259
  %v350 = vpack.c.b16 %v266, %v260
  %v351 = vpack.c.b16 %v267, %v261
  %v352 = vpack.c.b16 %v268, %v262
  %v353 = vpack.c.b16 %v275, %v269
  %v354 = vpack.c.b16 %v276, %v270
  %v355 = vpack.c.b16 %v277, %v271
  %v356 = vpack.c.b16 %v278, %v272
  %v357 = vpack.c.b16 %v279, %v273
  %v358 = vpack.c.b16 %v280, %v274
  %v359 = vpack.c.b16 %v287, %v281
  %v360 = vpack.c.b16 %v288, %v282
  %v361 = vpack.c.b16 %v289, %v283
  %v362 = vpack.c.b16 %v290, %v284
  %v363 = vpack.c.b16 %v291, %v285
  %v364 = vpack.c.b16 %v292, %v286
  %v365 = vpack.c.b16 %v299, %v293
  %v366 = vpack.c.b16 %v300, %v294
  %v367 = vpack.c.b16 %v301, %v295
  %v368 = vpack.c.b16 %v302, %v296
  %v369 = vpack.c.b16 %v303, %v297
  %v370 = vpack.c.b16 %v304, %v298
  %v371 = vpack.c.b16 %v311, %v305
  %v372 = vpack.c.b16 %v312, %v306
  %v373 = vpack.c.b16 %v313, %v307
  %v374 = vpack.c.b16 %v314, %v308
  %v375 = vpack.c.b16 %v315, %v309
  %v376 = vpack.c.b16 %v316, %v310
  %v377 = vpack.c.b16 %v323, %v317
  %v378 = vpack.c.b16 %v324, %v318
  %v379 = vpack.c.b16 %v325, %v319
  %v380 = vpack.c.b16 %v326, %v320
  %v381 = vpack.c.b16 %v327, %v321
  %v382 = vpack.c.b16 %v328, %v322
  %v383 = vpack.c.b16 %v335, %v329
  %v384 = vpack.c.b16 %v336, %v330
  %v385 = vpack.c.b16 %v337, %v331
  %v386 = vpack.c.b16 %v338, %v332
  %v387 = vpack.c.b16 %v339, %v333
  %v388 = vpack.c.b16 %v340, %v334
  %437 = vmatprep.subr.bf16.mxu0 %v342
  %438 = vmatpush1.bf16.msra.mxu0 %v341
  %439 = vmatprep.subr.bf16.mxu0 %v348
  %440 = vmatpush1.bf16.msra.mxu0 %v347
  %441 = vmatprep.subr.bf16.mxu0 %v354
  %442 = vmatpush1.bf16.msra.mxu0 %v353
  %443 = vmatprep.subr.bf16.mxu0 %v360
  %444 = vmatpush1.bf16.msra.mxu0 %v359
  %445 = vmatprep.subr.bf16.mxu0 %v366
  %446 = vmatpush1.bf16.msra.mxu0 %v365
  %447 = vmatprep.subr.bf16.mxu0 %v372
  %448 = vmatpush1.bf16.msra.mxu0 %v371
  %449 = vmatprep.subr.bf16.mxu0 %v378
  %450 = vmatpush1.bf16.msra.mxu0 %v377
  %451 = vmatprep.subr.bf16.mxu0 %v384
  %452 = vmatpush1.bf16.msra.mxu0 %v383
  %453 = vmatprep.subr.bf16.mxu0 0
  %454 = vmatpush1.bf16.msra.mxu0 0
  %455 = vmatprep.subr.bf16.mxu0 0
  %456 = vmatpush1.bf16.msra.mxu0 0
  %457 = vmatprep.subr.bf16.mxu0 0
  %458 = vmatpush1.bf16.msra.mxu0 0
  %459 = vmatprep.subr.bf16.mxu0 0
  %460 = vmatpush1.bf16.msra.mxu0 0
  %461 = vmatprep.subr.bf16.mxu0 0
  %462 = vmatpush1.bf16.msra.mxu0 0
  %463 = vmatprep.subr.bf16.mxu0 0
  %464 = vmatpush1.bf16.msra.mxu0 0
  %465 = vmatprep.subr.bf16.mxu0 0
  %466 = vmatpush1.bf16.msra.mxu0 0
  %467 = vmatprep.subr.bf16.mxu0 0
  %468 = vmatpush1.bf16.msra.mxu0 0
  %469 = vmatprep.mubr.bf16.mxu0 0
  %470 = vmatmul.mubr.bf16.gmra.mrb[0].mxu0 %v181
  %v471 = vpop.f32.mrb[0].mxu0
  %v472 = vadd.f32 0.0, %v471
  %v473 = vpop.f32.mrb[0].mxu0
  %v474 = vadd.f32 0.0, %v473
  %v475 = vpop.f32.mrb[0].mxu0
  %v476 = vadd.f32 0.0, %v475
  %v477 = vpop.f32.mrb[0].mxu0
  %v478 = vadd.f32 0.0, %v477
  %479 = vmatprep.mubr.bf16.mxu0 0
  %480 = vmatmul.mubr.bf16.gmra.mrb[0].mxu0 %v182
  %v481 = vpop.f32.mrb[0].mxu0
  %v482 = vadd.f32 0.0, %v481
  %v483 = vpop.f32.mrb[0].mxu0
  %v484 = vadd.f32 0.0, %v483
  %v485 = vpop.f32.mrb[0].mxu0
  %v486 = vadd.f32 0.0, %v485
  %v487 = vpop.f32.mrb[0].mxu0
  %v488 = vadd.f32 0.0, %v487
  %489 = vmatprep.mubr.bf16.mxu0 0
  %490 = vmatmul.mubr.bf16.gmra.mrb[0].mxu0 %v183
  %v491 = vpop.f32.mrb[0].mxu0
  %v492 = vadd.f32 0.0, %v491
  %v493 = vpop.f32.mrb[0].mxu0
  %v494 = vadd.f32 0.0, %v493
  %v495 = vpop.f32.mrb[0].mxu0
  %v496 = vadd.f32 0.0, %v495
  %v497 = vpop.f32.mrb[0].mxu0
  %v498 = vadd.f32 0.0, %v497
  %499 = vmatprep.mubr.bf16.mxu0 0
  %500 = vmatmul.mubr.bf16.gmra.mrb[0].mxu0 %v184
  %v501 = vpop.f32.mrb[0].mxu0
  %v502 = vadd.f32 0.0, %v501
  %v503 = vpop.f32.mrb[0].mxu0
  %v504 = vadd.f32 0.0, %v503
  %v505 = vpop.f32.mrb[0].mxu0
  %v506 = vadd.f32 0.0, %v505
  %v507 = vpop.f32.mrb[0].mxu0
  %v508 = vadd.f32 0.0, %v507
  %509 = vmatprep.mubr.bf16.mxu0 0
  %510 = vmatmul.mubr.bf16.gmra.mrb[0].mxu0 %v185
  %v511 = vpop.f32.mrb[0].mxu0
  %v512 = vadd.f32 0.0, %v511
  %v513 = vpop.f32.mrb[0].mxu0
  %v514 = vadd.f32 0.0, %v513
  %v515 = vpop.f32.mrb[0].mxu0
  %v516 = vadd.f32 0.0, %v515
  %v517 = vpop.f32.mrb[0].mxu0
  %v518 = vadd.f32 0.0, %v517
  %519 = vmatprep.mubr.bf16.mxu0 0
  %520 = vmatmul.mubr.bf16.gmra.mrb[0].mxu0 %v186
  %v521 = vpop.f32.mrb[0].mxu0
  %v522 = vadd.f32 0.0, %v521
  %v523 = vpop.f32.mrb[0].mxu0
  %v524 = vadd.f32 0.0, %v523
  %v525 = vpop.f32.mrb[0].mxu0
  %v526 = vadd.f32 0.0, %v525
  %v527 = vpop.f32.mrb[0].mxu0
  %v528 = vadd.f32 0.0, %v527
  %529 = vmatprep.mubr.bf16.mxu0 0
  %530 = vmatmul.mubr.bf16.gmra.mrb[0].mxu0 %v187
  %v531 = vpop.f32.mrb[0].mxu0
  %v532 = vadd.f32 0.0, %v531
  %v533 = vpop.f32.mrb[0].mxu0
  %v534 = vadd.f32 0.0, %v533
  %v535 = vpop.f32.mrb[0].mxu0
  %v536 = vadd.f32 0.0, %v535
  %v537 = vpop.f32.mrb[0].mxu0
  %v538 = vadd.f32 0.0, %v537
  %539 = vmatprep.mubr.bf16.mxu0 0
  %540 = vmatmul.mubr.bf16.gmra.mrb[0].mxu0 %v188
  %v541 = vpop.f32.mrb[0].mxu0
  %v542 = vadd.f32 0.0, %v541
  %v543 = vpop.f32.mrb[0].mxu0
  %v544 = vadd.f32 0.0, %v543
  %v545 = vpop.f32.mrb[0].mxu0
  %v546 = vadd.f32 0.0, %v545
  %v547 = vpop.f32.mrb[0].mxu0
  %v548 = vadd.f32 0.0, %v547
  %549 = vdwg.mxu0
  %550 = vmatprep.subr.bf16.mxu0 %v344
  %551 = vmatpush1.bf16.msra.mxu0 %v343
  %552 = vmatprep.subr.bf16.mxu0 %v350
  %553 = vmatpush1.bf16.msra.mxu0 %v349
  %554 = vmatprep.subr.bf16.mxu0 %v356
  %555 = vmatpush1.bf16.msra.mxu0 %v355
  %556 = vmatprep.subr.bf16.mxu0 %v362
  %557 = vmatpush1.bf16.msra.mxu0 %v361
  %558 = vmatprep.subr.bf16.mxu0 %v368
  %559 = vmatpush1.bf16.msra.mxu0 %v367
  %560 = vmatprep.subr.bf16.mxu0 %v374
  %561 = vmatpush1.bf16.msra.mxu0 %v373
  %562 = vmatprep.subr.bf16.mxu0 %v380
  %563 = vmatpush1.bf16.msra.mxu0 %v379
  %564 = vmatprep.subr.bf16.mxu0 %v386
  %565 = vmatpush1.bf16.msra.mxu0 %v385
  %566 = vmatprep.subr.bf16.mxu0 0
  %567 = vmatpush1.bf16.msra.mxu0 0
  %568 = vmatprep.subr.bf16.mxu0 0
  %569 = vmatpush1.bf16.msra.mxu0 0
  %570 = vmatprep.subr.bf16.mxu0 0
  %571 = vmatpush1.bf16.msra.mxu0 0
  %572 = vmatprep.subr.bf16.mxu0 0
  %573 = vmatpush1.bf16.msra.mxu0 0
  %574 = vmatprep.subr.bf16.mxu0 0
  %575 = vmatpush1.bf16.msra.mxu0 0
  %576 = vmatprep.subr.bf16.mxu0 0
  %577 = vmatpush1.bf16.msra.mxu0 0
  %578 = vmatprep.subr.bf16.mxu0 0
  %579 = vmatpush1.bf16.msra.mxu0 0
  %580 = vmatprep.subr.bf16.mxu0 0
  %581 = vmatpush1.bf16.msra.mxu0 0
  %582 = vmatprep.mubr.bf16.mxu0 0
  %583 = vmatmul.mubr.bf16.gmra.mrb[0].mxu0 %v181
  %v584 = vpop.f32.mrb[0].mxu0
  %v585 = vadd.f32 0.0, %v584
  %v586 = vpop.f32.mrb[0].mxu0
  %v587 = vadd.f32 0.0, %v586
  %v588 = vpop.f32.mrb[0].mxu0
  %v589 = vadd.f32 0.0, %v588
  %v590 = vpop.f32.mrb[0].mxu0
  %v591 = vadd.f32 0.0, %v590
  %592 = vmatprep.mubr.bf16.mxu0 0
  %593 = vmatmul.mubr.bf16.gmra.mrb[0].mxu0 %v182
  %v594 = vpop.f32.mrb[0].mxu0
  %v595 = vadd.f32 0.0, %v594
  %v596 = vpop.f32.mrb[0].mxu0
  %v597 = vadd.f32 0.0, %v596
  %v598 = vpop.f32.mrb[0].mxu0
  %v599 = vadd.f32 0.0, %v598
  %v600 = vpop.f32.mrb[0].mxu0
  %v601 = vadd.f32 0.0, %v600
  %602 = vmatprep.mubr.bf16.mxu0 0
  %603 = vmatmul.mubr.bf16.gmra.mrb[0].mxu0 %v183
  %v604 = vpop.f32.mrb[0].mxu0
  %v605 = vadd.f32 0.0, %v604
  %v606 = vpop.f32.mrb[0].mxu0
  %v607 = vadd.f32 0.0, %v606
  %v608 = vpop.f32.mrb[0].mxu0
  %v609 = vadd.f32 0.0, %v608
  %v610 = vpop.f32.mrb[0].mxu0
  %v611 = vadd.f32 0.0, %v610
  %612 = vmatprep.mubr.bf16.mxu0 0
  %613 = vmatmul.mubr.bf16.gmra.mrb[0].mxu0 %v184
  %v614 = vpop.f32.mrb[0].mxu0
  %v615 = vadd.f32 0.0, %v614
  %v616 = vpop.f32.mrb[0].mxu0
  %v617 = vadd.f32 0.0, %v616
  %v618 = vpop.f32.mrb[0].mxu0
  %v619 = vadd.f32 0.0, %v618
  %v620 = vpop.f32.mrb[0].mxu0
  %v621 = vadd.f32 0.0, %v620
  %622 = vmatprep.mubr.bf16.mxu0 0
  %623 = vmatmul.mubr.bf16.gmra.mrb[0].mxu0 %v185
  %v624 = vpop.f32.mrb[0].mxu0
  %v625 = vadd.f32 0.0, %v624
  %v626 = vpop.f32.mrb[0].mxu0
  %v627 = vadd.f32 0.0, %v626
  %v628 = vpop.f32.mrb[0].mxu0
  %v629 = vadd.f32 0.0, %v628
  %v630 = vpop.f32.mrb[0].mxu0
  %v631 = vadd.f32 0.0, %v630
  %632 = vmatprep.mubr.bf16.mxu0 0
  %633 = vmatmul.mubr.bf16.gmra.mrb[0].mxu0 %v186
  %v634 = vpop.f32.mrb[0].mxu0
  %v635 = vadd.f32 0.0, %v634
  %v636 = vpop.f32.mrb[0].mxu0
  %v637 = vadd.f32 0.0, %v636
  %v638 = vpop.f32.mrb[0].mxu0
  %v639 = vadd.f32 0.0, %v638
  %v640 = vpop.f32.mrb[0].mxu0
  %v641 = vadd.f32 0.0, %v640
  %642 = vmatprep.mubr.bf16.mxu0 0
  %643 = vmatmul.mubr.bf16.gmra.mrb[0].mxu0 %v187
  %v644 = vpop.f32.mrb[0].mxu0
  %v645 = vadd.f32 0.0, %v644
  %v646 = vpop.f32.mrb[0].mxu0
  %v647 = vadd.f32 0.0, %v646
  %v648 = vpop.f32.mrb[0].mxu0
  %v649 = vadd.f32 0.0, %v648
  %v650 = vpop.f32.mrb[0].mxu0
  %v651 = vadd.f32 0.0, %v650
  %652 = vmatprep.mubr.bf16.mxu0 0
  %653 = vmatmul.mubr.bf16.gmra.mrb[0].mxu0 %v188
  %v654 = vpop.f32.mrb[0].mxu0
  %v655 = vadd.f32 0.0, %v654
  %v656 = vpop.f32.mrb[0].mxu0
  %v657 = vadd.f32 0.0, %v656
  %v658 = vpop.f32.mrb[0].mxu0
  %v659 = vadd.f32 0.0, %v658
  %v660 = vpop.f32.mrb[0].mxu0
  %v661 = vadd.f32 0.0, %v660
  %662 = vdwg.mxu0
  %663 = vmatprep.subr.bf16.mxu0 %v346
  %664 = vmatpush1.bf16.msra.mxu0 %v345
  %665 = vmatprep.subr.bf16.mxu0 %v352
  %666 = vmatpush1.bf16.msra.mxu0 %v351
  %667 = vmatprep.subr.bf16.mxu0 %v358
  %668 = vmatpush1.bf16.msra.mxu0 %v357
  %669 = vmatprep.subr.bf16.mxu0 %v364
  %670 = vmatpush1.bf16.msra.mxu0 %v363
  %671 = vmatprep.subr.bf16.mxu0 %v370
  %672 = vmatpush1.bf16.msra.mxu0 %v369
  %673 = vmatprep.subr.bf16.mxu0 %v376
  %674 = vmatpush1.bf16.msra.mxu0 %v375
  %675 = vmatprep.subr.bf16.mxu0 %v382
  %676 = vmatpush1.bf16.msra.mxu0 %v381
  %677 = vmatprep.subr.bf16.mxu0 %v388
  %678 = vmatpush1.bf16.msra.mxu0 %v387
  %679 = vmatprep.subr.bf16.mxu0 0
  %680 = vmatpush1.bf16.msra.mxu0 0
  %681 = vmatprep.subr.bf16.mxu0 0
  %682 = vmatpush1.bf16.msra.mxu0 0
  %683 = vmatprep.subr.bf16.mxu0 0
  %684 = vmatpush1.bf16.msra.mxu0 0
  %685 = vmatprep.subr.bf16.mxu0 0
  %686 = vmatpush1.bf16.msra.mxu0 0
  %687 = vmatprep.subr.bf16.mxu0 0
  %688 = vmatpush1.bf16.msra.mxu0 0
  %689 = vmatprep.subr.bf16.mxu0 0
  %690 = vmatpush1.bf16.msra.mxu0 0
  %691 = vmatprep.subr.bf16.mxu0 0
  %692 = vmatpush1.bf16.msra.mxu0 0
  %693 = vmatprep.subr.bf16.mxu0 0
  %694 = vmatpush1.bf16.msra.mxu0 0
  %695 = vmatprep.mubr.bf16.mxu0 0
  %696 = vmatmul.mubr.bf16.gmra.mrb[0].mxu0 %v181
  %v697 = vpop.f32.mrb[0].mxu0
  %v698 = vadd.f32 0.0, %v697
  %v699 = vpop.f32.mrb[0].mxu0
  %v700 = vadd.f32 0.0, %v699
  %v701 = vpop.f32.mrb[0].mxu0
  %v702 = vadd.f32 0.0, %v701
  %v703 = vpop.f32.mrb[0].mxu0
  %v704 = vadd.f32 0.0, %v703
  %705 = vmatprep.mubr.bf16.mxu0 0
  %706 = vmatmul.mubr.bf16.gmra.mrb[0].mxu0 %v182
  %v707 = vpop.f32.mrb[0].mxu0
  %v708 = vadd.f32 0.0, %v707
  %v709 = vpop.f32.mrb[0].mxu0
  %v710 = vadd.f32 0.0, %v709
  %v711 = vpop.f32.mrb[0].mxu0
  %v712 = vadd.f32 0.0, %v711
  %v713 = vpop.f32.mrb[0].mxu0
  %v714 = vadd.f32 0.0, %v713
  %715 = vmatprep.mubr.bf16.mxu0 0
  %716 = vmatmul.mubr.bf16.gmra.mrb[0].mxu0 %v183
  %v717 = vpop.f32.mrb[0].mxu0
  %v718 = vadd.f32 0.0, %v717
  %v719 = vpop.f32.mrb[0].mxu0
  %v720 = vadd.f32 0.0, %v719
  %v721 = vpop.f32.mrb[0].mxu0
  %v722 = vadd.f32 0.0, %v721
  %v723 = vpop.f32.mrb[0].mxu0
  %v724 = vadd.f32 0.0, %v723
  %725 = vmatprep.mubr.bf16.mxu0 0
  %726 = vmatmul.mubr.bf16.gmra.mrb[0].mxu0 %v184
  %v727 = vpop.f32.mrb[0].mxu0
  %v728 = vadd.f32 0.0, %v727
  %v729 = vpop.f32.mrb[0].mxu0
  %v730 = vadd.f32 0.0, %v729
  %v731 = vpop.f32.mrb[0].mxu0
  %v732 = vadd.f32 0.0, %v731
  %v733 = vpop.f32.mrb[0].mxu0
  %v734 = vadd.f32 0.0, %v733
  %735 = vmatprep.mubr.bf16.mxu0 0
  %736 = vmatmul.mubr.bf16.gmra.mrb[0].mxu0 %v185
  %v737 = vpop.f32.mrb[0].mxu0
  %v738 = vadd.f32 0.0, %v737
  %v739 = vpop.f32.mrb[0].mxu0
  %v740 = vadd.f32 0.0, %v739
  %v741 = vpop.f32.mrb[0].mxu0
  %v742 = vadd.f32 0.0, %v741
  %v743 = vpop.f32.mrb[0].mxu0
  %v744 = vadd.f32 0.0, %v743
  %745 = vmatprep.mubr.bf16.mxu0 0
  %746 = vmatmul.mubr.bf16.gmra.mrb[0].mxu0 %v186
  %v747 = vpop.f32.mrb[0].mxu0
  %v748 = vadd.f32 0.0, %v747
  %v749 = vpop.f32.mrb[0].mxu0
  %v750 = vadd.f32 0.0, %v749
  %v751 = vpop.f32.mrb[0].mxu0
  %v752 = vadd.f32 0.0, %v751
  %v753 = vpop.f32.mrb[0].mxu0
  %v754 = vadd.f32 0.0, %v753
  %755 = vmatprep.mubr.bf16.mxu0 0
  %756 = vmatmul.mubr.bf16.gmra.mrb[0].mxu0 %v187
  %v757 = vpop.f32.mrb[0].mxu0
  %v758 = vadd.f32 0.0, %v757
  %v759 = vpop.f32.mrb[0].mxu0
  %v760 = vadd.f32 0.0, %v759
  %v761 = vpop.f32.mrb[0].mxu0
  %v762 = vadd.f32 0.0, %v761
  %v763 = vpop.f32.mrb[0].mxu0
  %v764 = vadd.f32 0.0, %v763
  %765 = vmatprep.mubr.bf16.mxu0 0
  %766 = vmatmul.mubr.bf16.gmra.mrb[0].mxu0 %v188
  %v767 = vpop.f32.mrb[0].mxu0
  %v768 = vadd.f32 0.0, %v767
  %v769 = vpop.f32.mrb[0].mxu0
  %v770 = vadd.f32 0.0, %v769
  %v771 = vpop.f32.mrb[0].mxu0
  %v772 = vadd.f32 0.0, %v771
  %v773 = vpop.f32.mrb[0].mxu0
  %v774 = vadd.f32 0.0, %v773
  %775 = vdwg.mxu0
  %v792 = vunpack.c.l.b16 %v21
  %v793 = vunpack.c.l.b16 %v22
  %v794 = vunpack.c.l.b16 %v23
  %v795 = vunpack.c.l.b16 %v24
  %v796 = vunpack.c.l.b16 %v25
  %v797 = vunpack.c.l.b16 %v26
  %v798 = vunpack.c.l.b16 %v27
  %v799 = vunpack.c.l.b16 %v28
  %v800 = vunpack.c.l.b16 %v29
  %v801 = vunpack.c.l.b16 %v30
  %v802 = vunpack.c.l.b16 %v31
  %v803 = vunpack.c.l.b16 %v32
  %v804 = vunpack.c.l.b16 %v33
  %v805 = vunpack.c.l.b16 %v34
  %v806 = vunpack.c.l.b16 %v35
  %v807 = vunpack.c.l.b16 %v36
  %v808 = vpack.c.b16 %v793, %v792
  %v809 = vpack.c.b16 %v795, %v794
  %v810 = vpack.c.b16 %v797, %v796
  %v811 = vpack.c.b16 %v799, %v798
  %v812 = vpack.c.b16 %v801, %v800
  %v813 = vpack.c.b16 %v803, %v802
  %v814 = vpack.c.b16 %v805, %v804
  %v815 = vpack.c.b16 %v807, %v806
  %v872 = vunpack.c.l.b16 %v37
  %v873 = vunpack.c.h.b16 %v37
  %v874 = vunpack.c.l.b16 %v38
  %v875 = vunpack.c.h.b16 %v38
  %v876 = vunpack.c.l.b16 %v39
  %v877 = vunpack.c.h.b16 %v39
  %v878 = vunpack.c.l.b16 %v40
  %v879 = vunpack.c.h.b16 %v40
  %v880 = vunpack.c.l.b16 %v41
  %v881 = vunpack.c.h.b16 %v41
  %v882 = vunpack.c.l.b16 %v42
  %v883 = vunpack.c.h.b16 %v42
  %v884 = vunpack.c.l.b16 %v43
  %v885 = vunpack.c.h.b16 %v43
  %v886 = vunpack.c.l.b16 %v44
  %v887 = vunpack.c.h.b16 %v44
  %v888 = vunpack.c.l.b16 %v45
  %v889 = vunpack.c.h.b16 %v45
  %v890 = vunpack.c.l.b16 %v46
  %v891 = vunpack.c.h.b16 %v46
  %v892 = vunpack.c.l.b16 %v47
  %v893 = vunpack.c.h.b16 %v47
  %v894 = vunpack.c.l.b16 %v48
  %v895 = vunpack.c.h.b16 %v48
  %v896 = vunpack.c.l.b16 %v49
  %v897 = vunpack.c.h.b16 %v49
  %v898 = vunpack.c.l.b16 %v50
  %v899 = vunpack.c.h.b16 %v50
  %v900 = vunpack.c.l.b16 %v51
  %v901 = vunpack.c.h.b16 %v51
  %v902 = vunpack.c.l.b16 %v52
  %v903 = vunpack.c.h.b16 %v52
  %v904 = vunpack.c.l.b16 %v53
  %v905 = vunpack.c.h.b16 %v53
  %v906 = vunpack.c.l.b16 %v54
  %v907 = vunpack.c.h.b16 %v54
  %v908 = vunpack.c.l.b16 %v55
  %v909 = vunpack.c.h.b16 %v55
  %v910 = vunpack.c.l.b16 %v56
  %v911 = vunpack.c.h.b16 %v56
  %v912 = vunpack.c.l.b16 %v57
  %v913 = vunpack.c.h.b16 %v57
  %v914 = vunpack.c.l.b16 %v58
  %v915 = vunpack.c.h.b16 %v58
  %v916 = vunpack.c.l.b16 %v59
  %v917 = vunpack.c.h.b16 %v59
  %v918 = vunpack.c.l.b16 %v60
  %v919 = vunpack.c.h.b16 %v60
  %v920 = vunpack.c.l.b16 %v61
  %v921 = vunpack.c.h.b16 %v61
  %v922 = vunpack.c.l.b16 %v62
  %v923 = vunpack.c.h.b16 %v62
  %v924 = vunpack.c.l.b16 %v63
  %v925 = vunpack.c.h.b16 %v63
  %v926 = vunpack.c.l.b16 %v64
  %v927 = vunpack.c.h.b16 %v64
  %v928 = vunpack.c.l.b16 %v65
  %v929 = vunpack.c.h.b16 %v65
  %v930 = vunpack.c.l.b16 %v66
  %v931 = vunpack.c.h.b16 %v66
  %v932 = vunpack.c.l.b16 %v67
  %v933 = vunpack.c.h.b16 %v67
  %v934 = vunpack.c.l.b16 %v68
  %v935 = vunpack.c.h.b16 %v68
  %v936 = vunpack.c.l.b16 %v69
  %v937 = vunpack.c.h.b16 %v69
  %v938 = vunpack.c.l.b16 %v70
  %v939 = vunpack.c.h.b16 %v70
  %v940 = vunpack.c.l.b16 %v71
  %v941 = vunpack.c.h.b16 %v71
  %v942 = vunpack.c.l.b16 %v72
  %v943 = vunpack.c.h.b16 %v72
  %v944 = vunpack.c.l.b16 %v73
  %v945 = vunpack.c.h.b16 %v73
  %v946 = vunpack.c.l.b16 %v74
  %v947 = vunpack.c.h.b16 %v74
  %v948 = vunpack.c.l.b16 %v75
  %v949 = vunpack.c.h.b16 %v75
  %v950 = vunpack.c.l.b16 %v76
  %v951 = vunpack.c.h.b16 %v76
  %v952 = vunpack.c.l.b16 %v77
  %v953 = vunpack.c.h.b16 %v77
  %v954 = vunpack.c.l.b16 %v78
  %v955 = vunpack.c.h.b16 %v78
  %v956 = vunpack.c.l.b16 %v79
  %v957 = vunpack.c.h.b16 %v79
  %v958 = vunpack.c.l.b16 %v80
  %v959 = vunpack.c.h.b16 %v80
  %v960 = vunpack.c.l.b16 %v81
  %v961 = vunpack.c.h.b16 %v81
  %v962 = vunpack.c.l.b16 %v82
  %v963 = vunpack.c.h.b16 %v82
  %v964 = vunpack.c.l.b16 %v83
  %v965 = vunpack.c.h.b16 %v83
  %v966 = vunpack.c.l.b16 %v84
  %v967 = vunpack.c.h.b16 %v84
  %v968 = vpack.c.b16 %v878, %v872
  %v969 = vpack.c.b16 %v879, %v873
  %v970 = vpack.c.b16 %v880, %v874
  %v971 = vpack.c.b16 %v881, %v875
  %v972 = vpack.c.b16 %v882, %v876
  %v973 = vpack.c.b16 %v883, %v877
  %v974 = vpack.c.b16 %v890, %v884
  %v975 = vpack.c.b16 %v891, %v885
  %v976 = vpack.c.b16 %v892, %v886
  %v977 = vpack.c.b16 %v893, %v887
  %v978 = vpack.c.b16 %v894, %v888
  %v979 = vpack.c.b16 %v895, %v889
  %v980 = vpack.c.b16 %v902, %v896
  %v981 = vpack.c.b16 %v903, %v897
  %v982 = vpack.c.b16 %v904, %v898
  %v983 = vpack.c.b16 %v905, %v899
  %v984 = vpack.c.b16 %v906, %v900
  %v985 = vpack.c.b16 %v907, %v901
  %v986 = vpack.c.b16 %v914, %v908
  %v987 = vpack.c.b16 %v915, %v909
  %v988 = vpack.c.b16 %v916, %v910
  %v989 = vpack.c.b16 %v917, %v911
  %v990 = vpack.c.b16 %v918, %v912
  %v991 = vpack.c.b16 %v919, %v913
  %v992 = vpack.c.b16 %v926, %v920
  %v993 = vpack.c.b16 %v927, %v921
  %v994 = vpack.c.b16 %v928, %v922
  %v995 = vpack.c.b16 %v929, %v923
  %v996 = vpack.c.b16 %v930, %v924
  %v997 = vpack.c.b16 %v931, %v925
  %v998 = vpack.c.b16 %v938, %v932
  %v999 = vpack.c.b16 %v939, %v933
  %v1000 = vpack.c.b16 %v940, %v934
  %v1001 = vpack.c.b16 %v941, %v935
  %v1002 = vpack.c.b16 %v942, %v936
  %v1003 = vpack.c.b16 %v943, %v937
  %v1004 = vpack.c.b16 %v950, %v944
  %v1005 = vpack.c.b16 %v951, %v945
  %v1006 = vpack.c.b16 %v952, %v946
  %v1007 = vpack.c.b16 %v953, %v947
  %v1008 = vpack.c.b16 %v954, %v948
  %v1009 = vpack.c.b16 %v955, %v949
  %v1010 = vpack.c.b16 %v962, %v956
  %v1011 = vpack.c.b16 %v963, %v957
  %v1012 = vpack.c.b16 %v964, %v958
  %v1013 = vpack.c.b16 %v965, %v959
  %v1014 = vpack.c.b16 %v966, %v960
  %v1015 = vpack.c.b16 %v967, %v961
  %1064 = vmatprep.subr.bf16.mxu0 %v969
  %1065 = vmatpush1.bf16.msra.mxu0 %v968
  %1066 = vmatprep.subr.bf16.mxu0 %v975
  %1067 = vmatpush1.bf16.msra.mxu0 %v974
  %1068 = vmatprep.subr.bf16.mxu0 %v981
  %1069 = vmatpush1.bf16.msra.mxu0 %v980
  %1070 = vmatprep.subr.bf16.mxu0 %v987
  %1071 = vmatpush1.bf16.msra.mxu0 %v986
  %1072 = vmatprep.subr.bf16.mxu0 %v993
  %1073 = vmatpush1.bf16.msra.mxu0 %v992
  %1074 = vmatprep.subr.bf16.mxu0 %v999
  %1075 = vmatpush1.bf16.msra.mxu0 %v998
  %1076 = vmatprep.subr.bf16.mxu0 %v1005
  %1077 = vmatpush1.bf16.msra.mxu0 %v1004
  %1078 = vmatprep.subr.bf16.mxu0 %v1011
  %1079 = vmatpush1.bf16.msra.mxu0 %v1010
  %1080 = vmatprep.subr.bf16.mxu0 0
  %1081 = vmatpush1.bf16.msra.mxu0 0
  %1082 = vmatprep.subr.bf16.mxu0 0
  %1083 = vmatpush1.bf16.msra.mxu0 0
  %1084 = vmatprep.subr.bf16.mxu0 0
  %1085 = vmatpush1.bf16.msra.mxu0 0
  %1086 = vmatprep.subr.bf16.mxu0 0
  %1087 = vmatpush1.bf16.msra.mxu0 0
  %1088 = vmatprep.subr.bf16.mxu0 0
  %1089 = vmatpush1.bf16.msra.mxu0 0
  %1090 = vmatprep.subr.bf16.mxu0 0
  %1091 = vmatpush1.bf16.msra.mxu0 0
  %1092 = vmatprep.subr.bf16.mxu0 0
  %1093 = vmatpush1.bf16.msra.mxu0 0
  %1094 = vmatprep.subr.bf16.mxu0 0
  %1095 = vmatpush1.bf16.msra.mxu0 0
  %1096 = vmatprep.mubr.bf16.mxu0 0
  %1097 = vmatmul.mubr.bf16.gmra.mrb[0].mxu0 %v808
  %v1098 = vpop.f32.mrb[0].mxu0
  %v1099 = vadd.f32 %v472, %v1098
  %v1100 = vpop.f32.mrb[0].mxu0
  %v1101 = vadd.f32 %v474, %v1100
  %v1102 = vpop.f32.mrb[0].mxu0
  %v1103 = vadd.f32 %v476, %v1102
  %v1104 = vpop.f32.mrb[0].mxu0
  %v1105 = vadd.f32 %v478, %v1104
  %1106 = vmatprep.mubr.bf16.mxu0 0
  %1107 = vmatmul.mubr.bf16.gmra.mrb[0].mxu0 %v809
  %v1108 = vpop.f32.mrb[0].mxu0
  %v1109 = vadd.f32 %v482, %v1108
  %v1110 = vpop.f32.mrb[0].mxu0
  %v1111 = vadd.f32 %v484, %v1110
  %v1112 = vpop.f32.mrb[0].mxu0
  %v1113 = vadd.f32 %v486, %v1112
  %v1114 = vpop.f32.mrb[0].mxu0
  %v1115 = vadd.f32 %v488, %v1114
  %1116 = vmatprep.mubr.bf16.mxu0 0
  %1117 = vmatmul.mubr.bf16.gmra.mrb[0].mxu0 %v810
  %v1118 = vpop.f32.mrb[0].mxu0
  %v1119 = vadd.f32 %v492, %v1118
  %v1120 = vpop.f32.mrb[0].mxu0
  %v1121 = vadd.f32 %v494, %v1120
  %v1122 = vpop.f32.mrb[0].mxu0
  %v1123 = vadd.f32 %v496, %v1122
  %v1124 = vpop.f32.mrb[0].mxu0
  %v1125 = vadd.f32 %v498, %v1124
  %1126 = vmatprep.mubr.bf16.mxu0 0
  %1127 = vmatmul.mubr.bf16.gmra.mrb[0].mxu0 %v811
  %v1128 = vpop.f32.mrb[0].mxu0
  %v1129 = vadd.f32 %v502, %v1128
  %v1130 = vpop.f32.mrb[0].mxu0
  %v1131 = vadd.f32 %v504, %v1130
  %v1132 = vpop.f32.mrb[0].mxu0
  %v1133 = vadd.f32 %v506, %v1132
  %v1134 = vpop.f32.mrb[0].mxu0
  %v1135 = vadd.f32 %v508, %v1134
  %1136 = vmatprep.mubr.bf16.mxu0 0
  %1137 = vmatmul.mubr.bf16.gmra.mrb[0].mxu0 %v812
  %v1138 = vpop.f32.mrb[0].mxu0
  %v1139 = vadd.f32 %v512, %v1138
  %v1140 = vpop.f32.mrb[0].mxu0
  %v1141 = vadd.f32 %v514, %v1140
  %v1142 = vpop.f32.mrb[0].mxu0
  %v1143 = vadd.f32 %v516, %v1142
  %v1144 = vpop.f32.mrb[0].mxu0
  %v1145 = vadd.f32 %v518, %v1144
  %1146 = vmatprep.mubr.bf16.mxu0 0
  %1147 = vmatmul.mubr.bf16.gmra.mrb[0].mxu0 %v813
  %v1148 = vpop.f32.mrb[0].mxu0
  %v1149 = vadd.f32 %v522, %v1148
  %v1150 = vpop.f32.mrb[0].mxu0
  %v1151 = vadd.f32 %v524, %v1150
  %v1152 = vpop.f32.mrb[0].mxu0
  %v1153 = vadd.f32 %v526, %v1152
  %v1154 = vpop.f32.mrb[0].mxu0
  %v1155 = vadd.f32 %v528, %v1154
  %1156 = vmatprep.mubr.bf16.mxu0 0
  %1157 = vmatmul.mubr.bf16.gmra.mrb[0].mxu0 %v814
  %v1158 = vpop.f32.mrb[0].mxu0
  %v1159 = vadd.f32 %v532, %v1158
  %v1160 = vpop.f32.mrb[0].mxu0
  %v1161 = vadd.f32 %v534, %v1160
  %v1162 = vpop.f32.mrb[0].mxu0
  %v1163 = vadd.f32 %v536, %v1162
  %v1164 = vpop.f32.mrb[0].mxu0
  %v1165 = vadd.f32 %v538, %v1164
  %1166 = vmatprep.mubr.bf16.mxu0 0
  %1167 = vmatmul.mubr.bf16.gmra.mrb[0].mxu0 %v815
  %v1168 = vpop.f32.mrb[0].mxu0
  %v1169 = vadd.f32 %v542, %v1168
  %v1170 = vpop.f32.mrb[0].mxu0
  %v1171 = vadd.f32 %v544, %v1170
  %v1172 = vpop.f32.mrb[0].mxu0
  %v1173 = vadd.f32 %v546, %v1172
  %v1174 = vpop.f32.mrb[0].mxu0
  %v1175 = vadd.f32 %v548, %v1174
  %1176 = vdwg.mxu0
  %1177 = vmatprep.subr.bf16.mxu0 %v971
  %1178 = vmatpush1.bf16.msra.mxu0 %v970
  %1179 = vmatprep.subr.bf16.mxu0 %v977
  %1180 = vmatpush1.bf16.msra.mxu0 %v976
  %1181 = vmatprep.subr.bf16.mxu0 %v983
  %1182 = vmatpush1.bf16.msra.mxu0 %v982
  %1183 = vmatprep.subr.bf16.mxu0 %v989
  %1184 = vmatpush1.bf16.msra.mxu0 %v988
  %1185 = vmatprep.subr.bf16.mxu0 %v995
  %1186 = vmatpush1.bf16.msra.mxu0 %v994
  %1187 = vmatprep.subr.bf16.mxu0 %v1001
  %1188 = vmatpush1.bf16.msra.mxu0 %v1000
  %1189 = vmatprep.subr.bf16.mxu0 %v1007
  %1190 = vmatpush1.bf16.msra.mxu0 %v1006
  %1191 = vmatprep.subr.bf16.mxu0 %v1013
  %1192 = vmatpush1.bf16.msra.mxu0 %v1012
  %1193 = vmatprep.subr.bf16.mxu0 0
  %1194 = vmatpush1.bf16.msra.mxu0 0
  %1195 = vmatprep.subr.bf16.mxu0 0
  %1196 = vmatpush1.bf16.msra.mxu0 0
  %1197 = vmatprep.subr.bf16.mxu0 0
  %1198 = vmatpush1.bf16.msra.mxu0 0
  %1199 = vmatprep.subr.bf16.mxu0 0
  %1200 = vmatpush1.bf16.msra.mxu0 0
  %1201 = vmatprep.subr.bf16.mxu0 0
  %1202 = vmatpush1.bf16.msra.mxu0 0
  %1203 = vmatprep.subr.bf16.mxu0 0
  %1204 = vmatpush1.bf16.msra.mxu0 0
  %1205 = vmatprep.subr.bf16.mxu0 0
  %1206 = vmatpush1.bf16.msra.mxu0 0
  %1207 = vmatprep.subr.bf16.mxu0 0
  %1208 = vmatpush1.bf16.msra.mxu0 0
  %1209 = vmatprep.mubr.bf16.mxu0 0
  %1210 = vmatmul.mubr.bf16.gmra.mrb[0].mxu0 %v808
  %v1211 = vpop.f32.mrb[0].mxu0
  %v1212 = vadd.f32 %v585, %v1211
  %v1213 = vpop.f32.mrb[0].mxu0
  %v1214 = vadd.f32 %v587, %v1213
  %v1215 = vpop.f32.mrb[0].mxu0
  %v1216 = vadd.f32 %v589, %v1215
  %v1217 = vpop.f32.mrb[0].mxu0
  %v1218 = vadd.f32 %v591, %v1217
  %1219 = vmatprep.mubr.bf16.mxu0 0
  %1220 = vmatmul.mubr.bf16.gmra.mrb[0].mxu0 %v809
  %v1221 = vpop.f32.mrb[0].mxu0
  %v1222 = vadd.f32 %v595, %v1221
  %v1223 = vpop.f32.mrb[0].mxu0
  %v1224 = vadd.f32 %v597, %v1223
  %v1225 = vpop.f32.mrb[0].mxu0
  %v1226 = vadd.f32 %v599, %v1225
  %v1227 = vpop.f32.mrb[0].mxu0
  %v1228 = vadd.f32 %v601, %v1227
  %1229 = vmatprep.mubr.bf16.mxu0 0
  %1230 = vmatmul.mubr.bf16.gmra.mrb[0].mxu0 %v810
  %v1231 = vpop.f32.mrb[0].mxu0
  %v1232 = vadd.f32 %v605, %v1231
  %v1233 = vpop.f32.mrb[0].mxu0
  %v1234 = vadd.f32 %v607, %v1233
  %v1235 = vpop.f32.mrb[0].mxu0
  %v1236 = vadd.f32 %v609, %v1235
  %v1237 = vpop.f32.mrb[0].mxu0
  %v1238 = vadd.f32 %v611, %v1237
  %1239 = vmatprep.mubr.bf16.mxu0 0
  %1240 = vmatmul.mubr.bf16.gmra.mrb[0].mxu0 %v811
  %v1241 = vpop.f32.mrb[0].mxu0
  %v1242 = vadd.f32 %v615, %v1241
  %v1243 = vpop.f32.mrb[0].mxu0
  %v1244 = vadd.f32 %v617, %v1243
  %v1245 = vpop.f32.mrb[0].mxu0
  %v1246 = vadd.f32 %v619, %v1245
  %v1247 = vpop.f32.mrb[0].mxu0
  %v1248 = vadd.f32 %v621, %v1247
  %1249 = vmatprep.mubr.bf16.mxu0 0
  %1250 = vmatmul.mubr.bf16.gmra.mrb[0].mxu0 %v812
  %v1251 = vpop.f32.mrb[0].mxu0
  %v1252 = vadd.f32 %v625, %v1251
  %v1253 = vpop.f32.mrb[0].mxu0
  %v1254 = vadd.f32 %v627, %v1253
  %v1255 = vpop.f32.mrb[0].mxu0
  %v1256 = vadd.f32 %v629, %v1255
  %v1257 = vpop.f32.mrb[0].mxu0
  %v1258 = vadd.f32 %v631, %v1257
  %1259 = vmatprep.mubr.bf16.mxu0 0
  %1260 = vmatmul.mubr.bf16.gmra.mrb[0].mxu0 %v813
  %v1261 = vpop.f32.mrb[0].mxu0
  %v1262 = vadd.f32 %v635, %v1261
  %v1263 = vpop.f32.mrb[0].mxu0
  %v1264 = vadd.f32 %v637, %v1263
  %v1265 = vpop.f32.mrb[0].mxu0
  %v1266 = vadd.f32 %v639, %v1265
  %v1267 = vpop.f32.mrb[0].mxu0
  %v1268 = vadd.f32 %v641, %v1267
  %1269 = vmatprep.mubr.bf16.mxu0 0
  %1270 = vmatmul.mubr.bf16.gmra.mrb[0].mxu0 %v814
  %v1271 = vpop.f32.mrb[0].mxu0
  %v1272 = vadd.f32 %v645, %v1271
  %v1273 = vpop.f32.mrb[0].mxu0
  %v1274 = vadd.f32 %v647, %v1273
  %v1275 = vpop.f32.mrb[0].mxu0
  %v1276 = vadd.f32 %v649, %v1275
  %v1277 = vpop.f32.mrb[0].mxu0
  %v1278 = vadd.f32 %v651, %v1277
  %1279 = vmatprep.mubr.bf16.mxu0 0
  %1280 = vmatmul.mubr.bf16.gmra.mrb[0].mxu0 %v815
  %v1281 = vpop.f32.mrb[0].mxu0
  %v1282 = vadd.f32 %v655, %v1281
  %v1283 = vpop.f32.mrb[0].mxu0
  %v1284 = vadd.f32 %v657, %v1283
  %v1285 = vpop.f32.mrb[0].mxu0
  %v1286 = vadd.f32 %v659, %v1285
  %v1287 = vpop.f32.mrb[0].mxu0
  %v1288 = vadd.f32 %v661, %v1287
  %1289 = vdwg.mxu0
  %1290 = vmatprep.subr.bf16.mxu0 %v973
  %1291 = vmatpush1.bf16.msra.mxu0 %v972
  %1292 = vmatprep.subr.bf16.mxu0 %v979
  %1293 = vmatpush1.bf16.msra.mxu0 %v978
  %1294 = vmatprep.subr.bf16.mxu0 %v985
  %1295 = vmatpush1.bf16.msra.mxu0 %v984
  %1296 = vmatprep.subr.bf16.mxu0 %v991
  %1297 = vmatpush1.bf16.msra.mxu0 %v990
  %1298 = vmatprep.subr.bf16.mxu0 %v997
  %1299 = vmatpush1.bf16.msra.mxu0 %v996
  %1300 = vmatprep.subr.bf16.mxu0 %v1003
  %1301 = vmatpush1.bf16.msra.mxu0 %v1002
  %1302 = vmatprep.subr.bf16.mxu0 %v1009
  %1303 = vmatpush1.bf16.msra.mxu0 %v1008
  %1304 = vmatprep.subr.bf16.mxu0 %v1015
  %1305 = vmatpush1.bf16.msra.mxu0 %v1014
  %1306 = vmatprep.subr.bf16.mxu0 0
  %1307 = vmatpush1.bf16.msra.mxu0 0
  %1308 = vmatprep.subr.bf16.mxu0 0
  %1309 = vmatpush1.bf16.msra.mxu0 0
  %1310 = vmatprep.subr.bf16.mxu0 0
  %1311 = vmatpush1.bf16.msra.mxu0 0
  %1312 = vmatprep.subr.bf16.mxu0 0
  %1313 = vmatpush1.bf16.msra.mxu0 0
  %1314 = vmatprep.subr.bf16.mxu0 0
  %1315 = vmatpush1.bf16.msra.mxu0 0
  %1316 = vmatprep.subr.bf16.mxu0 0
  %1317 = vmatpush1.bf16.msra.mxu0 0
  %1318 = vmatprep.subr.bf16.mxu0 0
  %1319 = vmatpush1.bf16.msra.mxu0 0
  %1320 = vmatprep.subr.bf16.mxu0 0
  %1321 = vmatpush1.bf16.msra.mxu0 0
  %1322 = vmatprep.mubr.bf16.mxu0 0
  %1323 = vmatmul.mubr.bf16.gmra.mrb[0].mxu0 %v808
  %v1324 = vpop.f32.mrb[0].mxu0
  %v1325 = vadd.f32 %v698, %v1324
  %v1326 = vpop.f32.mrb[0].mxu0
  %v1327 = vadd.f32 %v700, %v1326
  %v1328 = vpop.f32.mrb[0].mxu0
  %v1329 = vadd.f32 %v702, %v1328
  %v1330 = vpop.f32.mrb[0].mxu0
  %v1331 = vadd.f32 %v704, %v1330
  %1332 = vmatprep.mubr.bf16.mxu0 0
  %1333 = vmatmul.mubr.bf16.gmra.mrb[0].mxu0 %v809
  %v1334 = vpop.f32.mrb[0].mxu0
  %v1335 = vadd.f32 %v708, %v1334
  %v1336 = vpop.f32.mrb[0].mxu0
  %v1337 = vadd.f32 %v710, %v1336
  %v1338 = vpop.f32.mrb[0].mxu0
  %v1339 = vadd.f32 %v712, %v1338
  %v1340 = vpop.f32.mrb[0].mxu0
  %v1341 = vadd.f32 %v714, %v1340
  %1342 = vmatprep.mubr.bf16.mxu0 0
  %1343 = vmatmul.mubr.bf16.gmra.mrb[0].mxu0 %v810
  %v1344 = vpop.f32.mrb[0].mxu0
  %v1345 = vadd.f32 %v718, %v1344
  %v1346 = vpop.f32.mrb[0].mxu0
  %v1347 = vadd.f32 %v720, %v1346
  %v1348 = vpop.f32.mrb[0].mxu0
  %v1349 = vadd.f32 %v722, %v1348
  %v1350 = vpop.f32.mrb[0].mxu0
  %v1351 = vadd.f32 %v724, %v1350
  %1352 = vmatprep.mubr.bf16.mxu0 0
  %1353 = vmatmul.mubr.bf16.gmra.mrb[0].mxu0 %v811
  %v1354 = vpop.f32.mrb[0].mxu0
  %v1355 = vadd.f32 %v728, %v1354
  %v1356 = vpop.f32.mrb[0].mxu0
  %v1357 = vadd.f32 %v730, %v1356
  %v1358 = vpop.f32.mrb[0].mxu0
  %v1359 = vadd.f32 %v732, %v1358
  %v1360 = vpop.f32.mrb[0].mxu0
  %v1361 = vadd.f32 %v734, %v1360
  %1362 = vmatprep.mubr.bf16.mxu0 0
  %1363 = vmatmul.mubr.bf16.gmra.mrb[0].mxu0 %v812
  %v1364 = vpop.f32.mrb[0].mxu0
  %v1365 = vadd.f32 %v738, %v1364
  %v1366 = vpop.f32.mrb[0].mxu0
  %v1367 = vadd.f32 %v740, %v1366
  %v1368 = vpop.f32.mrb[0].mxu0
  %v1369 = vadd.f32 %v742, %v1368
  %v1370 = vpop.f32.mrb[0].mxu0
  %v1371 = vadd.f32 %v744, %v1370
  %1372 = vmatprep.mubr.bf16.mxu0 0
  %1373 = vmatmul.mubr.bf16.gmra.mrb[0].mxu0 %v813
  %v1374 = vpop.f32.mrb[0].mxu0
  %v1375 = vadd.f32 %v748, %v1374
  %v1376 = vpop.f32.mrb[0].mxu0
  %v1377 = vadd.f32 %v750, %v1376
  %v1378 = vpop.f32.mrb[0].mxu0
  %v1379 = vadd.f32 %v752, %v1378
  %v1380 = vpop.f32.mrb[0].mxu0
  %v1381 = vadd.f32 %v754, %v1380
  %1382 = vmatprep.mubr.bf16.mxu0 0
  %1383 = vmatmul.mubr.bf16.gmra.mrb[0].mxu0 %v814
  %v1384 = vpop.f32.mrb[0].mxu0
  %v1385 = vadd.f32 %v758, %v1384
  %v1386 = vpop.f32.mrb[0].mxu0
  %v1387 = vadd.f32 %v760, %v1386
  %v1388 = vpop.f32.mrb[0].mxu0
  %v1389 = vadd.f32 %v762, %v1388
  %v1390 = vpop.f32.mrb[0].mxu0
  %v1391 = vadd.f32 %v764, %v1390
  %1392 = vmatprep.mubr.bf16.mxu0 0
  %1393 = vmatmul.mubr.bf16.gmra.mrb[0].mxu0 %v815
  %v1394 = vpop.f32.mrb[0].mxu0
  %v1395 = vadd.f32 %v768, %v1394
  %v1396 = vpop.f32.mrb[0].mxu0
  %v1397 = vadd.f32 %v770, %v1396
  %v1398 = vpop.f32.mrb[0].mxu0
  %v1399 = vadd.f32 %v772, %v1398
  %v1400 = vpop.f32.mrb[0].mxu0
  %v1401 = vadd.f32 %v774, %v1400
  %1402 = vdwg.mxu0
  %v1403 = vld [vmem:[%s4] sm:$0x3f]
  %v1405 = vlaneseq
  %v1406 = vshrl.u32 %v1405, 7
  %v1407 = vsub.s32 0, %v1406
  %v1408 = vrot.slane %v1403, %v1407
  %v1409 = vlaneseq
  %v1410 = vshrl.u32 %v1409, 7
  %v1411 = vsub.s32 1, %v1410
  %v1412 = vrot.slane %v1403, %v1411
  %v1413 = vlaneseq
  %v1414 = vshrl.u32 %v1413, 7
  %v1415 = vsub.s32 2, %v1414
  %v1416 = vrot.slane %v1403, %v1415
  %v1417 = vlaneseq
  %v1418 = vshrl.u32 %v1417, 7
  %v1419 = vsub.s32 3, %v1418
  %v1420 = vrot.slane %v1403, %v1419
  %v1421 = vlaneseq
  %v1422 = vshrl.u32 %v1421, 7
  %v1423 = vsub.s32 4, %v1422
  %v1424 = vrot.slane %v1403, %v1423
  %v1425 = vlaneseq
  %v1426 = vshrl.u32 %v1425, 7
  %v1427 = vsub.s32 5, %v1426
  %v1428 = vrot.slane %v1403, %v1427
  %v1435 = vadd.f32 %v1099, %v1408
  %v1436 = vadd.f32 %v1101, %v1412
  %v1437 = vadd.f32 %v1212, %v1416
  %v1438 = vadd.f32 %v1214, %v1420
  %v1439 = vadd.f32 %v1325, %v1424
  %v1440 = vadd.f32 %v1327, %v1428
  %v1441 = vadd.f32 %v1103, %v1408
  %v1442 = vadd.f32 %v1105, %v1412
  %v1443 = vadd.f32 %v1216, %v1416
  %v1444 = vadd.f32 %v1218, %v1420
  %v1445 = vadd.f32 %v1329, %v1424
  %v1446 = vadd.f32 %v1331, %v1428
  %v1447 = vadd.f32 %v1109, %v1408
  %v1448 = vadd.f32 %v1111, %v1412
  %v1449 = vadd.f32 %v1222, %v1416
  %v1450 = vadd.f32 %v1224, %v1420
  %v1451 = vadd.f32 %v1335, %v1424
  %v1452 = vadd.f32 %v1337, %v1428
  %v1453 = vadd.f32 %v1113, %v1408
  %v1454 = vadd.f32 %v1115, %v1412
  %v1455 = vadd.f32 %v1226, %v1416
  %v1456 = vadd.f32 %v1228, %v1420
  %v1457 = vadd.f32 %v1339, %v1424
  %v1458 = vadd.f32 %v1341, %v1428
  %v1459 = vadd.f32 %v1119, %v1408
  %v1460 = vadd.f32 %v1121, %v1412
  %v1461 = vadd.f32 %v1232, %v1416
  %v1462 = vadd.f32 %v1234, %v1420
  %v1463 = vadd.f32 %v1345, %v1424
  %v1464 = vadd.f32 %v1347, %v1428
  %v1465 = vadd.f32 %v1123, %v1408
  %v1466 = vadd.f32 %v1125, %v1412
  %v1467 = vadd.f32 %v1236, %v1416
  %v1468 = vadd.f32 %v1238, %v1420
  %v1469 = vadd.f32 %v1349, %v1424
  %v1470 = vadd.f32 %v1351, %v1428
  %v1471 = vadd.f32 %v1129, %v1408
  %v1472 = vadd.f32 %v1131, %v1412
  %v1473 = vadd.f32 %v1242, %v1416
  %v1474 = vadd.f32 %v1244, %v1420
  %v1475 = vadd.f32 %v1355, %v1424
  %v1476 = vadd.f32 %v1357, %v1428
  %v1477 = vadd.f32 %v1133, %v1408
  %v1478 = vadd.f32 %v1135, %v1412
  %v1479 = vadd.f32 %v1246, %v1416
  %v1480 = vadd.f32 %v1248, %v1420
  %v1481 = vadd.f32 %v1359, %v1424
  %v1482 = vadd.f32 %v1361, %v1428
  %v1483 = vadd.f32 %v1139, %v1408
  %v1484 = vadd.f32 %v1141, %v1412
  %v1485 = vadd.f32 %v1252, %v1416
  %v1486 = vadd.f32 %v1254, %v1420
  %v1487 = vadd.f32 %v1365, %v1424
  %v1488 = vadd.f32 %v1367, %v1428
  %v1489 = vadd.f32 %v1143, %v1408
  %v1490 = vadd.f32 %v1145, %v1412
  %v1491 = vadd.f32 %v1256, %v1416
  %v1492 = vadd.f32 %v1258, %v1420
  %v1493 = vadd.f32 %v1369, %v1424
  %v1494 = vadd.f32 %v1371, %v1428
  %v1495 = vadd.f32 %v1149, %v1408
  %v1496 = vadd.f32 %v1151, %v1412
  %v1497 = vadd.f32 %v1262, %v1416
  %v1498 = vadd.f32 %v1264, %v1420
  %v1499 = vadd.f32 %v1375, %v1424
  %v1500 = vadd.f32 %v1377, %v1428
  %v1501 = vadd.f32 %v1153, %v1408
  %v1502 = vadd.f32 %v1155, %v1412
  %v1503 = vadd.f32 %v1266, %v1416
  %v1504 = vadd.f32 %v1268, %v1420
  %v1505 = vadd.f32 %v1379, %v1424
  %v1506 = vadd.f32 %v1381, %v1428
  %v1507 = vadd.f32 %v1159, %v1408
  %v1508 = vadd.f32 %v1161, %v1412
  %v1509 = vadd.f32 %v1272, %v1416
  %v1510 = vadd.f32 %v1274, %v1420
  %v1511 = vadd.f32 %v1385, %v1424
  %v1512 = vadd.f32 %v1387, %v1428
  %v1513 = vadd.f32 %v1163, %v1408
  %v1514 = vadd.f32 %v1165, %v1412
  %v1515 = vadd.f32 %v1276, %v1416
  %v1516 = vadd.f32 %v1278, %v1420
  %v1517 = vadd.f32 %v1389, %v1424
  %v1518 = vadd.f32 %v1391, %v1428
  %v1519 = vadd.f32 %v1169, %v1408
  %v1520 = vadd.f32 %v1171, %v1412
  %v1521 = vadd.f32 %v1282, %v1416
  %v1522 = vadd.f32 %v1284, %v1420
  %v1523 = vadd.f32 %v1395, %v1424
  %v1524 = vadd.f32 %v1397, %v1428
  %v1525 = vadd.f32 %v1173, %v1408
  %v1526 = vadd.f32 %v1175, %v1412
  %v1527 = vadd.f32 %v1286, %v1416
  %v1528 = vadd.f32 %v1288, %v1420
  %v1529 = vadd.f32 %v1399, %v1424
  %v1530 = vadd.f32 %v1401, %v1428
  %1531 = vst [vmem:[%s5] sm:$0xff] %v1435
  %1532 = vst [vmem:[%s5 + $0x8] sm:$0xff] %v1436
  %1533 = vst [vmem:[%s5 + $0x10] sm:$0xff] %v1437
  %1534 = vst [vmem:[%s5 + $0x18] sm:$0xff] %v1438
  %1535 = vst [vmem:[%s5 + $0x20] sm:$0xff] %v1439
  %1536 = vst [vmem:[%s5 + $0x28] sm:$0xff] %v1440
  %1537 = vst [vmem:[%s5 + $0x30] sm:$0xff] %v1441
  %1538 = vst [vmem:[%s5 + $0x38] sm:$0xff] %v1442
  %1539 = vst [vmem:[%s5 + $0x40] sm:$0xff] %v1443
  %1540 = vst [vmem:[%s5 + $0x48] sm:$0xff] %v1444
  %1541 = vst [vmem:[%s5 + $0x50] sm:$0xff] %v1445
  %1542 = vst [vmem:[%s5 + $0x58] sm:$0xff] %v1446
  %1543 = vst [vmem:[%s5 + $0x60] sm:$0xff] %v1447
  %1544 = vst [vmem:[%s5 + $0x68] sm:$0xff] %v1448
  %1545 = vst [vmem:[%s5 + $0x70] sm:$0xff] %v1449
  %1546 = vst [vmem:[%s5 + $0x78] sm:$0xff] %v1450
  %1547 = vst [vmem:[%s5 + $0x80] sm:$0xff] %v1451
  %1548 = vst [vmem:[%s5 + $0x88] sm:$0xff] %v1452
  %1549 = vst [vmem:[%s5 + $0x90] sm:$0xff] %v1453
  %1550 = vst [vmem:[%s5 + $0x98] sm:$0xff] %v1454
  %1551 = vst [vmem:[%s5 + $0xa0] sm:$0xff] %v1455
  %1552 = vst [vmem:[%s5 + $0xa8] sm:$0xff] %v1456
  %1553 = vst [vmem:[%s5 + $0xb0] sm:$0xff] %v1457
  %1554 = vst [vmem:[%s5 + $0xb8] sm:$0xff] %v1458
  %1555 = vst [vmem:[%s5 + $0xc0] sm:$0xff] %v1459
  %1556 = vst [vmem:[%s5 + $0xc8] sm:$0xff] %v1460
  %1557 = vst [vmem:[%s5 + $0xd0] sm:$0xff] %v1461
  %1558 = vst [vmem:[%s5 + $0xd8] sm:$0xff] %v1462
  %1559 = vst [vmem:[%s5 + $0xe0] sm:$0xff] %v1463
  %1560 = vst [vmem:[%s5 + $0xe8] sm:$0xff] %v1464
  %1561 = vst [vmem:[%s5 + $0xf0] sm:$0xff] %v1465
  %1562 = vst [vmem:[%s5 + $0xf8] sm:$0xff] %v1466
  %1563 = vst [vmem:[%s5 + $0x100] sm:$0xff] %v1467
  %1564 = vst [vmem:[%s5 + $0x108] sm:$0xff] %v1468
  %1565 = vst [vmem:[%s5 + $0x110] sm:$0xff] %v1469
  %1566 = vst [vmem:[%s5 + $0x118] sm:$0xff] %v1470
  %1567 = vst [vmem:[%s5 + $0x120] sm:$0xff] %v1471
  %1568 = vst [vmem:[%s5 + $0x128] sm:$0xff] %v1472
  %1569 = vst [vmem:[%s5 + $0x130] sm:$0xff] %v1473
  %1570 = vst [vmem:[%s5 + $0x138] sm:$0xff] %v1474
  %1571 = vst [vmem:[%s5 + $0x140] sm:$0xff] %v1475
  %1572 = vst [vmem:[%s5 + $0x148] sm:$0xff] %v1476
  %1573 = vst [vmem:[%s5 + $0x150] sm:$0xff] %v1477
  %1574 = vst [vmem:[%s5 + $0x158] sm:$0xff] %v1478
  %1575 = vst [vmem:[%s5 + $0x160] sm:$0xff] %v1479
  %1576 = vst [vmem:[%s5 + $0x168] sm:$0xff] %v1480
  %1577 = vst [vmem:[%s5 + $0x170] sm:$0xff] %v1481
  %1578 = vst [vmem:[%s5 + $0x178] sm:$0xff] %v1482
  %1579 = vst [vmem:[%s5 + $0x180] sm:$0xff] %v1483
  %1580 = vst [vmem:[%s5 + $0x188] sm:$0xff] %v1484
  %1581 = vst [vmem:[%s5 + $0x190] sm:$0xff] %v1485
  %1582 = vst [vmem:[%s5 + $0x198] sm:$0xff] %v1486
  %1583 = vst [vmem:[%s5 + $0x1a0] sm:$0xff] %v1487
  %1584 = vst [vmem:[%s5 + $0x1a8] sm:$0xff] %v1488
  %1585 = vst [vmem:[%s5 + $0x1b0] sm:$0xff] %v1489
  %1586 = vst [vmem:[%s5 + $0x1b8] sm:$0xff] %v1490
  %1587 = vst [vmem:[%s5 + $0x1c0] sm:$0xff] %v1491
  %1588 = vst [vmem:[%s5 + $0x1c8] sm:$0xff] %v1492
  %1589 = vst [vmem:[%s5 + $0x1d0] sm:$0xff] %v1493
  %1590 = vst [vmem:[%s5 + $0x1d8] sm:$0xff] %v1494
  %1591 = vst [vmem:[%s5 + $0x1e0] sm:$0xff] %v1495
  %1592 = vst [vmem:[%s5 + $0x1e8] sm:$0xff] %v1496
  %1593 = vst [vmem:[%s5 + $0x1f0] sm:$0xff] %v1497
  %1594 = vst [vmem:[%s5 + $0x1f8] sm:$0xff] %v1498
  %1595 = vst [vmem:[%s5 + $0x200] sm:$0xff] %v1499
  %1596 = vst [vmem:[%s5 + $0x208] sm:$0xff] %v1500
  %1597 = vst [vmem:[%s5 + $0x210] sm:$0xff] %v1501
  %1598 = vst [vmem:[%s5 + $0x218] sm:$0xff] %v1502
  %1599 = vst [vmem:[%s5 + $0x220] sm:$0xff] %v1503
  %1600 = vst [vmem:[%s5 + $0x228] sm:$0xff] %v1504
  %1601 = vst [vmem:[%s5 + $0x230] sm:$0xff] %v1505
  %1602 = vst [vmem:[%s5 + $0x238] sm:$0xff] %v1506
  %1603 = vst [vmem:[%s5 + $0x240] sm:$0xff] %v1507
  %1604 = vst [vmem:[%s5 + $0x248] sm:$0xff] %v1508
  %1605 = vst [vmem:[%s5 + $0x250] sm:$0xff] %v1509
  %1606 = vst [vmem:[%s5 + $0x258] sm:$0xff] %v1510
  %1607 = vst [vmem:[%s5 + $0x260] sm:$0xff] %v1511
  %1608 = vst [vmem:[%s5 + $0x268] sm:$0xff] %v1512
  %1609 = vst [vmem:[%s5 + $0x270] sm:$0xff] %v1513
  %1610 = vst [vmem:[%s5 + $0x278] sm:$0xff] %v1514
  %1611 = vst [vmem:[%s5 + $0x280] sm:$0xff] %v1515
  %1612 = vst [vmem:[%s5 + $0x288] sm:$0xff] %v1516
  %1613 = vst [vmem:[%s5 + $0x290] sm:$0xff] %v1517
  %1614 = vst [vmem:[%s5 + $0x298] sm:$0xff] %v1518
  %1615 = vst [vmem:[%s5 + $0x2a0] sm:$0xff] %v1519
  %1616 = vst [vmem:[%s5 + $0x2a8] sm:$0xff] %v1520
  %1617 = vst [vmem:[%s5 + $0x2b0] sm:$0xff] %v1521
  %1618 = vst [vmem:[%s5 + $0x2b8] sm:$0xff] %v1522
  %1619 = vst [vmem:[%s5 + $0x2c0] sm:$0xff] %v1523
  %1620 = vst [vmem:[%s5 + $0x2c8] sm:$0xff] %v1524
  %1621 = vst [vmem:[%s5 + $0x2d0] sm:$0xff] %v1525
  %1622 = vst [vmem:[%s5 + $0x2d8] sm:$0xff] %v1526
  %1623 = vst [vmem:[%s5 + $0x2e0] sm:$0xff] %v1527
  %1624 = vst [vmem:[%s5 + $0x2e8] sm:$0xff] %v1528
  %1625 = vst [vmem:[%s5 + $0x2f0] sm:$0xff] %v1529
  %1626 = vst [vmem:[%s5 + $0x2f8] sm:$0xff] %v1530
  // Predicated region
  $region22: #{rnn_forward.7} parent=0 // pred_check
    _
  $region23: #{rnn_forward.7} parent=0 // pred_check_branch
    %1628 = sbr.rel (0) target = $region25
  $region24: #{rnn_forward.7} parent=0 // pred_region
    _
  $region25: #{rnn_forward.7} parent=0 // pred_fallthru
    _
  // Predicated region
  $region26: #{rnn_forward.7} parent=0 // pred_check
    _
  $region27: #{rnn_forward.7} parent=0 // pred_check_branch
    %1630 = sbr.rel (0) target = $region29
  $region28: #{rnn_forward.7} parent=0 // pred_region
    _
  $region29: #{rnn_forward.7} parent=0 // pred_fallthru
    _

// kernel: rnn_forward.8
$region0: #{rnn_forward.8}
  #allocation0 [shape = 'u32[]', space=smem, size = 0x4, offset = 0x4, fixed_abs, tag = 'smem constant byte address 0x4 - core index']
  #allocation1 [shape = 'u32[144,128]{1,0:T(1,128)}', space=vmem, size = 0x12000, scoped, tag = 'internal scratch']
  #allocation2 [shape = 'f32[16,128]{1,0:T(8,128)}', space=vmem, size = 0x2000, scoped, tag = 'scratch operand']
  %s0 = inlined_call_operand.vmem [shape: f32[8,16,768], index: 0, kind: input, shape index: {}]
  %s1 = inlined_call_operand.vmem [shape: bf16[2,128,384], index: 1, kind: input, shape index: {}]
  %s2 = inlined_call_operand.vmem [shape: f32[2,1,128], index: 2, kind: input, shape index: {}]
  %s3 = inlined_call_operand.vmem [shape: f32[2,16,128], index: 3, kind: output, shape index: {}]
  %s4 = sld [smem:[#allocation0]]
  $region76: #{rnn_forward.8} parent=0
    _
  %s6 = ssub.s32 1, %s4
  %s7 = scalar_select 0, %s6, %s4
  $region1: #{rnn_forward.8} parent=0
    #allocation3 [shape = 'u8[393216]{0}', space=vmem, size = 0x60000, scoped, tag = 'input window, operand 0']
    loop: start=0, step=1, limit=4
    $region2: #{rnn_forward.8} parent=1 // loop_pre_header
      _
    $region3: #{rnn_forward.8} parent=1 // loop_header
      %s9 = sphi 0, %s13
      %p10 = scmp.ge.s32.totalorder %s9, 4
      %s16 = sphi 0, %s28
      %s17 = sphi 0, %s24
      %s18 = sphi 0, %s16
      %s19 = sphi 0, %s17
      %s20 = sphi 0, %s18
      %s21 = sphi 0, %s19
      %s43 = sphi 0, %s45
      %s46 = sphi 0, %s43
      %s47 = sphi 0, %s46
      %s63 = sphi 0, %s47
      %s69 = sphi 0, %s71
      %s72 = sphi 0, %s69
      %s73 = sphi 0, %s72
      %s89 = sphi 0, %s73
      %s95 = sphi 0, %s97
      %s98 = sphi 0, %s95
      %s99 = sphi 0, %s98
      %s115 = sphi 0, %s99
      %s121 = sphi 0, %s123
      %s124 = sphi 0, %s121
      %s125 = sphi 0, %s124
      %s141 = sphi 0, %s125
    $region4: #{rnn_forward.8} parent=1 // loop_header_branch
      %12 = sbr.rel (%p10) target = $region8
    $region5: #{rnn_forward.8} parent=1 // loop_body
      %s14 = ssub.s32 %s9, 1
      %s15 = ssub.s32 %s9, 2
      %s22 = sadd.s32 1, %s17
      %p23 = scmp.ge.s32.totalorder %s22, 1
      %s24 = scalar_select %p23, 0, %s22
      %s25 = sadd.s32 1, %s16
      %s26 = scalar_select %p23, %s25, %s16
      %p27 = scmp.ge.s32.totalorder %s26, 2
      %s28 = scalar_select %p27, 0, %s26
      %s29 = ssub.s32 1, %s16
      %s30 = smul.u32 %s29, %s17
      %s31 = ssub.s32 0, %s17
      %s32 = smul.u32 %s16, %s31
      %s33 = sadd.s32 %s30, %s32
      %s34 = ssub.s32 1, %s28
      %s35 = smul.u32 %s34, %s24
      %s36 = ssub.s32 0, %s24
      %s37 = smul.u32 %s28, %s36
      %s38 = sadd.s32 %s35, %s37
      %s39 = ssub.s32 %s33, %s38
      %s40 = ssub.s32 %s16, %s28
      %s41 = sor.u32 %s39, %s40
      %p42 = scmp.eq.s32.totalorder %s41, 0
      %s44 = sadd.s32 %s43, 1
      %s45 = scalar_select %p42, %s43, %s44
      %p48 = pneg %p42
      %p49 = scmp.eq.s32.totalorder %s9, 1
      %p50 = por %p48, %p49
      %p51 = scmp.ne.s32.totalorder %s43, %s46
      %p52 = scmp.eq.s32.totalorder %s9, 0
      %p53 = por %p51, %p52
      %p54 = scmp.ne.s32.totalorder %s43, %s46
      %p55 = scmp.eq.s32.totalorder %s14, 1
      %p56 = por %p54, %p55
      %p57 = scmp.ne.s32.totalorder %s46, %s47
      %p58 = scmp.eq.s32.totalorder %s14, 0
      %p59 = por %p57, %p58
      %p60 = scmp.ne.s32.totalorder %s46, %s47
      %p61 = scmp.eq.s32.totalorder %s15, 1
      %p62 = por %p60, %p61
      %p64 = scmp.ne.s32.totalorder %s47, %s63
      %p65 = scmp.eq.s32.totalorder %s15, 0
      %p66 = por %p64, %p65
      %s67 = ssub.s32 %s16, %s28
      %p68 = scmp.eq.s32.totalorder %s67, 0
      %s70 = sadd.s32 %s69, 1
      %s71 = scalar_select %p68, %s69, %s70
      %p74 = pneg %p68
      %p75 = scmp.eq.s32.totalorder %s9, 1
      %p76 = por %p74, %p75
      %p77 = scmp.ne.s32.totalorder %s69, %s72
      %p78 = scmp.eq.s32.totalorder %s9, 0
      %p79 = por %p77, %p78
      %p80 = scmp.ne.s32.totalorder %s69, %s72
      %p81 = scmp.eq.s32.totalorder %s14, 1
      %p82 = por %p80, %p81
      %p83 = scmp.ne.s32.totalorder %s72, %s73
      %p84 = scmp.eq.s32.totalorder %s14, 0
      %p85 = por %p83, %p84
      %p86 = scmp.ne.s32.totalorder %s72, %s73
      %p87 = scmp.eq.s32.totalorder %s15, 1
      %p88 = por %p86, %p87
      %p90 = scmp.ne.s32.totalorder %s73, %s89
      %p91 = scmp.eq.s32.totalorder %s15, 0
      %p92 = por %p90, %p91
      %s93 = ssub.s32 %s16, %s28
      %p94 = scmp.eq.s32.totalorder %s93, 0
      %s96 = sadd.s32 %s95, 1
      %s97 = scalar_select %p94, %s95, %s96
      %p100 = pneg %p94
      %p101 = scmp.eq.s32.totalorder %s9, 1
      %p102 = por %p100, %p101
      %p103 = scmp.ne.s32.totalorder %s95, %s98
      %p104 = scmp.eq.s32.totalorder %s9, 0
      %p105 = por %p103, %p104
      %p106 = scmp.ne.s32.totalorder %s95, %s98
      %p107 = scmp.eq.s32.totalorder %s14, 1
      %p108 = por %p106, %p107
      %p109 = scmp.ne.s32.totalorder %s98, %s99
      %p110 = scmp.eq.s32.totalorder %s14, 0
      %p111 = por %p109, %p110
      %p112 = scmp.ne.s32.totalorder %s98, %s99
      %p113 = scmp.eq.s32.totalorder %s15, 1
      %p114 = por %p112, %p113
      %p116 = scmp.ne.s32.totalorder %s99, %s115
      %p117 = scmp.eq.s32.totalorder %s15, 0
      %p118 = por %p116, %p117
      %s119 = ssub.s32 %s16, %s28
      %p120 = scmp.eq.s32.totalorder %s119, 0
      %s122 = sadd.s32 %s121, 1
      %s123 = scalar_select %p120, %s121, %s122
      %p126 = pneg %p120
      %p127 = scmp.eq.s32.totalorder %s9, 1
      %p128 = por %p126, %p127
      %p129 = scmp.ne.s32.totalorder %s121, %s124
      %p130 = scmp.eq.s32.totalorder %s9, 0
      %p131 = por %p129, %p130
      %p132 = scmp.ne.s32.totalorder %s121, %s124
      %p133 = scmp.eq.s32.totalorder %s14, 1
      %p134 = por %p132, %p133
      %p135 = scmp.ne.s32.totalorder %s124, %s125
      %p136 = scmp.eq.s32.totalorder %s14, 0
      %p137 = por %p135, %p136
      %p138 = scmp.ne.s32.totalorder %s124, %s125
      %p139 = scmp.eq.s32.totalorder %s15, 1
      %p140 = por %p138, %p139
      %p142 = scmp.ne.s32.totalorder %s125, %s141
      %p143 = scmp.eq.s32.totalorder %s15, 0
      %p144 = por %p142, %p143
      %p145 = scmp.le.s32.totalorder 1, %s9
      %p146 = scmp.lt.s32.totalorder %s9, 3
      %p147 = pnand %p145, %p146
      %p148 = pneg %p147
      // Predicated region
      $region9: #{rnn_forward.8} parent=5 // pred_check
        _
      $region10: #{rnn_forward.8} parent=5 // pred_check_branch
        %150 = sbr.rel (%p147) target = $region12
      $region11: #{rnn_forward.8} parent=5 // pred_region
        %s151 = ssub.s32 %s9, 1
      $region12: #{rnn_forward.8} parent=5 // pred_fallthru
        _
      %p152 = scmp.lt.s32.totalorder %s9, 2
      // Predicated region
      $region13: #{rnn_forward.8} parent=5 // pred_check
        %p153 = pneg %p152
      $region14: #{rnn_forward.8} parent=5 // pred_check_branch
        %155 = sbr.rel (%p153) target = $region16
      $region15: #{rnn_forward.8} parent=5 // pred_region
        // Predicated region
        $region17: #{rnn_forward.8} parent=15 // pred_check
          %p156 = pneg %p53
        $region18: #{rnn_forward.8} parent=15 // pred_check_branch
          %158 = sbr.rel (%p156) target = $region20
        $region19: #{rnn_forward.8} parent=15 // pred_region
          %s159 = sand.u32 %s43, 1
          %s160 = sand.u32 %s43, 1
          %s161 = smul.addr %s160, 384
          %s162 = scalar_lea.vmem [#allocation3], %s161
          %s163 = ssub.s32 1, %s16
          %s164 = smul.u32 %s163, %s17
          %s165 = ssub.s32 0, %s17
          %s166 = smul.u32 %s16, %s165
          %s167 = sadd.s32 %s164, %s166
          %s168 = smul.u32 8, %s167
          %s169 = smul.u32 3, %s16
          %s170 = smul.addr %s168, 12
          %s171 = sadd.s32 %s169, %s170
          %s172 = smul.addr %s171, 8
          %s173 = scalar_lea.vmem %s0, %s172
          // Predicated region
          $region21: #{rnn_forward.8} parent=19 // pred_check
            _
          $region22: #{rnn_forward.8} parent=19 // pred_check_branch
            %175 = sbr.rel (0) target = $region24
          $region23: #{rnn_forward.8} parent=19 // pred_region
            // Predicated region
            $region25: #{rnn_forward.8} parent=23 // pred_check
              _
            $region26: #{rnn_forward.8} parent=23 // pred_check_branch
              %177 = sbr.rel (0) target = $region28
            $region27: #{rnn_forward.8} parent=23 // pred_region
              loop: start=0, step=1, limit=1
              $region29: #{rnn_forward.8} parent=27 // loop_pre_header
                _
              $region30: #{rnn_forward.8} parent=27 // loop_header
                %s179 = sphi 0, %s183
                %p180 = scmp.ge.s32.totalorder %s179, 1
                %s184 = sphi %s173, %s173
                %s185 = sphi %s162, %s162
              $region31: #{rnn_forward.8} parent=27 // loop_header_branch
                %182 = sbr.rel (%p180) target = $region35
              $region32: #{rnn_forward.8} parent=27 // loop_body
                %v186 = vld [vmem:[%s184] sm:$0xff]
                %187 = vst [vmem:[%s185] sm:$0xff] %v186
                %v188 = vld [vmem:[%s184 + $0x8] sm:$0xff]
                %189 = vst [vmem:[%s185 + $0x8] sm:$0xff] %v188
                %v190 = vld [vmem:[%s184 + $0x10] sm:$0xff]
                %191 = vst [vmem:[%s185 + $0x10] sm:$0xff] %v190
                %v192 = vld [vmem:[%s184 + $0x30] sm:$0xff]
                %193 = vst [vmem:[%s185 + $0x18] sm:$0xff] %v192
                %v194 = vld [vmem:[%s184 + $0x38] sm:$0xff]
                %195 = vst [vmem:[%s185 + $0x20] sm:$0xff] %v194
                %v196 = vld [vmem:[%s184 + $0x40] sm:$0xff]
                %197 = vst [vmem:[%s185 + $0x28] sm:$0xff] %v196
                %v198 = vld [vmem:[%s184 + $0x60] sm:$0xff]
                %199 = vst [vmem:[%s185 + $0x30] sm:$0xff] %v198
                %v200 = vld [vmem:[%s184 + $0x68] sm:$0xff]
                %201 = vst [vmem:[%s185 + $0x38] sm:$0xff] %v200
                %v202 = vld [vmem:[%s184 + $0x70] sm:$0xff]
                %203 = vst [vmem:[%s185 + $0x40] sm:$0xff] %v202
                %v204 = vld [vmem:[%s184 + $0x90] sm:$0xff]
                %205 = vst [vmem:[%s185 + $0x48] sm:$0xff] %v204
                %v206 = vld [vmem:[%s184 + $0x98] sm:$0xff]
                %207 = vst [vmem:[%s185 + $0x50] sm:$0xff] %v206
                %v208 = vld [vmem:[%s184 + $0xa0] sm:$0xff]
                %209 = vst [vmem:[%s185 + $0x58] sm:$0xff] %v208
                %v210 = vld [vmem:[%s184 + $0xc0] sm:$0xff]
                %211 = vst [vmem:[%s185 + $0x60] sm:$0xff] %v210
                %v212 = vld [vmem:[%s184 + $0xc8] sm:$0xff]
                %213 = vst [vmem:[%s185 + $0x68] sm:$0xff] %v212
                %v214 = vld [vmem:[%s184 + $0xd0] sm:$0xff]
                %215 = vst [vmem:[%s185 + $0x70] sm:$0xff] %v214
                %v216 = vld [vmem:[%s184 + $0xf0] sm:$0xff]
                %217 = vst [vmem:[%s185 + $0x78] sm:$0xff] %v216
                %v218 = vld [vmem:[%s184 + $0xf8] sm:$0xff]
                %219 = vst [vmem:[%s185 + $0x80] sm:$0xff] %v218
                %v220 = vld [vmem:[%s184 + $0x100] sm:$0xff]
                %221 = vst [vmem:[%s185 + $0x88] sm:$0xff] %v220
                %v222 = vld [vmem:[%s184 + $0x120] sm:$0xff]
                %223 = vst [vmem:[%s185 + $0x90] sm:$0xff] %v222
                %v224 = vld [vmem:[%s184 + $0x128] sm:$0xff]
                %225 = vst [vmem:[%s185 + $0x98] sm:$0xff] %v224
                %v226 = vld [vmem:[%s184 + $0x130] sm:$0xff]
                %227 = vst [vmem:[%s185 + $0xa0] sm:$0xff] %v226
                %v228 = vld [vmem:[%s184 + $0x150] sm:$0xff]
                %229 = vst [vmem:[%s185 + $0xa8] sm:$0xff] %v228
                %v230 = vld [vmem:[%s184 + $0x158] sm:$0xff]
                %231 = vst [vmem:[%s185 + $0xb0] sm:$0xff] %v230
                %v232 = vld [vmem:[%s184 + $0x160] sm:$0xff]
                %233 = vst [vmem:[%s185 + $0xb8] sm:$0xff] %v232
                %v234 = vld [vmem:[%s184 + $0x180] sm:$0xff]
                %235 = vst [vmem:[%s185 + $0xc0] sm:$0xff] %v234
                %v236 = vld [vmem:[%s184 + $0x188] sm:$0xff]
                %237 = vst [vmem:[%s185 + $0xc8] sm:$0xff] %v236
                %v238 = vld [vmem:[%s184 + $0x190] sm:$0xff]
                %239 = vst [vmem:[%s185 + $0xd0] sm:$0xff] %v238
                %v240 = vld [vmem:[%s184 + $0x1b0] sm:$0xff]
                %241 = vst [vmem:[%s185 + $0xd8] sm:$0xff] %v240
                %v242 = vld [vmem:[%s184 + $0x1b8] sm:$0xff]
                %243 = vst [vmem:[%s185 + $0xe0] sm:$0xff] %v242
                %v244 = vld [vmem:[%s184 + $0x1c0] sm:$0xff]
                %245 = vst [vmem:[%s185 + $0xe8] sm:$0xff] %v244
                %v246 = vld [vmem:[%s184 + $0x1e0] sm:$0xff]
                %247 = vst [vmem:[%s185 + $0xf0] sm:$0xff] %v246
                %v248 = vld [vmem:[%s184 + $0x1e8] sm:$0xff]
                %249 = vst [vmem:[%s185 + $0xf8] sm:$0xff] %v248
                %v250 = vld [vmem:[%s184 + $0x1f0] sm:$0xff]
                %251 = vst [vmem:[%s185 + $0x100] sm:$0xff] %v250
                %v252 = vld [vmem:[%s184 + $0x210] sm:$0xff]
                %253 = vst [vmem:[%s185 + $0x108] sm:$0xff] %v252
                %v254 = vld [vmem:[%s184 + $0x218] sm:$0xff]
                %255 = vst [vmem:[%s185 + $0x110] sm:$0xff] %v254
                %v256 = vld [vmem:[%s184 + $0x220] sm:$0xff]
                %257 = vst [vmem:[%s185 + $0x118] sm:$0xff] %v256
                %v258 = vld [vmem:[%s184 + $0x240] sm:$0xff]
                %259 = vst [vmem:[%s185 + $0x120] sm:$0xff] %v258
                %v260 = vld [vmem:[%s184 + $0x248] sm:$0xff]
                %261 = vst [vmem:[%s185 + $0x128] sm:$0xff] %v260
                %v262 = vld [vmem:[%s184 + $0x250] sm:$0xff]
                %263 = vst [vmem:[%s185 + $0x130] sm:$0xff] %v262
                %v264 = vld [vmem:[%s184 + $0x270] sm:$0xff]
                %265 = vst [vmem:[%s185 + $0x138] sm:$0xff] %v264
                %v266 = vld [vmem:[%s184 + $0x278] sm:$0xff]
                %267 = vst [vmem:[%s185 + $0x140] sm:$0xff] %v266
                %v268 = vld [vmem:[%s184 + $0x280] sm:$0xff]
                %269 = vst [vmem:[%s185 + $0x148] sm:$0xff] %v268
                %v270 = vld [vmem:[%s184 + $0x2a0] sm:$0xff]
                %271 = vst [vmem:[%s185 + $0x150] sm:$0xff] %v270
                %v272 = vld [vmem:[%s184 + $0x2a8] sm:$0xff]
                %273 = vst [vmem:[%s185 + $0x158] sm:$0xff] %v272
                %v274 = vld [vmem:[%s184 + $0x2b0] sm:$0xff]
                %275 = vst [vmem:[%s185 + $0x160] sm:$0xff] %v274
                %v276 = vld [vmem:[%s184 + $0x2d0] sm:$0xff]
                %277 = vst [vmem:[%s185 + $0x168] sm:$0xff] %v276
                %v278 = vld [vmem:[%s184 + $0x2d8] sm:$0xff]
                %279 = vst [vmem:[%s185 + $0x170] sm:$0xff] %v278
                %v280 = vld [vmem:[%s184 + $0x2e0] sm:$0xff]
                %281 = vst [vmem:[%s185 + $0x178] sm:$0xff] %v280
              $region33: #{rnn_forward.8} parent=27 // loop_footer
                %s183 = sadd.s32 1, %s179
              $region34: #{rnn_forward.8} parent=27 // loop_footer_branch
                %178 = sbr.rel target = $region30
              $region35: #{rnn_forward.8} parent=27 // loop_exit
                _
            $region28: #{rnn_forward.8} parent=23 // pred_fallthru
              _
            // Predicated region
            $region36: #{rnn_forward.8} parent=23 // pred_check
              _
            $region37: #{rnn_forward.8} parent=23 // pred_check_branch
              %283 = sbr.rel target = $region39
            $region38: #{rnn_forward.8} parent=23 // pred_region
              _
            $region39: #{rnn_forward.8} parent=23 // pred_fallthru
              _
          $region24: #{rnn_forward.8} parent=19 // pred_fallthru
            _
          %284 = vnop
        $region20: #{rnn_forward.8} parent=15 // pred_fallthru
          _
        // Predicated region
        $region40: #{rnn_forward.8} parent=15 // pred_check
          %p285 = pneg %p79
        $region41: #{rnn_forward.8} parent=15 // pred_check_branch
          %287 = sbr.rel (%p285) target = $region43
        $region42: #{rnn_forward.8} parent=15 // pred_region
          %p288 = scmp.lt.s32.totalorder %s16, 1
          %s289 = scalar_select %p288, %s16, 1
          %s290 = smul.addr %s289, 48
          %s291 = smul.addr %s290, 4
          %s292 = scalar_lea.vmem %s1, %s291
        $region43: #{rnn_forward.8} parent=15 // pred_fallthru
          _
        // Predicated region
        $region44: #{rnn_forward.8} parent=15 // pred_check
          %p293 = pneg %p105
        $region45: #{rnn_forward.8} parent=15 // pred_check_branch
          %295 = sbr.rel (%p293) target = $region47
        $region46: #{rnn_forward.8} parent=15 // pred_region
          %p296 = scmp.lt.s32.totalorder %s16, 1
          %s297 = scalar_select %p296, %s16, 1
          %s298 = scalar_lea.vmem %s2, %s297
        $region47: #{rnn_forward.8} parent=15 // pred_fallthru
          _
      $region16: #{rnn_forward.8} parent=5 // pred_fallthru
        _
      %p299 = scmp.le.s32.totalorder 1, %s9
      %p300 = scmp.lt.s32.totalorder %s9, 3
      %p301 = pnand %p299, %p300
      %p302 = pneg %p301
      // Predicated region
      $region48: #{rnn_forward.8} parent=5 // pred_check
        _
      $region49: #{rnn_forward.8} parent=5 // pred_check_branch
        %304 = sbr.rel (%p301) target = $region51
      $region50: #{rnn_forward.8} parent=5 // pred_region
        %s305 = ssub.s32 %s9, 1
        %s306 = sand.u32 %s46, 1
        %s307 = sand.u32 %s46, 1
        %s308 = smul.addr %s307, 384
        %s309 = scalar_lea.vmem [#allocation3], %s308
        // Predicated region
        $region52: #{rnn_forward.8} parent=50 // pred_check
          %p310 = pneg %p59
        $region53: #{rnn_forward.8} parent=50 // pred_check_branch
          %312 = sbr.rel (%p310) target = $region55
        $region54: #{rnn_forward.8} parent=50 // pred_region
          _
        $region55: #{rnn_forward.8} parent=50 // pred_fallthru
          _
        %s313 = sand.u32 %s46, 1
        %s314 = sand.u32 %s46, 1
        %s315 = smul.addr %s314, 384
        %s316 = scalar_lea.vmem [#allocation3], %s315
        %p317 = pneg %p59
        %p318 = pneg %p56
        %p319 = scmp.lt.s32.totalorder %s18, 1
        %s320 = scalar_select %p319, %s18, 1
        %s321 = smul.addr %s320, 48
        %s322 = smul.addr %s321, 4
        %s323 = scalar_lea.vmem %s1, %s322
        %p324 = pneg %p85
        %p325 = pneg %p82
        %p326 = scmp.lt.s32.totalorder %s18, 1
        %s327 = scalar_select %p326, %s18, 1
        %s328 = scalar_lea.vmem %s2, %s327
        %p329 = pneg %p111
        %p330 = pneg %p108
        %p331 = pneg %p137
        %p332 = pneg %p134
        %p333 = scmp.lt.s32.totalorder %s18, 1
        %s334 = scalar_select %p333, %s18, 1
        %s335 = smul.addr %s334, 2
        %s336 = smul.addr %s335, 8
        %s337 = scalar_lea.vmem %s3, %s336
        %s338 = ssub.s32 1, %s18
        %s339 = smul.u32 %s338, %s19
        %s340 = ssub.s32 0, %s19
        %s341 = smul.u32 %s18, %s340
        %s342 = sadd.s32 %s339, %s341
        %s343 = smul.u32 8, %s342
        %s344 = smul.u32 3, %s18
        %p345 = scmp.lt.s32.totalorder %s18, 1
        %s346 = scalar_select %p345, %s18, 1
        %s347 = smul.addr %s346, 48
        %s348 = smul.addr %s347, 4
        %s349 = scalar_lea.vmem %s1, %s348
        %p350 = scmp.lt.s32.totalorder %s18, 1
        %s351 = scalar_select %p350, %s18, 1
        %s352 = scalar_lea.vmem %s2, %s351
        %p353 = scmp.lt.s32.totalorder %s18, 1
        %s354 = scalar_select %p353, %s18, 1
        %s355 = smul.addr %s354, 2
        %s356 = smul.addr %s355, 8
        %s357 = scalar_lea.vmem %s3, %s356
        %p359 = scmp.eq.s32.totalorder %s19, 0
        // Predicated region
        $region56: #{rnn_forward.8} parent=50 // pred_check
          %p360 = pneg %p359
        $region57: #{rnn_forward.8} parent=50 // pred_check_branch
          %362 = sbr.rel (%p360) target = $region59
        $region58: #{rnn_forward.8} parent=50 // pred_region
          %363 = vst [vmem:[#allocation2] sm:$0xff] 0.0
          %364 = vst [vmem:[#allocation2 + $0x8] sm:$0xff] 0.0
        $region59: #{rnn_forward.8} parent=50 // pred_fallthru
          _
        %v365 = vld [vmem:[%s349] sm:$0xff]
        %v366 = vld [vmem:[%s349 + $0x8] sm:$0xf]
        %v367 = vld [vmem:[%s349 + $0xc] sm:$0xff]
        %v368 = vld [vmem:[%s349 + $0x14] sm:$0xf]
        %v369 = vld [vmem:[%s349 + $0x18] sm:$0xff]
        %v370 = vld [vmem:[%s349 + $0x20] sm:$0xf]
        %v371 = vld [vmem:[%s349 + $0x24] sm:$0xff]
        %v372 = vld [vmem:[%s349 + $0x2c] sm:$0xf]
        %v373 = vld [vmem:[%s349 + $0x30] sm:$0xff]
        %v374 = vld [vmem:[%s349 + $0x38] sm:$0xf]
        %v375 = vld [vmem:[%s349 + $0x3c] sm:$0xff]
        %v376 = vld [vmem:[%s349 + $0x44] sm:$0xf]
        %v377 = vld [vmem:[%s349 + $0x48] sm:$0xff]
        %v378 = vld [vmem:[%s349 + $0x50] sm:$0xf]
        %v379 = vld [vmem:[%s349 + $0x54] sm:$0xff]
        %v380 = vld [vmem:[%s349 + $0x5c] sm:$0xf]
        %v381 = vld [vmem:[%s349 + $0x60] sm:$0xff]
        %v382 = vld [vmem:[%s349 + $0x68] sm:$0xf]
        %v383 = vld [vmem:[%s349 + $0x6c] sm:$0xff]
        %v384 = vld [vmem:[%s349 + $0x74] sm:$0xf]
        %v385 = vld [vmem:[%s349 + $0x78] sm:$0xff]
        %v386 = vld [vmem:[%s349 + $0x80] sm:$0xf]
        %v387 = vld [vmem:[%s349 + $0x84] sm:$0xff]
        %v388 = vld [vmem:[%s349 + $0x8c] sm:$0xf]
        %v389 = vld [vmem:[%s349 + $0x90] sm:$0xff]
        %v390 = vld [vmem:[%s349 + $0x98] sm:$0xf]
        %v391 = vld [vmem:[%s349 + $0x9c] sm:$0xff]
        %v392 = vld [vmem:[%s349 + $0xa4] sm:$0xf]
        %v393 = vld [vmem:[%s349 + $0xa8] sm:$0xff]
        %v394 = vld [vmem:[%s349 + $0xb0] sm:$0xf]
        %v395 = vld [vmem:[%s349 + $0xb4] sm:$0xff]
        %v396 = vld [vmem:[%s349 + $0xbc] sm:$0xf]
        %v397 = vld [vmem:[%s352] sm:$0x1]
        %s398 = smul.u32 %s18, 7
        %s399 = smul.u32 %s18, 2
        %s400 = ssub.s32 1, %s399
        %v401 = vld [vmem:[#allocation2] sm:$0xff]
        %v402 = vld [vmem:[#allocation2 + $0x8] sm:$0xff]
        %s403 = smul.u32 %s398, 6
        %s404 = smul.addr %s403, 8
        %s405 = scalar_lea.vmem %s309, %s404 [#allocation3]
        %v406 = vld [vmem:[%s405] sm:$0xff]
        %v407 = vld [vmem:[%s405 + $0x8] sm:$0xff]
        %v408 = vld [vmem:[%s405 + $0x10] sm:$0xff]
        %v409 = vld [vmem:[%s405 + $0x18] sm:$0xff]
        %v410 = vld [vmem:[%s405 + $0x20] sm:$0xff]
        %v411 = vld [vmem:[%s405 + $0x28] sm:$0xff]
        %v412 = vpack.c.bf16 %v402, %v401
        %v445 = vunpack.c.l.b16 %v365
        %v446 = vunpack.c.h.b16 %v365
        %v447 = vunpack.c.l.b16 %v366
        %v448 = vunpack.c.l.b16 %v367
        %v449 = vunpack.c.h.b16 %v367
        %v450 = vunpack.c.l.b16 %v368
        %v451 = vunpack.c.l.b16 %v369
        %v452 = vunpack.c.h.b16 %v369
        %v453 = vunpack.c.l.b16 %v370
        %v454 = vunpack.c.l.b16 %v371
        %v455 = vunpack.c.h.b16 %v371
        %v456 = vunpack.c.l.b16 %v372
        %v457 = vunpack.c.l.b16 %v373
        %v458 = vunpack.c.h.b16 %v373
        %v459 = vunpack.c.l.b16 %v374
        %v460 = vunpack.c.l.b16 %v375
        %v461 = vunpack.c.h.b16 %v375
        %v462 = vunpack.c.l.b16 %v376
        %v463 = vunpack.c.l.b16 %v377
        %v464 = vunpack.c.h.b16 %v377
        %v465 = vunpack.c.l.b16 %v378
        %v466 = vunpack.c.l.b16 %v379
        %v467 = vunpack.c.h.b16 %v379
        %v468 = vunpack.c.l.b16 %v380
        %v469 = vunpack.c.l.b16 %v381
        %v470 = vunpack.c.h.b16 %v381
        %v471 = vunpack.c.l.b16 %v382
        %v472 = vunpack.c.l.b16 %v383
        %v473 = vunpack.c.h.b16 %v383
        %v474 = vunpack.c.l.b16 %v384
        %v475 = vunpack.c.l.b16 %v385
        %v476 = vunpack.c.h.b16 %v385
        %v477 = vunpack.c.l.b16 %v386
        %v478 = vunpack.c.l.b16 %v387
        %v479 = vunpack.c.h.b16 %v387
        %v480 = vunpack.c.l.b16 %v388
        %v481 = vunpack.c.l.b16 %v389
        %v482 = vunpack.c.h.b16 %v389
        %v483 = vunpack.c.l.b16 %v390
        %v484 = vunpack.c.l.b16 %v391
        %v485 = vunpack.c.h.b16 %v391
        %v486 = vunpack.c.l.b16 %v392
        %v487 = vunpack.c.l.b16 %v393
        %v488 = vunpack.c.h.b16 %v393
        %v489 = vunpack.c.l.b16 %v394
        %v490 = vunpack.c.l.b16 %v395
        %v491 = vunpack.c.h.b16 %v395
        %v492 = vunpack.c.l.b16 %v396
        %v493 = vpack.c.b16 %v448, %v445
        %v494 = vpack.c.b16 %v449, %v446
        %v495 = vpack.c.b16 %v450, %v447
        %v496 = vpack.c.b16 %v454, %v451
        %v497 = vpack.c.b16 %v455, %v452
        %v498 = vpack.c.b16 %v456, %v453
        %v499 = vpack.c.b16 %v460, %v457
        %v500 = vpack.c.b16 %v461, %v458
        %v501 = vpack.c.b16 %v462, %v459
        %v502 = vpack.c.b16 %v466, %v463
        %v503 = vpack.c.b16 %v467, %v464
        %v504 = vpack.c.b16 %v468, %v465
        %v505 = vpack.c.b16 %v472, %v469
        %v506 = vpack.c.b16 %v473, %v470
        %v507 = vpack.c.b16 %v474, %v471
        %v508 = vpack.c.b16 %v478, %v475
        %v509 = vpack.c.b16 %v479, %v476
        %v510 = vpack.c.b16 %v480, %v477
        %v511 = vpack.c.b16 %v484, %v481
        %v512 = vpack.c.b16 %v485, %v482
        %v513 = vpack.c.b16 %v486, %v483
        %v514 = vpack.c.b16 %v490, %v487
        %v515 = vpack.c.b16 %v491, %v488
        %v516 = vpack.c.b16 %v492, %v489
        %541 = vmatprep.subr.bf16.mxu0 %v494
        %542 = vmatpush1.bf16.msra.mxu0 %v493
        %543 = vmatprep.subr.bf16.mxu0 %v497
        %544 = vmatpush1.bf16.msra.mxu0 %v496
        %545 = vmatprep.subr.bf16.mxu0 %v500
        %546 = vmatpush1.bf16.msra.mxu0 %v499
        %547 = vmatprep.subr.bf16.mxu0 %v503
        %548 = vmatpush1.bf16.msra.mxu0 %v502
        %549 = vmatprep.subr.bf16.mxu0 %v506
        %550 = vmatpush1.bf16.msra.mxu0 %v505
        %551 = vmatprep.subr.bf16.mxu0 %v509
        %552 = vmatpush1.bf16.msra.mxu0 %v508
        %553 = vmatprep.subr.bf16.mxu0 %v512
        %554 = vmatpush1.bf16.msra.mxu0 %v511
        %555 = vmatprep.subr.bf16.mxu0 %v515
        %556 = vmatpush1.bf16.msra.mxu0 %v514
        %557 = vmatprep.subr.bf16.mxu0 0
        %558 = vmatpush1.bf16.msra.mxu0 0
        %559 = vmatprep.subr.bf16.mxu0 0
        %560 = vmatpush1.bf16.msra.mxu0 0
        %561 = vmatprep.subr.bf16.mxu0 0
        %562 = vmatpush1.bf16.msra.mxu0 0
        %563 = vmatprep.subr.bf16.mxu0 0
        %564 = vmatpush1.bf16.msra.mxu0 0
        %565 = vmatprep.subr.bf16.mxu0 0
        %566 = vmatpush1.bf16.msra.mxu0 0
        %567 = vmatprep.subr.bf16.mxu0 0
        %568 = vmatpush1.bf16.msra.mxu0 0
        %569 = vmatprep.subr.bf16.mxu0 0
        %570 = vmatpush1.bf16.msra.mxu0 0
        %571 = vmatprep.subr.bf16.mxu0 0
        %572 = vmatpush1.bf16.msra.mxu0 0
        %573 = vmatprep.mubr.bf16.mxu0 0
        %574 = vmatmul.mubr.bf16.gmra.mrb[0].mxu0 %v412
        %v575 = vpop.f32.mrb[0].mxu0
        %v576 = vadd.f32 0.0, %v575
        %v577 = vpop.f32.mrb[0].mxu0
        %v578 = vadd.f32 0.0, %v577
        %v579 = vpop.f32.mrb[0].mxu0
        %v580 = vadd.f32 0.0, %v579
        %v581 = vpop.f32.mrb[0].mxu0
        %v582 = vadd.f32 0.0, %v581
        %583 = vdwg.mxu0
        %584 = vmatprep.subr.bf16.mxu0 0
        %585 = vmatpush1.bf16.msra.mxu0 %v495
        %586 = vmatprep.subr.bf16.mxu0 0
        %587 = vmatpush1.bf16.msra.mxu0 %v498
        %588 = vmatprep.subr.bf16.mxu0 0
        %589 = vmatpush1.bf16.msra.mxu0 %v501
        %590 = vmatprep.subr.bf16.mxu0 0
        %591 = vmatpush1.bf16.msra.mxu0 %v504
        %592 = vmatprep.subr.bf16.mxu0 0
        %593 = vmatpush1.bf16.msra.mxu0 %v507
        %594 = vmatprep.subr.bf16.mxu0 0
        %595 = vmatpush1.bf16.msra.mxu0 %v510
        %596 = vmatprep.subr.bf16.mxu0 0
        %597 = vmatpush1.bf16.msra.mxu0 %v513
        %598 = vmatprep.subr.bf16.mxu0 0
        %599 = vmatpush1.bf16.msra.mxu0 %v516
        %600 = vmatprep.subr.bf16.mxu0 0
        %601 = vmatpush1.bf16.msra.mxu0 0
        %602 = vmatprep.subr.bf16.mxu0 0
        %603 = vmatpush1.bf16.msra.mxu0 0
        %604 = vmatprep.subr.bf16.mxu0 0
        %605 = vmatpush1.bf16.msra.mxu0 0
        %606 = vmatprep.subr.bf16.mxu0 0
        %607 = vmatpush1.bf16.msra.mxu0 0
        %608 = vmatprep.subr.bf16.mxu0 0
        %609 = vmatpush1.bf16.msra.mxu0 0
        %610 = vmatprep.subr.bf16.mxu0 0
        %611 = vmatpush1.bf16.msra.mxu0 0
        %612 = vmatprep.subr.bf16.mxu0 0
        %613 = vmatpush1.bf16.msra.mxu0 0
        %614 = vmatprep.subr.bf16.mxu0 0
        %615 = vmatpush1.bf16.msra.mxu0 0
        %616 = vmatprep.mubr.bf16.mxu0 0
        %617 = vmatmul.mubr.bf16.gmra.mrb[0].mxu0 %v412
        %v618 = vpop.f32.mrb[0].mxu0
        %v619 = vadd.f32 0.0, %v618
        %v620 = vpop.f32.mrb[0].mxu0
        %v621 = vpop.f32.mrb[0].mxu0
        %v622 = vadd.f32 0.0, %v621
        %v623 = vpop.f32.mrb[0].mxu0
        %624 = vdwg.mxu0
        %v625 = vadd.f32 %v406, %v576
        %v626 = vadd.f32 %v407, %v578
        %v627 = vadd.f32 %v409, %v580
        %v628 = vadd.f32 %v410, %v582
        %v629 = vmul.f32 %v625, 0.5
        %v630 = vmul.f32 %v626, 0.5
        %v631 = vmul.f32 %v627, 0.5
        %v632 = vmul.f32 %v628, 0.5
        %v633 = vtanh.pop %v629
        %v634 = vtanh.pop %v630
        %v635 = vtanh.pop %v631
        %v636 = vtanh.pop %v632
        %v637 = vadd.f32 %v633, 1.0
        %v638 = vadd.f32 %v634, 1.0
        %v639 = vadd.f32 %v635, 1.0
        %v640 = vadd.f32 %v636, 1.0
        %v641 = vmul.f32 %v637, 0.5
        %v642 = vmul.f32 %v638, 0.5
        %v643 = vmul.f32 %v639, 0.5
        %v644 = vmul.f32 %v640, 0.5
        %v646 = vlaneseq
        %v647 = vshrl.u32 %v646, 7
        %v648 = vsub.s32 0, %v647
        %v649 = vrot.slane %v397, %v648
        %v651 = vadd.f32 %v619, %v649
        %v652 = vadd.f32 %v622, %v649
        %v653 = vmul.f32 %v641, %v651
        %v654 = vmul.f32 %v643, %v652
        %v655 = vadd.f32 %v408, %v653
        %v656 = vadd.f32 %v411, %v654
        %v657 = vtanh.pop %v655
        %v658 = vtanh.pop %v656
        %v659 = vsub.f32 %v401, %v657
        %v660 = vsub.f32 %v402, %v658
        %v661 = vmul.f32 %v642, %v659
        %v662 = vmul.f32 %v644, %v660
        %v663 = vadd.f32 %v657, %v661
        %v664 = vadd.f32 %v658, %v662
        %s665 = sadd.s32 %s398, %s400
        %s666 = smul.u32 %s665, 6
        %s667 = smul.addr %s666, 8
        %s668 = scalar_lea.vmem %s309, %s667 [#allocation3]
        %v669 = vld [vmem:[%s668] sm:$0xff]
        %v670 = vld [vmem:[%s668 + $0x8] sm:$0xff]
        %v671 = vld [vmem:[%s668 + $0x10] sm:$0xff]
        %v672 = vld [vmem:[%s668 + $0x18] sm:$0xff]
        %v673 = vld [vmem:[%s668 + $0x20] sm:$0xff]
        %v674 = vld [vmem:[%s668 + $0x28] sm:$0xff]
        %v675 = vpack.c.bf16 %v664, %v663
        %676 = vmatprep.subr.bf16.mxu0 %v494
        %677 = vmatpush1.bf16.msra.mxu0 %v493
        %678 = vmatprep.subr.bf16.mxu0 %v497
        %679 = vmatpush1.bf16.msra.mxu0 %v496
        %680 = vmatprep.subr.bf16.mxu0 %v500
        %681 = vmatpush1.bf16.msra.mxu0 %v499
        %682 = vmatprep.subr.bf16.mxu0 %v503
        %683 = vmatpush1.bf16.msra.mxu0 %v502
        %684 = vmatprep.subr.bf16.mxu0 %v506
        %685 = vmatpush1.bf16.msra.mxu0 %v505
        %686 = vmatprep.subr.bf16.mxu0 %v509
        %687 = vmatpush1.bf16.msra.mxu0 %v508
        %688 = vmatprep.subr.bf16.mxu0 %v512
        %689 = vmatpush1.bf16.msra.mxu0 %v511
        %690 = vmatprep.subr.bf16.mxu0 %v515
        %691 = vmatpush1.bf16.msra.mxu0 %v514
        %692 = vmatprep.subr.bf16.mxu0 0
        %693 = vmatpush1.bf16.msra.mxu0 0
        %694 = vmatprep.subr.bf16.mxu0 0
        %695 = vmatpush1.bf16.msra.mxu0 0
        %696 = vmatprep.subr.bf16.mxu0 0
        %697 = vmatpush1.bf16.msra.mxu0 0
        %698 = vmatprep.subr.bf16.mxu0 0
        %699 = vmatpush1.bf16.msra.mxu0 0
        %700 = vmatprep.subr.bf16.mxu0 0
        %701 = vmatpush1.bf16.msra.mxu0 0
        %702 = vmatprep.subr.bf16.mxu0 0
        %703 = vmatpush1.bf16.msra.mxu0 0
        %704 = vmatprep.subr.bf16.mxu0 0
        %705 = vmatpush1.bf16.msra.mxu0 0
        %706 = vmatprep.subr.bf16.mxu0 0
        %707 = vmatpush1.bf16.msra.mxu0 0
        %708 = vmatprep.mubr.bf16.mxu0 0
        %709 = vmatmul.mubr.bf16.gmra.mrb[0].mxu0 %v675
        %v710 = vpop.f32.mrb[0].mxu0
        %v711 = vadd.f32 0.0, %v710
        %v712 = vpop.f32.mrb[0].mxu0
        %v713 = vadd.f32 0.0, %v712
        %v714 = vpop.f32.mrb[0].mxu0
        %v715 = vadd.f32 0.0, %v714
        %v716 = vpop.f32.mrb[0].mxu0
        %v717 = vadd.f32 0.0, %v716
        %718 = vdwg.mxu0
        %719 = vmatprep.subr.bf16.mxu0 0
        %720 = vmatpush1.bf16.msra.mxu0 %v495
        %721 = vmatprep.subr.bf16.mxu0 0
        %722 = vmatpush1.bf16.msra.mxu0 %v498
        %723 = vmatprep.subr.bf16.mxu0 0
        %724 = vmatpush1.bf16.msra.mxu0 %v501
        %725 = vmatprep.subr.bf16.mxu0 0
        %726 = vmatpush1.bf16.msra.mxu0 %v504
        %727 = vmatprep.subr.bf16.mxu0 0
        %728 = vmatpush1.bf16.msra.mxu0 %v507
        %729 = vmatprep.subr.bf16.mxu0 0
        %730 = vmatpush1.bf16.msra.mxu0 %v510
        %731 = vmatprep.subr.bf16.mxu0 0
        %732 = vmatpush1.bf16.msra.mxu0 %v513
        %733 = vmatprep.subr.bf16.mxu0 0
        %734 = vmatpush1.bf16.msra.mxu0 %v516
        %735 = vmatprep.subr.bf16.mxu0 0
        %736 = vmatpush1.bf16.msra.mxu0 0
        %737 = vmatprep.subr.bf16.mxu0 0
        %738 = vmatpush1.bf16.msra.mxu0 0
        %739 = vmatprep.subr.bf16.mxu0 0
        %740 = vmatpush1.bf16.msra.mxu0 0
        %741 = vmatprep.subr.bf16.mxu0 0
        %742 = vmatpush1.bf16.msra.mxu0 0
        %743 = vmatprep.subr.bf16.mxu0 0
        %744 = vmatpush1.bf16.msra.mxu0 0
        %745 = vmatprep.subr.bf16.mxu0 0
        %746 = vmatpush1.bf16.msra.mxu0 0
        %747 = vmatprep.subr.bf16.mxu0 0
        %748 = vmatpush1.bf16.msra.mxu0 0
        %749 = vmatprep.subr.bf16.mxu0 0
        %750 = vmatpush1.bf16.msra.mxu0 0
        %751 = vmatprep.mubr.bf16.mxu0 0
        %752 = vmatmul.mubr.bf16.gmra.mrb[0].mxu0 %v675
        %v753 = vpop.f32.mrb[0].mxu0
        %v754 = vadd.f32 0.0, %v753
        %v755 = vpop.f32.mrb[0].mxu0
        %v756 = vpop.f32.mrb[0].mxu0
        %v757 = vadd.f32 0.0, %v756
        %v758 = vpop.f32.mrb[0].mxu0
        %759 = vdwg.mxu0
        %v760 = vadd.f32 %v669, %v711
        %v761 = vadd.f32 %v670, %v713
        %v762 = vadd.f32 %v672, %v715
        %v763 = vadd.f32 %v673, %v717
        %v764 = vmul.f32 %v760, 0.5
        %v765 = vmul.f32 %v761, 0.5
        %v766 = vmul.f32 %v762, 0.5
        %v767 = vmul.f32 %v763, 0.5
        %v768 = vtanh.pop %v764
        %v769 = vtanh.pop %v765
        %v770 = vtanh.pop %v766
        %v771 = vtanh.pop %v767
        %v772 = vadd.f32 %v768, 1.0
        %v773 = vadd.f32 %v769, 1.0
        %v774 = vadd.f32 %v770, 1.0
        %v775 = vadd.f32 %v771, 1.0
        %v776 = vmul.f32 %v772, 0.5
        %v777 = vmul.f32 %v773, 0.5
        %v778 = vmul.f32 %v774, 0.5
        %v779 = vmul.f32 %v775, 0.5
        %v780 = vadd.f32 %v754, %v649
        %v781 = vadd.f32 %v757, %v649
        %v782 = vmul.f32 %v776, %v780
        %v783 = vmul.f32 %v778, %v781
        %v784 = vadd.f32 %v671, %v782
        %v785 = vadd.f32 %v674, %v783
        %v786 = vtanh.pop %v784
        %v787 = vtanh.pop %v785
        %v788 = vsub.f32 %v663, %v786
        %v789 = vsub.f32 %v664, %v787
        %v790 = vmul.f32 %v777, %v788
        %v791 = vmul.f32 %v779, %v789
        %v792 = vadd.f32 %v786, %v790
        %v793 = vadd.f32 %v787, %v791
        %s794 = smul.u32 %s400, 2
        %s795 = sadd.s32 %s398, %s794
        %s796 = smul.u32 %s795, 6
        %s797 = smul.addr %s796, 8
        %s798 = scalar_lea.vmem %s309, %s797 [#allocation3]
        %v799 = vld [vmem:[%s798] sm:$0xff]
        %v800 = vld [vmem:[%s798 + $0x8] sm:$0xff]
        %v801 = vld [vmem:[%s798 + $0x10] sm:$0xff]
        %v802 = vld [vmem:[%s798 + $0x18] sm:$0xff]
        %v803 = vld [vmem:[%s798 + $0x20] sm:$0xff]
        %v804 = vld [vmem:[%s798 + $0x28] sm:$0xff]
        %v805 = vpack.c.bf16 %v793, %v792
        %806 = vmatprep.subr.bf16.mxu0 %v494
        %807 = vmatpush1.bf16.msra.mxu0 %v493
        %808 = vmatprep.subr.bf16.mxu0 %v497
        %809 = vmatpush1.bf16.msra.mxu0 %v496
        %810 = vmatprep.subr.bf16.mxu0 %v500
        %811 = vmatpush1.bf16.msra.mxu0 %v499
        %812 = vmatprep.subr.bf16.mxu0 %v503
        %813 = vmatpush1.bf16.msra.mxu0 %v502
        %814 = vmatprep.subr.bf16.mxu0 %v506
        %815 = vmatpush1.bf16.msra.mxu0 %v505
        %816 = vmatprep.subr.bf16.mxu0 %v509
        %817 = vmatpush1.bf16.msra.mxu0 %v508
        %818 = vmatprep.subr.bf16.mxu0 %v512
        %819 = vmatpush1.bf16.msra.mxu0 %v511
        %820 = vmatprep.subr.bf16.mxu0 %v515
        %821 = vmatpush1.bf16.msra.mxu0 %v514
        %822 = vmatprep.subr.bf16.mxu0 0
        %823 = vmatpush1.bf16.msra.mxu0 0
        %824 = vmatprep.subr.bf16.mxu0 0
        %825 = vmatpush1.bf16.msra.mxu0 0
        %826 = vmatprep.subr.bf16.mxu0 0
        %827 = vmatpush1.bf16.msra.mxu0 0
        %828 = vmatprep.subr.bf16.mxu0 0
        %829 = vmatpush1.bf16.msra.mxu0 0
        %830 = vmatprep.subr.bf16.mxu0 0
        %831 = vmatpush1.bf16.msra.mxu0 0
        %832 = vmatprep.subr.bf16.mxu0 0
        %833 = vmatpush1.bf16.msra.mxu0 0
        %834 = vmatprep.subr.bf16.mxu0 0
        %835 = vmatpush1.bf16.msra.mxu0 0
        %836 = vmatprep.subr.bf16.mxu0 0
        %837 = vmatpush1.bf16.msra.mxu0 0
        %838 = vmatprep.mubr.bf16.mxu0 0
        %839 = vmatmul.mubr.bf16.gmra.mrb[0].mxu0 %v805
        %v840 = vpop.f32.mrb[0].mxu0
        %v841 = vadd.f32 0.0, %v840
        %v842 = vpop.f32.mrb[0].mxu0
        %v843 = vadd.f32 0.0, %v842
        %v844 = vpop.f32.mrb[0].mxu0
        %v845 = vadd.f32 0.0, %v844
        %v846 = vpop.f32.mrb[0].mxu0
        %v847 = vadd.f32 0.0, %v846
        %848 = vdwg.mxu0
        %849 = vmatprep.subr.bf16.mxu0 0
        %850 = vmatpush1.bf16.msra.mxu0 %v495
        %851 = vmatprep.subr.bf16.mxu0 0
        %852 = vmatpush1.bf16.msra.mxu0 %v498
        %853 = vmatprep.subr.bf16.mxu0 0
        %854 = vmatpush1.bf16.msra.mxu0 %v501
        %855 = vmatprep.subr.bf16.mxu0 0
        %856 = vmatpush1.bf16.msra.mxu0 %v504
        %857 = vmatprep.subr.bf16.mxu0 0
        %858 = vmatpush1.bf16.msra.mxu0 %v507
        %859 = vmatprep.subr.bf16.mxu0 0
        %860 = vmatpush1.bf16.msra.mxu0 %v510
        %861 = vmatprep.subr.bf16.mxu0 0
        %862 = vmatpush1.bf16.msra.mxu0 %v513
        %863 = vmatprep.subr.bf16.mxu0 0
        %864 = vmatpush1.bf16.msra.mxu0 %v516
        %865 = vmatprep.subr.bf16.mxu0 0
        %866 = vmatpush1.bf16.msra.mxu0 0
        %867 = vmatprep.subr.bf16.mxu0 0
        %868 = vmatpush1.bf16.msra.mxu0 0
        %869 = vmatprep.subr.bf16.mxu0 0
        %870 = vmatpush1.bf16.msra.mxu0 0
        %871 = vmatprep.subr.bf16.mxu0 0
        %872 = vmatpush1.bf16.msra.mxu0 0
        %873 = vmatprep.subr.bf16.mxu0 0
        %874 = vmatpush1.bf16.msra.mxu0 0
        %875 = vmatprep.subr.bf16.mxu0 0
        %876 = vmatpush1.bf16.msra.mxu0 0
        %877 = vmatprep.subr.bf16.mxu0 0
        %878 = vmatpush1.bf16.msra.mxu0 0
        %879 = vmatprep.subr.bf16.mxu0 0
        %880 = vmatpush1.bf16.msra.mxu0 0
        %881 = vmatprep.mubr.bf16.mxu0 0
        %882 = vmatmul.mubr.bf16.gmra.mrb[0].mxu0 %v805
        %v883 = vpop.f32.mrb[0].mxu0
        %v884 = vadd.f32 0.0, %v883
        %v885 = vpop.f32.mrb[0].mxu0
        %v886 = vpop.f32.mrb[0].mxu0
        %v887 = vadd.f32 0.0, %v886
        %v888 = vpop.f32.mrb[0].mxu0
        %889 = vdwg.mxu0
        %v890 = vadd.f32 %v799, %v841
        %v891 = vadd.f32 %v800, %v843
        %v892 = vadd.f32 %v802, %v845
        %v893 = vadd.f32 %v803, %v847
        %v894 = vmul.f32 %v890, 0.5
        %v895 = vmul.f32 %v891, 0.5
        %v896 = vmul.f32 %v892, 0.5
        %v897 = vmul.f32 %v893, 0.5
        %v898 = vtanh.pop %v894
        %v899 = vtanh.pop %v895
        %v900 = vtanh.pop %v896
        %v901 = vtanh.pop %v897
        %v902 = vadd.f32 %v898, 1.0
        %v903 = vadd.f32 %v899, 1.0
        %v904 = vadd.f32 %v900, 1.0
        %v905 = vadd.f32 %v901, 1.0
        %v906 = vmul.f32 %v902, 0.5
        %v907 = vmul.f32 %v903, 0.5
        %v908 = vmul.f32 %v904, 0.5
        %v909 = vmul.f32 %v905, 0.5
        %v910 = vadd.f32 %v884, %v649
        %v911 = vadd.f32 %v887, %v649
        %v912 = vmul.f32 %v906, %v910
        %v913 = vmul.f32 %v908, %v911
        %v914 = vadd.f32 %v801, %v912
        %v915 = vadd.f32 %v804, %v913
        %v916 = vtanh.pop %v914
        %v917 = vtanh.pop %v915
        %v918 = vsub.f32 %v792, %v916
        %v919 = vsub.f32 %v793, %v917
        %v920 = vmul.f32 %v907, %v918
        %v921 = vmul.f32 %v909, %v919
        %v922 = vadd.f32 %v916, %v920
        %v923 = vadd.f32 %v917, %v921
        %s924 = smul.u32 %s400, 3
        %s925 = sadd.s32 %s398, %s924
        %s926 = smul.u32 %s925, 6
        %s927 = smul.addr %s926, 8
        %s928 = scalar_lea.vmem %s309, %s927 [#allocation3]
        %v929 = vld [vmem:[%s928] sm:$0xff]
        %v930 = vld [vmem:[%s928 + $0x8] sm:$0xff]
        %v931 = vld [vmem:[%s928 + $0x10] sm:$0xff]
        %v932 = vld [vmem:[%s928 + $0x18] sm:$0xff]
        %v933 = vld [vmem:[%s928 + $0x20] sm:$0xff]
        %v934 = vld [vmem:[%s928 + $0x28] sm:$0xff]
        %v935 = vpack.c.bf16 %v923, %v922
        %936 = vmatprep.subr.bf16.mxu0 %v494
        %937 = vmatpush1.bf16.msra.mxu0 %v493
        %938 = vmatprep.subr.bf16.mxu0 %v497
        %939 = vmatpush1.bf16.msra.mxu0 %v496
        %940 = vmatprep.subr.bf16.mxu0 %v500
        %941 = vmatpush1.bf16.msra.mxu0 %v499
        %942 = vmatprep.subr.bf16.mxu0 %v503
        %943 = vmatpush1.bf16.msra.mxu0 %v502
        %944 = vmatprep.subr.bf16.mxu0 %v506
        %945 = vmatpush1.bf16.msra.mxu0 %v505
        %946 = vmatprep.subr.bf16.mxu0 %v509
        %947 = vmatpush1.bf16.msra.mxu0 %v508
        %948 = vmatprep.subr.bf16.mxu0 %v512
        %949 = vmatpush1.bf16.msra.mxu0 %v511
        %950 = vmatprep.subr.bf16.mxu0 %v515
        %951 = vmatpush1.bf16.msra.mxu0 %v514
        %952 = vmatprep.subr.bf16.mxu0 0
        %953 = vmatpush1.bf16.msra.mxu0 0
        %954 = vmatprep.subr.bf16.mxu0 0
        %955 = vmatpush1.bf16.msra.mxu0 0
        %956 = vmatprep.subr.bf16.mxu0 0
        %957 = vmatpush1.bf16.msra.mxu0 0
        %958 = vmatprep.subr.bf16.mxu0 0
        %959 = vmatpush1.bf16.msra.mxu0 0
        %960 = vmatprep.subr.bf16.mxu0 0
        %961 = vmatpush1.bf16.msra.mxu0 0
        %962 = vmatprep.subr.bf16.mxu0 0
        %963 = vmatpush1.bf16.msra.mxu0 0
        %964 = vmatprep.subr.bf16.mxu0 0
        %965 = vmatpush1.bf16.msra.mxu0 0
        %966 = vmatprep.subr.bf16.mxu0 0
        %967 = vmatpush1.bf16.msra.mxu0 0
        %968 = vmatprep.mubr.bf16.mxu0 0
        %969 = vmatmul.mubr.bf16.gmra.mrb[0].mxu0 %v935
        %v970 = vpop.f32.mrb[0].mxu0
        %v971 = vadd.f32 0.0, %v970
        %v972 = vpop.f32.mrb[0].mxu0
        %v973 = vadd.f32 0.0, %v972
        %v974 = vpop.f32.mrb[0].mxu0
        %v975 = vadd.f32 0.0, %v974
        %v976 = vpop.f32.mrb[0].mxu0
        %v977 = vadd.f32 0.0, %v976
        %978 = vdwg.mxu0
        %979 = vmatprep.subr.bf16.mxu0 0
        %980 = vmatpush1.bf16.msra.mxu0 %v495
        %981 = vmatprep.subr.bf16.mxu0 0
        %982 = vmatpush1.bf16.msra.mxu0 %v498
        %983 = vmatprep.subr.bf16.mxu0 0
        %984 = vmatpush1.bf16.msra.mxu0 %v501
        %985 = vmatprep.subr.bf16.mxu0 0
        %986 = vmatpush1.bf16.msra.mxu0 %v504
        %987 = vmatprep.subr.bf16.mxu0 0
        %988 = vmatpush1.bf16.msra.mxu0 %v507
        %989 = vmatprep.subr.bf16.mxu0 0
        %990 = vmatpush1.bf16.msra.mxu0 %v510
        %991 = vmatprep.subr.bf16.mxu0 0
        %992 = vmatpush1.bf16.msra.mxu0 %v513
        %993 = vmatprep.subr.bf16.mxu0 0
        %994 = vmatpush1.bf16.msra.mxu0 %v516
        %995 = vmatprep.subr.bf16.mxu0 0
        %996 = vmatpush1.bf16.msra.mxu0 0
        %997 = vmatprep.subr.bf16.mxu0 0
        %998 = vmatpush1.bf16.msra.mxu0 0
        %999 = vmatprep.subr.bf16.mxu0 0
        %1000 = vmatpush1.bf16.msra.mxu0 0
        %1001 = vmatprep.subr.bf16.mxu0 0
        %1002 = vmatpush1.bf16.msra.mxu0 0
        %1003 = vmatprep.subr.bf16.mxu0 0
        %1004 = vmatpush1.bf16.msra.mxu0 0
        %1005 = vmatprep.subr.bf16.mxu0 0
        %1006 = vmatpush1.bf16.msra.mxu0 0
        %1007 = vmatprep.subr.bf16.mxu0 0
        %1008 = vmatpush1.bf16.msra.mxu0 0
        %1009 = vmatprep.subr.bf16.mxu0 0
        %1010 = vmatpush1.bf16.msra.mxu0 0
        %1011 = vmatprep.mubr.bf16.mxu0 0
        %1012 = vmatmul.mubr.bf16.gmra.mrb[0].mxu0 %v935
        %v1013 = vpop.f32.mrb[0].mxu0
        %v1014 = vadd.f32 0.0, %v1013
        %v1015 = vpop.f32.mrb[0].mxu0
        %v1016 = vpop.f32.mrb[0].mxu0
        %v1017 = vadd.f32 0.0, %v1016
        %v1018 = vpop.f32.mrb[0].mxu0
        %1019 = vdwg.mxu0
        %v1020 = vadd.f32 %v929, %v971
        %v1021 = vadd.f32 %v930, %v973
        %v1022 = vadd.f32 %v932, %v975
        %v1023 = vadd.f32 %v933, %v977
        %v1024 = vmul.f32 %v1020, 0.5
        %v1025 = vmul.f32 %v1021, 0.5
        %v1026 = vmul.f32 %v1022, 0.5
        %v1027 = vmul.f32 %v1023, 0.5
        %v1028 = vtanh.pop %v1024
        %v1029 = vtanh.pop %v1025
        %v1030 = vtanh.pop %v1026
        %v1031 = vtanh.pop %v1027
        %v1032 = vadd.f32 %v1028, 1.0
        %v1033 = vadd.f32 %v1029, 1.0
        %v1034 = vadd.f32 %v1030, 1.0
        %v1035 = vadd.f32 %v1031, 1.0
        %v1036 = vmul.f32 %v1032, 0.5
        %v1037 = vmul.f32 %v1033, 0.5
        %v1038 = vmul.f32 %v1034, 0.5
        %v1039 = vmul.f32 %v1035, 0.5
        %v1040 = vadd.f32 %v1014, %v649
        %v1041 = vadd.f32 %v1017, %v649
        %v1042 = vmul.f32 %v1036, %v1040
        %v1043 = vmul.f32 %v1038, %v1041
        %v1044 = vadd.f32 %v931, %v1042
        %v1045 = vadd.f32 %v934, %v1043
        %v1046 = vtanh.pop %v1044
        %v1047 = vtanh.pop %v1045
        %v1048 = vsub.f32 %v922, %v1046
        %v1049 = vsub.f32 %v923, %v1047
        %v1050 = vmul.f32 %v1037, %v1048
        %v1051 = vmul.f32 %v1039, %v1049
        %v1052 = vadd.f32 %v1046, %v1050
        %v1053 = vadd.f32 %v1047, %v1051
        %s1054 = smul.u32 %s400, 4
        %s1055 = sadd.s32 %s398, %s1054
        %s1056 = smul.u32 %s1055, 6
        %s1057 = smul.addr %s1056, 8
        %s1058 = scalar_lea.vmem %s309, %s1057 [#allocation3]
        %v1059 = vld [vmem:[%s1058] sm:$0xff]
        %v1060 = vld [vmem:[%s1058 + $0x8] sm:$0xff]
        %v1061 = vld [vmem:[%s1058 + $0x10] sm:$0xff]
        %v1062 = vld [vmem:[%s1058 + $0x18] sm:$0xff]
        %v1063 = vld [vmem:[%s1058 + $0x20] sm:$0xff]
        %v1064 = vld [vmem:[%s1058 + $0x28] sm:$0xff]
        %v1065 = vpack.c.bf16 %v1053, %v1052
        %1066 = vmatprep.subr.bf16.mxu0 %v494
        %1067 = vmatpush1.bf16.msra.mxu0 %v493
        %1068 = vmatprep.subr.bf16.mxu0 %v497
        %1069 = vmatpush1.bf16.msra.mxu0 %v496
        %1070 = vmatprep.subr.bf16.mxu0 %v500
        %1071 = vmatpush1.bf16.msra.mxu0 %v499
        %1072 = vmatprep.subr.bf16.mxu0 %v503
        %1073 = vmatpush1.bf16.msra.mxu0 %v502
        %1074 = vmatprep.subr.bf16.mxu0 %v506
        %1075 = vmatpush1.bf16.msra.mxu0 %v505
        %1076 = vmatprep.subr.bf16.mxu0 %v509
        %1077 = vmatpush1.bf16.msra.mxu0 %v508
        %1078 = vmatprep.subr.bf16.mxu0 %v512
        %1079 = vmatpush1.bf16.msra.mxu0 %v511
        %1080 = vmatprep.subr.bf16.mxu0 %v515
        %1081 = vmatpush1.bf16.msra.mxu0 %v514
        %1082 = vmatprep.subr.bf16.mxu0 0
        %1083 = vmatpush1.bf16.msra.mxu0 0
        %1084 = vmatprep.subr.bf16.mxu0 0
        %1085 = vmatpush1.bf16.msra.mxu0 0
        %1086 = vmatprep.subr.bf16.mxu0 0
        %1087 = vmatpush1.bf16.msra.mxu0 0
        %1088 = vmatprep.subr.bf16.mxu0 0
        %1089 = vmatpush1.bf16.msra.mxu0 0
        %1090 = vmatprep.subr.bf16.mxu0 0
        %1091 = vmatpush1.bf16.msra.mxu0 0
        %1092 = vmatprep.subr.bf16.mxu0 0
        %1093 = vmatpush1.bf16.msra.mxu0 0
        %1094 = vmatprep.subr.bf16.mxu0 0
        %1095 = vmatpush1.bf16.msra.mxu0 0
        %1096 = vmatprep.subr.bf16.mxu0 0
        %1097 = vmatpush1.bf16.msra.mxu0 0
        %1098 = vmatprep.mubr.bf16.mxu0 0
        %1099 = vmatmul.mubr.bf16.gmra.mrb[0].mxu0 %v1065
        %v1100 = vpop.f32.mrb[0].mxu0
        %v1101 = vadd.f32 0.0, %v1100
        %v1102 = vpop.f32.mrb[0].mxu0
        %v1103 = vadd.f32 0.0, %v1102
        %v1104 = vpop.f32.mrb[0].mxu0
        %v1105 = vadd.f32 0.0, %v1104
        %v1106 = vpop.f32.mrb[0].mxu0
        %v1107 = vadd.f32 0.0, %v1106
        %1108 = vdwg.mxu0
        %1109 = vmatprep.subr.bf16.mxu0 0
        %1110 = vmatpush1.bf16.msra.mxu0 %v495
        %1111 = vmatprep.subr.bf16.mxu0 0
        %1112 = vmatpush1.bf16.msra.mxu0 %v498
        %1113 = vmatprep.subr.bf16.mxu0 0
        %1114 = vmatpush1.bf16.msra.mxu0 %v501
        %1115 = vmatprep.subr.bf16.mxu0 0
        %1116 = vmatpush1.bf16.msra.mxu0 %v504
        %1117 = vmatprep.subr.bf16.mxu0 0
        %1118 = vmatpush1.bf16.msra.mxu0 %v507
        %1119 = vmatprep.subr.bf16.mxu0 0
        %1120 = vmatpush1.bf16.msra.mxu0 %v510
        %1121 = vmatprep.subr.bf16.mxu0 0
        %1122 = vmatpush1.bf16.msra.mxu0 %v513
        %1123 = vmatprep.subr.bf16.mxu0 0
        %1124 = vmatpush1.bf16.msra.mxu0 %v516
        %1125 = vmatprep.subr.bf16.mxu0 0
        %1126 = vmatpush1.bf16.msra.mxu0 0
        %1127 = vmatprep.subr.bf16.mxu0 0
        %1128 = vmatpush1.bf16.msra.mxu0 0
        %1129 = vmatprep.subr.bf16.mxu0 0
        %1130 = vmatpush1.bf16.msra.mxu0 0
        %1131 = vmatprep.subr.bf16.mxu0 0
        %1132 = vmatpush1.bf16.msra.mxu0 0
        %1133 = vmatprep.subr.bf16.mxu0 0
        %1134 = vmatpush1.bf16.msra.mxu0 0
        %1135 = vmatprep.subr.bf16.mxu0 0
        %1136 = vmatpush1.bf16.msra.mxu0 0
        %1137 = vmatprep.subr.bf16.mxu0 0
        %1138 = vmatpush1.bf16.msra.mxu0 0
        %1139 = vmatprep.subr.bf16.mxu0 0
        %1140 = vmatpush1.bf16.msra.mxu0 0
        %1141 = vmatprep.mubr.bf16.mxu0 0
        %1142 = vmatmul.mubr.bf16.gmra.mrb[0].mxu0 %v1065
        %v1143 = vpop.f32.mrb[0].mxu0
        %v1144 = vadd.f32 0.0, %v1143
        %v1145 = vpop.f32.mrb[0].mxu0
        %v1146 = vpop.f32.mrb[0].mxu0
        %v1147 = vadd.f32 0.0, %v1146
        %v1148 = vpop.f32.mrb[0].mxu0
        %1149 = vdwg.mxu0
        %v1150 = vadd.f32 %v1059, %v1101
        %v1151 = vadd.f32 %v1060, %v1103
        %v1152 = vadd.f32 %v1062, %v1105
        %v1153 = vadd.f32 %v1063, %v1107
        %v1154 = vmul.f32 %v1150, 0.5
        %v1155 = vmul.f32 %v1151, 0.5
        %v1156 = vmul.f32 %v1152, 0.5
        %v1157 = vmul.f32 %v1153, 0.5
        %v1158 = vtanh.pop %v1154
        %v1159 = vtanh.pop %v1155
        %v1160 = vtanh.pop %v1156
        %v1161 = vtanh.pop %v1157
        %v1162 = vadd.f32 %v1158, 1.0
        %v1163 = vadd.f32 %v1159, 1.0
        %v1164 = vadd.f32 %v1160, 1.0
        %v1165 = vadd.f32 %v1161, 1.0
        %v1166 = vmul.f32 %v1162, 0.5
        %v1167 = vmul.f32 %v1163, 0.5
        %v1168 = vmul.f32 %v1164, 0.5
        %v1169 = vmul.f32 %v1165, 0.5
        %v1170 = vadd.f32 %v1144, %v649
        %v1171 = vadd.f32 %v1147, %v649
        %v1172 = vmul.f32 %v1166, %v1170
        %v1173 = vmul.f32 %v1168, %v1171
        %v1174 = vadd.f32 %v1061, %v1172
        %v1175 = vadd.f32 %v1064, %v1173
        %v1176 = vtanh.pop %v1174
        %v1177 = vtanh.pop %v1175
        %v1178 = vsub.f32 %v1052, %v1176
        %v1179 = vsub.f32 %v1053, %v1177
        %v1180 = vmul.f32 %v1167, %v1178
        %v1181 = vmul.f32 %v1169, %v1179
        %v1182 = vadd.f32 %v1176, %v1180
        %v1183 = vadd.f32 %v1177, %v1181
        %s1184 = smul.u32 %s400, 5
        %s1185 = sadd.s32 %s398, %s1184
        %s1186 = smul.u32 %s1185, 6
        %s1187 = smul.addr %s1186, 8
        %s1188 = scalar_lea.vmem %s309, %s1187 [#allocation3]
        %v1189 = vld [vmem:[%s1188] sm:$0xff]
        %v1190 = vld [vmem:[%s1188 + $0x8] sm:$0xff]
        %v1191 = vld [vmem:[%s1188 + $0x10] sm:$0xff]
        %v1192 = vld [vmem:[%s1188 + $0x18] sm:$0xff]
        %v1193 = vld [vmem:[%s1188 + $0x20] sm:$0xff]
        %v1194 = vld [vmem:[%s1188 + $0x28] sm:$0xff]
        %v1195 = vpack.c.bf16 %v1183, %v1182
        %1196 = vmatprep.subr.bf16.mxu0 %v494
        %1197 = vmatpush1.bf16.msra.mxu0 %v493
        %1198 = vmatprep.subr.bf16.mxu0 %v497
        %1199 = vmatpush1.bf16.msra.mxu0 %v496
        %1200 = vmatprep.subr.bf16.mxu0 %v500
        %1201 = vmatpush1.bf16.msra.mxu0 %v499
        %1202 = vmatprep.subr.bf16.mxu0 %v503
        %1203 = vmatpush1.bf16.msra.mxu0 %v502
        %1204 = vmatprep.subr.bf16.mxu0 %v506
        %1205 = vmatpush1.bf16.msra.mxu0 %v505
        %1206 = vmatprep.subr.bf16.mxu0 %v509
        %1207 = vmatpush1.bf16.msra.mxu0 %v508
        %1208 = vmatprep.subr.bf16.mxu0 %v512
        %1209 = vmatpush1.bf16.msra.mxu0 %v511
        %1210 = vmatprep.subr.bf16.mxu0 %v515
        %1211 = vmatpush1.bf16.msra.mxu0 %v514
        %1212 = vmatprep.subr.bf16.mxu0 0
        %1213 = vmatpush1.bf16.msra.mxu0 0
        %1214 = vmatprep.subr.bf16.mxu0 0
        %1215 = vmatpush1.bf16.msra.mxu0 0
        %1216 = vmatprep.subr.bf16.mxu0 0
        %1217 = vmatpush1.bf16.msra.mxu0 0
        %1218 = vmatprep.subr.bf16.mxu0 0
        %1219 = vmatpush1.bf16.msra.mxu0 0
        %1220 = vmatprep.subr.bf16.mxu0 0
        %1221 = vmatpush1.bf16.msra.mxu0 0
        %1222 = vmatprep.subr.bf16.mxu0 0
        %1223 = vmatpush1.bf16.msra.mxu0 0
        %1224 = vmatprep.subr.bf16.mxu0 0
        %1225 = vmatpush1.bf16.msra.mxu0 0
        %1226 = vmatprep.subr.bf16.mxu0 0
        %1227 = vmatpush1.bf16.msra.mxu0 0
        %1228 = vmatprep.mubr.bf16.mxu0 0
        %1229 = vmatmul.mubr.bf16.gmra.mrb[0].mxu0 %v1195
        %v1230 = vpop.f32.mrb[0].mxu0
        %v1231 = vadd.f32 0.0, %v1230
        %v1232 = vpop.f32.mrb[0].mxu0
        %v1233 = vadd.f32 0.0, %v1232
        %v1234 = vpop.f32.mrb[0].mxu0
        %v1235 = vadd.f32 0.0, %v1234
        %v1236 = vpop.f32.mrb[0].mxu0
        %v1237 = vadd.f32 0.0, %v1236
        %1238 = vdwg.mxu0
        %1239 = vmatprep.subr.bf16.mxu0 0
        %1240 = vmatpush1.bf16.msra.mxu0 %v495
        %1241 = vmatprep.subr.bf16.mxu0 0
        %1242 = vmatpush1.bf16.msra.mxu0 %v498
        %1243 = vmatprep.subr.bf16.mxu0 0
        %1244 = vmatpush1.bf16.msra.mxu0 %v501
        %1245 = vmatprep.subr.bf16.mxu0 0
        %1246 = vmatpush1.bf16.msra.mxu0 %v504
        %1247 = vmatprep.subr.bf16.mxu0 0
        %1248 = vmatpush1.bf16.msra.mxu0 %v507
        %1249 = vmatprep.subr.bf16.mxu0 0
        %1250 = vmatpush1.bf16.msra.mxu0 %v510
        %1251 = vmatprep.subr.bf16.mxu0 0
        %1252 = vmatpush1.bf16.msra.mxu0 %v513
        %1253 = vmatprep.subr.bf16.mxu0 0
        %1254 = vmatpush1.bf16.msra.mxu0 %v516
        %1255 = vmatprep.subr.bf16.mxu0 0
        %1256 = vmatpush1.bf16.msra.mxu0 0
        %1257 = vmatprep.subr.bf16.mxu0 0
        %1258 = vmatpush1.bf16.msra.mxu0 0
        %1259 = vmatprep.subr.bf16.mxu0 0
        %1260 = vmatpush1.bf16.msra.mxu0 0
        %1261 = vmatprep.subr.bf16.mxu0 0
        %1262 = vmatpush1.bf16.msra.mxu0 0
        %1263 = vmatprep.subr.bf16.mxu0 0
        %1264 = vmatpush1.bf16.msra.mxu0 0
        %1265 = vmatprep.subr.bf16.mxu0 0
        %1266 = vmatpush1.bf16.msra.mxu0 0
        %1267 = vmatprep.subr.bf16.mxu0 0
        %1268 = vmatpush1.bf16.msra.mxu0 0
        %1269 = vmatprep.subr.bf16.mxu0 0
        %1270 = vmatpush1.bf16.msra.mxu0 0
        %1271 = vmatprep.mubr.bf16.mxu0 0
        %1272 = vmatmul.mubr.bf16.gmra.mrb[0].mxu0 %v1195
        %v1273 = vpop.f32.mrb[0].mxu0
        %v1274 = vadd.f32 0.0, %v1273
        %v1275 = vpop.f32.mrb[0].mxu0
        %v1276 = vpop.f32.mrb[0].mxu0
        %v1277 = vadd.f32 0.0, %v1276
        %v1278 = vpop.f32.mrb[0].mxu0
        %1279 = vdwg.mxu0
        %v1280 = vadd.f32 %v1189, %v1231
        %v1281 = vadd.f32 %v1190, %v1233
        %v1282 = vadd.f32 %v1192, %v1235
        %v1283 = vadd.f32 %v1193, %v1237
        %v1284 = vmul.f32 %v1280, 0.5
        %v1285 = vmul.f32 %v1281, 0.5
        %v1286 = vmul.f32 %v1282, 0.5
        %v1287 = vmul.f32 %v1283, 0.5
        %v1288 = vtanh.pop %v1284
        %v1289 = vtanh.pop %v1285
        %v1290 = vtanh.pop %v1286
        %v1291 = vtanh.pop %v1287
        %v1292 = vadd.f32 %v1288, 1.0
        %v1293 = vadd.f32 %v1289, 1.0
        %v1294 = vadd.f32 %v1290, 1.0
        %v1295 = vadd.f32 %v1291, 1.0
        %v1296 = vmul.f32 %v1292, 0.5
        %v1297 = vmul.f32 %v1293, 0.5
        %v1298 = vmul.f32 %v1294, 0.5
        %v1299 = vmul.f32 %v1295, 0.5
        %v1300 = vadd.f32 %v1274, %v649
        %v1301 = vadd.f32 %v1277, %v649
        %v1302 = vmul.f32 %v1296, %v1300
        %v1303 = vmul.f32 %v1298, %v1301
        %v1304 = vadd.f32 %v1191, %v1302
        %v1305 = vadd.f32 %v1194, %v1303
        %v1306 = vtanh.pop %v1304
        %v1307 = vtanh.pop %v1305
        %v1308 = vsub.f32 %v1182, %v1306
        %v1309 = vsub.f32 %v1183, %v1307
        %v1310 = vmul.f32 %v1297, %v1308
        %v1311 = vmul.f32 %v1299, %v1309
        %v1312 = vadd.f32 %v1306, %v1310
        %v1313 = vadd.f32 %v1307, %v1311
        %s1314 = smul.u32 %s400, 6
        %s1315 = sadd.s32 %s398, %s1314
        %s1316 = smul.u32 %s1315, 6
        %s1317 = smul.addr %s1316, 8
        %s1318 = scalar_lea.vmem %s309, %s1317 [#allocation3]
        %v1319 = vld [vmem:[%s1318] sm:$0xff]
        %v1320 = vld [vmem:[%s1318 + $0x8] sm:$0xff]
        %v1321 = vld [vmem:[%s1318 + $0x10] sm:$0xff]
        %v1322 = vld [vmem:[%s1318 + $0x18] sm:$0xff]
        %v1323 = vld [vmem:[%s1318 + $0x20] sm:$0xff]
        %v1324 = vld [vmem:[%s1318 + $0x28] sm:$0xff]
        %v1325 = vpack.c.bf16 %v1313, %v1312
        %1326 = vmatprep.subr.bf16.mxu0 %v494
        %1327 = vmatpush1.bf16.msra.mxu0 %v493
        %1328 = vmatprep.subr.bf16.mxu0 %v497
        %1329 = vmatpush1.bf16.msra.mxu0 %v496
        %1330 = vmatprep.subr.bf16.mxu0 %v500
        %1331 = vmatpush1.bf16.msra.mxu0 %v499
        %1332 = vmatprep.subr.bf16.mxu0 %v503
        %1333 = vmatpush1.bf16.msra.mxu0 %v502
        %1334 = vmatprep.subr.bf16.mxu0 %v506
        %1335 = vmatpush1.bf16.msra.mxu0 %v505
        %1336 = vmatprep.subr.bf16.mxu0 %v509
        %1337 = vmatpush1.bf16.msra.mxu0 %v508
        %1338 = vmatprep.subr.bf16.mxu0 %v512
        %1339 = vmatpush1.bf16.msra.mxu0 %v511
        %1340 = vmatprep.subr.bf16.mxu0 %v515
        %1341 = vmatpush1.bf16.msra.mxu0 %v514
        %1342 = vmatprep.subr.bf16.mxu0 0
        %1343 = vmatpush1.bf16.msra.mxu0 0
        %1344 = vmatprep.subr.bf16.mxu0 0
        %1345 = vmatpush1.bf16.msra.mxu0 0
        %1346 = vmatprep.subr.bf16.mxu0 0
        %1347 = vmatpush1.bf16.msra.mxu0 0
        %1348 = vmatprep.subr.bf16.mxu0 0
        %1349 = vmatpush1.bf16.msra.mxu0 0
        %1350 = vmatprep.subr.bf16.mxu0 0
        %1351 = vmatpush1.bf16.msra.mxu0 0
        %1352 = vmatprep.subr.bf16.mxu0 0
        %1353 = vmatpush1.bf16.msra.mxu0 0
        %1354 = vmatprep.subr.bf16.mxu0 0
        %1355 = vmatpush1.bf16.msra.mxu0 0
        %1356 = vmatprep.subr.bf16.mxu0 0
        %1357 = vmatpush1.bf16.msra.mxu0 0
        %1358 = vmatprep.mubr.bf16.mxu0 0
        %1359 = vmatmul.mubr.bf16.gmra.mrb[0].mxu0 %v1325
        %v1360 = vpop.f32.mrb[0].mxu0
        %v1361 = vadd.f32 0.0, %v1360
        %v1362 = vpop.f32.mrb[0].mxu0
        %v1363 = vadd.f32 0.0, %v1362
        %v1364 = vpop.f32.mrb[0].mxu0
        %v1365 = vadd.f32 0.0, %v1364
        %v1366 = vpop.f32.mrb[0].mxu0
        %v1367 = vadd.f32 0.0, %v1366
        %1368 = vdwg.mxu0
        %1369 = vmatprep.subr.bf16.mxu0 0
        %1370 = vmatpush1.bf16.msra.mxu0 %v495
        %1371 = vmatprep.subr.bf16.mxu0 0
        %1372 = vmatpush1.bf16.msra.mxu0 %v498
        %1373 = vmatprep.subr.bf16.mxu0 0
        %1374 = vmatpush1.bf16.msra.mxu0 %v501
        %1375 = vmatprep.subr.bf16.mxu0 0
        %1376 = vmatpush1.bf16.msra.mxu0 %v504
        %1377 = vmatprep.subr.bf16.mxu0 0
        %1378 = vmatpush1.bf16.msra.mxu0 %v507
        %1379 = vmatprep.subr.bf16.mxu0 0
        %1380 = vmatpush1.bf16.msra.mxu0 %v510
        %1381 = vmatprep.subr.bf16.mxu0 0
        %1382 = vmatpush1.bf16.msra.mxu0 %v513
        %1383 = vmatprep.subr.bf16.mxu0 0
        %1384 = vmatpush1.bf16.msra.mxu0 %v516
        %1385 = vmatprep.subr.bf16.mxu0 0
        %1386 = vmatpush1.bf16.msra.mxu0 0
        %1387 = vmatprep.subr.bf16.mxu0 0
        %1388 = vmatpush1.bf16.msra.mxu0 0
        %1389 = vmatprep.subr.bf16.mxu0 0
        %1390 = vmatpush1.bf16.msra.mxu0 0
        %1391 = vmatprep.subr.bf16.mxu0 0
        %1392 = vmatpush1.bf16.msra.mxu0 0
        %1393 = vmatprep.subr.bf16.mxu0 0
        %1394 = vmatpush1.bf16.msra.mxu0 0
        %1395 = vmatprep.subr.bf16.mxu0 0
        %1396 = vmatpush1.bf16.msra.mxu0 0
        %1397 = vmatprep.subr.bf16.mxu0 0
        %1398 = vmatpush1.bf16.msra.mxu0 0
        %1399 = vmatprep.subr.bf16.mxu0 0
        %1400 = vmatpush1.bf16.msra.mxu0 0
        %1401 = vmatprep.mubr.bf16.mxu0 0
        %1402 = vmatmul.mubr.bf16.gmra.mrb[0].mxu0 %v1325
        %v1403 = vpop.f32.mrb[0].mxu0
        %v1404 = vadd.f32 0.0, %v1403
        %v1405 = vpop.f32.mrb[0].mxu0
        %v1406 = vpop.f32.mrb[0].mxu0
        %v1407 = vadd.f32 0.0, %v1406
        %v1408 = vpop.f32.mrb[0].mxu0
        %1409 = vdwg.mxu0
        %v1410 = vadd.f32 %v1319, %v1361
        %v1411 = vadd.f32 %v1320, %v1363
        %v1412 = vadd.f32 %v1322, %v1365
        %v1413 = vadd.f32 %v1323, %v1367
        %v1414 = vmul.f32 %v1410, 0.5
        %v1415 = vmul.f32 %v1411, 0.5
        %v1416 = vmul.f32 %v1412, 0.5
        %v1417 = vmul.f32 %v1413, 0.5
        %v1418 = vtanh.pop %v1414
        %v1419 = vtanh.pop %v1415
        %v1420 = vtanh.pop %v1416
        %v1421 = vtanh.pop %v1417
        %v1422 = vadd.f32 %v1418, 1.0
        %v1423 = vadd.f32 %v1419, 1.0
        %v1424 = vadd.f32 %v1420, 1.0
        %v1425 = vadd.f32 %v1421, 1.0
        %v1426 = vmul.f32 %v1422, 0.5
        %v1427 = vmul.f32 %v1423, 0.5
        %v1428 = vmul.f32 %v1424, 0.5
        %v1429 = vmul.f32 %v1425, 0.5
        %v1430 = vadd.f32 %v1404, %v649
        %v1431 = vadd.f32 %v1407, %v649
        %v1432 = vmul.f32 %v1426, %v1430
        %v1433 = vmul.f32 %v1428, %v1431
        %v1434 = vadd.f32 %v1321, %v1432
        %v1435 = vadd.f32 %v1324, %v1433
        %v1436 = vtanh.pop %v1434
        %v1437 = vtanh.pop %v1435
        %v1438 = vsub.f32 %v1312, %v1436
        %v1439 = vsub.f32 %v1313, %v1437
        %v1440 = vmul.f32 %v1427, %v1438
        %v1441 = vmul.f32 %v1429, %v1439
        %v1442 = vadd.f32 %v1436, %v1440
        %v1443 = vadd.f32 %v1437, %v1441
        %s1444 = smul.u32 %s400, 7
        %s1445 = sadd.s32 %s398, %s1444
        %s1446 = smul.u32 %s1445, 6
        %s1447 = smul.addr %s1446, 8
        %s1448 = scalar_lea.vmem %s309, %s1447 [#allocation3]
        %v1449 = vld [vmem:[%s1448] sm:$0xff]
        %v1450 = vld [vmem:[%s1448 + $0x8] sm:$0xff]
        %v1451 = vld [vmem:[%s1448 + $0x10] sm:$0xff]
        %v1452 = vld [vmem:[%s1448 + $0x18] sm:$0xff]
        %v1453 = vld [vmem:[%s1448 + $0x20] sm:$0xff]
        %v1454 = vld [vmem:[%s1448 + $0x28] sm:$0xff]
        %v1455 = vpack.c.bf16 %v1443, %v1442
        %1456 = vmatprep.subr.bf16.mxu0 %v494
        %1457 = vmatpush1.bf16.msra.mxu0 %v493
        %1458 = vmatprep.subr.bf16.mxu0 %v497
        %1459 = vmatpush1.bf16.msra.mxu0 %v496
        %1460 = vmatprep.subr.bf16.mxu0 %v500
        %1461 = vmatpush1.bf16.msra.mxu0 %v499
        %1462 = vmatprep.subr.bf16.mxu0 %v503
        %1463 = vmatpush1.bf16.msra.mxu0 %v502
        %1464 = vmatprep.subr.bf16.mxu0 %v506
        %1465 = vmatpush1.bf16.msra.mxu0 %v505
        %1466 = vmatprep.subr.bf16.mxu0 %v509
        %1467 = vmatpush1.bf16.msra.mxu0 %v508
        %1468 = vmatprep.subr.bf16.mxu0 %v512
        %1469 = vmatpush1.bf16.msra.mxu0 %v511
        %1470 = vmatprep.subr.bf16.mxu0 %v515
        %1471 = vmatpush1.bf16.msra.mxu0 %v514
        %1472 = vmatprep.subr.bf16.mxu0 0
        %1473 = vmatpush1.bf16.msra.mxu0 0
        %1474 = vmatprep.subr.bf16.mxu0 0
        %1475 = vmatpush1.bf16.msra.mxu0 0
        %1476 = vmatprep.subr.bf16.mxu0 0
        %1477 = vmatpush1.bf16.msra.mxu0 0
        %1478 = vmatprep.subr.bf16.mxu0 0
        %1479 = vmatpush1.bf16.msra.mxu0 0
        %1480 = vmatprep.subr.bf16.mxu0 0
        %1481 = vmatpush1.bf16.msra.mxu0 0
        %1482 = vmatprep.subr.bf16.mxu0 0
        %1483 = vmatpush1.bf16.msra.mxu0 0
        %1484 = vmatprep.subr.bf16.mxu0 0
        %1485 = vmatpush1.bf16.msra.mxu0 0
        %1486 = vmatprep.subr.bf16.mxu0 0
        %1487 = vmatpush1.bf16.msra.mxu0 0
        %1488 = vmatprep.mubr.bf16.mxu0 0
        %1489 = vmatmul.mubr.bf16.gmra.mrb[0].mxu0 %v1455
        %v1490 = vpop.f32.mrb[0].mxu0
        %v1491 = vadd.f32 0.0, %v1490
        %v1492 = vpop.f32.mrb[0].mxu0
        %v1493 = vadd.f32 0.0, %v1492
        %v1494 = vpop.f32.mrb[0].mxu0
        %v1495 = vadd.f32 0.0, %v1494
        %v1496 = vpop.f32.mrb[0].mxu0
        %v1497 = vadd.f32 0.0, %v1496
        %1498 = vdwg.mxu0
        %1499 = vmatprep.subr.bf16.mxu0 0
        %1500 = vmatpush1.bf16.msra.mxu0 %v495
        %1501 = vmatprep.subr.bf16.mxu0 0
        %1502 = vmatpush1.bf16.msra.mxu0 %v498
        %1503 = vmatprep.subr.bf16.mxu0 0
        %1504 = vmatpush1.bf16.msra.mxu0 %v501
        %1505 = vmatprep.subr.bf16.mxu0 0
        %1506 = vmatpush1.bf16.msra.mxu0 %v504
        %1507 = vmatprep.subr.bf16.mxu0 0
        %1508 = vmatpush1.bf16.msra.mxu0 %v507
        %1509 = vmatprep.subr.bf16.mxu0 0
        %1510 = vmatpush1.bf16.msra.mxu0 %v510
        %1511 = vmatprep.subr.bf16.mxu0 0
        %1512 = vmatpush1.bf16.msra.mxu0 %v513
        %1513 = vmatprep.subr.bf16.mxu0 0
        %1514 = vmatpush1.bf16.msra.mxu0 %v516
        %1515 = vmatprep.subr.bf16.mxu0 0
        %1516 = vmatpush1.bf16.msra.mxu0 0
        %1517 = vmatprep.subr.bf16.mxu0 0
        %1518 = vmatpush1.bf16.msra.mxu0 0
        %1519 = vmatprep.subr.bf16.mxu0 0
        %1520 = vmatpush1.bf16.msra.mxu0 0
        %1521 = vmatprep.subr.bf16.mxu0 0
        %1522 = vmatpush1.bf16.msra.mxu0 0
        %1523 = vmatprep.subr.bf16.mxu0 0
        %1524 = vmatpush1.bf16.msra.mxu0 0
        %1525 = vmatprep.subr.bf16.mxu0 0
        %1526 = vmatpush1.bf16.msra.mxu0 0
        %1527 = vmatprep.subr.bf16.mxu0 0
        %1528 = vmatpush1.bf16.msra.mxu0 0
        %1529 = vmatprep.subr.bf16.mxu0 0
        %1530 = vmatpush1.bf16.msra.mxu0 0
        %1531 = vmatprep.mubr.bf16.mxu0 0
        %1532 = vmatmul.mubr.bf16.gmra.mrb[0].mxu0 %v1455
        %v1533 = vpop.f32.mrb[0].mxu0
        %v1534 = vadd.f32 0.0, %v1533
        %v1535 = vpop.f32.mrb[0].mxu0
        %v1536 = vpop.f32.mrb[0].mxu0
        %v1537 = vadd.f32 0.0, %v1536
        %v1538 = vpop.f32.mrb[0].mxu0
        %1539 = vdwg.mxu0
        %v1540 = vadd.f32 %v1449, %v1491
        %v1541 = vadd.f32 %v1450, %v1493
        %v1542 = vadd.f32 %v1452, %v1495
        %v1543 = vadd.f32 %v1453, %v1497
        %v1544 = vmul.f32 %v1540, 0.5
        %v1545 = vmul.f32 %v1541, 0.5
        %v1546 = vmul.f32 %v1542, 0.5
        %v1547 = vmul.f32 %v1543, 0.5
        %v1548 = vtanh.pop %v1544
        %v1549 = vtanh.pop %v1545
        %v1550 = vtanh.pop %v1546
        %v1551 = vtanh.pop %v1547
        %v1552 = vadd.f32 %v1548, 1.0
        %v1553 = vadd.f32 %v1549, 1.0
        %v1554 = vadd.f32 %v1550, 1.0
        %v1555 = vadd.f32 %v1551, 1.0
        %v1556 = vmul.f32 %v1552, 0.5
        %v1557 = vmul.f32 %v1553, 0.5
        %v1558 = vmul.f32 %v1554, 0.5
        %v1559 = vmul.f32 %v1555, 0.5
        %v1560 = vadd.f32 %v1534, %v649
        %v1561 = vadd.f32 %v1537, %v649
        %v1562 = vmul.f32 %v1556, %v1560
        %v1563 = vmul.f32 %v1558, %v1561
        %v1564 = vadd.f32 %v1451, %v1562
        %v1565 = vadd.f32 %v1454, %v1563
        %v1566 = vtanh.pop %v1564
        %v1567 = vtanh.pop %v1565
        %v1568 = vsub.f32 %v1442, %v1566
        %v1569 = vsub.f32 %v1443, %v1567
        %v1570 = vmul.f32 %v1557, %v1568
        %v1571 = vmul.f32 %v1559, %v1569
        %v1572 = vadd.f32 %v1566, %v1570
        %v1573 = vadd.f32 %v1567, %v1571
        %1574 = vst [vmem:[#allocation2] sm:$0xff] %v1572
        %1575 = vst [vmem:[#allocation2 + $0x8] sm:$0xff] %v1573
        // Predicated region
        $region60: #{rnn_forward.8} parent=50 // pred_check
          %p1576 = pneg %p359
        $region61: #{rnn_forward.8} parent=50 // pred_check_branch
          %1578 = sbr.rel (%p1576) target = $region63
        $region62: #{rnn_forward.8} parent=50 // pred_region
          %v1579 = vld [vmem:[#allocation2] sm:$0xff]
          %v1580 = vld [vmem:[#allocation2 + $0x8] sm:$0xff]
          %1581 = vst [vmem:[%s357] sm:$0xff] %v1579
          %1582 = vst [vmem:[%s357 + $0x8] sm:$0xff] %v1580
        $region63: #{rnn_forward.8} parent=50 // pred_fallthru
          _
        %p1583 = scmp.lt.s32.totalorder %s18, 1
        %s1584 = scalar_select %p1583, %s18, 1
        %s1585 = smul.addr %s1584, 2
        %s1586 = smul.addr %s1585, 8
        %s1587 = scalar_lea.vmem %s3, %s1586
        // Predicated region
        $region64: #{rnn_forward.8} parent=50 // pred_check
          %p1588 = pneg %p134
        $region65: #{rnn_forward.8} parent=50 // pred_check_branch
          %1590 = sbr.rel (%p1588) target = $region67
        $region66: #{rnn_forward.8} parent=50 // pred_region
          _
        $region67: #{rnn_forward.8} parent=50 // pred_fallthru
          _
      $region51: #{rnn_forward.8} parent=5 // pred_fallthru
        _
      %p1591 = scmp.le.s32.totalorder 2, %s9
      // Predicated region
      $region68: #{rnn_forward.8} parent=5 // pred_check
        %p1592 = pneg %p1591
      $region69: #{rnn_forward.8} parent=5 // pred_check_branch
        %1594 = sbr.rel (%p1592) target = $region71
      $region70: #{rnn_forward.8} parent=5 // pred_region
        %s1595 = ssub.s32 %s9, 2
        // Predicated region
        $region72: #{rnn_forward.8} parent=70 // pred_check
          %p1596 = pneg %p140
        $region73: #{rnn_forward.8} parent=70 // pred_check_branch
          %1598 = sbr.rel (%p1596) target = $region75
        $region74: #{rnn_forward.8} parent=70 // pred_region
          %p1599 = scmp.lt.s32.totalorder %s20, 1
          %s1600 = scalar_select %p1599, %s20, 1
          %s1601 = smul.addr %s1600, 2
          %s1602 = smul.addr %s1601, 8
          %s1603 = scalar_lea.vmem %s3, %s1602
        $region75: #{rnn_forward.8} parent=70 // pred_fallthru
          _
      $region71: #{rnn_forward.8} parent=5 // pred_fallthru
        _
    $region6: #{rnn_forward.8} parent=1 // loop_footer
      %s13 = sadd.s32 1, %s9
    $region7: #{rnn_forward.8} parent=1 // loop_footer_branch
      %8 = sbr.rel target = $region3
    $region8: #{rnn_forward.8} parent=1 // loop_exit
      _

// kernel: rnn_forward.9
$region0: #{rnn_forward.9}
  #allocation0 [shape = 'u32[]', space=smem, size = 0x4, offset = 0x4, fixed_abs, tag = 'smem constant byte address 0x4 - core index']
  #allocation1 [shape = 'u32[144,128]{1,0:T(1,128)}', space=vmem, size = 0x12000, scoped, tag = 'internal scratch']
  %s0 = inlined_call_operand.vmem [shape: f32[16,128], index: 0, kind: input, shape index: {}]
  %s1 = inlined_call_operand.vmem [shape: f32[16,128], index: 1, kind: input, shape index: {}]
  %s2 = inlined_call_operand.vmem [shape: bf16[128,128], index: 2, kind: input, shape index: {}]
  %s3 = inlined_call_operand.vmem [shape: bf16[128,128], index: 3, kind: input, shape index: {}]
  %s4 = inlined_call_operand.vmem [shape: f32[1,128], index: 4, kind: input, shape index: {}]
  %s5 = inlined_call_operand.vmem [shape: f32[16,128], index: 5, kind: output, shape index: {}]
  %s6 = sld [smem:[#allocation0]]
  $region30: #{rnn_forward.9} parent=0
    _
  %s8 = ssub.s32 1, %s6
  %s9 = scalar_select 0, %s8, %s6
  // Predicated region
  $region2: #{rnn_forward.9} parent=0 // pred_check
    _
  $region3: #{rnn_forward.9} parent=0 // pred_check_branch
    %11 = sbr.rel (0) target = $region5
  $region4: #{rnn_forward.9} parent=0 // pred_region
    _
  $region5: #{rnn_forward.9} parent=0 // pred_fallthru
    _
  // Predicated region
  $region6: #{rnn_forward.9} parent=0 // pred_check
    _
  $region7: #{rnn_forward.9} parent=0 // pred_check_branch
    %13 = sbr.rel (0) target = $region9
  $region8: #{rnn_forward.9} parent=0 // pred_region
    _
  $region9: #{rnn_forward.9} parent=0 // pred_fallthru
    _
  // Predicated region
  $region10: #{rnn_forward.9} parent=0 // pred_check
    _
  $region11: #{rnn_forward.9} parent=0 // pred_check_branch
    %15 = sbr.rel (0) target = $region13
  $region12: #{rnn_forward.9} parent=0 // pred_region
    _
  $region13: #{rnn_forward.9} parent=0 // pred_fallthru
    _
  // Predicated region
  $region14: #{rnn_forward.9} parent=0 // pred_check
    _
  $region15: #{rnn_forward.9} parent=0 // pred_check_branch
    %17 = sbr.rel (0) target = $region17
  $region16: #{rnn_forward.9} parent=0 // pred_region
    _
  $region17: #{rnn_forward.9} parent=0 // pred_fallthru
    _
  // Predicated region
  $region18: #{rnn_forward.9} parent=0 // pred_check
    _
  $region19: #{rnn_forward.9} parent=0 // pred_check_branch
    %19 = sbr.rel (0) target = $region21
  $region20: #{rnn_forward.9} parent=0 // pred_region
    _
  $region21: #{rnn_forward.9} parent=0 // pred_fallthru
    _
  %v21 = vld [vmem:[%s0] sm:$0xff]
  %v22 = vld [vmem:[%s0 + $0x8] sm:$0xff]
  %v23 = vpack.c.bf16 %v22, %v21
  %v24 = vld [vmem:[%s2] sm:$0xf]
  %v25 = vld [vmem:[%s2 + $0x4] sm:$0xf]
  %v26 = vld [vmem:[%s2 + $0x8] sm:$0xf]
  %v27 = vld [vmem:[%s2 + $0xc] sm:$0xf]
  %v28 = vld [vmem:[%s2 + $0x10] sm:$0xf]
  %v29 = vld [vmem:[%s2 + $0x14] sm:$0xf]
  %v30 = vld [vmem:[%s2 + $0x18] sm:$0xf]
  %v31 = vld [vmem:[%s2 + $0x1c] sm:$0xf]
  %v32 = vld [vmem:[%s2 + $0x20] sm:$0xf]
  %v33 = vld [vmem:[%s2 + $0x24] sm:$0xf]
  %v34 = vld [vmem:[%s2 + $0x28] sm:$0xf]
  %v35 = vld [vmem:[%s2 + $0x2c] sm:$0xf]
  %v36 = vld [vmem:[%s2 + $0x30] sm:$0xf]
  %v37 = vld [vmem:[%s2 + $0x34] sm:$0xf]
  %v38 = vld [vmem:[%s2 + $0x38] sm:$0xf]
  %v39 = vld [vmem:[%s2 + $0x3c] sm:$0xf]
  %v40 = vld [vmem:[%s1] sm:$0xff]
  %v41 = vld [vmem:[%s1 + $0x8] sm:$0xff]
  %v42 = vpack.c.bf16 %v41, %v40
  %v43 = vld [vmem:[%s3] sm:$0xf]
  %v44 = vld [vmem:[%s3 + $0x4] sm:$0xf]
  %v45 = vld [vmem:[%s3 + $0x8] sm:$0xf]
  %v46 = vld [vmem:[%s3 + $0xc] sm:$0xf]
  %v47 = vld [vmem:[%s3 + $0x10] sm:$0xf]
  %v48 = vld [vmem:[%s3 + $0x14] sm:$0xf]
  %v49 = vld [vmem:[%s3 + $0x18] sm:$0xf]
  %v50 = vld [vmem:[%s3 + $0x1c] sm:$0xf]
  %v51 = vld [vmem:[%s3 + $0x20] sm:$0xf]
  %v52 = vld [vmem:[%s3 + $0x24] sm:$0xf]
  %v53 = vld [vmem:[%s3 + $0x28] sm:$0xf]
  %v54 = vld [vmem:[%s3 + $0x2c] sm:$0xf]
  %v55 = vld [vmem:[%s3 + $0x30] sm:$0xf]
  %v56 = vld [vmem:[%s3 + $0x34] sm:$0xf]
  %v57 = vld [vmem:[%s3 + $0x38] sm:$0xf]
  %v58 = vld [vmem:[%s3 + $0x3c] sm:$0xf]
  %v75 = vunpack.c.l.b16 %v43
  %v76 = vunpack.c.l.b16 %v44
  %v77 = vunpack.c.l.b16 %v45
  %v78 = vunpack.c.l.b16 %v46
  %v79 = vunpack.c.l.b16 %v47
  %v80 = vunpack.c.l.b16 %v48
  %v81 = vunpack.c.l.b16 %v49
  %v82 = vunpack.c.l.b16 %v50
  %v83 = vunpack.c.l.b16 %v51
  %v84 = vunpack.c.l.b16 %v52
  %v85 = vunpack.c.l.b16 %v53
  %v86 = vunpack.c.l.b16 %v54
  %v87 = vunpack.c.l.b16 %v55
  %v88 = vunpack.c.l.b16 %v56
  %v89 = vunpack.c.l.b16 %v57
  %v90 = vunpack.c.l.b16 %v58
  %v91 = vpack.c.b16 %v76, %v75
  %v92 = vpack.c.b16 %v78, %v77
  %v93 = vpack.c.b16 %v80, %v79
  %v94 = vpack.c.b16 %v82, %v81
  %v95 = vpack.c.b16 %v84, %v83
  %v96 = vpack.c.b16 %v86, %v85
  %v97 = vpack.c.b16 %v88, %v87
  %v98 = vpack.c.b16 %v90, %v89
  %107 = vmatprep.subr.bf16.mxu0 0
  %108 = vmatpush1.bf16.msra.mxu0 %v91
  %109 = vmatprep.subr.bf16.mxu0 0
  %110 = vmatpush1.bf16.msra.mxu0 %v92
  %111 = vmatprep.subr.bf16.mxu0 0
  %112 = vmatpush1.bf16.msra.mxu0 %v93
  %113 = vmatprep.subr.bf16.mxu0 0
  %114 = vmatpush1.bf16.msra.mxu0 %v94
  %115 = vmatprep.subr.bf16.mxu0 0
  %116 = vmatpush1.bf16.msra.mxu0 %v95
  %117 = vmatprep.subr.bf16.mxu0 0
  %118 = vmatpush1.bf16.msra.mxu0 %v96
  %119 = vmatprep.subr.bf16.mxu0 0
  %120 = vmatpush1.bf16.msra.mxu0 %v97
  %121 = vmatprep.subr.bf16.mxu0 0
  %122 = vmatpush1.bf16.msra.mxu0 %v98
  %123 = vmatprep.subr.bf16.mxu0 0
  %124 = vmatpush1.bf16.msra.mxu0 0
  %125 = vmatprep.subr.bf16.mxu0 0
  %126 = vmatpush1.bf16.msra.mxu0 0
  %127 = vmatprep.subr.bf16.mxu0 0
  %128 = vmatpush1.bf16.msra.mxu0 0
  %129 = vmatprep.subr.bf16.mxu0 0
  %130 = vmatpush1.bf16.msra.mxu0 0
  %131 = vmatprep.subr.bf16.mxu0 0
  %132 = vmatpush1.bf16.msra.mxu0 0
  %133 = vmatprep.subr.bf16.mxu0 0
  %134 = vmatpush1.bf16.msra.mxu0 0
  %135 = vmatprep.subr.bf16.mxu0 0
  %136 = vmatpush1.bf16.msra.mxu0 0
  %137 = vmatprep.subr.bf16.mxu0 0
  %138 = vmatpush1.bf16.msra.mxu0 0
  %139 = vmatprep.mubr.bf16.mxu0 0
  %140 = vmatmul.mubr.bf16.gmra.mrb[0].mxu0 %v42
  %v141 = vpop.f32.mrb[0].mxu0
  %v142 = vadd.f32 0.0, %v141
  %v143 = vpop.f32.mrb[0].mxu0
  %v144 = vpop.f32.mrb[0].mxu0
  %v145 = vadd.f32 0.0, %v144
  %v146 = vpop.f32.mrb[0].mxu0
  %147 = vdwg.mxu0
  %v164 = vunpack.c.l.b16 %v24
  %v165 = vunpack.c.l.b16 %v25
  %v166 = vunpack.c.l.b16 %v26
  %v167 = vunpack.c.l.b16 %v27
  %v168 = vunpack.c.l.b16 %v28
  %v169 = vunpack.c.l.b16 %v29
  %v170 = vunpack.c.l.b16 %v30
  %v171 = vunpack.c.l.b16 %v31
  %v172 = vunpack.c.l.b16 %v32
  %v173 = vunpack.c.l.b16 %v33
  %v174 = vunpack.c.l.b16 %v34
  %v175 = vunpack.c.l.b16 %v35
  %v176 = vunpack.c.l.b16 %v36
  %v177 = vunpack.c.l.b16 %v37
  %v178 = vunpack.c.l.b16 %v38
  %v179 = vunpack.c.l.b16 %v39
  %v180 = vpack.c.b16 %v165, %v164
  %v181 = vpack.c.b16 %v167, %v166
  %v182 = vpack.c.b16 %v169, %v168
  %v183 = vpack.c.b16 %v171, %v170
  %v184 = vpack.c.b16 %v173, %v172
  %v185 = vpack.c.b16 %v175, %v174
  %v186 = vpack.c.b16 %v177, %v176
  %v187 = vpack.c.b16 %v179, %v178
  %196 = vmatprep.subr.bf16.mxu0 0
  %197 = vmatpush1.bf16.msra.mxu0 %v180
  %198 = vmatprep.subr.bf16.mxu0 0
  %199 = vmatpush1.bf16.msra.mxu0 %v181
  %200 = vmatprep.subr.bf16.mxu0 0
  %201 = vmatpush1.bf16.msra.mxu0 %v182
  %202 = vmatprep.subr.bf16.mxu0 0
  %203 = vmatpush1.bf16.msra.mxu0 %v183
  %204 = vmatprep.subr.bf16.mxu0 0
  %205 = vmatpush1.bf16.msra.mxu0 %v184
  %206 = vmatprep.subr.bf16.mxu0 0
  %207 = vmatpush1.bf16.msra.mxu0 %v185
  %208 = vmatprep.subr.bf16.mxu0 0
  %209 = vmatpush1.bf16.msra.mxu0 %v186
  %210 = vmatprep.subr.bf16.mxu0 0
  %211 = vmatpush1.bf16.msra.mxu0 %v187
  %212 = vmatprep.subr.bf16.mxu0 0
  %213 = vmatpush1.bf16.msra.mxu0 0
  %214 = vmatprep.subr.bf16.mxu0 0
  %215 = vmatpush1.bf16.msra.mxu0 0
  %216 = vmatprep.subr.bf16.mxu0 0
  %217 = vmatpush1.bf16.msra.mxu0 0
  %218 = vmatprep.subr.bf16.mxu0 0
  %219 = vmatpush1.bf16.msra.mxu0 0
  %220 = vmatprep.subr.bf16.mxu0 0
  %221 = vmatpush1.bf16.msra.mxu0 0
  %222 = vmatprep.subr.bf16.mxu0 0
  %223 = vmatpush1.bf16.msra.mxu0 0
  %224 = vmatprep.subr.bf16.mxu0 0
  %225 = vmatpush1.bf16.msra.mxu0 0
  %226 = vmatprep.subr.bf16.mxu0 0
  %227 = vmatpush1.bf16.msra.mxu0 0
  %228 = vmatprep.mubr.bf16.mxu0 0
  %229 = vmatmul.mubr.bf16.gmra.mrb[0].mxu0 %v23
  %v230 = vpop.f32.mrb[0].mxu0
  %v231 = vadd.f32 %v142, %v230
  %v232 = vpop.f32.mrb[0].mxu0
  %v233 = vpop.f32.mrb[0].mxu0
  %v234 = vadd.f32 %v145, %v233
  %v235 = vpop.f32.mrb[0].mxu0
  %236 = vdwg.mxu0
  %v237 = vld [vmem:[%s4] sm:$0x1]
  %v239 = vlaneseq
  %v240 = vshrl.u32 %v239, 7
  %v241 = vsub.s32 0, %v240
  %v242 = vrot.slane %v237, %v241
  %v244 = vadd.f32 %v231, %v242
  %v245 = vadd.f32 %v234, %v242
  %246 = vst [vmem:[%s5] sm:$0xff] %v244
  %247 = vst [vmem:[%s5 + $0x8] sm:$0xff] %v245
  // Predicated region
  $region22: #{rnn_forward.9} parent=0 // pred_check
    _
  $region23: #{rnn_forward.9} parent=0 // pred_check_branch
    %249 = sbr.rel (0) target = $region25
  $region24: #{rnn_forward.9} parent=0 // pred_region
    _
  $region25: #{rnn_forward.9} parent=0 // pred_fallthru
    _
  // Predicated region
  $region26: #{rnn_forward.9} parent=0 // pred_check
    _
  $region27: #{rnn_forward.9} parent=0 // pred_check_branch
    %251 = sbr.rel (0) target = $region29
  $region28: #{rnn_forward.9} parent=0 // pred_region
    _
  $region29: #{rnn_forward.9} parent=0 // pred_fallthru
    _

</llo_original>
